<compile_context>
chip_gen: v7x
topology: tpu7x:2x2x1
jax: 0.10.0
libtpu: 0.0.40
codegen_flags: <defaults>
</compile_context>

<pallas_src>
import math
import functools

import jax
import jax.numpy as jnp
import numpy as np
from jax.experimental import pallas as pl
from jax.experimental.pallas import tpu as pltpu


# ----------------------------- Pallas kernel -------------------------------

def residual_attention_kernel(x_ref,
                              ln1w_ref, ln1b_ref,
                              w_in_ref, b_in_ref,
                              w_out_ref, b_out_ref,
                              ln2w_ref, ln2b_ref,
                              w_fc_ref, b_fc_ref,
                              w_proj_ref, b_proj_ref,
                              o_ref,
                              attn_buf_ref,
                              *, n_head: int):
    """One batch-block per grid step: x block is (Nb, L, D)."""
    Nb, L, D = x_ref.shape
    M = Nb * L
    hd = D // n_head
    eps = 1e-5

    # Flatten the batch block: all projection / MLP matmuls run with M rows.
    x = x_ref[...].astype(jnp.float32).reshape(M, D)        # (M, D) fp32

    def layer_norm(v, w, b):                                 # fp32 math throughout
        mu = jnp.mean(v, axis=-1, keepdims=True)
        var = jnp.mean(jnp.square(v - mu), axis=-1, keepdims=True)
        return (v - mu) * jax.lax.rsqrt(var + eps) * w + b

    # ---- attention branch: x + out_proj(MHA(LN1(x))) ----
    h = layer_norm(x, ln1w_ref[...], ln1b_ref[...])
    # bf16 operands, fp32 accumulation.  The 1/sqrt(head_dim) scale on q is
    # already folded into w_in / b_in host-side.
    qkv = jnp.dot(h.astype(jnp.bfloat16), w_in_ref[...],
                  preferred_element_type=jnp.float32) + b_in_ref[...]   # (M, 3D)
    qkv_b = qkv.astype(jnp.bfloat16)                          # single hoisted cast

    q = qkv_b[:, 0 * D:1 * D].reshape(Nb, L, D)
    k = qkv_b[:, 1 * D:2 * D].reshape(Nb, L, D)
    v = qkv_b[:, 2 * D:3 * D].reshape(Nb, L, D)

    for hh in range(n_head):                                  # static unrolled loop
        sl = slice(hh * hd, (hh + 1) * hd)                    # lane-aligned (hd=128)
        s = jnp.einsum('bqd,bkd->bqk', q[:, :, sl], k[:, :, sl],
                       preferred_element_type=jnp.float32)    # (Nb, L, L) fp32
        s = s - jnp.max(s, axis=-1, keepdims=True)
        p = jnp.exp(s)
        p = p * pl.reciprocal(jnp.sum(p, axis=-1, keepdims=True), approx=True)
        ah = jnp.einsum('bqk,bkd->bqd', p.astype(jnp.bfloat16), v[:, :, sl],
                        preferred_element_type=jnp.float32)   # (Nb, L, hd)
        # Write this head's output into lane-aligned columns of the bf16
        # scratch buffer; the out-projection becomes ONE K = D matmul.
        attn_buf_ref[:, :, sl] = ah.astype(jnp.bfloat16)

    attn = jnp.dot(attn_buf_ref[...].reshape(M, D), w_out_ref[...],
                   preferred_element_type=jnp.float32) + b_out_ref[...]
    x1 = x + attn

    # ---- MLP branch: x1 + c_proj(QuickGELU(c_fc(LN2(x1)))) ----
    h2 = layer_norm(x1, ln2w_ref[...], ln2b_ref[...])
    f = jnp.dot(h2.astype(jnp.bfloat16), w_fc_ref[...],
                preferred_element_type=jnp.float32) + b_fc_ref[...]     # (M, 4D)
    f = f * jax.nn.sigmoid(1.702 * f)                         # QuickGELU (fp32)
    m = jnp.dot(f.astype(jnp.bfloat16), w_proj_ref[...],
                preferred_element_type=jnp.float32) + b_proj_ref[...]

    o_ref[...] = (x1 + m).reshape(Nb, L, D).astype(o_ref.dtype)


# ------------------------------- wrapper ------------------------------------

def _choose_batch_block(N, L, *, target_rows=256, min_grid=2):
    """Batch elements per grid step: fill the 256-row MXU (M = Nb*L >= 256 when
    possible) while keeping at least `min_grid` grid steps for v7x megacore."""
    nb = max(1, -(-target_rows // L))                 # ceil(target_rows / L)
    nb = min(nb, max(1, N // min_grid))
    nb = max(1, min(nb, N))
    while N % nb != 0:                                # require an even split
        nb -= 1
    return nb


def _vmem_limit_bytes(Nb, L, D, x_itemsize):
    """Computed VMEM budget (generation-agnostic): weights (single-buffered,
    bf16), double-buffered activation I/O blocks, and rough live fp32/bf16
    intermediates, plus headroom for compiler scratch."""
    M = Nb * L
    weights = 12 * D * D * 2 + 14 * D * 4             # bf16 matmul weights + fp32 vecs
    act_io = 2 * 2 * M * D * x_itemsize               # 2x-buffered input + output block
    live = M * D * (3 * 4 + 3 * 2 + 4 * 4 + 4 * 2 + 2 + 3 * 4)
    budget = int(1.5 * (weights + act_io + live)) + (4 << 20)
    return int(min(max(16 << 20, budget), 100 << 20))


def residual_attention_block(x, params, n_head, *, batch_first=True):
    """x: (N, L, D) if batch_first else (L, N, D) (PyTorch MHA layout).

    Prefer batch_first=True: it avoids two full-activation HBM transposes.
    """
    if not batch_first:
        x = jnp.transpose(x, (1, 0, 2))
    N, L, D = x.shape

    Nb = _choose_batch_block(N, L)
    grid = (N // Nb,)

    weight_args = (
        params['ln1_w'], params['ln1_b'],
        params['w_in_t'], params['b_in'],
        params['w_out_t'], params['b_out'],
        params['ln2_w'], params['ln2_b'],
        params['w_fc_t'], params['b_fc'],
        params['w_proj_t'], params['b_proj'],
    )
    # Weights are fully VMEM-resident with a constant index_map -> single-buffer
    # them (double-buffering an invariant block only wastes VMEM on v7x).
    weight_specs = [
        pl.BlockSpec(w.shape, lambda b: (0, 0), pipeline_mode=pl.Buffered(1))
        for w in weight_args
    ]

    out = pl.pallas_call(
        functools.partial(residual_attention_kernel, n_head=n_head),
        out_shape=jax.ShapeDtypeStruct((N, L, D), x.dtype),
        grid=grid,
        in_specs=[pl.BlockSpec((Nb, L, D), lambda b: (b, 0, 0))] + weight_specs,
        out_specs=pl.BlockSpec((Nb, L, D), lambda b: (b, 0, 0)),
        scratch_shapes=[pltpu.VMEM((Nb, L, D), jnp.bfloat16)],   # per-head outputs
        compiler_params=pltpu.CompilerParams(
            dimension_semantics=("parallel",),        # batch blocks independent
            vmem_limit_bytes=_vmem_limit_bytes(Nb, L, D, x.dtype.itemsize)),
    )(x, *weight_args)

    if not batch_first:
        out = jnp.transpose(out, (1, 0, 2))
    return out


def residual_attention_block_module(inp, params, n_head):
    """Mirrors the PyTorch module interface: (x, mode) -> (x, mode).
    In eval mode Dropout / DropPath are identities, so 'local' == 'global'."""
    x, mode = inp
    return residual_attention_block(x, params, n_head), mode


# --------------------------- parameter handling ------------------------------

def make_raw_params(key, d_model):
    """PyTorch-layout fp32 parameters (Linear weight = (out_features, in_features)),
    initialized like CLIP.initialize_parameters for a 1-layer transformer."""
    ks = jax.random.split(key, 8)
    D = d_model
    attn_std = D ** -0.5
    proj_std = D ** -0.5
    fc_std = (2 * D) ** -0.5
    return {
        'ln1_w': jnp.ones((D,), jnp.float32),
        'ln1_b': jnp.zeros((D,), jnp.float32),
        'in_proj_weight': attn_std * jax.random.normal(ks[0], (3 * D, D), jnp.float32),
        'in_proj_bias': 0.02 * jax.random.normal(ks[1], (3 * D,), jnp.float32),
        'out_proj_weight': proj_std * jax.random.normal(ks[2], (D, D), jnp.float32),
        'out_proj_bias': 0.02 * jax.random.normal(ks[3], (D,), jnp.float32),
        'ln2_w': jnp.ones((D,), jnp.float32),
        'ln2_b': jnp.zeros((D,), jnp.float32),
        'c_fc_weight': fc_std * jax.random.normal(ks[4], (4 * D, D), jnp.float32),
        'c_fc_bias': 0.02 * jax.random.normal(ks[5], (4 * D,), jnp.float32),
        'c_proj_weight': proj_std * jax.random.normal(ks[6], (D, 4 * D), jnp.float32),
        'c_proj_bias': 0.02 * jax.random.normal(ks[7], (D,), jnp.float32),
    }


def prepare_params(raw, n_head):
    """Kernel-ready params: (in, out) layout, bf16 matmul weights, fp32 biases /
    LN params (as (1, out) rows), with 1/sqrt(head_dim) folded into w_in / b_in."""
    D = raw['ln1_w'].shape[0]
    hd = D // n_head
    scale = 1.0 / math.sqrt(hd)
    col_scale = jnp.concatenate(
        [jnp.full((D,), scale, jnp.float32), jnp.ones((2 * D,), jnp.float32)])
    w_in_t = raw['in_proj_weight'].T * col_scale[None, :]
    b_in = raw['in_proj_bias'] * col_scale
    return {
        'ln1_w':    raw['ln1_w'].reshape(1, D),
        'ln1_b':    raw['ln1_b'].reshape(1, D),
        'w_in_t':   w_in_t.astype(jnp.bfloat16),
        'b_in':     b_in.reshape(1, 3 * D).astype(jnp.float32),
        'w_out_t':  raw['out_proj_weight'].T.astype(jnp.bfloat16),
        'b_out':    raw['out_proj_bias'].reshape(1, D),
        'ln2_w':    raw['ln2_w'].reshape(1, D),
        'ln2_b':    raw['ln2_b'].reshape(1, D),
        'w_fc_t':   raw['c_fc_weight'].T.astype(jnp.bfloat16),
        'b_fc':     raw['c_fc_bias'].reshape(1, 4 * D),
        'w_proj_t': raw['c_proj_weight'].T.astype(jnp.bfloat16),
        'b_proj':   raw['c_proj_bias'].reshape(1, D),
    }


# ------------------------------ numpy reference ------------------------------

def reference(x_nld, raw, n_head):
    """fp32 numpy reference of the original PyTorch module (eval mode),
    operating on (N, L, D)."""
    p = {k: np.asarray(v, np.float32) for k, v in raw.items()}
    x = np.asarray(x_nld, np.float32)
    N, L, D = x.shape
    hd = D // n_head

    def ln(v, w, b):
        mu = v.mean(-1, keepdims=True)
        var = ((v - mu) ** 2).mean(-1, keepdims=True)
        return (v - mu) / np.sqrt(var + 1e-5) * w + b

    h = ln(x, p['ln1_w'], p['ln1_b'])
    qkv = h @ p['in_proj_weight'].T + p['in_proj_bias']
    q, k, v = qkv[..., :D], qkv[..., D:2 * D], qkv[..., 2 * D:]
    q = q.reshape(N, L, n_head, hd) / math.sqrt(hd)     # PyTorch scales q post-proj
    k = k.reshape(N, L, n_head, hd)
    v = v.reshape(N, L, n_head, hd)
    s = np.einsum('nqhd,nkhd->nhqk', q, k)
    s = s - s.max(-1, keepdims=True)
    pw = np.exp(s)
    pw = pw / pw.sum(-1, keepdims=True)
    a = np.einsum('nhqk,nkhd->nqhd', pw, v).reshape(N, L, D)
    a = a @ p['out_proj_weight'].T + p['out_proj_bias']
    x1 = x + a
    h2 = ln(x1, p['ln2_w'], p['ln2_b'])
    f = h2 @ p['c_fc_weight'].T + p['c_fc_bias']
    f = f * (1.0 / (1.0 + np.exp(-1.702 * f)))          # QuickGELU
    m = f @ p['c_proj_weight'].T + p['c_proj_bias']
    return x1 + m


# ---------------------------------- main -------------------------------------

if __name__ == "__main__":
    # batch, seq, d_model, n_head  (head_dim = 128 -> lane-aligned head slices).
    # N=16, L=16 -> Nb=8 per grid step (M = 128 matmul rows), grid length 2.
    N, L, D, H = 16, 16, 256, 2
    key = jax.random.PRNGKey(0)
    kx, kp = jax.random.split(key)

    x = jax.random.normal(kx, (N, L, D), jnp.float32)   # (N, L, D) layout
    raw = make_raw_params(kp, D)
    params = prepare_params(raw, H)

    out, mode = residual_attention_block_module((x, 'global'), params, H)
    out = jax.block_until_ready(out)

    ref = reference(x, raw, H)
    # bf16 matmul operands + approx reciprocal -> compare at bf16-level tolerance.
    np.testing.assert_allclose(np.asarray(out), ref, rtol=2e-2, atol=5e-2)
    assert mode == 'global'
    print("KERNEL_OK")
</pallas_src>

<mosaic_0001>
module attributes {stable_mosaic.version = 11 : i64} {
  func.func @residual_attention_kernel(%arg0: i32, %arg1: memref<8x16x256xf32, #tpu.memory_space<vmem>>, %arg2: memref<1x256xf32, #tpu.memory_space<vmem>>, %arg3: memref<1x256xf32, #tpu.memory_space<vmem>>, %arg4: memref<256x768xbf16, #tpu.memory_space<vmem>>, %arg5: memref<1x768xf32, #tpu.memory_space<vmem>>, %arg6: memref<256x256xbf16, #tpu.memory_space<vmem>>, %arg7: memref<1x256xf32, #tpu.memory_space<vmem>>, %arg8: memref<1x256xf32, #tpu.memory_space<vmem>>, %arg9: memref<1x256xf32, #tpu.memory_space<vmem>>, %arg10: memref<256x1024xbf16, #tpu.memory_space<vmem>>, %arg11: memref<1x1024xf32, #tpu.memory_space<vmem>>, %arg12: memref<1024x256xbf16, #tpu.memory_space<vmem>>, %arg13: memref<1x256xf32, #tpu.memory_space<vmem>>, %arg14: memref<8x16x256xf32, #tpu.memory_space<vmem>>, %arg15: memref<8x16x256xbf16, #tpu.memory_space<vmem>>) attributes {dimension_semantics = [#tpu.dimension_semantics<parallel>], iteration_bounds = array<i64: 2>, scalar_prefetch = 0 : i64, scratch_operands = 1 : i64, tpu.core_type = #tpu.core_type<tc>, window_params = [{transform_indices = @transform_0, window_bounds = array<i64: 8, 16, 256>}, {pipeline_mode = #tpu.pipeline_mode<synchronous>, transform_indices = @transform_1, window_bounds = array<i64: 1, 256>}, {pipeline_mode = #tpu.pipeline_mode<synchronous>, transform_indices = @transform_2, window_bounds = array<i64: 1, 256>}, {pipeline_mode = #tpu.pipeline_mode<synchronous>, transform_indices = @transform_3, window_bounds = array<i64: 256, 768>}, {pipeline_mode = #tpu.pipeline_mode<synchronous>, transform_indices = @transform_4, window_bounds = array<i64: 1, 768>}, {pipeline_mode = #tpu.pipeline_mode<synchronous>, transform_indices = @transform_5, window_bounds = array<i64: 256, 256>}, {pipeline_mode = #tpu.pipeline_mode<synchronous>, transform_indices = @transform_6, window_bounds = array<i64: 1, 256>}, {pipeline_mode = #tpu.pipeline_mode<synchronous>, transform_indices = @transform_7, window_bounds = array<i64: 1, 256>}, {pipeline_mode = #tpu.pipeline_mode<synchronous>, transform_indices = @transform_8, window_bounds = array<i64: 1, 256>}, {pipeline_mode = #tpu.pipeline_mode<synchronous>, transform_indices = @transform_9, window_bounds = array<i64: 256, 1024>}, {pipeline_mode = #tpu.pipeline_mode<synchronous>, transform_indices = @transform_10, window_bounds = array<i64: 1, 1024>}, {pipeline_mode = #tpu.pipeline_mode<synchronous>, transform_indices = @transform_11, window_bounds = array<i64: 1024, 256>}, {pipeline_mode = #tpu.pipeline_mode<synchronous>, transform_indices = @transform_12, window_bounds = array<i64: 1, 256>}, {transform_indices = @transform_13, window_bounds = array<i64: 8, 16, 256>}]} {
    %c0 = arith.constant 0 : index
    %c0_0 = arith.constant 0 : index
    %c0_1 = arith.constant 0 : index
    %0 = vector.load %arg1[%c0, %c0_0, %c0_1] : memref<8x16x256xf32, #tpu.memory_space<vmem>>, vector<8x16x256xf32>
    %1 = vector.shape_cast %0 : vector<8x16x256xf32> to vector<128x256xf32>
    %c0_2 = arith.constant 0 : index
    %c0_3 = arith.constant 0 : index
    %2 = vector.load %arg2[%c0_2, %c0_3] : memref<1x256xf32, #tpu.memory_space<vmem>>, vector<1x256xf32>
    %c0_4 = arith.constant 0 : index
    %c0_5 = arith.constant 0 : index
    %3 = vector.load %arg3[%c0_4, %c0_5] : memref<1x256xf32, #tpu.memory_space<vmem>>, vector<1x256xf32>
    %cst = arith.constant dense<0.000000e+00> : vector<128xf32>
    %4 = vector.multi_reduction <add>, %1, %cst [1] : vector<128x256xf32> to vector<128xf32>
    %5 = vector.shape_cast %4 : vector<128xf32> to vector<128x1xf32>
    %cst_6 = arith.constant 2.560000e+02 : f32
    %6 = vector.broadcast %cst_6 : f32 to vector<128x1xf32>
    %7 = arith.divf %5, %6 : vector<128x1xf32>
    %8 = vector.broadcast %7 : vector<128x1xf32> to vector<128x256xf32>
    %9 = arith.subf %1, %8 : vector<128x256xf32>
    %10 = arith.mulf %9, %9 : vector<128x256xf32>
    %cst_7 = arith.constant dense<0.000000e+00> : vector<128xf32>
    %11 = vector.multi_reduction <add>, %10, %cst_7 [1] : vector<128x256xf32> to vector<128xf32>
    %12 = vector.shape_cast %11 : vector<128xf32> to vector<128x1xf32>
    %cst_8 = arith.constant 2.560000e+02 : f32
    %13 = vector.broadcast %cst_8 : f32 to vector<128x1xf32>
    %14 = arith.divf %12, %13 : vector<128x1xf32>
    %15 = vector.broadcast %7 : vector<128x1xf32> to vector<128x256xf32>
    %16 = arith.subf %1, %15 : vector<128x256xf32>
    %cst_9 = arith.constant 9.99999974E-6 : f32
    %17 = vector.broadcast %cst_9 : f32 to vector<128x1xf32>
    %18 = arith.addf %14, %17 : vector<128x1xf32>
    %19 = math.rsqrt %18 : vector<128x1xf32>
    %20 = vector.broadcast %19 : vector<128x1xf32> to vector<128x256xf32>
    %21 = arith.mulf %16, %20 : vector<128x256xf32>
    %22 = vector.broadcast %2 : vector<1x256xf32> to vector<128x256xf32>
    %23 = arith.mulf %21, %22 : vector<128x256xf32>
    %24 = vector.broadcast %3 : vector<1x256xf32> to vector<128x256xf32>
    %25 = arith.addf %23, %24 : vector<128x256xf32>
    %26 = arith.truncf %25 : vector<128x256xf32> to vector<128x256xbf16>
    %c0_10 = arith.constant 0 : index
    %c0_11 = arith.constant 0 : index
    %27 = vector.load %arg4[%c0_10, %c0_11] : memref<256x768xbf16, #tpu.memory_space<vmem>>, vector<256x768xbf16>
    %cst_12 = arith.constant dense<0.000000e+00> : vector<128x768xf32>
    %28 = tpu.matmul %26, %27, %cst_12 {dimension_numbers = #tpu.dot_dimension_numbers<[1], [0], [0], [1], [0, 0, 1, 1], [], []>} : vector<128x256xbf16>, vector<256x768xbf16>, vector<128x768xf32> -> vector<128x768xf32>
    %c0_13 = arith.constant 0 : index
    %c0_14 = arith.constant 0 : index
    %29 = vector.load %arg5[%c0_13, %c0_14] : memref<1x768xf32, #tpu.memory_space<vmem>>, vector<1x768xf32>
    %30 = vector.broadcast %29 : vector<1x768xf32> to vector<128x768xf32>
    %31 = arith.addf %28, %30 : vector<128x768xf32>
    %32 = arith.truncf %31 : vector<128x768xf32> to vector<128x768xbf16>
    %33 = vector.extract_strided_slice %32 {offsets = [0, 0], sizes = [128, 256], strides = [1, 1]} : vector<128x768xbf16> to vector<128x256xbf16>
    %34 = vector.shape_cast %33 : vector<128x256xbf16> to vector<8x16x256xbf16>
    %35 = vector.extract_strided_slice %32 {offsets = [0, 256], sizes = [128, 256], strides = [1, 1]} : vector<128x768xbf16> to vector<128x256xbf16>
    %36 = vector.shape_cast %35 : vector<128x256xbf16> to vector<8x16x256xbf16>
    %37 = vector.extract_strided_slice %32 {offsets = [0, 512], sizes = [128, 256], strides = [1, 1]} : vector<128x768xbf16> to vector<128x256xbf16>
    %38 = vector.shape_cast %37 : vector<128x256xbf16> to vector<8x16x256xbf16>
    %39 = vector.extract_strided_slice %34 {offsets = [0, 0, 0], sizes = [8, 16, 128], strides = [1, 1, 1]} : vector<8x16x256xbf16> to vector<8x16x128xbf16>
    %40 = vector.extract_strided_slice %36 {offsets = [0, 0, 0], sizes = [8, 16, 128], strides = [1, 1, 1]} : vector<8x16x256xbf16> to vector<8x16x128xbf16>
    "tpu.trace_start"() <{level = 10 : i32, message = "bqd,bkd->bqk"}> : () -> ()
    %cst_15 = arith.constant dense<0.000000e+00> : vector<8x16x16xf32>
    %41 = tpu.matmul %39, %40, %cst_15 {dimension_numbers = #tpu.dot_dimension_numbers<[2], [2], [1], [1], [0, 0, 0, 1, 1, 1], [0], [0]>} : vector<8x16x128xbf16>, vector<8x16x128xbf16>, vector<8x16x16xf32> -> vector<8x16x16xf32>
    "tpu.trace_stop"() : () -> ()
    %cst_16 = arith.constant dense<0xFF800000> : vector<8x16xf32>
    %42 = vector.multi_reduction <maximumf>, %41, %cst_16 [2] : vector<8x16x16xf32> to vector<8x16xf32>
    %43 = vector.shape_cast %42 : vector<8x16xf32> to vector<8x16x1xf32>
    %44 = vector.broadcast %43 : vector<8x16x1xf32> to vector<8x16x16xf32>
    %45 = arith.subf %41, %44 : vector<8x16x16xf32>
    %46 = math.exp %45 : vector<8x16x16xf32>
    %cst_17 = arith.constant dense<0.000000e+00> : vector<8x16xf32>
    %47 = vector.multi_reduction <add>, %46, %cst_17 [2] : vector<8x16x16xf32> to vector<8x16xf32>
    %48 = vector.shape_cast %47 : vector<8x16xf32> to vector<8x16x1xf32>
    %49 = tpu.reciprocal %48 {approx = true} : vector<8x16x1xf32> -> vector<8x16x1xf32>
    %50 = vector.broadcast %49 : vector<8x16x1xf32> to vector<8x16x16xf32>
    %51 = arith.mulf %46, %50 : vector<8x16x16xf32>
    %52 = arith.truncf %51 : vector<8x16x16xf32> to vector<8x16x16xbf16>
    %53 = vector.extract_strided_slice %38 {offsets = [0, 0, 0], sizes = [8, 16, 128], strides = [1, 1, 1]} : vector<8x16x256xbf16> to vector<8x16x128xbf16>
    "tpu.trace_start"() <{level = 10 : i32, message = "bqk,bkd->bqd"}> : () -> ()
    %cst_18 = arith.constant dense<0.000000e+00> : vector<8x16x128xf32>
    %54 = tpu.matmul %52, %53, %cst_18 {dimension_numbers = #tpu.dot_dimension_numbers<[2], [1], [1], [2], [0, 0, 0, 1, 1, 2], [0], [0]>} : vector<8x16x16xbf16>, vector<8x16x128xbf16>, vector<8x16x128xf32> -> vector<8x16x128xf32>
    "tpu.trace_stop"() : () -> ()
    %55 = arith.truncf %54 : vector<8x16x128xf32> to vector<8x16x128xbf16>
    %c0_19 = arith.constant 0 : index
    %c0_20 = arith.constant 0 : index
    %c0_21 = arith.constant 0 : index
    %56 = vector.load %arg15[%c0_19, %c0_20, %c0_21] : memref<8x16x256xbf16, #tpu.memory_space<vmem>>, vector<8x16x128xbf16>
    tpu.vector_store %arg15[%c0_19, %c0_20, %c0_21], %55 {strides = array<i32>} : memref<8x16x256xbf16, #tpu.memory_space<vmem>>, vector<8x16x128xbf16>,
    %57 = vector.extract_strided_slice %34 {offsets = [0, 0, 128], sizes = [8, 16, 128], strides = [1, 1, 1]} : vector<8x16x256xbf16> to vector<8x16x128xbf16>
    %58 = vector.extract_strided_slice %36 {offsets = [0, 0, 128], sizes = [8, 16, 128], strides = [1, 1, 1]} : vector<8x16x256xbf16> to vector<8x16x128xbf16>
    "tpu.trace_start"() <{level = 10 : i32, message = "bqd,bkd->bqk"}> : () -> ()
    %cst_22 = arith.constant dense<0.000000e+00> : vector<8x16x16xf32>
    %59 = tpu.matmul %57, %58, %cst_22 {dimension_numbers = #tpu.dot_dimension_numbers<[2], [2], [1], [1], [0, 0, 0, 1, 1, 1], [0], [0]>} : vector<8x16x128xbf16>, vector<8x16x128xbf16>, vector<8x16x16xf32> -> vector<8x16x16xf32>
    "tpu.trace_stop"() : () -> ()
    %cst_23 = arith.constant dense<0xFF800000> : vector<8x16xf32>
    %60 = vector.multi_reduction <maximumf>, %59, %cst_23 [2] : vector<8x16x16xf32> to vector<8x16xf32>
    %61 = vector.shape_cast %60 : vector<8x16xf32> to vector<8x16x1xf32>
    %62 = vector.broadcast %61 : vector<8x16x1xf32> to vector<8x16x16xf32>
    %63 = arith.subf %59, %62 : vector<8x16x16xf32>
    %64 = math.exp %63 : vector<8x16x16xf32>
    %cst_24 = arith.constant dense<0.000000e+00> : vector<8x16xf32>
    %65 = vector.multi_reduction <add>, %64, %cst_24 [2] : vector<8x16x16xf32> to vector<8x16xf32>
    %66 = vector.shape_cast %65 : vector<8x16xf32> to vector<8x16x1xf32>
    %67 = tpu.reciprocal %66 {approx = true} : vector<8x16x1xf32> -> vector<8x16x1xf32>
    %68 = vector.broadcast %67 : vector<8x16x1xf32> to vector<8x16x16xf32>
    %69 = arith.mulf %64, %68 : vector<8x16x16xf32>
    %70 = arith.truncf %69 : vector<8x16x16xf32> to vector<8x16x16xbf16>
    %71 = vector.extract_strided_slice %38 {offsets = [0, 0, 128], sizes = [8, 16, 128], strides = [1, 1, 1]} : vector<8x16x256xbf16> to vector<8x16x128xbf16>
    "tpu.trace_start"() <{level = 10 : i32, message = "bqk,bkd->bqd"}> : () -> ()
    %cst_25 = arith.constant dense<0.000000e+00> : vector<8x16x128xf32>
    %72 = tpu.matmul %70, %71, %cst_25 {dimension_numbers = #tpu.dot_dimension_numbers<[2], [1], [1], [2], [0, 0, 0, 1, 1, 2], [0], [0]>} : vector<8x16x16xbf16>, vector<8x16x128xbf16>, vector<8x16x128xf32> -> vector<8x16x128xf32>
    "tpu.trace_stop"() : () -> ()
    %73 = arith.truncf %72 : vector<8x16x128xf32> to vector<8x16x128xbf16>
    %c0_26 = arith.constant 0 : index
    %c0_27 = arith.constant 0 : index
    %c128 = arith.constant 128 : index
    %74 = vector.load %arg15[%c0_26, %c0_27, %c128] : memref<8x16x256xbf16, #tpu.memory_space<vmem>>, vector<8x16x128xbf16>
    tpu.vector_store %arg15[%c0_26, %c0_27, %c128], %73 {strides = array<i32>} : memref<8x16x256xbf16, #tpu.memory_space<vmem>>, vector<8x16x128xbf16>,
    %c0_28 = arith.constant 0 : index
    %c0_29 = arith.constant 0 : index
    %c0_30 = arith.constant 0 : index
    %75 = vector.load %arg15[%c0_28, %c0_29, %c0_30] : memref<8x16x256xbf16, #tpu.memory_space<vmem>>, vector<8x16x256xbf16>
    %76 = vector.shape_cast %75 : vector<8x16x256xbf16> to vector<128x256xbf16>
    %c0_31 = arith.constant 0 : index
    %c0_32 = arith.constant 0 : index
    %77 = vector.load %arg6[%c0_31, %c0_32] : memref<256x256xbf16, #tpu.memory_space<vmem>>, vector<256x256xbf16>
    %cst_33 = arith.constant dense<0.000000e+00> : vector<128x256xf32>
    %78 = tpu.matmul %76, %77, %cst_33 {dimension_numbers = #tpu.dot_dimension_numbers<[1], [0], [0], [1], [0, 0, 1, 1], [], []>} : vector<128x256xbf16>, vector<256x256xbf16>, vector<128x256xf32> -> vector<128x256xf32>
    %c0_34 = arith.constant 0 : index
    %c0_35 = arith.constant 0 : index
    %79 = vector.load %arg7[%c0_34, %c0_35] : memref<1x256xf32, #tpu.memory_space<vmem>>, vector<1x256xf32>
    %80 = vector.broadcast %79 : vector<1x256xf32> to vector<128x256xf32>
    %81 = arith.addf %78, %80 : vector<128x256xf32>
    %82 = arith.addf %1, %81 : vector<128x256xf32>
    %c0_36 = arith.constant 0 : index
    %c0_37 = arith.constant 0 : index
    %83 = vector.load %arg8[%c0_36, %c0_37] : memref<1x256xf32, #tpu.memory_space<vmem>>, vector<1x256xf32>
    %c0_38 = arith.constant 0 : index
    %c0_39 = arith.constant 0 : index
    %84 = vector.load %arg9[%c0_38, %c0_39] : memref<1x256xf32, #tpu.memory_space<vmem>>, vector<1x256xf32>
    %cst_40 = arith.constant dense<0.000000e+00> : vector<128xf32>
    %85 = vector.multi_reduction <add>, %82, %cst_40 [1] : vector<128x256xf32> to vector<128xf32>
    %86 = vector.shape_cast %85 : vector<128xf32> to vector<128x1xf32>
    %cst_41 = arith.constant 2.560000e+02 : f32
    %87 = vector.broadcast %cst_41 : f32 to vector<128x1xf32>
    %88 = arith.divf %86, %87 : vector<128x1xf32>
    %89 = vector.broadcast %88 : vector<128x1xf32> to vector<128x256xf32>
    %90 = arith.subf %82, %89 : vector<128x256xf32>
    %91 = arith.mulf %90, %90 : vector<128x256xf32>
    %cst_42 = arith.constant dense<0.000000e+00> : vector<128xf32>
    %92 = vector.multi_reduction <add>, %91, %cst_42 [1] : vector<128x256xf32> to vector<128xf32>
    %93 = vector.shape_cast %92 : vector<128xf32> to vector<128x1xf32>
    %cst_43 = arith.constant 2.560000e+02 : f32
    %94 = vector.broadcast %cst_43 : f32 to vector<128x1xf32>
    %95 = arith.divf %93, %94 : vector<128x1xf32>
    %96 = vector.broadcast %88 : vector<128x1xf32> to vector<128x256xf32>
    %97 = arith.subf %82, %96 : vector<128x256xf32>
    %cst_44 = arith.constant 9.99999974E-6 : f32
    %98 = vector.broadcast %cst_44 : f32 to vector<128x1xf32>
    %99 = arith.addf %95, %98 : vector<128x1xf32>
    %100 = math.rsqrt %99 : vector<128x1xf32>
    %101 = vector.broadcast %100 : vector<128x1xf32> to vector<128x256xf32>
    %102 = arith.mulf %97, %101 : vector<128x256xf32>
    %103 = vector.broadcast %83 : vector<1x256xf32> to vector<128x256xf32>
    %104 = arith.mulf %102, %103 : vector<128x256xf32>
    %105 = vector.broadcast %84 : vector<1x256xf32> to vector<128x256xf32>
    %106 = arith.addf %104, %105 : vector<128x256xf32>
    %107 = arith.truncf %106 : vector<128x256xf32> to vector<128x256xbf16>
    %c0_45 = arith.constant 0 : index
    %c0_46 = arith.constant 0 : index
    %108 = vector.load %arg10[%c0_45, %c0_46] : memref<256x1024xbf16, #tpu.memory_space<vmem>>, vector<256x1024xbf16>
    %cst_47 = arith.constant dense<0.000000e+00> : vector<128x1024xf32>
    %109 = tpu.matmul %107, %108, %cst_47 {dimension_numbers = #tpu.dot_dimension_numbers<[1], [0], [0], [1], [0, 0, 1, 1], [], []>} : vector<128x256xbf16>, vector<256x1024xbf16>, vector<128x1024xf32> -> vector<128x1024xf32>
    %c0_48 = arith.constant 0 : index
    %c0_49 = arith.constant 0 : index
    %110 = vector.load %arg11[%c0_48, %c0_49] : memref<1x1024xf32, #tpu.memory_space<vmem>>, vector<1x1024xf32>
    %111 = vector.broadcast %110 : vector<1x1024xf32> to vector<128x1024xf32>
    %112 = arith.addf %109, %111 : vector<128x1024xf32>
    %cst_50 = arith.constant 1.702000e+00 : f32
    %113 = vector.broadcast %cst_50 : f32 to vector<128x1024xf32>
    %114 = arith.mulf %113, %112 : vector<128x1024xf32>
    %115 = arith.negf %114 : vector<128x1024xf32>
    %116 = math.exp %115 : vector<128x1024xf32>
    %cst_51 = arith.constant 1.000000e+00 : f32
    %117 = vector.broadcast %cst_51 : f32 to vector<128x1024xf32>
    %118 = arith.addf %117, %116 : vector<128x1024xf32>
    %119 = arith.divf %117, %118 : vector<128x1024xf32>
    %120 = arith.mulf %112, %119 : vector<128x1024xf32>
    %121 = arith.truncf %120 : vector<128x1024xf32> to vector<128x1024xbf16>
    %c0_52 = arith.constant 0 : index
    %c0_53 = arith.constant 0 : index
    %122 = vector.load %arg12[%c0_52, %c0_53] : memref<1024x256xbf16, #tpu.memory_space<vmem>>, vector<1024x256xbf16>
    %cst_54 = arith.constant dense<0.000000e+00> : vector<128x256xf32>
    %123 = tpu.matmul %121, %122, %cst_54 {dimension_numbers = #tpu.dot_dimension_numbers<[1], [0], [0], [1], [0, 0, 1, 1], [], []>} : vector<128x1024xbf16>, vector<1024x256xbf16>, vector<128x256xf32> -> vector<128x256xf32>
    %c0_55 = arith.constant 0 : index
    %c0_56 = arith.constant 0 : index
    %124 = vector.load %arg13[%c0_55, %c0_56] : memref<1x256xf32, #tpu.memory_space<vmem>>, vector<1x256xf32>
    %125 = vector.broadcast %124 : vector<1x256xf32> to vector<128x256xf32>
    %126 = arith.addf %123, %125 : vector<128x256xf32>
    %127 = arith.addf %82, %126 : vector<128x256xf32>
    %128 = vector.shape_cast %127 : vector<128x256xf32> to vector<8x16x256xf32>
    %c0_57 = arith.constant 0 : index
    %c0_58 = arith.constant 0 : index
    %c0_59 = arith.constant 0 : index
    %129 = vector.load %arg14[%c0_57, %c0_58, %c0_59] : memref<8x16x256xf32, #tpu.memory_space<vmem>>, vector<8x16x256xf32>
    tpu.vector_store %arg14[%c0_57, %c0_58, %c0_59], %128 {strides = array<i32>} : memref<8x16x256xf32, #tpu.memory_space<vmem>>, vector<8x16x256xf32>,
    return
  }
  func.func @transform_0(%arg0: i32) -> (i32, i32, i32) {
    %c0_i32 = arith.constant 0 : i32
    %c0_i32_0 = arith.constant 0 : i32
    %c0_i32_1 = arith.constant 0 : i32
    return %arg0, %c0_i32, %c0_i32_0 : i32, i32, i32
  }
  func.func @transform_1(%arg0: i32) -> (i32, i32) {
    %c0_i32 = arith.constant 0 : i32
    %c0_i32_0 = arith.constant 0 : i32
    %c0_i32_1 = arith.constant 0 : i32
    return %c0_i32, %c0_i32_0 : i32, i32
  }
  func.func @transform_2(%arg0: i32) -> (i32, i32) {
    %c0_i32 = arith.constant 0 : i32
    %c0_i32_0 = arith.constant 0 : i32
    %c0_i32_1 = arith.constant 0 : i32
    return %c0_i32, %c0_i32_0 : i32, i32
  }
  func.func @transform_3(%arg0: i32) -> (i32, i32) {
    %c0_i32 = arith.constant 0 : i32
    %c0_i32_0 = arith.constant 0 : i32
    %c0_i32_1 = arith.constant 0 : i32
    return %c0_i32, %c0_i32_0 : i32, i32
  }
  func.func @transform_4(%arg0: i32) -> (i32, i32) {
    %c0_i32 = arith.constant 0 : i32
    %c0_i32_0 = arith.constant 0 : i32
    %c0_i32_1 = arith.constant 0 : i32
    return %c0_i32, %c0_i32_0 : i32, i32
  }
  func.func @transform_5(%arg0: i32) -> (i32, i32) {
    %c0_i32 = arith.constant 0 : i32
    %c0_i32_0 = arith.constant 0 : i32
    %c0_i32_1 = arith.constant 0 : i32
    return %c0_i32, %c0_i32_0 : i32, i32
  }
  func.func @transform_6(%arg0: i32) -> (i32, i32) {
    %c0_i32 = arith.constant 0 : i32
    %c0_i32_0 = arith.constant 0 : i32
    %c0_i32_1 = arith.constant 0 : i32
    return %c0_i32, %c0_i32_0 : i32, i32
  }
  func.func @transform_7(%arg0: i32) -> (i32, i32) {
    %c0_i32 = arith.constant 0 : i32
    %c0_i32_0 = arith.constant 0 : i32
    %c0_i32_1 = arith.constant 0 : i32
    return %c0_i32, %c0_i32_0 : i32, i32
  }
  func.func @transform_8(%arg0: i32) -> (i32, i32) {
    %c0_i32 = arith.constant 0 : i32
    %c0_i32_0 = arith.constant 0 : i32
    %c0_i32_1 = arith.constant 0 : i32
    return %c0_i32, %c0_i32_0 : i32, i32
  }
  func.func @transform_9(%arg0: i32) -> (i32, i32) {
    %c0_i32 = arith.constant 0 : i32
    %c0_i32_0 = arith.constant 0 : i32
    %c0_i32_1 = arith.constant 0 : i32
    return %c0_i32, %c0_i32_0 : i32, i32
  }
  func.func @transform_10(%arg0: i32) -> (i32, i32) {
    %c0_i32 = arith.constant 0 : i32
    %c0_i32_0 = arith.constant 0 : i32
    %c0_i32_1 = arith.constant 0 : i32
    return %c0_i32, %c0_i32_0 : i32, i32
  }
  func.func @transform_11(%arg0: i32) -> (i32, i32) {
    %c0_i32 = arith.constant 0 : i32
    %c0_i32_0 = arith.constant 0 : i32
    %c0_i32_1 = arith.constant 0 : i32
    return %c0_i32, %c0_i32_0 : i32, i32
  }
  func.func @transform_12(%arg0: i32) -> (i32, i32) {
    %c0_i32 = arith.constant 0 : i32
    %c0_i32_0 = arith.constant 0 : i32
    %c0_i32_1 = arith.constant 0 : i32
    return %c0_i32, %c0_i32_0 : i32, i32
  }
  func.func @transform_13(%arg0: i32) -> (i32, i32, i32) {
    %c0_i32 = arith.constant 0 : i32
    %c0_i32_0 = arith.constant 0 : i32
    %c0_i32_1 = arith.constant 0 : i32
    return %arg0, %c0_i32, %c0_i32_0 : i32, i32, i32
  }
}

</mosaic_0001>

<llo_original>
// kernel: tpu_custom_call.1
$region0: #{tpu_custom_call.1}
  #allocation0 [shape = 'u32[]', space=smem, size = 0x4, offset = 0x4, fixed_abs, tag = 'smem constant byte address 0x4 - core index']
  #allocation1 [shape = 'u32[144,128]{1,0:T(1,128)}', space=vmem, size = 0x12000, scoped, tag = 'internal scratch']
  #allocation2 [shape = 'bf16[8,16,256]{2,1,0:T(16,128)(2,1)}', space=vmem, size = 0x10000, scoped, tag = 'scratch operand']
  %s0 = inlined_call_operand.hbm [shape: f32[16,16,256], index: 0, kind: input, shape index: {}]
  %s1 = inlined_call_operand.hbm [shape: f32[1,256], index: 1, kind: input, shape index: {}]
  %s2 = inlined_call_operand.hbm [shape: f32[1,256], index: 2, kind: input, shape index: {}]
  %s3 = inlined_call_operand.hbm [shape: bf16[256,768], index: 3, kind: input, shape index: {}]
  %s4 = inlined_call_operand.vmem [shape: f32[1,768], index: 4, kind: input, shape index: {}]
  %s5 = inlined_call_operand.hbm [shape: bf16[256,256], index: 5, kind: input, shape index: {}]
  %s6 = inlined_call_operand.vmem [shape: f32[1,256], index: 6, kind: input, shape index: {}]
  %s7 = inlined_call_operand.vmem [shape: f32[1,256], index: 7, kind: input, shape index: {}]
  %s8 = inlined_call_operand.vmem [shape: f32[1,256], index: 8, kind: input, shape index: {}]
  %s9 = inlined_call_operand.hbm [shape: bf16[256,1024], index: 9, kind: input, shape index: {}]
  %s10 = inlined_call_operand.vmem [shape: f32[1,1024], index: 10, kind: input, shape index: {}]
  %s11 = inlined_call_operand.hbm [shape: bf16[1024,256], index: 11, kind: input, shape index: {}]
  %s12 = inlined_call_operand.vmem [shape: f32[1,256], index: 12, kind: input, shape index: {}]
  %s13 = inlined_call_operand.hbm [shape: f32[16,16,256], index: 13, kind: output, shape index: {}]
  %s14 = sld [smem:[#allocation0]]
  $region113: #{tpu_custom_call.1} parent=0
    _
  %s16 = ssub.s32 1, %s14
  %s17 = scalar_select 0, %s16, %s14
  $region1: #{tpu_custom_call.1} parent=0
    #allocation3 [shape = 'u8[262144]{0}', space=vmem, size = 0x40000, scoped, tag = 'input window, operand 0']
    #allocation4 [shape = 's32[2]{0}', space=sflag, size = 0x8, scoped, tag = 'scoped memory for tpu_custom_call.1']
    #allocation5 [shape = 's32[2]{0}', space=sflag, size = 0x8, scoped, tag = 'scoped memory for tpu_custom_call.1']
    #allocation6 [shape = 'u8[1024]{0}', space=vmem, size = 0x400, scoped, tag = 'input window, operand 1, single buffered']
    #allocation7 [shape = 's32[1]{0}', space=sflag, size = 0x4, scoped, tag = 'scoped memory for tpu_custom_call.1']
    #allocation8 [shape = 'u8[1024]{0}', space=vmem, size = 0x400, scoped, tag = 'input window, operand 2, single buffered']
    #allocation9 [shape = 'u8[393216]{0}', space=vmem, size = 0x60000, scoped, tag = 'input window, operand 3, single buffered']
    #allocation10 [shape = 's32[1]{0}', space=sflag, size = 0x4, scoped, tag = 'scoped memory for tpu_custom_call.1']
    #allocation11 [shape = 'u8[131072]{0}', space=vmem, size = 0x20000, scoped, tag = 'input window, operand 5, single buffered']
    #allocation12 [shape = 'u8[524288]{0}', space=vmem, size = 0x80000, scoped, tag = 'input window, operand 9, single buffered']
    #allocation13 [shape = 's32[1]{0}', space=sflag, size = 0x4, scoped, tag = 'scoped memory for tpu_custom_call.1']
    #allocation14 [shape = 'u8[524288]{0}', space=vmem, size = 0x80000, scoped, tag = 'input window, operand 11, single buffered']
    #allocation15 [shape = 'u8[262144]{0}', space=vmem, size = 0x40000, scoped, tag = 'output window, operand 0']
    %18 = vsyncpa [#allocation4], 0
    %s19 = scalar_lea.sflag [#allocation4], 1
    %20 = vsyncpa %s19, 0
    %21 = vsyncpa [#allocation7], 0
    %22 = vsyncpa [#allocation10], 0
    %23 = vsyncpa [#allocation13], 0
    %24 = vsyncpa [#allocation5], 0
    %s25 = scalar_lea.sflag [#allocation5], 1
    %26 = vsyncpa %s25, 0
    loop: start=0, step=1, limit=4
    $region2: #{tpu_custom_call.1} parent=1 // loop_pre_header
      _
    $region3: #{tpu_custom_call.1} parent=1 // loop_header
      %s28 = sphi 0, %s32
      %p29 = scmp.ge.s32.totalorder %s28, 4
      %s38 = sphi 0, %s40
      %s41 = sphi 0, %s38
      %s42 = sphi 0, %s41
      %s58 = sphi 0, %s42
      %s62 = sphi 0, %s62
      %s64 = sphi 0, %s62
      %s65 = sphi 0, %s64
      %s79 = sphi 0, %s65
      %s83 = sphi 0, %s83
      %s85 = sphi 0, %s83
      %s86 = sphi 0, %s85
      %s100 = sphi 0, %s86
      %s104 = sphi 0, %s104
      %s106 = sphi 0, %s104
      %s107 = sphi 0, %s106
      %s121 = sphi 0, %s107
      %s125 = sphi 0, %s125
      %s127 = sphi 0, %s125
      %s128 = sphi 0, %s127
      %s142 = sphi 0, %s128
      %s146 = sphi 0, %s146
      %s148 = sphi 0, %s146
      %s149 = sphi 0, %s148
      %s163 = sphi 0, %s149
      %s167 = sphi 0, %s167
      %s169 = sphi 0, %s167
      %s170 = sphi 0, %s169
      %s184 = sphi 0, %s170
      %s188 = sphi 0, %s188
      %s190 = sphi 0, %s188
      %s191 = sphi 0, %s190
      %s205 = sphi 0, %s191
      %s209 = sphi 0, %s209
      %s211 = sphi 0, %s209
      %s212 = sphi 0, %s211
      %s226 = sphi 0, %s212
      %s230 = sphi 0, %s230
      %s232 = sphi 0, %s230
      %s233 = sphi 0, %s232
      %s247 = sphi 0, %s233
      %s251 = sphi 0, %s251
      %s253 = sphi 0, %s251
      %s254 = sphi 0, %s253
      %s268 = sphi 0, %s254
      %s272 = sphi 0, %s272
      %s274 = sphi 0, %s272
      %s275 = sphi 0, %s274
      %s289 = sphi 0, %s275
      %s293 = sphi 0, %s293
      %s295 = sphi 0, %s293
      %s296 = sphi 0, %s295
      %s310 = sphi 0, %s296
      %s316 = sphi 0, %s318
      %s319 = sphi 0, %s316
      %s320 = sphi 0, %s319
      %s336 = sphi 0, %s320
    $region4: #{tpu_custom_call.1} parent=1 // loop_header_branch
      %31 = sbr.rel (%p29) target = $region8
    $region5: #{tpu_custom_call.1} parent=1 // loop_body
      %s33 = ssub.s32 %s28, 1
      %s34 = ssub.s32 %s28, 2
      %s35 = sadd.s32 %s28, 1
      %s36 = ssub.s32 %s28, %s35
      %p37 = scmp.eq.s32.totalorder %s36, 0
      %s39 = sadd.s32 %s38, 1
      %s40 = scalar_select %p37, %s38, %s39
      %p43 = pneg %p37
      %p44 = scmp.eq.s32.totalorder %s28, 1
      %p45 = por %p43, %p44
      %p46 = scmp.ne.s32.totalorder %s38, %s41
      %p47 = scmp.eq.s32.totalorder %s28, 0
      %p48 = por %p46, %p47
      %p49 = scmp.ne.s32.totalorder %s38, %s41
      %p50 = scmp.eq.s32.totalorder %s33, 1
      %p51 = por %p49, %p50
      %p52 = scmp.ne.s32.totalorder %s41, %s42
      %p53 = scmp.eq.s32.totalorder %s33, 0
      %p54 = por %p52, %p53
      %p55 = scmp.ne.s32.totalorder %s41, %s42
      %p56 = scmp.eq.s32.totalorder %s34, 1
      %p57 = por %p55, %p56
      %p59 = scmp.ne.s32.totalorder %s42, %s58
      %p60 = scmp.eq.s32.totalorder %s34, 0
      %p61 = por %p59, %p60
      %s63 = sadd.s32 %s62, 1
      %p66 = scmp.eq.s32.totalorder %s28, 1
      %p67 = scmp.ne.s32.totalorder %s62, %s64
      %p68 = scmp.eq.s32.totalorder %s28, 0
      %p69 = por %p67, %p68
      %p70 = scmp.ne.s32.totalorder %s62, %s64
      %p71 = scmp.eq.s32.totalorder %s33, 1
      %p72 = por %p70, %p71
      %p73 = scmp.ne.s32.totalorder %s64, %s65
      %p74 = scmp.eq.s32.totalorder %s33, 0
      %p75 = por %p73, %p74
      %p76 = scmp.ne.s32.totalorder %s64, %s65
      %p77 = scmp.eq.s32.totalorder %s34, 1
      %p78 = por %p76, %p77
      %p80 = scmp.ne.s32.totalorder %s65, %s79
      %p81 = scmp.eq.s32.totalorder %s34, 0
      %p82 = por %p80, %p81
      %s84 = sadd.s32 %s83, 1
      %p87 = scmp.eq.s32.totalorder %s28, 1
      %p88 = scmp.ne.s32.totalorder %s83, %s85
      %p89 = scmp.eq.s32.totalorder %s28, 0
      %p90 = por %p88, %p89
      %p91 = scmp.ne.s32.totalorder %s83, %s85
      %p92 = scmp.eq.s32.totalorder %s33, 1
      %p93 = por %p91, %p92
      %p94 = scmp.ne.s32.totalorder %s85, %s86
      %p95 = scmp.eq.s32.totalorder %s33, 0
      %p96 = por %p94, %p95
      %p97 = scmp.ne.s32.totalorder %s85, %s86
      %p98 = scmp.eq.s32.totalorder %s34, 1
      %p99 = por %p97, %p98
      %p101 = scmp.ne.s32.totalorder %s86, %s100
      %p102 = scmp.eq.s32.totalorder %s34, 0
      %p103 = por %p101, %p102
      %s105 = sadd.s32 %s104, 1
      %p108 = scmp.eq.s32.totalorder %s28, 1
      %p109 = scmp.ne.s32.totalorder %s104, %s106
      %p110 = scmp.eq.s32.totalorder %s28, 0
      %p111 = por %p109, %p110
      %p112 = scmp.ne.s32.totalorder %s104, %s106
      %p113 = scmp.eq.s32.totalorder %s33, 1
      %p114 = por %p112, %p113
      %p115 = scmp.ne.s32.totalorder %s106, %s107
      %p116 = scmp.eq.s32.totalorder %s33, 0
      %p117 = por %p115, %p116
      %p118 = scmp.ne.s32.totalorder %s106, %s107
      %p119 = scmp.eq.s32.totalorder %s34, 1
      %p120 = por %p118, %p119
      %p122 = scmp.ne.s32.totalorder %s107, %s121
      %p123 = scmp.eq.s32.totalorder %s34, 0
      %p124 = por %p122, %p123
      %s126 = sadd.s32 %s125, 1
      %p129 = scmp.eq.s32.totalorder %s28, 1
      %p130 = scmp.ne.s32.totalorder %s125, %s127
      %p131 = scmp.eq.s32.totalorder %s28, 0
      %p132 = por %p130, %p131
      %p133 = scmp.ne.s32.totalorder %s125, %s127
      %p134 = scmp.eq.s32.totalorder %s33, 1
      %p135 = por %p133, %p134
      %p136 = scmp.ne.s32.totalorder %s127, %s128
      %p137 = scmp.eq.s32.totalorder %s33, 0
      %p138 = por %p136, %p137
      %p139 = scmp.ne.s32.totalorder %s127, %s128
      %p140 = scmp.eq.s32.totalorder %s34, 1
      %p141 = por %p139, %p140
      %p143 = scmp.ne.s32.totalorder %s128, %s142
      %p144 = scmp.eq.s32.totalorder %s34, 0
      %p145 = por %p143, %p144
      %s147 = sadd.s32 %s146, 1
      %p150 = scmp.eq.s32.totalorder %s28, 1
      %p151 = scmp.ne.s32.totalorder %s146, %s148
      %p152 = scmp.eq.s32.totalorder %s28, 0
      %p153 = por %p151, %p152
      %p154 = scmp.ne.s32.totalorder %s146, %s148
      %p155 = scmp.eq.s32.totalorder %s33, 1
      %p156 = por %p154, %p155
      %p157 = scmp.ne.s32.totalorder %s148, %s149
      %p158 = scmp.eq.s32.totalorder %s33, 0
      %p159 = por %p157, %p158
      %p160 = scmp.ne.s32.totalorder %s148, %s149
      %p161 = scmp.eq.s32.totalorder %s34, 1
      %p162 = por %p160, %p161
      %p164 = scmp.ne.s32.totalorder %s149, %s163
      %p165 = scmp.eq.s32.totalorder %s34, 0
      %p166 = por %p164, %p165
      %s168 = sadd.s32 %s167, 1
      %p171 = scmp.eq.s32.totalorder %s28, 1
      %p172 = scmp.ne.s32.totalorder %s167, %s169
      %p173 = scmp.eq.s32.totalorder %s28, 0
      %p174 = por %p172, %p173
      %p175 = scmp.ne.s32.totalorder %s167, %s169
      %p176 = scmp.eq.s32.totalorder %s33, 1
      %p177 = por %p175, %p176
      %p178 = scmp.ne.s32.totalorder %s169, %s170
      %p179 = scmp.eq.s32.totalorder %s33, 0
      %p180 = por %p178, %p179
      %p181 = scmp.ne.s32.totalorder %s169, %s170
      %p182 = scmp.eq.s32.totalorder %s34, 1
      %p183 = por %p181, %p182
      %p185 = scmp.ne.s32.totalorder %s170, %s184
      %p186 = scmp.eq.s32.totalorder %s34, 0
      %p187 = por %p185, %p186
      %s189 = sadd.s32 %s188, 1
      %p192 = scmp.eq.s32.totalorder %s28, 1
      %p193 = scmp.ne.s32.totalorder %s188, %s190
      %p194 = scmp.eq.s32.totalorder %s28, 0
      %p195 = por %p193, %p194
      %p196 = scmp.ne.s32.totalorder %s188, %s190
      %p197 = scmp.eq.s32.totalorder %s33, 1
      %p198 = por %p196, %p197
      %p199 = scmp.ne.s32.totalorder %s190, %s191
      %p200 = scmp.eq.s32.totalorder %s33, 0
      %p201 = por %p199, %p200
      %p202 = scmp.ne.s32.totalorder %s190, %s191
      %p203 = scmp.eq.s32.totalorder %s34, 1
      %p204 = por %p202, %p203
      %p206 = scmp.ne.s32.totalorder %s191, %s205
      %p207 = scmp.eq.s32.totalorder %s34, 0
      %p208 = por %p206, %p207
      %s210 = sadd.s32 %s209, 1
      %p213 = scmp.eq.s32.totalorder %s28, 1
      %p214 = scmp.ne.s32.totalorder %s209, %s211
      %p215 = scmp.eq.s32.totalorder %s28, 0
      %p216 = por %p214, %p215
      %p217 = scmp.ne.s32.totalorder %s209, %s211
      %p218 = scmp.eq.s32.totalorder %s33, 1
      %p219 = por %p217, %p218
      %p220 = scmp.ne.s32.totalorder %s211, %s212
      %p221 = scmp.eq.s32.totalorder %s33, 0
      %p222 = por %p220, %p221
      %p223 = scmp.ne.s32.totalorder %s211, %s212
      %p224 = scmp.eq.s32.totalorder %s34, 1
      %p225 = por %p223, %p224
      %p227 = scmp.ne.s32.totalorder %s212, %s226
      %p228 = scmp.eq.s32.totalorder %s34, 0
      %p229 = por %p227, %p228
      %s231 = sadd.s32 %s230, 1
      %p234 = scmp.eq.s32.totalorder %s28, 1
      %p235 = scmp.ne.s32.totalorder %s230, %s232
      %p236 = scmp.eq.s32.totalorder %s28, 0
      %p237 = por %p235, %p236
      %p238 = scmp.ne.s32.totalorder %s230, %s232
      %p239 = scmp.eq.s32.totalorder %s33, 1
      %p240 = por %p238, %p239
      %p241 = scmp.ne.s32.totalorder %s232, %s233
      %p242 = scmp.eq.s32.totalorder %s33, 0
      %p243 = por %p241, %p242
      %p244 = scmp.ne.s32.totalorder %s232, %s233
      %p245 = scmp.eq.s32.totalorder %s34, 1
      %p246 = por %p244, %p245
      %p248 = scmp.ne.s32.totalorder %s233, %s247
      %p249 = scmp.eq.s32.totalorder %s34, 0
      %p250 = por %p248, %p249
      %s252 = sadd.s32 %s251, 1
      %p255 = scmp.eq.s32.totalorder %s28, 1
      %p256 = scmp.ne.s32.totalorder %s251, %s253
      %p257 = scmp.eq.s32.totalorder %s28, 0
      %p258 = por %p256, %p257
      %p259 = scmp.ne.s32.totalorder %s251, %s253
      %p260 = scmp.eq.s32.totalorder %s33, 1
      %p261 = por %p259, %p260
      %p262 = scmp.ne.s32.totalorder %s253, %s254
      %p263 = scmp.eq.s32.totalorder %s33, 0
      %p264 = por %p262, %p263
      %p265 = scmp.ne.s32.totalorder %s253, %s254
      %p266 = scmp.eq.s32.totalorder %s34, 1
      %p267 = por %p265, %p266
      %p269 = scmp.ne.s32.totalorder %s254, %s268
      %p270 = scmp.eq.s32.totalorder %s34, 0
      %p271 = por %p269, %p270
      %s273 = sadd.s32 %s272, 1
      %p276 = scmp.eq.s32.totalorder %s28, 1
      %p277 = scmp.ne.s32.totalorder %s272, %s274
      %p278 = scmp.eq.s32.totalorder %s28, 0
      %p279 = por %p277, %p278
      %p280 = scmp.ne.s32.totalorder %s272, %s274
      %p281 = scmp.eq.s32.totalorder %s33, 1
      %p282 = por %p280, %p281
      %p283 = scmp.ne.s32.totalorder %s274, %s275
      %p284 = scmp.eq.s32.totalorder %s33, 0
      %p285 = por %p283, %p284
      %p286 = scmp.ne.s32.totalorder %s274, %s275
      %p287 = scmp.eq.s32.totalorder %s34, 1
      %p288 = por %p286, %p287
      %p290 = scmp.ne.s32.totalorder %s275, %s289
      %p291 = scmp.eq.s32.totalorder %s34, 0
      %p292 = por %p290, %p291
      %s294 = sadd.s32 %s293, 1
      %p297 = scmp.eq.s32.totalorder %s28, 1
      %p298 = scmp.ne.s32.totalorder %s293, %s295
      %p299 = scmp.eq.s32.totalorder %s28, 0
      %p300 = por %p298, %p299
      %p301 = scmp.ne.s32.totalorder %s293, %s295
      %p302 = scmp.eq.s32.totalorder %s33, 1
      %p303 = por %p301, %p302
      %p304 = scmp.ne.s32.totalorder %s295, %s296
      %p305 = scmp.eq.s32.totalorder %s33, 0
      %p306 = por %p304, %p305
      %p307 = scmp.ne.s32.totalorder %s295, %s296
      %p308 = scmp.eq.s32.totalorder %s34, 1
      %p309 = por %p307, %p308
      %p311 = scmp.ne.s32.totalorder %s296, %s310
      %p312 = scmp.eq.s32.totalorder %s34, 0
      %p313 = por %p311, %p312
      %s314 = ssub.s32 %s28, %s35
      %p315 = scmp.eq.s32.totalorder %s314, 0
      %s317 = sadd.s32 %s316, 1
      %s318 = scalar_select %p315, %s316, %s317
      %p321 = pneg %p315
      %p322 = scmp.eq.s32.totalorder %s28, 1
      %p323 = por %p321, %p322
      %p324 = scmp.ne.s32.totalorder %s316, %s319
      %p325 = scmp.eq.s32.totalorder %s28, 0
      %p326 = por %p324, %p325
      %p327 = scmp.ne.s32.totalorder %s316, %s319
      %p328 = scmp.eq.s32.totalorder %s33, 1
      %p329 = por %p327, %p328
      %p330 = scmp.ne.s32.totalorder %s319, %s320
      %p331 = scmp.eq.s32.totalorder %s33, 0
      %p332 = por %p330, %p331
      %p333 = scmp.ne.s32.totalorder %s319, %s320
      %p334 = scmp.eq.s32.totalorder %s34, 1
      %p335 = por %p333, %p334
      %p337 = scmp.ne.s32.totalorder %s320, %s336
      %p338 = scmp.eq.s32.totalorder %s34, 0
      %p339 = por %p337, %p338
      %p340 = scmp.le.s32.totalorder 1, %s28
      %p341 = scmp.lt.s32.totalorder %s28, 3
      %p342 = pnand %p340, %p341
      %p343 = pneg %p342
      // Predicated region
      $region9: #{tpu_custom_call.1} parent=5 // pred_check
        _
      $region10: #{tpu_custom_call.1} parent=5 // pred_check_branch
        %345 = sbr.rel (%p342) target = $region12
      $region11: #{tpu_custom_call.1} parent=5 // pred_region
        %s346 = ssub.s32 %s28, 1
        // Predicated region
        $region13: #{tpu_custom_call.1} parent=11 // pred_check
          %p347 = pneg %p75
        $region14: #{tpu_custom_call.1} parent=11 // pred_check_branch
          %349 = sbr.rel (%p347) target = $region16
        $region15: #{tpu_custom_call.1} parent=11 // pred_region
          %s351 = ssub.s32 32, 32
          %352 = vsyncadd [#allocation7], %s351
          %s354 = sshll.u32 [#allocation6], 4
          %s355 = int_to_ptr.vmem [resolvable:$true] %s354
          %357 = dma.hbm_to_vmem [thread:$0]  %s1, 32, %s355, [#allocation7]
        $region16: #{tpu_custom_call.1} parent=11 // pred_fallthru
          _
        // Predicated region
        $region17: #{tpu_custom_call.1} parent=11 // pred_check
          %p358 = pneg %p96
        $region18: #{tpu_custom_call.1} parent=11 // pred_check_branch
          %360 = sbr.rel (%p358) target = $region20
        $region19: #{tpu_custom_call.1} parent=11 // pred_region
          %s362 = ssub.s32 32, 32
          %363 = vsyncadd [#allocation7], %s362
          %s365 = sshll.u32 [#allocation8], 4
          %s366 = int_to_ptr.vmem [resolvable:$true] %s365
          %368 = dma.hbm_to_vmem [thread:$0]  %s2, 32, %s366, [#allocation7]
        $region20: #{tpu_custom_call.1} parent=11 // pred_fallthru
          _
        // Predicated region
        $region21: #{tpu_custom_call.1} parent=11 // pred_check
          %p369 = pneg %p117
        $region22: #{tpu_custom_call.1} parent=11 // pred_check_branch
          %371 = sbr.rel (%p369) target = $region24
        $region23: #{tpu_custom_call.1} parent=11 // pred_region
          %s373 = ssub.s32 12288, 12288
          %374 = vsyncadd [#allocation10], %s373
          %s375 = sshll.u32 [#allocation9], 4
          %s376 = int_to_ptr.vmem [resolvable:$true] %s375
          %381 = dma.hbm_to_vmem [thread:$0]  %s3, 12288, %s376, [#allocation10], 384, 384, 24
        $region24: #{tpu_custom_call.1} parent=11 // pred_fallthru
          _
        // Predicated region
        $region25: #{tpu_custom_call.1} parent=11 // pred_check
          %p382 = pneg %p138
        $region26: #{tpu_custom_call.1} parent=11 // pred_check_branch
          %384 = sbr.rel (%p382) target = $region28
        $region27: #{tpu_custom_call.1} parent=11 // pred_region
          _
        $region28: #{tpu_custom_call.1} parent=11 // pred_fallthru
          _
        // Predicated region
        $region29: #{tpu_custom_call.1} parent=11 // pred_check
          %p385 = pneg %p159
        $region30: #{tpu_custom_call.1} parent=11 // pred_check_branch
          %387 = sbr.rel (%p385) target = $region32
        $region31: #{tpu_custom_call.1} parent=11 // pred_region
          %s389 = ssub.s32 4096, 4096
          %390 = vsyncadd [#allocation10], %s389
          %s391 = sshll.u32 [#allocation11], 4
          %s392 = int_to_ptr.vmem [resolvable:$true] %s391
          %397 = dma.hbm_to_vmem [thread:$0]  %s5, 4096, %s392, [#allocation10], 128, 128, 8
        $region32: #{tpu_custom_call.1} parent=11 // pred_fallthru
          _
        // Predicated region
        $region33: #{tpu_custom_call.1} parent=11 // pred_check
          %p398 = pneg %p180
        $region34: #{tpu_custom_call.1} parent=11 // pred_check_branch
          %400 = sbr.rel (%p398) target = $region36
        $region35: #{tpu_custom_call.1} parent=11 // pred_region
          _
        $region36: #{tpu_custom_call.1} parent=11 // pred_fallthru
          _
        // Predicated region
        $region37: #{tpu_custom_call.1} parent=11 // pred_check
          %p401 = pneg %p201
        $region38: #{tpu_custom_call.1} parent=11 // pred_check_branch
          %403 = sbr.rel (%p401) target = $region40
        $region39: #{tpu_custom_call.1} parent=11 // pred_region
          _
        $region40: #{tpu_custom_call.1} parent=11 // pred_fallthru
          _
        // Predicated region
        $region41: #{tpu_custom_call.1} parent=11 // pred_check
          %p404 = pneg %p222
        $region42: #{tpu_custom_call.1} parent=11 // pred_check_branch
          %406 = sbr.rel (%p404) target = $region44
        $region43: #{tpu_custom_call.1} parent=11 // pred_region
          _
        $region44: #{tpu_custom_call.1} parent=11 // pred_fallthru
          _
        // Predicated region
        $region45: #{tpu_custom_call.1} parent=11 // pred_check
          %p407 = pneg %p243
        $region46: #{tpu_custom_call.1} parent=11 // pred_check_branch
          %409 = sbr.rel (%p407) target = $region48
        $region47: #{tpu_custom_call.1} parent=11 // pred_region
          %s411 = ssub.s32 16384, 16384
          %412 = vsyncadd [#allocation13], %s411
          %s413 = sshll.u32 [#allocation12], 4
          %s414 = int_to_ptr.vmem [resolvable:$true] %s413
          %419 = dma.hbm_to_vmem [thread:$0]  %s9, 16384, %s414, [#allocation13], 512, 512, 32
        $region48: #{tpu_custom_call.1} parent=11 // pred_fallthru
          _
        // Predicated region
        $region49: #{tpu_custom_call.1} parent=11 // pred_check
          %p420 = pneg %p264
        $region50: #{tpu_custom_call.1} parent=11 // pred_check_branch
          %422 = sbr.rel (%p420) target = $region52
        $region51: #{tpu_custom_call.1} parent=11 // pred_region
          _
        $region52: #{tpu_custom_call.1} parent=11 // pred_fallthru
          _
        // Predicated region
        $region53: #{tpu_custom_call.1} parent=11 // pred_check
          %p423 = pneg %p285
        $region54: #{tpu_custom_call.1} parent=11 // pred_check_branch
          %425 = sbr.rel (%p423) target = $region56
        $region55: #{tpu_custom_call.1} parent=11 // pred_region
          %s427 = ssub.s32 16384, 16384
          %428 = vsyncadd [#allocation13], %s427
          %s429 = sshll.u32 [#allocation14], 4
          %s430 = int_to_ptr.vmem [resolvable:$true] %s429
          %435 = dma.hbm_to_vmem [thread:$0]  %s11, 16384, %s430, [#allocation13], 128, 128, 8
        $region56: #{tpu_custom_call.1} parent=11 // pred_fallthru
          _
        // Predicated region
        $region57: #{tpu_custom_call.1} parent=11 // pred_check
          %p436 = pneg %p306
        $region58: #{tpu_custom_call.1} parent=11 // pred_check_branch
          %438 = sbr.rel (%p436) target = $region60
        $region59: #{tpu_custom_call.1} parent=11 // pred_region
          _
        $region60: #{tpu_custom_call.1} parent=11 // pred_fallthru
          _
      $region12: #{tpu_custom_call.1} parent=5 // pred_fallthru
        _
      %p439 = scmp.lt.s32.totalorder %s28, 2
      // Predicated region
      $region61: #{tpu_custom_call.1} parent=5 // pred_check
        %p440 = pneg %p439
      $region62: #{tpu_custom_call.1} parent=5 // pred_check_branch
        %442 = sbr.rel (%p440) target = $region64
      $region63: #{tpu_custom_call.1} parent=5 // pred_region
        // Predicated region
        $region65: #{tpu_custom_call.1} parent=63 // pred_check
          %p443 = pneg %p48
        $region66: #{tpu_custom_call.1} parent=63 // pred_check_branch
          %445 = sbr.rel (%p443) target = $region68
        $region67: #{tpu_custom_call.1} parent=63 // pred_region
          %s446 = sand.u32 %s38, 1
          %s447 = scalar_lea.sflag [#allocation4], %s446
          %s448 = sand.u32 %s38, 1
          %s449 = smul.addr %s448, 256
          %s450 = scalar_lea.vmem [#allocation3], %s449
          %s451 = smul.u32 8, %s28
          %s453 = ssub.s32 4096, 4096
          %454 = vsyncadd %s447, %s453
          %s455 = smul.addr %s451, 4
          %s456 = smul.addr %s455, 128
          %s457 = scalar_lea.hbm %s0, %s456
          %s458 = sshll.u32 %s450, 4
          %s459 = int_to_ptr.vmem [resolvable:$true] %s458
          %464 = dma.hbm_to_vmem [thread:$0]  %s457, 4096, %s459, %s447, 256, 256, 16
        $region68: #{tpu_custom_call.1} parent=63 // pred_fallthru
          _
      $region64: #{tpu_custom_call.1} parent=5 // pred_fallthru
        _
      %p465 = scmp.le.s32.totalorder 1, %s28
      %p466 = scmp.lt.s32.totalorder %s28, 3
      %p467 = pnand %p465, %p466
      %p468 = pneg %p467
      // Predicated region
      $region69: #{tpu_custom_call.1} parent=5 // pred_check
        _
      $region70: #{tpu_custom_call.1} parent=5 // pred_check_branch
        %470 = sbr.rel (%p467) target = $region72
      $region71: #{tpu_custom_call.1} parent=5 // pred_region
        %s471 = ssub.s32 %s28, 1
        %s472 = sand.u32 %s41, 1
        %s473 = scalar_lea.sflag [#allocation4], %s472
        %s474 = sand.u32 %s41, 1
        %s475 = smul.addr %s474, 256
        %s476 = scalar_lea.vmem [#allocation3], %s475
        // Predicated region
        $region73: #{tpu_custom_call.1} parent=71 // pred_check
          %p477 = pneg %p54
        $region74: #{tpu_custom_call.1} parent=71 // pred_check_branch
          %479 = sbr.rel (%p477) target = $region76
        $region75: #{tpu_custom_call.1} parent=71 // pred_region
          %480 = dma.done %s473, 4096
        $region76: #{tpu_custom_call.1} parent=71 // pred_fallthru
          _
        // Predicated region
        $region77: #{tpu_custom_call.1} parent=71 // pred_check
          %p481 = pneg %p75
        $region78: #{tpu_custom_call.1} parent=71 // pred_check_branch
          %483 = sbr.rel (%p481) target = $region80
        $region79: #{tpu_custom_call.1} parent=71 // pred_region
          %484 = dma.done [#allocation7], 32
        $region80: #{tpu_custom_call.1} parent=71 // pred_fallthru
          _
        // Predicated region
        $region81: #{tpu_custom_call.1} parent=71 // pred_check
          %p485 = pneg %p96
        $region82: #{tpu_custom_call.1} parent=71 // pred_check_branch
          %487 = sbr.rel (%p485) target = $region84
        $region83: #{tpu_custom_call.1} parent=71 // pred_region
          %488 = dma.done [#allocation7], 32
        $region84: #{tpu_custom_call.1} parent=71 // pred_fallthru
          _
        // Predicated region
        $region85: #{tpu_custom_call.1} parent=71 // pred_check
          %p489 = pneg %p117
        $region86: #{tpu_custom_call.1} parent=71 // pred_check_branch
          %491 = sbr.rel (%p489) target = $region88
        $region87: #{tpu_custom_call.1} parent=71 // pred_region
          %492 = dma.done [#allocation10], 12288
        $region88: #{tpu_custom_call.1} parent=71 // pred_fallthru
          _
        // Predicated region
        $region89: #{tpu_custom_call.1} parent=71 // pred_check
          %p493 = pneg %p159
        $region90: #{tpu_custom_call.1} parent=71 // pred_check_branch
          %495 = sbr.rel (%p493) target = $region92
        $region91: #{tpu_custom_call.1} parent=71 // pred_region
          %496 = dma.done [#allocation10], 4096
        $region92: #{tpu_custom_call.1} parent=71 // pred_fallthru
          _
        // Predicated region
        $region93: #{tpu_custom_call.1} parent=71 // pred_check
          %p497 = pneg %p243
        $region94: #{tpu_custom_call.1} parent=71 // pred_check_branch
          %499 = sbr.rel (%p497) target = $region96
        $region95: #{tpu_custom_call.1} parent=71 // pred_region
          %500 = dma.done [#allocation13], 16384
        $region96: #{tpu_custom_call.1} parent=71 // pred_fallthru
          _
        // Predicated region
        $region97: #{tpu_custom_call.1} parent=71 // pred_check
          %p501 = pneg %p285
        $region98: #{tpu_custom_call.1} parent=71 // pred_check_branch
          %503 = sbr.rel (%p501) target = $region100
        $region99: #{tpu_custom_call.1} parent=71 // pred_region
          %504 = dma.done [#allocation13], 16384
        $region100: #{tpu_custom_call.1} parent=71 // pred_fallthru
          _
        %s505 = sand.u32 %s41, 1
        %s506 = scalar_lea.sflag [#allocation4], %s505
        %s507 = sand.u32 %s41, 1
        %s508 = smul.addr %s507, 256
        %s509 = scalar_lea.vmem [#allocation3], %s508
        %p510 = pneg %p54
        %p511 = pneg %p51
        %p512 = pneg %p75
        %p513 = pneg %p72
        %p514 = pneg %p96
        %p515 = pneg %p93
        %p516 = pneg %p117
        %p517 = pneg %p114
        %p518 = pneg %p138
        %p519 = pneg %p135
        %p520 = pneg %p159
        %p521 = pneg %p156
        %p522 = pneg %p180
        %p523 = pneg %p177
        %p524 = pneg %p201
        %p525 = pneg %p198
        %p526 = pneg %p222
        %p527 = pneg %p219
        %p528 = pneg %p243
        %p529 = pneg %p240
        %p530 = pneg %p264
        %p531 = pneg %p261
        %p532 = pneg %p285
        %p533 = pneg %p282
        %p534 = pneg %p306
        %p535 = pneg %p303
        %p536 = pneg %p332
        %p537 = pneg %p329
        %s538 = sand.u32 %s319, 1
        %s539 = scalar_lea.sflag [#allocation5], %s538
        %s540 = sand.u32 %s319, 1
        %s541 = smul.addr %s540, 256
        %s542 = scalar_lea.vmem [#allocation15], %s541
        %s543 = smul.u32 8, %s33
        %s544 = smul.u32 8, %s33
        %v546 = vld [vmem:[%s476] sm:$0xff]
        %v547 = vld [vmem:[%s476 + $0x8] sm:$0xff]
        %v548 = vld [vmem:[%s476 + $0x10] sm:$0xff]
        %v549 = vld [vmem:[%s476 + $0x18] sm:$0xff]
        %v550 = vld [vmem:[%s476 + $0x20] sm:$0xff]
        %v551 = vld [vmem:[%s476 + $0x28] sm:$0xff]
        %v552 = vld [vmem:[%s476 + $0x30] sm:$0xff]
        %v553 = vld [vmem:[%s476 + $0x38] sm:$0xff]
        %v554 = vld [vmem:[%s476 + $0x40] sm:$0xff]
        %v555 = vld [vmem:[%s476 + $0x48] sm:$0xff]
        %v556 = vld [vmem:[%s476 + $0x50] sm:$0xff]
        %v557 = vld [vmem:[%s476 + $0x58] sm:$0xff]
        %v558 = vld [vmem:[%s476 + $0x60] sm:$0xff]
        %v559 = vld [vmem:[%s476 + $0x68] sm:$0xff]
        %v560 = vld [vmem:[%s476 + $0x70] sm:$0xff]
        %v561 = vld [vmem:[%s476 + $0x78] sm:$0xff]
        %v562 = vld [vmem:[%s476 + $0x80] sm:$0xff]
        %v563 = vld [vmem:[%s476 + $0x88] sm:$0xff]
        %v564 = vld [vmem:[%s476 + $0x90] sm:$0xff]
        %v565 = vld [vmem:[%s476 + $0x98] sm:$0xff]
        %v566 = vld [vmem:[%s476 + $0xa0] sm:$0xff]
        %v567 = vld [vmem:[%s476 + $0xa8] sm:$0xff]
        %v568 = vld [vmem:[%s476 + $0xb0] sm:$0xff]
        %v569 = vld [vmem:[%s476 + $0xb8] sm:$0xff]
        %v570 = vld [vmem:[%s476 + $0xc0] sm:$0xff]
        %v571 = vld [vmem:[%s476 + $0xc8] sm:$0xff]
        %v572 = vld [vmem:[%s476 + $0xd0] sm:$0xff]
        %v573 = vld [vmem:[%s476 + $0xd8] sm:$0xff]
        %v574 = vld [vmem:[%s476 + $0xe0] sm:$0xff]
        %v575 = vld [vmem:[%s476 + $0xe8] sm:$0xff]
        %v576 = vld [vmem:[%s476 + $0xf0] sm:$0xff]
        %v577 = vld [vmem:[%s476 + $0xf8] sm:$0xff]
        %v578 = vld [vmem:[#allocation6] sm:$0x3]
        %v579 = vld [vmem:[#allocation8] sm:$0x3]
        %v580 = vadd.f32 %v546, %v547
        %581 = vadd.xlane.f32.xlu0 %v580
        %v582 = vpop.xlane.xlu0 %581
        %v583 = vadd.f32 %v548, %v549
        %584 = vadd.xlane.f32.xlu0 %v583
        %v585 = vpop.xlane.xlu0 %584
        %v586 = vadd.f32 %v550, %v551
        %587 = vadd.xlane.f32.xlu0 %v586
        %v588 = vpop.xlane.xlu0 %587
        %v589 = vadd.f32 %v552, %v553
        %590 = vadd.xlane.f32.xlu0 %v589
        %v591 = vpop.xlane.xlu0 %590
        %v592 = vadd.f32 %v554, %v555
        %593 = vadd.xlane.f32.xlu0 %v592
        %v594 = vpop.xlane.xlu0 %593
        %v595 = vadd.f32 %v556, %v557
        %596 = vadd.xlane.f32.xlu0 %v595
        %v597 = vpop.xlane.xlu0 %596
        %v598 = vadd.f32 %v558, %v559
        %599 = vadd.xlane.f32.xlu0 %v598
        %v600 = vpop.xlane.xlu0 %599
        %v601 = vadd.f32 %v560, %v561
        %602 = vadd.xlane.f32.xlu0 %v601
        %v603 = vpop.xlane.xlu0 %602
        %v604 = vadd.f32 %v562, %v563
        %605 = vadd.xlane.f32.xlu0 %v604
        %v606 = vpop.xlane.xlu0 %605
        %v607 = vadd.f32 %v564, %v565
        %608 = vadd.xlane.f32.xlu0 %v607
        %v609 = vpop.xlane.xlu0 %608
        %v610 = vadd.f32 %v566, %v567
        %611 = vadd.xlane.f32.xlu0 %v610
        %v612 = vpop.xlane.xlu0 %611
        %v613 = vadd.f32 %v568, %v569
        %614 = vadd.xlane.f32.xlu0 %v613
        %v615 = vpop.xlane.xlu0 %614
        %v616 = vadd.f32 %v570, %v571
        %617 = vadd.xlane.f32.xlu0 %v616
        %v618 = vpop.xlane.xlu0 %617
        %v619 = vadd.f32 %v572, %v573
        %620 = vadd.xlane.f32.xlu0 %v619
        %v621 = vpop.xlane.xlu0 %620
        %v622 = vadd.f32 %v574, %v575
        %623 = vadd.xlane.f32.xlu0 %v622
        %v624 = vpop.xlane.xlu0 %623
        %v625 = vadd.f32 %v576, %v577
        %626 = vadd.xlane.f32.xlu0 %v625
        %v627 = vpop.xlane.xlu0 %626
        %v628 = vrcp.pop 256.0
        %v629 = vmul.f32 %v582, %v628
        %v630 = vmul.f32 %v585, %v628
        %v631 = vmul.f32 %v588, %v628
        %v632 = vmul.f32 %v591, %v628
        %v633 = vmul.f32 %v594, %v628
        %v634 = vmul.f32 %v597, %v628
        %v635 = vmul.f32 %v600, %v628
        %v636 = vmul.f32 %v603, %v628
        %v637 = vmul.f32 %v606, %v628
        %v638 = vmul.f32 %v609, %v628
        %v639 = vmul.f32 %v612, %v628
        %v640 = vmul.f32 %v615, %v628
        %v641 = vmul.f32 %v618, %v628
        %v642 = vmul.f32 %v621, %v628
        %v643 = vmul.f32 %v624, %v628
        %v644 = vmul.f32 %v627, %v628
        %v645 = vsub.f32 %v546, %v629
        %v646 = vsub.f32 %v547, %v629
        %v647 = vsub.f32 %v548, %v630
        %v648 = vsub.f32 %v549, %v630
        %v649 = vsub.f32 %v550, %v631
        %v650 = vsub.f32 %v551, %v631
        %v651 = vsub.f32 %v552, %v632
        %v652 = vsub.f32 %v553, %v632
        %v653 = vsub.f32 %v554, %v633
        %v654 = vsub.f32 %v555, %v633
        %v655 = vsub.f32 %v556, %v634
        %v656 = vsub.f32 %v557, %v634
        %v657 = vsub.f32 %v558, %v635
        %v658 = vsub.f32 %v559, %v635
        %v659 = vsub.f32 %v560, %v636
        %v660 = vsub.f32 %v561, %v636
        %v661 = vsub.f32 %v562, %v637
        %v662 = vsub.f32 %v563, %v637
        %v663 = vsub.f32 %v564, %v638
        %v664 = vsub.f32 %v565, %v638
        %v665 = vsub.f32 %v566, %v639
        %v666 = vsub.f32 %v567, %v639
        %v667 = vsub.f32 %v568, %v640
        %v668 = vsub.f32 %v569, %v640
        %v669 = vsub.f32 %v570, %v641
        %v670 = vsub.f32 %v571, %v641
        %v671 = vsub.f32 %v572, %v642
        %v672 = vsub.f32 %v573, %v642
        %v673 = vsub.f32 %v574, %v643
        %v674 = vsub.f32 %v575, %v643
        %v675 = vsub.f32 %v576, %v644
        %v676 = vsub.f32 %v577, %v644
        %v677 = vmul.f32 %v645, %v645
        %v678 = vmul.f32 %v646, %v646
        %v679 = vmul.f32 %v647, %v647
        %v680 = vmul.f32 %v648, %v648
        %v681 = vmul.f32 %v649, %v649
        %v682 = vmul.f32 %v650, %v650
        %v683 = vmul.f32 %v651, %v651
        %v684 = vmul.f32 %v652, %v652
        %v685 = vmul.f32 %v653, %v653
        %v686 = vmul.f32 %v654, %v654
        %v687 = vmul.f32 %v655, %v655
        %v688 = vmul.f32 %v656, %v656
        %v689 = vmul.f32 %v657, %v657
        %v690 = vmul.f32 %v658, %v658
        %v691 = vmul.f32 %v659, %v659
        %v692 = vmul.f32 %v660, %v660
        %v693 = vmul.f32 %v661, %v661
        %v694 = vmul.f32 %v662, %v662
        %v695 = vmul.f32 %v663, %v663
        %v696 = vmul.f32 %v664, %v664
        %v697 = vmul.f32 %v665, %v665
        %v698 = vmul.f32 %v666, %v666
        %v699 = vmul.f32 %v667, %v667
        %v700 = vmul.f32 %v668, %v668
        %v701 = vmul.f32 %v669, %v669
        %v702 = vmul.f32 %v670, %v670
        %v703 = vmul.f32 %v671, %v671
        %v704 = vmul.f32 %v672, %v672
        %v705 = vmul.f32 %v673, %v673
        %v706 = vmul.f32 %v674, %v674
        %v707 = vmul.f32 %v675, %v675
        %v708 = vmul.f32 %v676, %v676
        %v709 = vadd.f32 %v677, %v678
        %710 = vadd.xlane.f32.xlu0 %v709
        %v711 = vpop.xlane.xlu0 %710
        %v712 = vadd.f32 %v679, %v680
        %713 = vadd.xlane.f32.xlu0 %v712
        %v714 = vpop.xlane.xlu0 %713
        %v715 = vadd.f32 %v681, %v682
        %716 = vadd.xlane.f32.xlu0 %v715
        %v717 = vpop.xlane.xlu0 %716
        %v718 = vadd.f32 %v683, %v684
        %719 = vadd.xlane.f32.xlu0 %v718
        %v720 = vpop.xlane.xlu0 %719
        %v721 = vadd.f32 %v685, %v686
        %722 = vadd.xlane.f32.xlu0 %v721
        %v723 = vpop.xlane.xlu0 %722
        %v724 = vadd.f32 %v687, %v688
        %725 = vadd.xlane.f32.xlu0 %v724
        %v726 = vpop.xlane.xlu0 %725
        %v727 = vadd.f32 %v689, %v690
        %728 = vadd.xlane.f32.xlu0 %v727
        %v729 = vpop.xlane.xlu0 %728
        %v730 = vadd.f32 %v691, %v692
        %731 = vadd.xlane.f32.xlu0 %v730
        %v732 = vpop.xlane.xlu0 %731
        %v733 = vadd.f32 %v693, %v694
        %734 = vadd.xlane.f32.xlu0 %v733
        %v735 = vpop.xlane.xlu0 %734
        %v736 = vadd.f32 %v695, %v696
        %737 = vadd.xlane.f32.xlu0 %v736
        %v738 = vpop.xlane.xlu0 %737
        %v739 = vadd.f32 %v697, %v698
        %740 = vadd.xlane.f32.xlu0 %v739
        %v741 = vpop.xlane.xlu0 %740
        %v742 = vadd.f32 %v699, %v700
        %743 = vadd.xlane.f32.xlu0 %v742
        %v744 = vpop.xlane.xlu0 %743
        %v745 = vadd.f32 %v701, %v702
        %746 = vadd.xlane.f32.xlu0 %v745
        %v747 = vpop.xlane.xlu0 %746
        %v748 = vadd.f32 %v703, %v704
        %749 = vadd.xlane.f32.xlu0 %v748
        %v750 = vpop.xlane.xlu0 %749
        %v751 = vadd.f32 %v705, %v706
        %752 = vadd.xlane.f32.xlu0 %v751
        %v753 = vpop.xlane.xlu0 %752
        %v754 = vadd.f32 %v707, %v708
        %755 = vadd.xlane.f32.xlu0 %v754
        %v756 = vpop.xlane.xlu0 %755
        %v757 = vmul.f32 %v711, %v628
        %v758 = vmul.f32 %v714, %v628
        %v759 = vmul.f32 %v717, %v628
        %v760 = vmul.f32 %v720, %v628
        %v761 = vmul.f32 %v723, %v628
        %v762 = vmul.f32 %v726, %v628
        %v763 = vmul.f32 %v729, %v628
        %v764 = vmul.f32 %v732, %v628
        %v765 = vmul.f32 %v735, %v628
        %v766 = vmul.f32 %v738, %v628
        %v767 = vmul.f32 %v741, %v628
        %v768 = vmul.f32 %v744, %v628
        %v769 = vmul.f32 %v747, %v628
        %v770 = vmul.f32 %v750, %v628
        %v771 = vmul.f32 %v753, %v628
        %v772 = vmul.f32 %v756, %v628
        %v773 = vadd.f32 %v757, 1e-05
        %v774 = vadd.f32 %v758, 1e-05
        %v775 = vadd.f32 %v759, 1e-05
        %v776 = vadd.f32 %v760, 1e-05
        %v777 = vadd.f32 %v761, 1e-05
        %v778 = vadd.f32 %v762, 1e-05
        %v779 = vadd.f32 %v763, 1e-05
        %v780 = vadd.f32 %v764, 1e-05
        %v781 = vadd.f32 %v765, 1e-05
        %v782 = vadd.f32 %v766, 1e-05
        %v783 = vadd.f32 %v767, 1e-05
        %v784 = vadd.f32 %v768, 1e-05
        %v785 = vadd.f32 %v769, 1e-05
        %v786 = vadd.f32 %v770, 1e-05
        %v787 = vadd.f32 %v771, 1e-05
        %v788 = vadd.f32 %v772, 1e-05
        %v789 = vrsqrt.pop %v773
        %v790 = vrsqrt.pop %v774
        %v791 = vrsqrt.pop %v775
        %v792 = vrsqrt.pop %v776
        %v793 = vrsqrt.pop %v777
        %v794 = vrsqrt.pop %v778
        %v795 = vrsqrt.pop %v779
        %v796 = vrsqrt.pop %v780
        %v797 = vrsqrt.pop %v781
        %v798 = vrsqrt.pop %v782
        %v799 = vrsqrt.pop %v783
        %v800 = vrsqrt.pop %v784
        %v801 = vrsqrt.pop %v785
        %v802 = vrsqrt.pop %v786
        %v803 = vrsqrt.pop %v787
        %v804 = vrsqrt.pop %v788
        %v805 = vmul.f32 %v645, %v789
        %v806 = vmul.f32 %v646, %v789
        %v807 = vmul.f32 %v647, %v790
        %v808 = vmul.f32 %v648, %v790
        %v809 = vmul.f32 %v649, %v791
        %v810 = vmul.f32 %v650, %v791
        %v811 = vmul.f32 %v651, %v792
        %v812 = vmul.f32 %v652, %v792
        %v813 = vmul.f32 %v653, %v793
        %v814 = vmul.f32 %v654, %v793
        %v815 = vmul.f32 %v655, %v794
        %v816 = vmul.f32 %v656, %v794
        %v817 = vmul.f32 %v657, %v795
        %v818 = vmul.f32 %v658, %v795
        %v819 = vmul.f32 %v659, %v796
        %v820 = vmul.f32 %v660, %v796
        %v821 = vmul.f32 %v661, %v797
        %v822 = vmul.f32 %v662, %v797
        %v823 = vmul.f32 %v663, %v798
        %v824 = vmul.f32 %v664, %v798
        %v825 = vmul.f32 %v665, %v799
        %v826 = vmul.f32 %v666, %v799
        %v827 = vmul.f32 %v667, %v800
        %v828 = vmul.f32 %v668, %v800
        %v829 = vmul.f32 %v669, %v801
        %v830 = vmul.f32 %v670, %v801
        %v831 = vmul.f32 %v671, %v802
        %v832 = vmul.f32 %v672, %v802
        %v833 = vmul.f32 %v673, %v803
        %v834 = vmul.f32 %v674, %v803
        %v835 = vmul.f32 %v675, %v804
        %v836 = vmul.f32 %v676, %v804
        %v838 = vlaneseq
        %v839 = vshrl.u32 %v838, 7
        %v840 = vsub.s32 0, %v839
        %v841 = vrot.slane %v578, %v840
        %v842 = vlaneseq
        %v843 = vshrl.u32 %v842, 7
        %v844 = vsub.s32 1, %v843
        %v845 = vrot.slane %v578, %v844
        %v848 = vmul.f32 %v805, %v841
        %v849 = vmul.f32 %v806, %v845
        %v850 = vmul.f32 %v807, %v841
        %v851 = vmul.f32 %v808, %v845
        %v852 = vmul.f32 %v809, %v841
        %v853 = vmul.f32 %v810, %v845
        %v854 = vmul.f32 %v811, %v841
        %v855 = vmul.f32 %v812, %v845
        %v856 = vmul.f32 %v813, %v841
        %v857 = vmul.f32 %v814, %v845
        %v858 = vmul.f32 %v815, %v841
        %v859 = vmul.f32 %v816, %v845
        %v860 = vmul.f32 %v817, %v841
        %v861 = vmul.f32 %v818, %v845
        %v862 = vmul.f32 %v819, %v841
        %v863 = vmul.f32 %v820, %v845
        %v864 = vmul.f32 %v821, %v841
        %v865 = vmul.f32 %v822, %v845
        %v866 = vmul.f32 %v823, %v841
        %v867 = vmul.f32 %v824, %v845
        %v868 = vmul.f32 %v825, %v841
        %v869 = vmul.f32 %v826, %v845
        %v870 = vmul.f32 %v827, %v841
        %v871 = vmul.f32 %v828, %v845
        %v872 = vmul.f32 %v829, %v841
        %v873 = vmul.f32 %v830, %v845
        %v874 = vmul.f32 %v831, %v841
        %v875 = vmul.f32 %v832, %v845
        %v876 = vmul.f32 %v833, %v841
        %v877 = vmul.f32 %v834, %v845
        %v878 = vmul.f32 %v835, %v841
        %v879 = vmul.f32 %v836, %v845
        %v881 = vlaneseq
        %v882 = vshrl.u32 %v881, 7
        %v883 = vsub.s32 0, %v882
        %v884 = vrot.slane %v579, %v883
        %v885 = vlaneseq
        %v886 = vshrl.u32 %v885, 7
        %v887 = vsub.s32 1, %v886
        %v888 = vrot.slane %v579, %v887
        %v891 = vadd.f32 %v848, %v884
        %v892 = vadd.f32 %v849, %v888
        %v893 = vadd.f32 %v850, %v884
        %v894 = vadd.f32 %v851, %v888
        %v895 = vadd.f32 %v852, %v884
        %v896 = vadd.f32 %v853, %v888
        %v897 = vadd.f32 %v854, %v884
        %v898 = vadd.f32 %v855, %v888
        %v899 = vadd.f32 %v856, %v884
        %v900 = vadd.f32 %v857, %v888
        %v901 = vadd.f32 %v858, %v884
        %v902 = vadd.f32 %v859, %v888
        %v903 = vadd.f32 %v860, %v884
        %v904 = vadd.f32 %v861, %v888
        %v905 = vadd.f32 %v862, %v884
        %v906 = vadd.f32 %v863, %v888
        %v907 = vadd.f32 %v864, %v884
        %v908 = vadd.f32 %v865, %v888
        %v909 = vadd.f32 %v866, %v884
        %v910 = vadd.f32 %v867, %v888
        %v911 = vadd.f32 %v868, %v884
        %v912 = vadd.f32 %v869, %v888
        %v913 = vadd.f32 %v870, %v884
        %v914 = vadd.f32 %v871, %v888
        %v915 = vadd.f32 %v872, %v884
        %v916 = vadd.f32 %v873, %v888
        %v917 = vadd.f32 %v874, %v884
        %v918 = vadd.f32 %v875, %v888
        %v919 = vadd.f32 %v876, %v884
        %v920 = vadd.f32 %v877, %v888
        %v921 = vadd.f32 %v878, %v884
        %v922 = vadd.f32 %v879, %v888
        %v923 = vpack.c.bf16 %v893, %v891
        %v924 = vpack.c.bf16 %v894, %v892
        %v925 = vpack.c.bf16 %v897, %v895
        %v926 = vpack.c.bf16 %v898, %v896
        %v927 = vpack.c.bf16 %v901, %v899
        %v928 = vpack.c.bf16 %v902, %v900
        %v929 = vpack.c.bf16 %v905, %v903
        %v930 = vpack.c.bf16 %v906, %v904
        %v931 = vpack.c.bf16 %v909, %v907
        %v932 = vpack.c.bf16 %v910, %v908
        %v933 = vpack.c.bf16 %v913, %v911
        %v934 = vpack.c.bf16 %v914, %v912
        %v935 = vpack.c.bf16 %v917, %v915
        %v936 = vpack.c.bf16 %v918, %v916
        %v937 = vpack.c.bf16 %v921, %v919
        %v938 = vpack.c.bf16 %v922, %v920
        %v939 = vld [vmem:[#allocation9] sm:$0xff]
        %v940 = vld [vmem:[#allocation9 + $0x8] sm:$0xff]
        %v941 = vld [vmem:[#allocation9 + $0x10] sm:$0xff]
        %v942 = vld [vmem:[#allocation9 + $0x18] sm:$0xff]
        %v943 = vld [vmem:[#allocation9 + $0x20] sm:$0xff]
        %v944 = vld [vmem:[#allocation9 + $0x28] sm:$0xff]
        %v945 = vld [vmem:[#allocation9 + $0x30] sm:$0xff]
        %v946 = vld [vmem:[#allocation9 + $0x38] sm:$0xff]
        %v947 = vld [vmem:[#allocation9 + $0x40] sm:$0xff]
        %v948 = vld [vmem:[#allocation9 + $0x48] sm:$0xff]
        %v949 = vld [vmem:[#allocation9 + $0x50] sm:$0xff]
        %v950 = vld [vmem:[#allocation9 + $0x58] sm:$0xff]
        %v951 = vld [vmem:[#allocation9 + $0x60] sm:$0xff]
        %v952 = vld [vmem:[#allocation9 + $0x68] sm:$0xff]
        %v953 = vld [vmem:[#allocation9 + $0x70] sm:$0xff]
        %v954 = vld [vmem:[#allocation9 + $0x78] sm:$0xff]
        %v955 = vld [vmem:[#allocation9 + $0x80] sm:$0xff]
        %v956 = vld [vmem:[#allocation9 + $0x88] sm:$0xff]
        %v957 = vld [vmem:[#allocation9 + $0x90] sm:$0xff]
        %v958 = vld [vmem:[#allocation9 + $0x98] sm:$0xff]
        %v959 = vld [vmem:[#allocation9 + $0xa0] sm:$0xff]
        %v960 = vld [vmem:[#allocation9 + $0xa8] sm:$0xff]
        %v961 = vld [vmem:[#allocation9 + $0xb0] sm:$0xff]
        %v962 = vld [vmem:[#allocation9 + $0xb8] sm:$0xff]
        %v963 = vld [vmem:[#allocation9 + $0xc0] sm:$0xff]
        %v964 = vld [vmem:[#allocation9 + $0xc8] sm:$0xff]
        %v965 = vld [vmem:[#allocation9 + $0xd0] sm:$0xff]
        %v966 = vld [vmem:[#allocation9 + $0xd8] sm:$0xff]
        %v967 = vld [vmem:[#allocation9 + $0xe0] sm:$0xff]
        %v968 = vld [vmem:[#allocation9 + $0xe8] sm:$0xff]
        %v969 = vld [vmem:[#allocation9 + $0xf0] sm:$0xff]
        %v970 = vld [vmem:[#allocation9 + $0xf8] sm:$0xff]
        %v971 = vld [vmem:[#allocation9 + $0x100] sm:$0xff]
        %v972 = vld [vmem:[#allocation9 + $0x108] sm:$0xff]
        %v973 = vld [vmem:[#allocation9 + $0x110] sm:$0xff]
        %v974 = vld [vmem:[#allocation9 + $0x118] sm:$0xff]
        %v975 = vld [vmem:[#allocation9 + $0x120] sm:$0xff]
        %v976 = vld [vmem:[#allocation9 + $0x128] sm:$0xff]
        %v977 = vld [vmem:[#allocation9 + $0x130] sm:$0xff]
        %v978 = vld [vmem:[#allocation9 + $0x138] sm:$0xff]
        %v979 = vld [vmem:[#allocation9 + $0x140] sm:$0xff]
        %v980 = vld [vmem:[#allocation9 + $0x148] sm:$0xff]
        %v981 = vld [vmem:[#allocation9 + $0x150] sm:$0xff]
        %v982 = vld [vmem:[#allocation9 + $0x158] sm:$0xff]
        %v983 = vld [vmem:[#allocation9 + $0x160] sm:$0xff]
        %v984 = vld [vmem:[#allocation9 + $0x168] sm:$0xff]
        %v985 = vld [vmem:[#allocation9 + $0x170] sm:$0xff]
        %v986 = vld [vmem:[#allocation9 + $0x178] sm:$0xff]
        %v987 = vld [vmem:[#allocation9 + $0x180] sm:$0xff]
        %v988 = vld [vmem:[#allocation9 + $0x188] sm:$0xff]
        %v989 = vld [vmem:[#allocation9 + $0x190] sm:$0xff]
        %v990 = vld [vmem:[#allocation9 + $0x198] sm:$0xff]
        %v991 = vld [vmem:[#allocation9 + $0x1a0] sm:$0xff]
        %v992 = vld [vmem:[#allocation9 + $0x1a8] sm:$0xff]
        %v993 = vld [vmem:[#allocation9 + $0x1b0] sm:$0xff]
        %v994 = vld [vmem:[#allocation9 + $0x1b8] sm:$0xff]
        %v995 = vld [vmem:[#allocation9 + $0x1c0] sm:$0xff]
        %v996 = vld [vmem:[#allocation9 + $0x1c8] sm:$0xff]
        %v997 = vld [vmem:[#allocation9 + $0x1d0] sm:$0xff]
        %v998 = vld [vmem:[#allocation9 + $0x1d8] sm:$0xff]
        %v999 = vld [vmem:[#allocation9 + $0x1e0] sm:$0xff]
        %v1000 = vld [vmem:[#allocation9 + $0x1e8] sm:$0xff]
        %v1001 = vld [vmem:[#allocation9 + $0x1f0] sm:$0xff]
        %v1002 = vld [vmem:[#allocation9 + $0x1f8] sm:$0xff]
        %v1003 = vld [vmem:[#allocation9 + $0x200] sm:$0xff]
        %v1004 = vld [vmem:[#allocation9 + $0x208] sm:$0xff]
        %v1005 = vld [vmem:[#allocation9 + $0x210] sm:$0xff]
        %v1006 = vld [vmem:[#allocation9 + $0x218] sm:$0xff]
        %v1007 = vld [vmem:[#allocation9 + $0x220] sm:$0xff]
        %v1008 = vld [vmem:[#allocation9 + $0x228] sm:$0xff]
        %v1009 = vld [vmem:[#allocation9 + $0x230] sm:$0xff]
        %v1010 = vld [vmem:[#allocation9 + $0x238] sm:$0xff]
        %v1011 = vld [vmem:[#allocation9 + $0x240] sm:$0xff]
        %v1012 = vld [vmem:[#allocation9 + $0x248] sm:$0xff]
        %v1013 = vld [vmem:[#allocation9 + $0x250] sm:$0xff]
        %v1014 = vld [vmem:[#allocation9 + $0x258] sm:$0xff]
        %v1015 = vld [vmem:[#allocation9 + $0x260] sm:$0xff]
        %v1016 = vld [vmem:[#allocation9 + $0x268] sm:$0xff]
        %v1017 = vld [vmem:[#allocation9 + $0x270] sm:$0xff]
        %v1018 = vld [vmem:[#allocation9 + $0x278] sm:$0xff]
        %v1019 = vld [vmem:[#allocation9 + $0x280] sm:$0xff]
        %v1020 = vld [vmem:[#allocation9 + $0x288] sm:$0xff]
        %v1021 = vld [vmem:[#allocation9 + $0x290] sm:$0xff]
        %v1022 = vld [vmem:[#allocation9 + $0x298] sm:$0xff]
        %v1023 = vld [vmem:[#allocation9 + $0x2a0] sm:$0xff]
        %v1024 = vld [vmem:[#allocation9 + $0x2a8] sm:$0xff]
        %v1025 = vld [vmem:[#allocation9 + $0x2b0] sm:$0xff]
        %v1026 = vld [vmem:[#allocation9 + $0x2b8] sm:$0xff]
        %v1027 = vld [vmem:[#allocation9 + $0x2c0] sm:$0xff]
        %v1028 = vld [vmem:[#allocation9 + $0x2c8] sm:$0xff]
        %v1029 = vld [vmem:[#allocation9 + $0x2d0] sm:$0xff]
        %v1030 = vld [vmem:[#allocation9 + $0x2d8] sm:$0xff]
        %v1031 = vld [vmem:[#allocation9 + $0x2e0] sm:$0xff]
        %v1032 = vld [vmem:[#allocation9 + $0x2e8] sm:$0xff]
        %v1033 = vld [vmem:[#allocation9 + $0x2f0] sm:$0xff]
        %v1034 = vld [vmem:[#allocation9 + $0x2f8] sm:$0xff]
        %v1035 = vld [vmem:[%s4] sm:$0x3f]
        %v1037 = vlaneseq
        %v1038 = vshrl.u32 %v1037, 7
        %v1039 = vsub.s32 0, %v1038
        %v1040 = vrot.slane %v1035, %v1039
        %v1041 = vlaneseq
        %v1042 = vshrl.u32 %v1041, 7
        %v1043 = vsub.s32 1, %v1042
        %v1044 = vrot.slane %v1035, %v1043
        %v1045 = vlaneseq
        %v1046 = vshrl.u32 %v1045, 7
        %v1047 = vsub.s32 2, %v1046
        %v1048 = vrot.slane %v1035, %v1047
        %v1049 = vlaneseq
        %v1050 = vshrl.u32 %v1049, 7
        %v1051 = vsub.s32 3, %v1050
        %v1052 = vrot.slane %v1035, %v1051
        %v1053 = vlaneseq
        %v1054 = vshrl.u32 %v1053, 7
        %v1055 = vsub.s32 4, %v1054
        %v1056 = vrot.slane %v1035, %v1055
        %v1057 = vlaneseq
        %v1058 = vshrl.u32 %v1057, 7
        %v1059 = vsub.s32 5, %v1058
        %v1060 = vrot.slane %v1035, %v1059
        %v1163 = vunpack.c.l.b16 %v939
        %v1164 = vunpack.c.h.b16 %v939
        %v1165 = vunpack.c.l.b16 %v940
        %v1166 = vunpack.c.h.b16 %v940
        %v1167 = vunpack.c.l.b16 %v941
        %v1168 = vunpack.c.h.b16 %v941
        %v1169 = vunpack.c.l.b16 %v942
        %v1170 = vunpack.c.h.b16 %v942
        %v1171 = vunpack.c.l.b16 %v943
        %v1172 = vunpack.c.h.b16 %v943
        %v1173 = vunpack.c.l.b16 %v944
        %v1174 = vunpack.c.h.b16 %v944
        %v1175 = vunpack.c.l.b16 %v945
        %v1176 = vunpack.c.h.b16 %v945
        %v1177 = vunpack.c.l.b16 %v946
        %v1178 = vunpack.c.h.b16 %v946
        %v1179 = vunpack.c.l.b16 %v947
        %v1180 = vunpack.c.h.b16 %v947
        %v1181 = vunpack.c.l.b16 %v948
        %v1182 = vunpack.c.h.b16 %v948
        %v1183 = vunpack.c.l.b16 %v949
        %v1184 = vunpack.c.h.b16 %v949
        %v1185 = vunpack.c.l.b16 %v950
        %v1186 = vunpack.c.h.b16 %v950
        %v1187 = vunpack.c.l.b16 %v951
        %v1188 = vunpack.c.h.b16 %v951
        %v1189 = vunpack.c.l.b16 %v952
        %v1190 = vunpack.c.h.b16 %v952
        %v1191 = vunpack.c.l.b16 %v953
        %v1192 = vunpack.c.h.b16 %v953
        %v1193 = vunpack.c.l.b16 %v954
        %v1194 = vunpack.c.h.b16 %v954
        %v1195 = vunpack.c.l.b16 %v955
        %v1196 = vunpack.c.h.b16 %v955
        %v1197 = vunpack.c.l.b16 %v956
        %v1198 = vunpack.c.h.b16 %v956
        %v1199 = vunpack.c.l.b16 %v957
        %v1200 = vunpack.c.h.b16 %v957
        %v1201 = vunpack.c.l.b16 %v958
        %v1202 = vunpack.c.h.b16 %v958
        %v1203 = vunpack.c.l.b16 %v959
        %v1204 = vunpack.c.h.b16 %v959
        %v1205 = vunpack.c.l.b16 %v960
        %v1206 = vunpack.c.h.b16 %v960
        %v1207 = vunpack.c.l.b16 %v961
        %v1208 = vunpack.c.h.b16 %v961
        %v1209 = vunpack.c.l.b16 %v962
        %v1210 = vunpack.c.h.b16 %v962
        %v1211 = vunpack.c.l.b16 %v963
        %v1212 = vunpack.c.h.b16 %v963
        %v1213 = vunpack.c.l.b16 %v964
        %v1214 = vunpack.c.h.b16 %v964
        %v1215 = vunpack.c.l.b16 %v965
        %v1216 = vunpack.c.h.b16 %v965
        %v1217 = vunpack.c.l.b16 %v966
        %v1218 = vunpack.c.h.b16 %v966
        %v1219 = vunpack.c.l.b16 %v967
        %v1220 = vunpack.c.h.b16 %v967
        %v1221 = vunpack.c.l.b16 %v968
        %v1222 = vunpack.c.h.b16 %v968
        %v1223 = vunpack.c.l.b16 %v969
        %v1224 = vunpack.c.h.b16 %v969
        %v1225 = vunpack.c.l.b16 %v970
        %v1226 = vunpack.c.h.b16 %v970
        %v1227 = vunpack.c.l.b16 %v971
        %v1228 = vunpack.c.h.b16 %v971
        %v1229 = vunpack.c.l.b16 %v972
        %v1230 = vunpack.c.h.b16 %v972
        %v1231 = vunpack.c.l.b16 %v973
        %v1232 = vunpack.c.h.b16 %v973
        %v1233 = vunpack.c.l.b16 %v974
        %v1234 = vunpack.c.h.b16 %v974
        %v1235 = vunpack.c.l.b16 %v975
        %v1236 = vunpack.c.h.b16 %v975
        %v1237 = vunpack.c.l.b16 %v976
        %v1238 = vunpack.c.h.b16 %v976
        %v1239 = vunpack.c.l.b16 %v977
        %v1240 = vunpack.c.h.b16 %v977
        %v1241 = vunpack.c.l.b16 %v978
        %v1242 = vunpack.c.h.b16 %v978
        %v1243 = vunpack.c.l.b16 %v979
        %v1244 = vunpack.c.h.b16 %v979
        %v1245 = vunpack.c.l.b16 %v980
        %v1246 = vunpack.c.h.b16 %v980
        %v1247 = vunpack.c.l.b16 %v981
        %v1248 = vunpack.c.h.b16 %v981
        %v1249 = vunpack.c.l.b16 %v982
        %v1250 = vunpack.c.h.b16 %v982
        %v1251 = vunpack.c.l.b16 %v983
        %v1252 = vunpack.c.h.b16 %v983
        %v1253 = vunpack.c.l.b16 %v984
        %v1254 = vunpack.c.h.b16 %v984
        %v1255 = vunpack.c.l.b16 %v985
        %v1256 = vunpack.c.h.b16 %v985
        %v1257 = vunpack.c.l.b16 %v986
        %v1258 = vunpack.c.h.b16 %v986
        %v1259 = vunpack.c.l.b16 %v987
        %v1260 = vunpack.c.h.b16 %v987
        %v1261 = vunpack.c.l.b16 %v988
        %v1262 = vunpack.c.h.b16 %v988
        %v1263 = vunpack.c.l.b16 %v989
        %v1264 = vunpack.c.h.b16 %v989
        %v1265 = vunpack.c.l.b16 %v990
        %v1266 = vunpack.c.h.b16 %v990
        %v1267 = vunpack.c.l.b16 %v991
        %v1268 = vunpack.c.h.b16 %v991
        %v1269 = vunpack.c.l.b16 %v992
        %v1270 = vunpack.c.h.b16 %v992
        %v1271 = vunpack.c.l.b16 %v993
        %v1272 = vunpack.c.h.b16 %v993
        %v1273 = vunpack.c.l.b16 %v994
        %v1274 = vunpack.c.h.b16 %v994
        %v1275 = vunpack.c.l.b16 %v995
        %v1276 = vunpack.c.h.b16 %v995
        %v1277 = vunpack.c.l.b16 %v996
        %v1278 = vunpack.c.h.b16 %v996
        %v1279 = vunpack.c.l.b16 %v997
        %v1280 = vunpack.c.h.b16 %v997
        %v1281 = vunpack.c.l.b16 %v998
        %v1282 = vunpack.c.h.b16 %v998
        %v1283 = vunpack.c.l.b16 %v999
        %v1284 = vunpack.c.h.b16 %v999
        %v1285 = vunpack.c.l.b16 %v1000
        %v1286 = vunpack.c.h.b16 %v1000
        %v1287 = vunpack.c.l.b16 %v1001
        %v1288 = vunpack.c.h.b16 %v1001
        %v1289 = vunpack.c.l.b16 %v1002
        %v1290 = vunpack.c.h.b16 %v1002
        %v1291 = vunpack.c.l.b16 %v1003
        %v1292 = vunpack.c.h.b16 %v1003
        %v1293 = vunpack.c.l.b16 %v1004
        %v1294 = vunpack.c.h.b16 %v1004
        %v1295 = vunpack.c.l.b16 %v1005
        %v1296 = vunpack.c.h.b16 %v1005
        %v1297 = vunpack.c.l.b16 %v1006
        %v1298 = vunpack.c.h.b16 %v1006
        %v1299 = vunpack.c.l.b16 %v1007
        %v1300 = vunpack.c.h.b16 %v1007
        %v1301 = vunpack.c.l.b16 %v1008
        %v1302 = vunpack.c.h.b16 %v1008
        %v1303 = vunpack.c.l.b16 %v1009
        %v1304 = vunpack.c.h.b16 %v1009
        %v1305 = vunpack.c.l.b16 %v1010
        %v1306 = vunpack.c.h.b16 %v1010
        %v1307 = vunpack.c.l.b16 %v1011
        %v1308 = vunpack.c.h.b16 %v1011
        %v1309 = vunpack.c.l.b16 %v1012
        %v1310 = vunpack.c.h.b16 %v1012
        %v1311 = vunpack.c.l.b16 %v1013
        %v1312 = vunpack.c.h.b16 %v1013
        %v1313 = vunpack.c.l.b16 %v1014
        %v1314 = vunpack.c.h.b16 %v1014
        %v1315 = vunpack.c.l.b16 %v1015
        %v1316 = vunpack.c.h.b16 %v1015
        %v1317 = vunpack.c.l.b16 %v1016
        %v1318 = vunpack.c.h.b16 %v1016
        %v1319 = vunpack.c.l.b16 %v1017
        %v1320 = vunpack.c.h.b16 %v1017
        %v1321 = vunpack.c.l.b16 %v1018
        %v1322 = vunpack.c.h.b16 %v1018
        %v1323 = vunpack.c.l.b16 %v1019
        %v1324 = vunpack.c.h.b16 %v1019
        %v1325 = vunpack.c.l.b16 %v1020
        %v1326 = vunpack.c.h.b16 %v1020
        %v1327 = vunpack.c.l.b16 %v1021
        %v1328 = vunpack.c.h.b16 %v1021
        %v1329 = vunpack.c.l.b16 %v1022
        %v1330 = vunpack.c.h.b16 %v1022
        %v1331 = vunpack.c.l.b16 %v1023
        %v1332 = vunpack.c.h.b16 %v1023
        %v1333 = vunpack.c.l.b16 %v1024
        %v1334 = vunpack.c.h.b16 %v1024
        %v1335 = vunpack.c.l.b16 %v1025
        %v1336 = vunpack.c.h.b16 %v1025
        %v1337 = vunpack.c.l.b16 %v1026
        %v1338 = vunpack.c.h.b16 %v1026
        %v1339 = vunpack.c.l.b16 %v1027
        %v1340 = vunpack.c.h.b16 %v1027
        %v1341 = vunpack.c.l.b16 %v1028
        %v1342 = vunpack.c.h.b16 %v1028
        %v1343 = vunpack.c.l.b16 %v1029
        %v1344 = vunpack.c.h.b16 %v1029
        %v1345 = vunpack.c.l.b16 %v1030
        %v1346 = vunpack.c.h.b16 %v1030
        %v1347 = vunpack.c.l.b16 %v1031
        %v1348 = vunpack.c.h.b16 %v1031
        %v1349 = vunpack.c.l.b16 %v1032
        %v1350 = vunpack.c.h.b16 %v1032
        %v1351 = vunpack.c.l.b16 %v1033
        %v1352 = vunpack.c.h.b16 %v1033
        %v1353 = vunpack.c.l.b16 %v1034
        %v1354 = vunpack.c.h.b16 %v1034
        %v1355 = vpack.c.b16 %v1169, %v1163
        %v1356 = vpack.c.b16 %v1170, %v1164
        %v1357 = vpack.c.b16 %v1171, %v1165
        %v1358 = vpack.c.b16 %v1172, %v1166
        %v1359 = vpack.c.b16 %v1173, %v1167
        %v1360 = vpack.c.b16 %v1174, %v1168
        %v1361 = vpack.c.b16 %v1181, %v1175
        %v1362 = vpack.c.b16 %v1182, %v1176
        %v1363 = vpack.c.b16 %v1183, %v1177
        %v1364 = vpack.c.b16 %v1184, %v1178
        %v1365 = vpack.c.b16 %v1185, %v1179
        %v1366 = vpack.c.b16 %v1186, %v1180
        %v1367 = vpack.c.b16 %v1193, %v1187
        %v1368 = vpack.c.b16 %v1194, %v1188
        %v1369 = vpack.c.b16 %v1195, %v1189
        %v1370 = vpack.c.b16 %v1196, %v1190
        %v1371 = vpack.c.b16 %v1197, %v1191
        %v1372 = vpack.c.b16 %v1198, %v1192
        %v1373 = vpack.c.b16 %v1205, %v1199
        %v1374 = vpack.c.b16 %v1206, %v1200
        %v1375 = vpack.c.b16 %v1207, %v1201
        %v1376 = vpack.c.b16 %v1208, %v1202
        %v1377 = vpack.c.b16 %v1209, %v1203
        %v1378 = vpack.c.b16 %v1210, %v1204
        %v1379 = vpack.c.b16 %v1217, %v1211
        %v1380 = vpack.c.b16 %v1218, %v1212
        %v1381 = vpack.c.b16 %v1219, %v1213
        %v1382 = vpack.c.b16 %v1220, %v1214
        %v1383 = vpack.c.b16 %v1221, %v1215
        %v1384 = vpack.c.b16 %v1222, %v1216
        %v1385 = vpack.c.b16 %v1229, %v1223
        %v1386 = vpack.c.b16 %v1230, %v1224
        %v1387 = vpack.c.b16 %v1231, %v1225
        %v1388 = vpack.c.b16 %v1232, %v1226
        %v1389 = vpack.c.b16 %v1233, %v1227
        %v1390 = vpack.c.b16 %v1234, %v1228
        %v1391 = vpack.c.b16 %v1241, %v1235
        %v1392 = vpack.c.b16 %v1242, %v1236
        %v1393 = vpack.c.b16 %v1243, %v1237
        %v1394 = vpack.c.b16 %v1244, %v1238
        %v1395 = vpack.c.b16 %v1245, %v1239
        %v1396 = vpack.c.b16 %v1246, %v1240
        %v1397 = vpack.c.b16 %v1253, %v1247
        %v1398 = vpack.c.b16 %v1254, %v1248
        %v1399 = vpack.c.b16 %v1255, %v1249
        %v1400 = vpack.c.b16 %v1256, %v1250
        %v1401 = vpack.c.b16 %v1257, %v1251
        %v1402 = vpack.c.b16 %v1258, %v1252
        %v1403 = vpack.c.b16 %v1265, %v1259
        %v1404 = vpack.c.b16 %v1266, %v1260
        %v1405 = vpack.c.b16 %v1267, %v1261
        %v1406 = vpack.c.b16 %v1268, %v1262
        %v1407 = vpack.c.b16 %v1269, %v1263
        %v1408 = vpack.c.b16 %v1270, %v1264
        %v1409 = vpack.c.b16 %v1277, %v1271
        %v1410 = vpack.c.b16 %v1278, %v1272
        %v1411 = vpack.c.b16 %v1279, %v1273
        %v1412 = vpack.c.b16 %v1280, %v1274
        %v1413 = vpack.c.b16 %v1281, %v1275
        %v1414 = vpack.c.b16 %v1282, %v1276
        %v1415 = vpack.c.b16 %v1289, %v1283
        %v1416 = vpack.c.b16 %v1290, %v1284
        %v1417 = vpack.c.b16 %v1291, %v1285
        %v1418 = vpack.c.b16 %v1292, %v1286
        %v1419 = vpack.c.b16 %v1293, %v1287
        %v1420 = vpack.c.b16 %v1294, %v1288
        %v1421 = vpack.c.b16 %v1301, %v1295
        %v1422 = vpack.c.b16 %v1302, %v1296
        %v1423 = vpack.c.b16 %v1303, %v1297
        %v1424 = vpack.c.b16 %v1304, %v1298
        %v1425 = vpack.c.b16 %v1305, %v1299
        %v1426 = vpack.c.b16 %v1306, %v1300
        %v1427 = vpack.c.b16 %v1313, %v1307
        %v1428 = vpack.c.b16 %v1314, %v1308
        %v1429 = vpack.c.b16 %v1315, %v1309
        %v1430 = vpack.c.b16 %v1316, %v1310
        %v1431 = vpack.c.b16 %v1317, %v1311
        %v1432 = vpack.c.b16 %v1318, %v1312
        %v1433 = vpack.c.b16 %v1325, %v1319
        %v1434 = vpack.c.b16 %v1326, %v1320
        %v1435 = vpack.c.b16 %v1327, %v1321
        %v1436 = vpack.c.b16 %v1328, %v1322
        %v1437 = vpack.c.b16 %v1329, %v1323
        %v1438 = vpack.c.b16 %v1330, %v1324
        %v1439 = vpack.c.b16 %v1337, %v1331
        %v1440 = vpack.c.b16 %v1338, %v1332
        %v1441 = vpack.c.b16 %v1339, %v1333
        %v1442 = vpack.c.b16 %v1340, %v1334
        %v1443 = vpack.c.b16 %v1341, %v1335
        %v1444 = vpack.c.b16 %v1342, %v1336
        %v1445 = vpack.c.b16 %v1349, %v1343
        %v1446 = vpack.c.b16 %v1350, %v1344
        %v1447 = vpack.c.b16 %v1351, %v1345
        %v1448 = vpack.c.b16 %v1352, %v1346
        %v1449 = vpack.c.b16 %v1353, %v1347
        %v1450 = vpack.c.b16 %v1354, %v1348
        %1547 = vmatprep.subr.bf16.mxu0 %v1356
        %1548 = vmatpush1.bf16.msra.mxu0 %v1355
        %1549 = vmatprep.subr.bf16.mxu0 %v1362
        %1550 = vmatpush1.bf16.msra.mxu0 %v1361
        %1551 = vmatprep.subr.bf16.mxu0 %v1368
        %1552 = vmatpush1.bf16.msra.mxu0 %v1367
        %1553 = vmatprep.subr.bf16.mxu0 %v1374
        %1554 = vmatpush1.bf16.msra.mxu0 %v1373
        %1555 = vmatprep.subr.bf16.mxu0 %v1380
        %1556 = vmatpush1.bf16.msra.mxu0 %v1379
        %1557 = vmatprep.subr.bf16.mxu0 %v1386
        %1558 = vmatpush1.bf16.msra.mxu0 %v1385
        %1559 = vmatprep.subr.bf16.mxu0 %v1392
        %1560 = vmatpush1.bf16.msra.mxu0 %v1391
        %1561 = vmatprep.subr.bf16.mxu0 %v1398
        %1562 = vmatpush1.bf16.msra.mxu0 %v1397
        %1563 = vmatprep.subr.bf16.mxu0 %v1404
        %1564 = vmatpush1.bf16.msra.mxu0 %v1403
        %1565 = vmatprep.subr.bf16.mxu0 %v1410
        %1566 = vmatpush1.bf16.msra.mxu0 %v1409
        %1567 = vmatprep.subr.bf16.mxu0 %v1416
        %1568 = vmatpush1.bf16.msra.mxu0 %v1415
        %1569 = vmatprep.subr.bf16.mxu0 %v1422
        %1570 = vmatpush1.bf16.msra.mxu0 %v1421
        %1571 = vmatprep.subr.bf16.mxu0 %v1428
        %1572 = vmatpush1.bf16.msra.mxu0 %v1427
        %1573 = vmatprep.subr.bf16.mxu0 %v1434
        %1574 = vmatpush1.bf16.msra.mxu0 %v1433
        %1575 = vmatprep.subr.bf16.mxu0 %v1440
        %1576 = vmatpush1.bf16.msra.mxu0 %v1439
        %1577 = vmatprep.subr.bf16.mxu0 %v1446
        %1578 = vmatpush1.bf16.msra.mxu0 %v1445
        %1579 = vmatprep.mubr.bf16.mxu0 %v924
        %1580 = vmatmul.mubr.bf16.gmra.mrb[0].mxu0 %v923
        %v1581 = vpop.f32.mrb[0].mxu0
        %v1582 = vadd.f32 %v1040, %v1581
        %v1583 = vpop.f32.mrb[0].mxu0
        %v1584 = vadd.f32 %v1044, %v1583
        %v1585 = vpop.f32.mrb[0].mxu0
        %v1586 = vadd.f32 %v1040, %v1585
        %v1587 = vpop.f32.mrb[0].mxu0
        %v1588 = vadd.f32 %v1044, %v1587
        %1589 = vmatprep.mubr.bf16.mxu0 %v926
        %1590 = vmatmul.mubr.bf16.gmra.mrb[0].mxu0 %v925
        %v1591 = vpop.f32.mrb[0].mxu0
        %v1592 = vadd.f32 %v1040, %v1591
        %v1593 = vpop.f32.mrb[0].mxu0
        %v1594 = vadd.f32 %v1044, %v1593
        %v1595 = vpop.f32.mrb[0].mxu0
        %v1596 = vadd.f32 %v1040, %v1595
        %v1597 = vpop.f32.mrb[0].mxu0
        %v1598 = vadd.f32 %v1044, %v1597
        %1599 = vmatprep.mubr.bf16.mxu0 %v928
        %1600 = vmatmul.mubr.bf16.gmra.mrb[0].mxu0 %v927
        %v1601 = vpop.f32.mrb[0].mxu0
        %v1602 = vadd.f32 %v1040, %v1601
        %v1603 = vpop.f32.mrb[0].mxu0
        %v1604 = vadd.f32 %v1044, %v1603
        %v1605 = vpop.f32.mrb[0].mxu0
        %v1606 = vadd.f32 %v1040, %v1605
        %v1607 = vpop.f32.mrb[0].mxu0
        %v1608 = vadd.f32 %v1044, %v1607
        %1609 = vmatprep.mubr.bf16.mxu0 %v930
        %1610 = vmatmul.mubr.bf16.gmra.mrb[0].mxu0 %v929
        %v1611 = vpop.f32.mrb[0].mxu0
        %v1612 = vadd.f32 %v1040, %v1611
        %v1613 = vpop.f32.mrb[0].mxu0
        %v1614 = vadd.f32 %v1044, %v1613
        %v1615 = vpop.f32.mrb[0].mxu0
        %v1616 = vadd.f32 %v1040, %v1615
        %v1617 = vpop.f32.mrb[0].mxu0
        %v1618 = vadd.f32 %v1044, %v1617
        %1619 = vmatprep.mubr.bf16.mxu0 %v932
        %1620 = vmatmul.mubr.bf16.gmra.mrb[0].mxu0 %v931
        %v1621 = vpop.f32.mrb[0].mxu0
        %v1622 = vadd.f32 %v1040, %v1621
        %v1623 = vpop.f32.mrb[0].mxu0
        %v1624 = vadd.f32 %v1044, %v1623
        %v1625 = vpop.f32.mrb[0].mxu0
        %v1626 = vadd.f32 %v1040, %v1625
        %v1627 = vpop.f32.mrb[0].mxu0
        %v1628 = vadd.f32 %v1044, %v1627
        %1629 = vmatprep.mubr.bf16.mxu0 %v934
        %1630 = vmatmul.mubr.bf16.gmra.mrb[0].mxu0 %v933
        %v1631 = vpop.f32.mrb[0].mxu0
        %v1632 = vadd.f32 %v1040, %v1631
        %v1633 = vpop.f32.mrb[0].mxu0
        %v1634 = vadd.f32 %v1044, %v1633
        %v1635 = vpop.f32.mrb[0].mxu0
        %v1636 = vadd.f32 %v1040, %v1635
        %v1637 = vpop.f32.mrb[0].mxu0
        %v1638 = vadd.f32 %v1044, %v1637
        %1639 = vmatprep.mubr.bf16.mxu0 %v936
        %1640 = vmatmul.mubr.bf16.gmra.mrb[0].mxu0 %v935
        %v1641 = vpop.f32.mrb[0].mxu0
        %v1642 = vadd.f32 %v1040, %v1641
        %v1643 = vpop.f32.mrb[0].mxu0
        %v1644 = vadd.f32 %v1044, %v1643
        %v1645 = vpop.f32.mrb[0].mxu0
        %v1646 = vadd.f32 %v1040, %v1645
        %v1647 = vpop.f32.mrb[0].mxu0
        %v1648 = vadd.f32 %v1044, %v1647
        %1649 = vmatprep.mubr.bf16.mxu0 %v938
        %1650 = vmatmul.mubr.bf16.gmra.mrb[0].mxu0 %v937
        %v1651 = vpop.f32.mrb[0].mxu0
        %v1652 = vadd.f32 %v1040, %v1651
        %v1653 = vpop.f32.mrb[0].mxu0
        %v1654 = vadd.f32 %v1044, %v1653
        %v1655 = vpop.f32.mrb[0].mxu0
        %v1656 = vadd.f32 %v1040, %v1655
        %v1657 = vpop.f32.mrb[0].mxu0
        %v1658 = vadd.f32 %v1044, %v1657
        %1659 = vdwg.mxu0
        %1660 = vmatprep.subr.bf16.mxu0 %v1358
        %1661 = vmatpush1.bf16.msra.mxu0 %v1357
        %1662 = vmatprep.subr.bf16.mxu0 %v1364
        %1663 = vmatpush1.bf16.msra.mxu0 %v1363
        %1664 = vmatprep.subr.bf16.mxu0 %v1370
        %1665 = vmatpush1.bf16.msra.mxu0 %v1369
        %1666 = vmatprep.subr.bf16.mxu0 %v1376
        %1667 = vmatpush1.bf16.msra.mxu0 %v1375
        %1668 = vmatprep.subr.bf16.mxu0 %v1382
        %1669 = vmatpush1.bf16.msra.mxu0 %v1381
        %1670 = vmatprep.subr.bf16.mxu0 %v1388
        %1671 = vmatpush1.bf16.msra.mxu0 %v1387
        %1672 = vmatprep.subr.bf16.mxu0 %v1394
        %1673 = vmatpush1.bf16.msra.mxu0 %v1393
        %1674 = vmatprep.subr.bf16.mxu0 %v1400
        %1675 = vmatpush1.bf16.msra.mxu0 %v1399
        %1676 = vmatprep.subr.bf16.mxu0 %v1406
        %1677 = vmatpush1.bf16.msra.mxu0 %v1405
        %1678 = vmatprep.subr.bf16.mxu0 %v1412
        %1679 = vmatpush1.bf16.msra.mxu0 %v1411
        %1680 = vmatprep.subr.bf16.mxu0 %v1418
        %1681 = vmatpush1.bf16.msra.mxu0 %v1417
        %1682 = vmatprep.subr.bf16.mxu0 %v1424
        %1683 = vmatpush1.bf16.msra.mxu0 %v1423
        %1684 = vmatprep.subr.bf16.mxu0 %v1430
        %1685 = vmatpush1.bf16.msra.mxu0 %v1429
        %1686 = vmatprep.subr.bf16.mxu0 %v1436
        %1687 = vmatpush1.bf16.msra.mxu0 %v1435
        %1688 = vmatprep.subr.bf16.mxu0 %v1442
        %1689 = vmatpush1.bf16.msra.mxu0 %v1441
        %1690 = vmatprep.subr.bf16.mxu0 %v1448
        %1691 = vmatpush1.bf16.msra.mxu0 %v1447
        %1692 = vmatprep.mubr.bf16.mxu0 %v924
        %1693 = vmatmul.mubr.bf16.gmra.mrb[0].mxu0 %v923
        %v1694 = vpop.f32.mrb[0].mxu0
        %v1695 = vadd.f32 %v1048, %v1694
        %v1696 = vpop.f32.mrb[0].mxu0
        %v1697 = vadd.f32 %v1052, %v1696
        %v1698 = vpop.f32.mrb[0].mxu0
        %v1699 = vadd.f32 %v1048, %v1698
        %v1700 = vpop.f32.mrb[0].mxu0
        %v1701 = vadd.f32 %v1052, %v1700
        %1702 = vmatprep.mubr.bf16.mxu0 %v926
        %1703 = vmatmul.mubr.bf16.gmra.mrb[0].mxu0 %v925
        %v1704 = vpop.f32.mrb[0].mxu0
        %v1705 = vadd.f32 %v1048, %v1704
        %v1706 = vpop.f32.mrb[0].mxu0
        %v1707 = vadd.f32 %v1052, %v1706
        %v1708 = vpop.f32.mrb[0].mxu0
        %v1709 = vadd.f32 %v1048, %v1708
        %v1710 = vpop.f32.mrb[0].mxu0
        %v1711 = vadd.f32 %v1052, %v1710
        %1712 = vmatprep.mubr.bf16.mxu0 %v928
        %1713 = vmatmul.mubr.bf16.gmra.mrb[0].mxu0 %v927
        %v1714 = vpop.f32.mrb[0].mxu0
        %v1715 = vadd.f32 %v1048, %v1714
        %v1716 = vpop.f32.mrb[0].mxu0
        %v1717 = vadd.f32 %v1052, %v1716
        %v1718 = vpop.f32.mrb[0].mxu0
        %v1719 = vadd.f32 %v1048, %v1718
        %v1720 = vpop.f32.mrb[0].mxu0
        %v1721 = vadd.f32 %v1052, %v1720
        %1722 = vmatprep.mubr.bf16.mxu0 %v930
        %1723 = vmatmul.mubr.bf16.gmra.mrb[0].mxu0 %v929
        %v1724 = vpop.f32.mrb[0].mxu0
        %v1725 = vadd.f32 %v1048, %v1724
        %v1726 = vpop.f32.mrb[0].mxu0
        %v1727 = vadd.f32 %v1052, %v1726
        %v1728 = vpop.f32.mrb[0].mxu0
        %v1729 = vadd.f32 %v1048, %v1728
        %v1730 = vpop.f32.mrb[0].mxu0
        %v1731 = vadd.f32 %v1052, %v1730
        %1732 = vmatprep.mubr.bf16.mxu0 %v932
        %1733 = vmatmul.mubr.bf16.gmra.mrb[0].mxu0 %v931
        %v1734 = vpop.f32.mrb[0].mxu0
        %v1735 = vadd.f32 %v1048, %v1734
        %v1736 = vpop.f32.mrb[0].mxu0
        %v1737 = vadd.f32 %v1052, %v1736
        %v1738 = vpop.f32.mrb[0].mxu0
        %v1739 = vadd.f32 %v1048, %v1738
        %v1740 = vpop.f32.mrb[0].mxu0
        %v1741 = vadd.f32 %v1052, %v1740
        %1742 = vmatprep.mubr.bf16.mxu0 %v934
        %1743 = vmatmul.mubr.bf16.gmra.mrb[0].mxu0 %v933
        %v1744 = vpop.f32.mrb[0].mxu0
        %v1745 = vadd.f32 %v1048, %v1744
        %v1746 = vpop.f32.mrb[0].mxu0
        %v1747 = vadd.f32 %v1052, %v1746
        %v1748 = vpop.f32.mrb[0].mxu0
        %v1749 = vadd.f32 %v1048, %v1748
        %v1750 = vpop.f32.mrb[0].mxu0
        %v1751 = vadd.f32 %v1052, %v1750
        %1752 = vmatprep.mubr.bf16.mxu0 %v936
        %1753 = vmatmul.mubr.bf16.gmra.mrb[0].mxu0 %v935
        %v1754 = vpop.f32.mrb[0].mxu0
        %v1755 = vadd.f32 %v1048, %v1754
        %v1756 = vpop.f32.mrb[0].mxu0
        %v1757 = vadd.f32 %v1052, %v1756
        %v1758 = vpop.f32.mrb[0].mxu0
        %v1759 = vadd.f32 %v1048, %v1758
        %v1760 = vpop.f32.mrb[0].mxu0
        %v1761 = vadd.f32 %v1052, %v1760
        %1762 = vmatprep.mubr.bf16.mxu0 %v938
        %1763 = vmatmul.mubr.bf16.gmra.mrb[0].mxu0 %v937
        %v1764 = vpop.f32.mrb[0].mxu0
        %v1765 = vadd.f32 %v1048, %v1764
        %v1766 = vpop.f32.mrb[0].mxu0
        %v1767 = vadd.f32 %v1052, %v1766
        %v1768 = vpop.f32.mrb[0].mxu0
        %v1769 = vadd.f32 %v1048, %v1768
        %v1770 = vpop.f32.mrb[0].mxu0
        %v1771 = vadd.f32 %v1052, %v1770
        %1772 = vdwg.mxu0
        %1773 = vmatprep.subr.bf16.mxu0 %v1360
        %1774 = vmatpush1.bf16.msra.mxu0 %v1359
        %1775 = vmatprep.subr.bf16.mxu0 %v1366
        %1776 = vmatpush1.bf16.msra.mxu0 %v1365
        %1777 = vmatprep.subr.bf16.mxu0 %v1372
        %1778 = vmatpush1.bf16.msra.mxu0 %v1371
        %1779 = vmatprep.subr.bf16.mxu0 %v1378
        %1780 = vmatpush1.bf16.msra.mxu0 %v1377
        %1781 = vmatprep.subr.bf16.mxu0 %v1384
        %1782 = vmatpush1.bf16.msra.mxu0 %v1383
        %1783 = vmatprep.subr.bf16.mxu0 %v1390
        %1784 = vmatpush1.bf16.msra.mxu0 %v1389
        %1785 = vmatprep.subr.bf16.mxu0 %v1396
        %1786 = vmatpush1.bf16.msra.mxu0 %v1395
        %1787 = vmatprep.subr.bf16.mxu0 %v1402
        %1788 = vmatpush1.bf16.msra.mxu0 %v1401
        %1789 = vmatprep.subr.bf16.mxu0 %v1408
        %1790 = vmatpush1.bf16.msra.mxu0 %v1407
        %1791 = vmatprep.subr.bf16.mxu0 %v1414
        %1792 = vmatpush1.bf16.msra.mxu0 %v1413
        %1793 = vmatprep.subr.bf16.mxu0 %v1420
        %1794 = vmatpush1.bf16.msra.mxu0 %v1419
        %1795 = vmatprep.subr.bf16.mxu0 %v1426
        %1796 = vmatpush1.bf16.msra.mxu0 %v1425
        %1797 = vmatprep.subr.bf16.mxu0 %v1432
        %1798 = vmatpush1.bf16.msra.mxu0 %v1431
        %1799 = vmatprep.subr.bf16.mxu0 %v1438
        %1800 = vmatpush1.bf16.msra.mxu0 %v1437
        %1801 = vmatprep.subr.bf16.mxu0 %v1444
        %1802 = vmatpush1.bf16.msra.mxu0 %v1443
        %1803 = vmatprep.subr.bf16.mxu0 %v1450
        %1804 = vmatpush1.bf16.msra.mxu0 %v1449
        %1805 = vmatprep.mubr.bf16.mxu0 %v924
        %1806 = vmatmul.mubr.bf16.gmra.mrb[0].mxu0 %v923
        %v1807 = vpop.f32.mrb[0].mxu0
        %v1808 = vadd.f32 %v1056, %v1807
        %v1809 = vpop.f32.mrb[0].mxu0
        %v1810 = vadd.f32 %v1060, %v1809
        %v1811 = vpop.f32.mrb[0].mxu0
        %v1812 = vadd.f32 %v1056, %v1811
        %v1813 = vpop.f32.mrb[0].mxu0
        %v1814 = vadd.f32 %v1060, %v1813
        %1815 = vmatprep.mubr.bf16.mxu0 %v926
        %1816 = vmatmul.mubr.bf16.gmra.mrb[0].mxu0 %v925
        %v1817 = vpop.f32.mrb[0].mxu0
        %v1818 = vadd.f32 %v1056, %v1817
        %v1819 = vpop.f32.mrb[0].mxu0
        %v1820 = vadd.f32 %v1060, %v1819
        %v1821 = vpop.f32.mrb[0].mxu0
        %v1822 = vadd.f32 %v1056, %v1821
        %v1823 = vpop.f32.mrb[0].mxu0
        %v1824 = vadd.f32 %v1060, %v1823
        %1825 = vmatprep.mubr.bf16.mxu0 %v928
        %1826 = vmatmul.mubr.bf16.gmra.mrb[0].mxu0 %v927
        %v1827 = vpop.f32.mrb[0].mxu0
        %v1828 = vadd.f32 %v1056, %v1827
        %v1829 = vpop.f32.mrb[0].mxu0
        %v1830 = vadd.f32 %v1060, %v1829
        %v1831 = vpop.f32.mrb[0].mxu0
        %v1832 = vadd.f32 %v1056, %v1831
        %v1833 = vpop.f32.mrb[0].mxu0
        %v1834 = vadd.f32 %v1060, %v1833
        %1835 = vmatprep.mubr.bf16.mxu0 %v930
        %1836 = vmatmul.mubr.bf16.gmra.mrb[0].mxu0 %v929
        %v1837 = vpop.f32.mrb[0].mxu0
        %v1838 = vadd.f32 %v1056, %v1837
        %v1839 = vpop.f32.mrb[0].mxu0
        %v1840 = vadd.f32 %v1060, %v1839
        %v1841 = vpop.f32.mrb[0].mxu0
        %v1842 = vadd.f32 %v1056, %v1841
        %v1843 = vpop.f32.mrb[0].mxu0
        %v1844 = vadd.f32 %v1060, %v1843
        %1845 = vmatprep.mubr.bf16.mxu0 %v932
        %1846 = vmatmul.mubr.bf16.gmra.mrb[0].mxu0 %v931
        %v1847 = vpop.f32.mrb[0].mxu0
        %v1848 = vadd.f32 %v1056, %v1847
        %v1849 = vpop.f32.mrb[0].mxu0
        %v1850 = vadd.f32 %v1060, %v1849
        %v1851 = vpop.f32.mrb[0].mxu0
        %v1852 = vadd.f32 %v1056, %v1851
        %v1853 = vpop.f32.mrb[0].mxu0
        %v1854 = vadd.f32 %v1060, %v1853
        %1855 = vmatprep.mubr.bf16.mxu0 %v934
        %1856 = vmatmul.mubr.bf16.gmra.mrb[0].mxu0 %v933
        %v1857 = vpop.f32.mrb[0].mxu0
        %v1858 = vadd.f32 %v1056, %v1857
        %v1859 = vpop.f32.mrb[0].mxu0
        %v1860 = vadd.f32 %v1060, %v1859
        %v1861 = vpop.f32.mrb[0].mxu0
        %v1862 = vadd.f32 %v1056, %v1861
        %v1863 = vpop.f32.mrb[0].mxu0
        %v1864 = vadd.f32 %v1060, %v1863
        %1865 = vmatprep.mubr.bf16.mxu0 %v936
        %1866 = vmatmul.mubr.bf16.gmra.mrb[0].mxu0 %v935
        %v1867 = vpop.f32.mrb[0].mxu0
        %v1868 = vadd.f32 %v1056, %v1867
        %v1869 = vpop.f32.mrb[0].mxu0
        %v1870 = vadd.f32 %v1060, %v1869
        %v1871 = vpop.f32.mrb[0].mxu0
        %v1872 = vadd.f32 %v1056, %v1871
        %v1873 = vpop.f32.mrb[0].mxu0
        %v1874 = vadd.f32 %v1060, %v1873
        %1875 = vmatprep.mubr.bf16.mxu0 %v938
        %1876 = vmatmul.mubr.bf16.gmra.mrb[0].mxu0 %v937
        %v1877 = vpop.f32.mrb[0].mxu0
        %v1878 = vadd.f32 %v1056, %v1877
        %v1879 = vpop.f32.mrb[0].mxu0
        %v1880 = vadd.f32 %v1060, %v1879
        %v1881 = vpop.f32.mrb[0].mxu0
        %v1882 = vadd.f32 %v1056, %v1881
        %v1883 = vpop.f32.mrb[0].mxu0
        %v1884 = vadd.f32 %v1060, %v1883
        %1885 = vdwg.mxu0
        %v1886 = vpack.c.bf16 %v1586, %v1582
        %v1887 = vpack.c.bf16 %v1588, %v1584
        %v1888 = vpack.c.bf16 %v1699, %v1695
        %v1889 = vpack.c.bf16 %v1701, %v1697
        %v1890 = vpack.c.bf16 %v1812, %v1808
        %v1891 = vpack.c.bf16 %v1814, %v1810
        %v1892 = vpack.c.bf16 %v1596, %v1592
        %v1893 = vpack.c.bf16 %v1598, %v1594
        %v1894 = vpack.c.bf16 %v1709, %v1705
        %v1895 = vpack.c.bf16 %v1711, %v1707
        %v1896 = vpack.c.bf16 %v1822, %v1818
        %v1897 = vpack.c.bf16 %v1824, %v1820
        %v1898 = vpack.c.bf16 %v1606, %v1602
        %v1899 = vpack.c.bf16 %v1608, %v1604
        %v1900 = vpack.c.bf16 %v1719, %v1715
        %v1901 = vpack.c.bf16 %v1721, %v1717
        %v1902 = vpack.c.bf16 %v1832, %v1828
        %v1903 = vpack.c.bf16 %v1834, %v1830
        %v1904 = vpack.c.bf16 %v1616, %v1612
        %v1905 = vpack.c.bf16 %v1618, %v1614
        %v1906 = vpack.c.bf16 %v1729, %v1725
        %v1907 = vpack.c.bf16 %v1731, %v1727
        %v1908 = vpack.c.bf16 %v1842, %v1838
        %v1909 = vpack.c.bf16 %v1844, %v1840
        %v1910 = vpack.c.bf16 %v1626, %v1622
        %v1911 = vpack.c.bf16 %v1628, %v1624
        %v1912 = vpack.c.bf16 %v1739, %v1735
        %v1913 = vpack.c.bf16 %v1741, %v1737
        %v1914 = vpack.c.bf16 %v1852, %v1848
        %v1915 = vpack.c.bf16 %v1854, %v1850
        %v1916 = vpack.c.bf16 %v1636, %v1632
        %v1917 = vpack.c.bf16 %v1638, %v1634
        %v1918 = vpack.c.bf16 %v1749, %v1745
        %v1919 = vpack.c.bf16 %v1751, %v1747
        %v1920 = vpack.c.bf16 %v1862, %v1858
        %v1921 = vpack.c.bf16 %v1864, %v1860
        %v1922 = vpack.c.bf16 %v1646, %v1642
        %v1923 = vpack.c.bf16 %v1648, %v1644
        %v1924 = vpack.c.bf16 %v1759, %v1755
        %v1925 = vpack.c.bf16 %v1761, %v1757
        %v1926 = vpack.c.bf16 %v1872, %v1868
        %v1927 = vpack.c.bf16 %v1874, %v1870
        %v1928 = vpack.c.bf16 %v1656, %v1652
        %v1929 = vpack.c.bf16 %v1658, %v1654
        %v1930 = vpack.c.bf16 %v1769, %v1765
        %v1931 = vpack.c.bf16 %v1771, %v1767
        %v1932 = vpack.c.bf16 %v1882, %v1878
        %v1933 = vpack.c.bf16 %v1884, %v1880
        %1934 = vmatprep.subr.bf16.mxu0 0
        %1935 = vmatpush1.bf16.xpose.msra.mxu0 %v1888
        %1936 = vmatprep.subr.bf16.mxu0 0
        %1937 = vmatpush1.bf16.xpose.msra.mxu0 0
        %1938 = vmatprep.subr.bf16.mxu0 0
        %1939 = vmatpush1.bf16.xpose.msra.mxu0 0
        %1940 = vmatprep.subr.bf16.mxu0 0
        %1941 = vmatpush1.bf16.xpose.msra.mxu0 0
        %1942 = vmatprep.subr.bf16.mxu0 0
        %1943 = vmatpush1.bf16.xpose.msra.mxu0 0
        %1944 = vmatprep.subr.bf16.mxu0 0
        %1945 = vmatpush1.bf16.xpose.msra.mxu0 0
        %1946 = vmatprep.subr.bf16.mxu0 0
        %1947 = vmatpush1.bf16.xpose.msra.mxu0 0
        %1948 = vmatprep.subr.bf16.mxu0 0
        %1949 = vmatpush1.bf16.xpose.msra.mxu0 0
        %1950 = vmatprep.subr.bf16.mxu0 0
        %1951 = vmatpush1.bf16.xpose.msra.mxu0 0
        %1952 = vmatprep.subr.bf16.mxu0 0
        %1953 = vmatpush1.bf16.xpose.msra.mxu0 0
        %1954 = vmatprep.subr.bf16.mxu0 0
        %1955 = vmatpush1.bf16.xpose.msra.mxu0 0
        %1956 = vmatprep.subr.bf16.mxu0 0
        %1957 = vmatpush1.bf16.xpose.msra.mxu0 0
        %1958 = vmatprep.subr.bf16.mxu0 0
        %1959 = vmatpush1.bf16.xpose.msra.mxu0 0
        %1960 = vmatprep.subr.bf16.mxu0 0
        %1961 = vmatpush1.bf16.xpose.msra.mxu0 0
        %1962 = vmatprep.subr.bf16.mxu0 0
        %1963 = vmatpush1.bf16.xpose.msra.mxu0 0
        %1964 = vmatprep.subr.bf16.mxu0 0
        %1965 = vmatpush1.bf16.xpose.msra.mxu0 0
        %1966 = vmatprep.mubr.bf16.mxu0 0
        %1967 = vmatmul.mubr.bf16.gmra.mrb[0].mxu0 %v1886
        %v1968 = vpop.f32.mrb[0].mxu0
        %v1969 = vadd.f32 0.0, %v1968
        %v1970 = vpop.f32.mrb[0].mxu0
        %v1971 = vpop.f32.mrb[0].mxu0
        %v1972 = vadd.f32 0.0, %v1971
        %v1973 = vpop.f32.mrb[0].mxu0
        %1974 = vdwg.mxu0
        %1975 = vmatprep.subr.bf16.mxu0 0
        %1976 = vmatpush1.bf16.xpose.msra.mxu0 %v1894
        %1977 = vmatprep.subr.bf16.mxu0 0
        %1978 = vmatpush1.bf16.xpose.msra.mxu0 0
        %1979 = vmatprep.subr.bf16.mxu0 0
        %1980 = vmatpush1.bf16.xpose.msra.mxu0 0
        %1981 = vmatprep.subr.bf16.mxu0 0
        %1982 = vmatpush1.bf16.xpose.msra.mxu0 0
        %1983 = vmatprep.subr.bf16.mxu0 0
        %1984 = vmatpush1.bf16.xpose.msra.mxu0 0
        %1985 = vmatprep.subr.bf16.mxu0 0
        %1986 = vmatpush1.bf16.xpose.msra.mxu0 0
        %1987 = vmatprep.subr.bf16.mxu0 0
        %1988 = vmatpush1.bf16.xpose.msra.mxu0 0
        %1989 = vmatprep.subr.bf16.mxu0 0
        %1990 = vmatpush1.bf16.xpose.msra.mxu0 0
        %1991 = vmatprep.subr.bf16.mxu0 0
        %1992 = vmatpush1.bf16.xpose.msra.mxu0 0
        %1993 = vmatprep.subr.bf16.mxu0 0
        %1994 = vmatpush1.bf16.xpose.msra.mxu0 0
        %1995 = vmatprep.subr.bf16.mxu0 0
        %1996 = vmatpush1.bf16.xpose.msra.mxu0 0
        %1997 = vmatprep.subr.bf16.mxu0 0
        %1998 = vmatpush1.bf16.xpose.msra.mxu0 0
        %1999 = vmatprep.subr.bf16.mxu0 0
        %2000 = vmatpush1.bf16.xpose.msra.mxu0 0
        %2001 = vmatprep.subr.bf16.mxu0 0
        %2002 = vmatpush1.bf16.xpose.msra.mxu0 0
        %2003 = vmatprep.subr.bf16.mxu0 0
        %2004 = vmatpush1.bf16.xpose.msra.mxu0 0
        %2005 = vmatprep.subr.bf16.mxu0 0
        %2006 = vmatpush1.bf16.xpose.msra.mxu0 0
        %2007 = vmatprep.mubr.bf16.mxu0 0
        %2008 = vmatmul.mubr.bf16.gmra.mrb[0].mxu0 %v1892
        %v2009 = vpop.f32.mrb[0].mxu0
        %v2010 = vadd.f32 0.0, %v2009
        %v2011 = vpop.f32.mrb[0].mxu0
        %v2012 = vpop.f32.mrb[0].mxu0
        %v2013 = vadd.f32 0.0, %v2012
        %v2014 = vpop.f32.mrb[0].mxu0
        %2015 = vdwg.mxu0
        %2016 = vmatprep.subr.bf16.mxu0 0
        %2017 = vmatpush1.bf16.xpose.msra.mxu0 %v1900
        %2018 = vmatprep.subr.bf16.mxu0 0
        %2019 = vmatpush1.bf16.xpose.msra.mxu0 0
        %2020 = vmatprep.subr.bf16.mxu0 0
        %2021 = vmatpush1.bf16.xpose.msra.mxu0 0
        %2022 = vmatprep.subr.bf16.mxu0 0
        %2023 = vmatpush1.bf16.xpose.msra.mxu0 0
        %2024 = vmatprep.subr.bf16.mxu0 0
        %2025 = vmatpush1.bf16.xpose.msra.mxu0 0
        %2026 = vmatprep.subr.bf16.mxu0 0
        %2027 = vmatpush1.bf16.xpose.msra.mxu0 0
        %2028 = vmatprep.subr.bf16.mxu0 0
        %2029 = vmatpush1.bf16.xpose.msra.mxu0 0
        %2030 = vmatprep.subr.bf16.mxu0 0
        %2031 = vmatpush1.bf16.xpose.msra.mxu0 0
        %2032 = vmatprep.subr.bf16.mxu0 0
        %2033 = vmatpush1.bf16.xpose.msra.mxu0 0
        %2034 = vmatprep.subr.bf16.mxu0 0
        %2035 = vmatpush1.bf16.xpose.msra.mxu0 0
        %2036 = vmatprep.subr.bf16.mxu0 0
        %2037 = vmatpush1.bf16.xpose.msra.mxu0 0
        %2038 = vmatprep.subr.bf16.mxu0 0
        %2039 = vmatpush1.bf16.xpose.msra.mxu0 0
        %2040 = vmatprep.subr.bf16.mxu0 0
        %2041 = vmatpush1.bf16.xpose.msra.mxu0 0
        %2042 = vmatprep.subr.bf16.mxu0 0
        %2043 = vmatpush1.bf16.xpose.msra.mxu0 0
        %2044 = vmatprep.subr.bf16.mxu0 0
        %2045 = vmatpush1.bf16.xpose.msra.mxu0 0
        %2046 = vmatprep.subr.bf16.mxu0 0
        %2047 = vmatpush1.bf16.xpose.msra.mxu0 0
        %2048 = vmatprep.mubr.bf16.mxu0 0
        %2049 = vmatmul.mubr.bf16.gmra.mrb[0].mxu0 %v1898
        %v2050 = vpop.f32.mrb[0].mxu0
        %v2051 = vadd.f32 0.0, %v2050
        %v2052 = vpop.f32.mrb[0].mxu0
        %v2053 = vpop.f32.mrb[0].mxu0
        %v2054 = vadd.f32 0.0, %v2053
        %v2055 = vpop.f32.mrb[0].mxu0
        %2056 = vdwg.mxu0
        %2057 = vmatprep.subr.bf16.mxu0 0
        %2058 = vmatpush1.bf16.xpose.msra.mxu0 %v1906
        %2059 = vmatprep.subr.bf16.mxu0 0
        %2060 = vmatpush1.bf16.xpose.msra.mxu0 0
        %2061 = vmatprep.subr.bf16.mxu0 0
        %2062 = vmatpush1.bf16.xpose.msra.mxu0 0
        %2063 = vmatprep.subr.bf16.mxu0 0
        %2064 = vmatpush1.bf16.xpose.msra.mxu0 0
        %2065 = vmatprep.subr.bf16.mxu0 0
        %2066 = vmatpush1.bf16.xpose.msra.mxu0 0
        %2067 = vmatprep.subr.bf16.mxu0 0
        %2068 = vmatpush1.bf16.xpose.msra.mxu0 0
        %2069 = vmatprep.subr.bf16.mxu0 0
        %2070 = vmatpush1.bf16.xpose.msra.mxu0 0
        %2071 = vmatprep.subr.bf16.mxu0 0
        %2072 = vmatpush1.bf16.xpose.msra.mxu0 0
        %2073 = vmatprep.subr.bf16.mxu0 0
        %2074 = vmatpush1.bf16.xpose.msra.mxu0 0
        %2075 = vmatprep.subr.bf16.mxu0 0
        %2076 = vmatpush1.bf16.xpose.msra.mxu0 0
        %2077 = vmatprep.subr.bf16.mxu0 0
        %2078 = vmatpush1.bf16.xpose.msra.mxu0 0
        %2079 = vmatprep.subr.bf16.mxu0 0
        %2080 = vmatpush1.bf16.xpose.msra.mxu0 0
        %2081 = vmatprep.subr.bf16.mxu0 0
        %2082 = vmatpush1.bf16.xpose.msra.mxu0 0
        %2083 = vmatprep.subr.bf16.mxu0 0
        %2084 = vmatpush1.bf16.xpose.msra.mxu0 0
        %2085 = vmatprep.subr.bf16.mxu0 0
        %2086 = vmatpush1.bf16.xpose.msra.mxu0 0
        %2087 = vmatprep.subr.bf16.mxu0 0
        %2088 = vmatpush1.bf16.xpose.msra.mxu0 0
        %2089 = vmatprep.mubr.bf16.mxu0 0
        %2090 = vmatmul.mubr.bf16.gmra.mrb[0].mxu0 %v1904
        %v2091 = vpop.f32.mrb[0].mxu0
        %v2092 = vadd.f32 0.0, %v2091
        %v2093 = vpop.f32.mrb[0].mxu0
        %v2094 = vpop.f32.mrb[0].mxu0
        %v2095 = vadd.f32 0.0, %v2094
        %v2096 = vpop.f32.mrb[0].mxu0
        %2097 = vdwg.mxu0
        %2098 = vmatprep.subr.bf16.mxu0 0
        %2099 = vmatpush1.bf16.xpose.msra.mxu0 %v1912
        %2100 = vmatprep.subr.bf16.mxu0 0
        %2101 = vmatpush1.bf16.xpose.msra.mxu0 0
        %2102 = vmatprep.subr.bf16.mxu0 0
        %2103 = vmatpush1.bf16.xpose.msra.mxu0 0
        %2104 = vmatprep.subr.bf16.mxu0 0
        %2105 = vmatpush1.bf16.xpose.msra.mxu0 0
        %2106 = vmatprep.subr.bf16.mxu0 0
        %2107 = vmatpush1.bf16.xpose.msra.mxu0 0
        %2108 = vmatprep.subr.bf16.mxu0 0
        %2109 = vmatpush1.bf16.xpose.msra.mxu0 0
        %2110 = vmatprep.subr.bf16.mxu0 0
        %2111 = vmatpush1.bf16.xpose.msra.mxu0 0
        %2112 = vmatprep.subr.bf16.mxu0 0
        %2113 = vmatpush1.bf16.xpose.msra.mxu0 0
        %2114 = vmatprep.subr.bf16.mxu0 0
        %2115 = vmatpush1.bf16.xpose.msra.mxu0 0
        %2116 = vmatprep.subr.bf16.mxu0 0
        %2117 = vmatpush1.bf16.xpose.msra.mxu0 0
        %2118 = vmatprep.subr.bf16.mxu0 0
        %2119 = vmatpush1.bf16.xpose.msra.mxu0 0
        %2120 = vmatprep.subr.bf16.mxu0 0
        %2121 = vmatpush1.bf16.xpose.msra.mxu0 0
        %2122 = vmatprep.subr.bf16.mxu0 0
        %2123 = vmatpush1.bf16.xpose.msra.mxu0 0
        %2124 = vmatprep.subr.bf16.mxu0 0
        %2125 = vmatpush1.bf16.xpose.msra.mxu0 0
        %2126 = vmatprep.subr.bf16.mxu0 0
        %2127 = vmatpush1.bf16.xpose.msra.mxu0 0
        %2128 = vmatprep.subr.bf16.mxu0 0
        %2129 = vmatpush1.bf16.xpose.msra.mxu0 0
        %2130 = vmatprep.mubr.bf16.mxu0 0
        %2131 = vmatmul.mubr.bf16.gmra.mrb[0].mxu0 %v1910
        %v2132 = vpop.f32.mrb[0].mxu0
        %v2133 = vadd.f32 0.0, %v2132
        %v2134 = vpop.f32.mrb[0].mxu0
        %v2135 = vpop.f32.mrb[0].mxu0
        %v2136 = vadd.f32 0.0, %v2135
        %v2137 = vpop.f32.mrb[0].mxu0
        %2138 = vdwg.mxu0
        %2139 = vmatprep.subr.bf16.mxu0 0
        %2140 = vmatpush1.bf16.xpose.msra.mxu0 %v1918
        %2141 = vmatprep.subr.bf16.mxu0 0
        %2142 = vmatpush1.bf16.xpose.msra.mxu0 0
        %2143 = vmatprep.subr.bf16.mxu0 0
        %2144 = vmatpush1.bf16.xpose.msra.mxu0 0
        %2145 = vmatprep.subr.bf16.mxu0 0
        %2146 = vmatpush1.bf16.xpose.msra.mxu0 0
        %2147 = vmatprep.subr.bf16.mxu0 0
        %2148 = vmatpush1.bf16.xpose.msra.mxu0 0
        %2149 = vmatprep.subr.bf16.mxu0 0
        %2150 = vmatpush1.bf16.xpose.msra.mxu0 0
        %2151 = vmatprep.subr.bf16.mxu0 0
        %2152 = vmatpush1.bf16.xpose.msra.mxu0 0
        %2153 = vmatprep.subr.bf16.mxu0 0
        %2154 = vmatpush1.bf16.xpose.msra.mxu0 0
        %2155 = vmatprep.subr.bf16.mxu0 0
        %2156 = vmatpush1.bf16.xpose.msra.mxu0 0
        %2157 = vmatprep.subr.bf16.mxu0 0
        %2158 = vmatpush1.bf16.xpose.msra.mxu0 0
        %2159 = vmatprep.subr.bf16.mxu0 0
        %2160 = vmatpush1.bf16.xpose.msra.mxu0 0
        %2161 = vmatprep.subr.bf16.mxu0 0
        %2162 = vmatpush1.bf16.xpose.msra.mxu0 0
        %2163 = vmatprep.subr.bf16.mxu0 0
        %2164 = vmatpush1.bf16.xpose.msra.mxu0 0
        %2165 = vmatprep.subr.bf16.mxu0 0
        %2166 = vmatpush1.bf16.xpose.msra.mxu0 0
        %2167 = vmatprep.subr.bf16.mxu0 0
        %2168 = vmatpush1.bf16.xpose.msra.mxu0 0
        %2169 = vmatprep.subr.bf16.mxu0 0
        %2170 = vmatpush1.bf16.xpose.msra.mxu0 0
        %2171 = vmatprep.mubr.bf16.mxu0 0
        %2172 = vmatmul.mubr.bf16.gmra.mrb[0].mxu0 %v1916
        %v2173 = vpop.f32.mrb[0].mxu0
        %v2174 = vadd.f32 0.0, %v2173
        %v2175 = vpop.f32.mrb[0].mxu0
        %v2176 = vpop.f32.mrb[0].mxu0
        %v2177 = vadd.f32 0.0, %v2176
        %v2178 = vpop.f32.mrb[0].mxu0
        %2179 = vdwg.mxu0
        %2180 = vmatprep.subr.bf16.mxu0 0
        %2181 = vmatpush1.bf16.xpose.msra.mxu0 %v1924
        %2182 = vmatprep.subr.bf16.mxu0 0
        %2183 = vmatpush1.bf16.xpose.msra.mxu0 0
        %2184 = vmatprep.subr.bf16.mxu0 0
        %2185 = vmatpush1.bf16.xpose.msra.mxu0 0
        %2186 = vmatprep.subr.bf16.mxu0 0
        %2187 = vmatpush1.bf16.xpose.msra.mxu0 0
        %2188 = vmatprep.subr.bf16.mxu0 0
        %2189 = vmatpush1.bf16.xpose.msra.mxu0 0
        %2190 = vmatprep.subr.bf16.mxu0 0
        %2191 = vmatpush1.bf16.xpose.msra.mxu0 0
        %2192 = vmatprep.subr.bf16.mxu0 0
        %2193 = vmatpush1.bf16.xpose.msra.mxu0 0
        %2194 = vmatprep.subr.bf16.mxu0 0
        %2195 = vmatpush1.bf16.xpose.msra.mxu0 0
        %2196 = vmatprep.subr.bf16.mxu0 0
        %2197 = vmatpush1.bf16.xpose.msra.mxu0 0
        %2198 = vmatprep.subr.bf16.mxu0 0
        %2199 = vmatpush1.bf16.xpose.msra.mxu0 0
        %2200 = vmatprep.subr.bf16.mxu0 0
        %2201 = vmatpush1.bf16.xpose.msra.mxu0 0
        %2202 = vmatprep.subr.bf16.mxu0 0
        %2203 = vmatpush1.bf16.xpose.msra.mxu0 0
        %2204 = vmatprep.subr.bf16.mxu0 0
        %2205 = vmatpush1.bf16.xpose.msra.mxu0 0
        %2206 = vmatprep.subr.bf16.mxu0 0
        %2207 = vmatpush1.bf16.xpose.msra.mxu0 0
        %2208 = vmatprep.subr.bf16.mxu0 0
        %2209 = vmatpush1.bf16.xpose.msra.mxu0 0
        %2210 = vmatprep.subr.bf16.mxu0 0
        %2211 = vmatpush1.bf16.xpose.msra.mxu0 0
        %2212 = vmatprep.mubr.bf16.mxu0 0
        %2213 = vmatmul.mubr.bf16.gmra.mrb[0].mxu0 %v1922
        %v2214 = vpop.f32.mrb[0].mxu0
        %v2215 = vadd.f32 0.0, %v2214
        %v2216 = vpop.f32.mrb[0].mxu0
        %v2217 = vpop.f32.mrb[0].mxu0
        %v2218 = vadd.f32 0.0, %v2217
        %v2219 = vpop.f32.mrb[0].mxu0
        %2220 = vdwg.mxu0
        %2221 = vmatprep.subr.bf16.mxu0 0
        %2222 = vmatpush1.bf16.xpose.msra.mxu0 %v1930
        %2223 = vmatprep.subr.bf16.mxu0 0
        %2224 = vmatpush1.bf16.xpose.msra.mxu0 0
        %2225 = vmatprep.subr.bf16.mxu0 0
        %2226 = vmatpush1.bf16.xpose.msra.mxu0 0
        %2227 = vmatprep.subr.bf16.mxu0 0
        %2228 = vmatpush1.bf16.xpose.msra.mxu0 0
        %2229 = vmatprep.subr.bf16.mxu0 0
        %2230 = vmatpush1.bf16.xpose.msra.mxu0 0
        %2231 = vmatprep.subr.bf16.mxu0 0
        %2232 = vmatpush1.bf16.xpose.msra.mxu0 0
        %2233 = vmatprep.subr.bf16.mxu0 0
        %2234 = vmatpush1.bf16.xpose.msra.mxu0 0
        %2235 = vmatprep.subr.bf16.mxu0 0
        %2236 = vmatpush1.bf16.xpose.msra.mxu0 0
        %2237 = vmatprep.subr.bf16.mxu0 0
        %2238 = vmatpush1.bf16.xpose.msra.mxu0 0
        %2239 = vmatprep.subr.bf16.mxu0 0
        %2240 = vmatpush1.bf16.xpose.msra.mxu0 0
        %2241 = vmatprep.subr.bf16.mxu0 0
        %2242 = vmatpush1.bf16.xpose.msra.mxu0 0
        %2243 = vmatprep.subr.bf16.mxu0 0
        %2244 = vmatpush1.bf16.xpose.msra.mxu0 0
        %2245 = vmatprep.subr.bf16.mxu0 0
        %2246 = vmatpush1.bf16.xpose.msra.mxu0 0
        %2247 = vmatprep.subr.bf16.mxu0 0
        %2248 = vmatpush1.bf16.xpose.msra.mxu0 0
        %2249 = vmatprep.subr.bf16.mxu0 0
        %2250 = vmatpush1.bf16.xpose.msra.mxu0 0
        %2251 = vmatprep.subr.bf16.mxu0 0
        %2252 = vmatpush1.bf16.xpose.msra.mxu0 0
        %2253 = vmatprep.mubr.bf16.mxu0 0
        %2254 = vmatmul.mubr.bf16.gmra.mrb[0].mxu0 %v1928
        %v2255 = vpop.f32.mrb[0].mxu0
        %v2256 = vadd.f32 0.0, %v2255
        %v2257 = vpop.f32.mrb[0].mxu0
        %v2258 = vpop.f32.mrb[0].mxu0
        %v2259 = vadd.f32 0.0, %v2258
        %v2260 = vpop.f32.mrb[0].mxu0
        %2261 = vdwg.mxu0
        %vm2262 = vcmask 130048
        %v2263 = vsel %vm2262, %v1969, -inf
        %2264 = vmax.xlane.f32.xlu0 %v2263
        %v2265 = vpop.xlane.xlu0 %2264
        %v2266 = vsel %vm2262, %v1972, -inf
        %2267 = vmax.xlane.f32.xlu0 %v2266
        %v2268 = vpop.xlane.xlu0 %2267
        %v2269 = vsel %vm2262, %v2010, -inf
        %2270 = vmax.xlane.f32.xlu0 %v2269
        %v2271 = vpop.xlane.xlu0 %2270
        %v2272 = vsel %vm2262, %v2013, -inf
        %2273 = vmax.xlane.f32.xlu0 %v2272
        %v2274 = vpop.xlane.xlu0 %2273
        %v2275 = vsel %vm2262, %v2051, -inf
        %2276 = vmax.xlane.f32.xlu0 %v2275
        %v2277 = vpop.xlane.xlu0 %2276
        %v2278 = vsel %vm2262, %v2054, -inf
        %2279 = vmax.xlane.f32.xlu0 %v2278
        %v2280 = vpop.xlane.xlu0 %2279
        %v2281 = vsel %vm2262, %v2092, -inf
        %2282 = vmax.xlane.f32.xlu0 %v2281
        %v2283 = vpop.xlane.xlu0 %2282
        %v2284 = vsel %vm2262, %v2095, -inf
        %2285 = vmax.xlane.f32.xlu0 %v2284
        %v2286 = vpop.xlane.xlu0 %2285
        %v2287 = vsel %vm2262, %v2133, -inf
        %2288 = vmax.xlane.f32.xlu0 %v2287
        %v2289 = vpop.xlane.xlu0 %2288
        %v2290 = vsel %vm2262, %v2136, -inf
        %2291 = vmax.xlane.f32.xlu0 %v2290
        %v2292 = vpop.xlane.xlu0 %2291
        %v2293 = vsel %vm2262, %v2174, -inf
        %2294 = vmax.xlane.f32.xlu0 %v2293
        %v2295 = vpop.xlane.xlu0 %2294
        %v2296 = vsel %vm2262, %v2177, -inf
        %2297 = vmax.xlane.f32.xlu0 %v2296
        %v2298 = vpop.xlane.xlu0 %2297
        %v2299 = vsel %vm2262, %v2215, -inf
        %2300 = vmax.xlane.f32.xlu0 %v2299
        %v2301 = vpop.xlane.xlu0 %2300
        %v2302 = vsel %vm2262, %v2218, -inf
        %2303 = vmax.xlane.f32.xlu0 %v2302
        %v2304 = vpop.xlane.xlu0 %2303
        %v2305 = vsel %vm2262, %v2256, -inf
        %2306 = vmax.xlane.f32.xlu0 %v2305
        %v2307 = vpop.xlane.xlu0 %2306
        %v2308 = vsel %vm2262, %v2259, -inf
        %2309 = vmax.xlane.f32.xlu0 %v2308
        %v2310 = vpop.xlane.xlu0 %2309
        %v2311 = vsub.f32 %v1969, %v2265
        %v2312 = vsub.f32 %v1972, %v2268
        %v2313 = vsub.f32 %v2010, %v2271
        %v2314 = vsub.f32 %v2013, %v2274
        %v2315 = vsub.f32 %v2051, %v2277
        %v2316 = vsub.f32 %v2054, %v2280
        %v2317 = vsub.f32 %v2092, %v2283
        %v2318 = vsub.f32 %v2095, %v2286
        %v2319 = vsub.f32 %v2133, %v2289
        %v2320 = vsub.f32 %v2136, %v2292
        %v2321 = vsub.f32 %v2174, %v2295
        %v2322 = vsub.f32 %v2177, %v2298
        %v2323 = vsub.f32 %v2215, %v2301
        %v2324 = vsub.f32 %v2218, %v2304
        %v2325 = vsub.f32 %v2256, %v2307
        %v2326 = vsub.f32 %v2259, %v2310
        %v2327 = vmul.f32 %v2311, 1.442695
        %v2328 = vpow.pop %v2327
        %v2329 = vmul.f32 %v2312, 1.442695
        %v2330 = vpow.pop %v2329
        %v2331 = vmul.f32 %v2313, 1.442695
        %v2332 = vpow.pop %v2331
        %v2333 = vmul.f32 %v2314, 1.442695
        %v2334 = vpow.pop %v2333
        %v2335 = vmul.f32 %v2315, 1.442695
        %v2336 = vpow.pop %v2335
        %v2337 = vmul.f32 %v2316, 1.442695
        %v2338 = vpow.pop %v2337
        %v2339 = vmul.f32 %v2317, 1.442695
        %v2340 = vpow.pop %v2339
        %v2341 = vmul.f32 %v2318, 1.442695
        %v2342 = vpow.pop %v2341
        %v2343 = vmul.f32 %v2319, 1.442695
        %v2344 = vpow.pop %v2343
        %v2345 = vmul.f32 %v2320, 1.442695
        %v2346 = vpow.pop %v2345
        %v2347 = vmul.f32 %v2321, 1.442695
        %v2348 = vpow.pop %v2347
        %v2349 = vmul.f32 %v2322, 1.442695
        %v2350 = vpow.pop %v2349
        %v2351 = vmul.f32 %v2323, 1.442695
        %v2352 = vpow.pop %v2351
        %v2353 = vmul.f32 %v2324, 1.442695
        %v2354 = vpow.pop %v2353
        %v2355 = vmul.f32 %v2325, 1.442695
        %v2356 = vpow.pop %v2355
        %v2357 = vmul.f32 %v2326, 1.442695
        %v2358 = vpow.pop %v2357
        %v2359 = vsel %vm2262, %v2328, 0.0
        %2360 = vadd.xlane.f32.xlu0 %v2359
        %v2361 = vpop.xlane.xlu0 %2360
        %v2362 = vsel %vm2262, %v2330, 0.0
        %2363 = vadd.xlane.f32.xlu0 %v2362
        %v2364 = vpop.xlane.xlu0 %2363
        %v2365 = vsel %vm2262, %v2332, 0.0
        %2366 = vadd.xlane.f32.xlu0 %v2365
        %v2367 = vpop.xlane.xlu0 %2366
        %v2368 = vsel %vm2262, %v2334, 0.0
        %2369 = vadd.xlane.f32.xlu0 %v2368
        %v2370 = vpop.xlane.xlu0 %2369
        %v2371 = vsel %vm2262, %v2336, 0.0
        %2372 = vadd.xlane.f32.xlu0 %v2371
        %v2373 = vpop.xlane.xlu0 %2372
        %v2374 = vsel %vm2262, %v2338, 0.0
        %2375 = vadd.xlane.f32.xlu0 %v2374
        %v2376 = vpop.xlane.xlu0 %2375
        %v2377 = vsel %vm2262, %v2340, 0.0
        %2378 = vadd.xlane.f32.xlu0 %v2377
        %v2379 = vpop.xlane.xlu0 %2378
        %v2380 = vsel %vm2262, %v2342, 0.0
        %2381 = vadd.xlane.f32.xlu0 %v2380
        %v2382 = vpop.xlane.xlu0 %2381
        %v2383 = vsel %vm2262, %v2344, 0.0
        %2384 = vadd.xlane.f32.xlu0 %v2383
        %v2385 = vpop.xlane.xlu0 %2384
        %v2386 = vsel %vm2262, %v2346, 0.0
        %2387 = vadd.xlane.f32.xlu0 %v2386
        %v2388 = vpop.xlane.xlu0 %2387
        %v2389 = vsel %vm2262, %v2348, 0.0
        %2390 = vadd.xlane.f32.xlu0 %v2389
        %v2391 = vpop.xlane.xlu0 %2390
        %v2392 = vsel %vm2262, %v2350, 0.0
        %2393 = vadd.xlane.f32.xlu0 %v2392
        %v2394 = vpop.xlane.xlu0 %2393
        %v2395 = vsel %vm2262, %v2352, 0.0
        %2396 = vadd.xlane.f32.xlu0 %v2395
        %v2397 = vpop.xlane.xlu0 %2396
        %v2398 = vsel %vm2262, %v2354, 0.0
        %2399 = vadd.xlane.f32.xlu0 %v2398
        %v2400 = vpop.xlane.xlu0 %2399
        %v2401 = vsel %vm2262, %v2356, 0.0
        %2402 = vadd.xlane.f32.xlu0 %v2401
        %v2403 = vpop.xlane.xlu0 %2402
        %v2404 = vsel %vm2262, %v2358, 0.0
        %2405 = vadd.xlane.f32.xlu0 %v2404
        %v2406 = vpop.xlane.xlu0 %2405
        %v2407 = vrcp.pop %v2361
        %v2408 = vrcp.pop %v2364
        %v2409 = vrcp.pop %v2367
        %v2410 = vrcp.pop %v2370
        %v2411 = vrcp.pop %v2373
        %v2412 = vrcp.pop %v2376
        %v2413 = vrcp.pop %v2379
        %v2414 = vrcp.pop %v2382
        %v2415 = vrcp.pop %v2385
        %v2416 = vrcp.pop %v2388
        %v2417 = vrcp.pop %v2391
        %v2418 = vrcp.pop %v2394
        %v2419 = vrcp.pop %v2397
        %v2420 = vrcp.pop %v2400
        %v2421 = vrcp.pop %v2403
        %v2422 = vrcp.pop %v2406
        %v2423 = vmul.f32 %v2328, %v2407
        %v2424 = vmul.f32 %v2330, %v2408
        %v2425 = vmul.f32 %v2332, %v2409
        %v2426 = vmul.f32 %v2334, %v2410
        %v2427 = vmul.f32 %v2336, %v2411
        %v2428 = vmul.f32 %v2338, %v2412
        %v2429 = vmul.f32 %v2340, %v2413
        %v2430 = vmul.f32 %v2342, %v2414
        %v2431 = vmul.f32 %v2344, %v2415
        %v2432 = vmul.f32 %v2346, %v2416
        %v2433 = vmul.f32 %v2348, %v2417
        %v2434 = vmul.f32 %v2350, %v2418
        %v2435 = vmul.f32 %v2352, %v2419
        %v2436 = vmul.f32 %v2354, %v2420
        %v2437 = vmul.f32 %v2356, %v2421
        %v2438 = vmul.f32 %v2358, %v2422
        %v2439 = vpack.c.bf16 %v2424, %v2423
        %v2440 = vpack.c.bf16 %v2426, %v2425
        %v2441 = vpack.c.bf16 %v2428, %v2427
        %v2442 = vpack.c.bf16 %v2430, %v2429
        %v2443 = vpack.c.bf16 %v2432, %v2431
        %v2444 = vpack.c.bf16 %v2434, %v2433
        %v2445 = vpack.c.bf16 %v2436, %v2435
        %v2446 = vpack.c.bf16 %v2438, %v2437
        %v2448 = vsel %vm2262, %v2439, 0
        %2450 = vmatprep.subr.bf16.mxu0 0
        %2451 = vmatpush1.bf16.msra.mxu0 %v1890
        %2452 = vmatprep.subr.bf16.mxu0 0
        %2453 = vmatpush1.bf16.msra.mxu0 0
        %2454 = vmatprep.subr.bf16.mxu0 0
        %2455 = vmatpush1.bf16.msra.mxu0 0
        %2456 = vmatprep.subr.bf16.mxu0 0
        %2457 = vmatpush1.bf16.msra.mxu0 0
        %2458 = vmatprep.subr.bf16.mxu0 0
        %2459 = vmatpush1.bf16.msra.mxu0 0
        %2460 = vmatprep.subr.bf16.mxu0 0
        %2461 = vmatpush1.bf16.msra.mxu0 0
        %2462 = vmatprep.subr.bf16.mxu0 0
        %2463 = vmatpush1.bf16.msra.mxu0 0
        %2464 = vmatprep.subr.bf16.mxu0 0
        %2465 = vmatpush1.bf16.msra.mxu0 0
        %2466 = vmatprep.subr.bf16.mxu0 0
        %2467 = vmatpush1.bf16.msra.mxu0 0
        %2468 = vmatprep.subr.bf16.mxu0 0
        %2469 = vmatpush1.bf16.msra.mxu0 0
        %2470 = vmatprep.subr.bf16.mxu0 0
        %2471 = vmatpush1.bf16.msra.mxu0 0
        %2472 = vmatprep.subr.bf16.mxu0 0
        %2473 = vmatpush1.bf16.msra.mxu0 0
        %2474 = vmatprep.subr.bf16.mxu0 0
        %2475 = vmatpush1.bf16.msra.mxu0 0
        %2476 = vmatprep.subr.bf16.mxu0 0
        %2477 = vmatpush1.bf16.msra.mxu0 0
        %2478 = vmatprep.subr.bf16.mxu0 0
        %2479 = vmatpush1.bf16.msra.mxu0 0
        %2480 = vmatprep.subr.bf16.mxu0 0
        %2481 = vmatpush1.bf16.msra.mxu0 0
        %2482 = vmatprep.mubr.bf16.mxu0 0
        %2483 = vmatmul.mubr.bf16.gmra.mrb[0].mxu0 %v2448
        %v2484 = vpop.f32.mrb[0].mxu0
        %v2485 = vadd.f32 0.0, %v2484
        %v2486 = vpop.f32.mrb[0].mxu0
        %v2487 = vpop.f32.mrb[0].mxu0
        %v2488 = vadd.f32 0.0, %v2487
        %v2489 = vpop.f32.mrb[0].mxu0
        %2490 = vdwg.mxu0
        %v2492 = vsel %vm2262, %v2440, 0
        %2494 = vmatprep.subr.bf16.mxu0 0
        %2495 = vmatpush1.bf16.msra.mxu0 %v1896
        %2496 = vmatprep.subr.bf16.mxu0 0
        %2497 = vmatpush1.bf16.msra.mxu0 0
        %2498 = vmatprep.subr.bf16.mxu0 0
        %2499 = vmatpush1.bf16.msra.mxu0 0
        %2500 = vmatprep.subr.bf16.mxu0 0
        %2501 = vmatpush1.bf16.msra.mxu0 0
        %2502 = vmatprep.subr.bf16.mxu0 0
        %2503 = vmatpush1.bf16.msra.mxu0 0
        %2504 = vmatprep.subr.bf16.mxu0 0
        %2505 = vmatpush1.bf16.msra.mxu0 0
        %2506 = vmatprep.subr.bf16.mxu0 0
        %2507 = vmatpush1.bf16.msra.mxu0 0
        %2508 = vmatprep.subr.bf16.mxu0 0
        %2509 = vmatpush1.bf16.msra.mxu0 0
        %2510 = vmatprep.subr.bf16.mxu0 0
        %2511 = vmatpush1.bf16.msra.mxu0 0
        %2512 = vmatprep.subr.bf16.mxu0 0
        %2513 = vmatpush1.bf16.msra.mxu0 0
        %2514 = vmatprep.subr.bf16.mxu0 0
        %2515 = vmatpush1.bf16.msra.mxu0 0
        %2516 = vmatprep.subr.bf16.mxu0 0
        %2517 = vmatpush1.bf16.msra.mxu0 0
        %2518 = vmatprep.subr.bf16.mxu0 0
        %2519 = vmatpush1.bf16.msra.mxu0 0
        %2520 = vmatprep.subr.bf16.mxu0 0
        %2521 = vmatpush1.bf16.msra.mxu0 0
        %2522 = vmatprep.subr.bf16.mxu0 0
        %2523 = vmatpush1.bf16.msra.mxu0 0
        %2524 = vmatprep.subr.bf16.mxu0 0
        %2525 = vmatpush1.bf16.msra.mxu0 0
        %2526 = vmatprep.mubr.bf16.mxu0 0
        %2527 = vmatmul.mubr.bf16.gmra.mrb[0].mxu0 %v2492
        %v2528 = vpop.f32.mrb[0].mxu0
        %v2529 = vadd.f32 0.0, %v2528
        %v2530 = vpop.f32.mrb[0].mxu0
        %v2531 = vpop.f32.mrb[0].mxu0
        %v2532 = vadd.f32 0.0, %v2531
        %v2533 = vpop.f32.mrb[0].mxu0
        %2534 = vdwg.mxu0
        %v2536 = vsel %vm2262, %v2441, 0
        %2538 = vmatprep.subr.bf16.mxu0 0
        %2539 = vmatpush1.bf16.msra.mxu0 %v1902
        %2540 = vmatprep.subr.bf16.mxu0 0
        %2541 = vmatpush1.bf16.msra.mxu0 0
        %2542 = vmatprep.subr.bf16.mxu0 0
        %2543 = vmatpush1.bf16.msra.mxu0 0
        %2544 = vmatprep.subr.bf16.mxu0 0
        %2545 = vmatpush1.bf16.msra.mxu0 0
        %2546 = vmatprep.subr.bf16.mxu0 0
        %2547 = vmatpush1.bf16.msra.mxu0 0
        %2548 = vmatprep.subr.bf16.mxu0 0
        %2549 = vmatpush1.bf16.msra.mxu0 0
        %2550 = vmatprep.subr.bf16.mxu0 0
        %2551 = vmatpush1.bf16.msra.mxu0 0
        %2552 = vmatprep.subr.bf16.mxu0 0
        %2553 = vmatpush1.bf16.msra.mxu0 0
        %2554 = vmatprep.subr.bf16.mxu0 0
        %2555 = vmatpush1.bf16.msra.mxu0 0
        %2556 = vmatprep.subr.bf16.mxu0 0
        %2557 = vmatpush1.bf16.msra.mxu0 0
        %2558 = vmatprep.subr.bf16.mxu0 0
        %2559 = vmatpush1.bf16.msra.mxu0 0
        %2560 = vmatprep.subr.bf16.mxu0 0
        %2561 = vmatpush1.bf16.msra.mxu0 0
        %2562 = vmatprep.subr.bf16.mxu0 0
        %2563 = vmatpush1.bf16.msra.mxu0 0
        %2564 = vmatprep.subr.bf16.mxu0 0
        %2565 = vmatpush1.bf16.msra.mxu0 0
        %2566 = vmatprep.subr.bf16.mxu0 0
        %2567 = vmatpush1.bf16.msra.mxu0 0
        %2568 = vmatprep.subr.bf16.mxu0 0
        %2569 = vmatpush1.bf16.msra.mxu0 0
        %2570 = vmatprep.mubr.bf16.mxu0 0
        %2571 = vmatmul.mubr.bf16.gmra.mrb[0].mxu0 %v2536
        %v2572 = vpop.f32.mrb[0].mxu0
        %v2573 = vadd.f32 0.0, %v2572
        %v2574 = vpop.f32.mrb[0].mxu0
        %v2575 = vpop.f32.mrb[0].mxu0
        %v2576 = vadd.f32 0.0, %v2575
        %v2577 = vpop.f32.mrb[0].mxu0
        %2578 = vdwg.mxu0
        %v2580 = vsel %vm2262, %v2442, 0
        %2582 = vmatprep.subr.bf16.mxu0 0
        %2583 = vmatpush1.bf16.msra.mxu0 %v1908
        %2584 = vmatprep.subr.bf16.mxu0 0
        %2585 = vmatpush1.bf16.msra.mxu0 0
        %2586 = vmatprep.subr.bf16.mxu0 0
        %2587 = vmatpush1.bf16.msra.mxu0 0
        %2588 = vmatprep.subr.bf16.mxu0 0
        %2589 = vmatpush1.bf16.msra.mxu0 0
        %2590 = vmatprep.subr.bf16.mxu0 0
        %2591 = vmatpush1.bf16.msra.mxu0 0
        %2592 = vmatprep.subr.bf16.mxu0 0
        %2593 = vmatpush1.bf16.msra.mxu0 0
        %2594 = vmatprep.subr.bf16.mxu0 0
        %2595 = vmatpush1.bf16.msra.mxu0 0
        %2596 = vmatprep.subr.bf16.mxu0 0
        %2597 = vmatpush1.bf16.msra.mxu0 0
        %2598 = vmatprep.subr.bf16.mxu0 0
        %2599 = vmatpush1.bf16.msra.mxu0 0
        %2600 = vmatprep.subr.bf16.mxu0 0
        %2601 = vmatpush1.bf16.msra.mxu0 0
        %2602 = vmatprep.subr.bf16.mxu0 0
        %2603 = vmatpush1.bf16.msra.mxu0 0
        %2604 = vmatprep.subr.bf16.mxu0 0
        %2605 = vmatpush1.bf16.msra.mxu0 0
        %2606 = vmatprep.subr.bf16.mxu0 0
        %2607 = vmatpush1.bf16.msra.mxu0 0
        %2608 = vmatprep.subr.bf16.mxu0 0
        %2609 = vmatpush1.bf16.msra.mxu0 0
        %2610 = vmatprep.subr.bf16.mxu0 0
        %2611 = vmatpush1.bf16.msra.mxu0 0
        %2612 = vmatprep.subr.bf16.mxu0 0
        %2613 = vmatpush1.bf16.msra.mxu0 0
        %2614 = vmatprep.mubr.bf16.mxu0 0
        %2615 = vmatmul.mubr.bf16.gmra.mrb[0].mxu0 %v2580
        %v2616 = vpop.f32.mrb[0].mxu0
        %v2617 = vadd.f32 0.0, %v2616
        %v2618 = vpop.f32.mrb[0].mxu0
        %v2619 = vpop.f32.mrb[0].mxu0
        %v2620 = vadd.f32 0.0, %v2619
        %v2621 = vpop.f32.mrb[0].mxu0
        %2622 = vdwg.mxu0
        %v2624 = vsel %vm2262, %v2443, 0
        %2626 = vmatprep.subr.bf16.mxu0 0
        %2627 = vmatpush1.bf16.msra.mxu0 %v1914
        %2628 = vmatprep.subr.bf16.mxu0 0
        %2629 = vmatpush1.bf16.msra.mxu0 0
        %2630 = vmatprep.subr.bf16.mxu0 0
        %2631 = vmatpush1.bf16.msra.mxu0 0
        %2632 = vmatprep.subr.bf16.mxu0 0
        %2633 = vmatpush1.bf16.msra.mxu0 0
        %2634 = vmatprep.subr.bf16.mxu0 0
        %2635 = vmatpush1.bf16.msra.mxu0 0
        %2636 = vmatprep.subr.bf16.mxu0 0
        %2637 = vmatpush1.bf16.msra.mxu0 0
        %2638 = vmatprep.subr.bf16.mxu0 0
        %2639 = vmatpush1.bf16.msra.mxu0 0
        %2640 = vmatprep.subr.bf16.mxu0 0
        %2641 = vmatpush1.bf16.msra.mxu0 0
        %2642 = vmatprep.subr.bf16.mxu0 0
        %2643 = vmatpush1.bf16.msra.mxu0 0
        %2644 = vmatprep.subr.bf16.mxu0 0
        %2645 = vmatpush1.bf16.msra.mxu0 0
        %2646 = vmatprep.subr.bf16.mxu0 0
        %2647 = vmatpush1.bf16.msra.mxu0 0
        %2648 = vmatprep.subr.bf16.mxu0 0
        %2649 = vmatpush1.bf16.msra.mxu0 0
        %2650 = vmatprep.subr.bf16.mxu0 0
        %2651 = vmatpush1.bf16.msra.mxu0 0
        %2652 = vmatprep.subr.bf16.mxu0 0
        %2653 = vmatpush1.bf16.msra.mxu0 0
        %2654 = vmatprep.subr.bf16.mxu0 0
        %2655 = vmatpush1.bf16.msra.mxu0 0
        %2656 = vmatprep.subr.bf16.mxu0 0
        %2657 = vmatpush1.bf16.msra.mxu0 0
        %2658 = vmatprep.mubr.bf16.mxu0 0
        %2659 = vmatmul.mubr.bf16.gmra.mrb[0].mxu0 %v2624
        %v2660 = vpop.f32.mrb[0].mxu0
        %v2661 = vadd.f32 0.0, %v2660
        %v2662 = vpop.f32.mrb[0].mxu0
        %v2663 = vpop.f32.mrb[0].mxu0
        %v2664 = vadd.f32 0.0, %v2663
        %v2665 = vpop.f32.mrb[0].mxu0
        %2666 = vdwg.mxu0
        %v2668 = vsel %vm2262, %v2444, 0
        %2670 = vmatprep.subr.bf16.mxu0 0
        %2671 = vmatpush1.bf16.msra.mxu0 %v1920
        %2672 = vmatprep.subr.bf16.mxu0 0
        %2673 = vmatpush1.bf16.msra.mxu0 0
        %2674 = vmatprep.subr.bf16.mxu0 0
        %2675 = vmatpush1.bf16.msra.mxu0 0
        %2676 = vmatprep.subr.bf16.mxu0 0
        %2677 = vmatpush1.bf16.msra.mxu0 0
        %2678 = vmatprep.subr.bf16.mxu0 0
        %2679 = vmatpush1.bf16.msra.mxu0 0
        %2680 = vmatprep.subr.bf16.mxu0 0
        %2681 = vmatpush1.bf16.msra.mxu0 0
        %2682 = vmatprep.subr.bf16.mxu0 0
        %2683 = vmatpush1.bf16.msra.mxu0 0
        %2684 = vmatprep.subr.bf16.mxu0 0
        %2685 = vmatpush1.bf16.msra.mxu0 0
        %2686 = vmatprep.subr.bf16.mxu0 0
        %2687 = vmatpush1.bf16.msra.mxu0 0
        %2688 = vmatprep.subr.bf16.mxu0 0
        %2689 = vmatpush1.bf16.msra.mxu0 0
        %2690 = vmatprep.subr.bf16.mxu0 0
        %2691 = vmatpush1.bf16.msra.mxu0 0
        %2692 = vmatprep.subr.bf16.mxu0 0
        %2693 = vmatpush1.bf16.msra.mxu0 0
        %2694 = vmatprep.subr.bf16.mxu0 0
        %2695 = vmatpush1.bf16.msra.mxu0 0
        %2696 = vmatprep.subr.bf16.mxu0 0
        %2697 = vmatpush1.bf16.msra.mxu0 0
        %2698 = vmatprep.subr.bf16.mxu0 0
        %2699 = vmatpush1.bf16.msra.mxu0 0
        %2700 = vmatprep.subr.bf16.mxu0 0
        %2701 = vmatpush1.bf16.msra.mxu0 0
        %2702 = vmatprep.mubr.bf16.mxu0 0
        %2703 = vmatmul.mubr.bf16.gmra.mrb[0].mxu0 %v2668
        %v2704 = vpop.f32.mrb[0].mxu0
        %v2705 = vadd.f32 0.0, %v2704
        %v2706 = vpop.f32.mrb[0].mxu0
        %v2707 = vpop.f32.mrb[0].mxu0
        %v2708 = vadd.f32 0.0, %v2707
        %v2709 = vpop.f32.mrb[0].mxu0
        %2710 = vdwg.mxu0
        %v2712 = vsel %vm2262, %v2445, 0
        %2714 = vmatprep.subr.bf16.mxu0 0
        %2715 = vmatpush1.bf16.msra.mxu0 %v1926
        %2716 = vmatprep.subr.bf16.mxu0 0
        %2717 = vmatpush1.bf16.msra.mxu0 0
        %2718 = vmatprep.subr.bf16.mxu0 0
        %2719 = vmatpush1.bf16.msra.mxu0 0
        %2720 = vmatprep.subr.bf16.mxu0 0
        %2721 = vmatpush1.bf16.msra.mxu0 0
        %2722 = vmatprep.subr.bf16.mxu0 0
        %2723 = vmatpush1.bf16.msra.mxu0 0
        %2724 = vmatprep.subr.bf16.mxu0 0
        %2725 = vmatpush1.bf16.msra.mxu0 0
        %2726 = vmatprep.subr.bf16.mxu0 0
        %2727 = vmatpush1.bf16.msra.mxu0 0
        %2728 = vmatprep.subr.bf16.mxu0 0
        %2729 = vmatpush1.bf16.msra.mxu0 0
        %2730 = vmatprep.subr.bf16.mxu0 0
        %2731 = vmatpush1.bf16.msra.mxu0 0
        %2732 = vmatprep.subr.bf16.mxu0 0
        %2733 = vmatpush1.bf16.msra.mxu0 0
        %2734 = vmatprep.subr.bf16.mxu0 0
        %2735 = vmatpush1.bf16.msra.mxu0 0
        %2736 = vmatprep.subr.bf16.mxu0 0
        %2737 = vmatpush1.bf16.msra.mxu0 0
        %2738 = vmatprep.subr.bf16.mxu0 0
        %2739 = vmatpush1.bf16.msra.mxu0 0
        %2740 = vmatprep.subr.bf16.mxu0 0
        %2741 = vmatpush1.bf16.msra.mxu0 0
        %2742 = vmatprep.subr.bf16.mxu0 0
        %2743 = vmatpush1.bf16.msra.mxu0 0
        %2744 = vmatprep.subr.bf16.mxu0 0
        %2745 = vmatpush1.bf16.msra.mxu0 0
        %2746 = vmatprep.mubr.bf16.mxu0 0
        %2747 = vmatmul.mubr.bf16.gmra.mrb[0].mxu0 %v2712
        %v2748 = vpop.f32.mrb[0].mxu0
        %v2749 = vadd.f32 0.0, %v2748
        %v2750 = vpop.f32.mrb[0].mxu0
        %v2751 = vpop.f32.mrb[0].mxu0
        %v2752 = vadd.f32 0.0, %v2751
        %v2753 = vpop.f32.mrb[0].mxu0
        %2754 = vdwg.mxu0
        %v2756 = vsel %vm2262, %v2446, 0
        %2758 = vmatprep.subr.bf16.mxu0 0
        %2759 = vmatpush1.bf16.msra.mxu0 %v1932
        %2760 = vmatprep.subr.bf16.mxu0 0
        %2761 = vmatpush1.bf16.msra.mxu0 0
        %2762 = vmatprep.subr.bf16.mxu0 0
        %2763 = vmatpush1.bf16.msra.mxu0 0
        %2764 = vmatprep.subr.bf16.mxu0 0
        %2765 = vmatpush1.bf16.msra.mxu0 0
        %2766 = vmatprep.subr.bf16.mxu0 0
        %2767 = vmatpush1.bf16.msra.mxu0 0
        %2768 = vmatprep.subr.bf16.mxu0 0
        %2769 = vmatpush1.bf16.msra.mxu0 0
        %2770 = vmatprep.subr.bf16.mxu0 0
        %2771 = vmatpush1.bf16.msra.mxu0 0
        %2772 = vmatprep.subr.bf16.mxu0 0
        %2773 = vmatpush1.bf16.msra.mxu0 0
        %2774 = vmatprep.subr.bf16.mxu0 0
        %2775 = vmatpush1.bf16.msra.mxu0 0
        %2776 = vmatprep.subr.bf16.mxu0 0
        %2777 = vmatpush1.bf16.msra.mxu0 0
        %2778 = vmatprep.subr.bf16.mxu0 0
        %2779 = vmatpush1.bf16.msra.mxu0 0
        %2780 = vmatprep.subr.bf16.mxu0 0
        %2781 = vmatpush1.bf16.msra.mxu0 0
        %2782 = vmatprep.subr.bf16.mxu0 0
        %2783 = vmatpush1.bf16.msra.mxu0 0
        %2784 = vmatprep.subr.bf16.mxu0 0
        %2785 = vmatpush1.bf16.msra.mxu0 0
        %2786 = vmatprep.subr.bf16.mxu0 0
        %2787 = vmatpush1.bf16.msra.mxu0 0
        %2788 = vmatprep.subr.bf16.mxu0 0
        %2789 = vmatpush1.bf16.msra.mxu0 0
        %2790 = vmatprep.mubr.bf16.mxu0 0
        %2791 = vmatmul.mubr.bf16.gmra.mrb[0].mxu0 %v2756
        %v2792 = vpop.f32.mrb[0].mxu0
        %v2793 = vadd.f32 0.0, %v2792
        %v2794 = vpop.f32.mrb[0].mxu0
        %v2795 = vpop.f32.mrb[0].mxu0
        %v2796 = vadd.f32 0.0, %v2795
        %v2797 = vpop.f32.mrb[0].mxu0
        %2798 = vdwg.mxu0
        %v2799 = vpack.c.bf16 %v2488, %v2485
        %v2800 = vpack.c.bf16 %v2532, %v2529
        %v2801 = vpack.c.bf16 %v2576, %v2573
        %v2802 = vpack.c.bf16 %v2620, %v2617
        %v2803 = vpack.c.bf16 %v2664, %v2661
        %v2804 = vpack.c.bf16 %v2708, %v2705
        %v2805 = vpack.c.bf16 %v2752, %v2749
        %v2806 = vpack.c.bf16 %v2796, %v2793
        %2807 = vst [vmem:[#allocation2] sm:$0xff] %v2799
        %2808 = vst [vmem:[#allocation2 + $0x10] sm:$0xff] %v2800
        %2809 = vst [vmem:[#allocation2 + $0x20] sm:$0xff] %v2801
        %2810 = vst [vmem:[#allocation2 + $0x30] sm:$0xff] %v2802
        %2811 = vst [vmem:[#allocation2 + $0x40] sm:$0xff] %v2803
        %2812 = vst [vmem:[#allocation2 + $0x50] sm:$0xff] %v2804
        %2813 = vst [vmem:[#allocation2 + $0x60] sm:$0xff] %v2805
        %2814 = vst [vmem:[#allocation2 + $0x70] sm:$0xff] %v2806
        %2815 = vmatprep.subr.bf16.mxu0 0
        %2816 = vmatpush1.bf16.xpose.msra.mxu0 %v1889
        %2817 = vmatprep.subr.bf16.mxu0 0
        %2818 = vmatpush1.bf16.xpose.msra.mxu0 0
        %2819 = vmatprep.subr.bf16.mxu0 0
        %2820 = vmatpush1.bf16.xpose.msra.mxu0 0
        %2821 = vmatprep.subr.bf16.mxu0 0
        %2822 = vmatpush1.bf16.xpose.msra.mxu0 0
        %2823 = vmatprep.subr.bf16.mxu0 0
        %2824 = vmatpush1.bf16.xpose.msra.mxu0 0
        %2825 = vmatprep.subr.bf16.mxu0 0
        %2826 = vmatpush1.bf16.xpose.msra.mxu0 0
        %2827 = vmatprep.subr.bf16.mxu0 0
        %2828 = vmatpush1.bf16.xpose.msra.mxu0 0
        %2829 = vmatprep.subr.bf16.mxu0 0
        %2830 = vmatpush1.bf16.xpose.msra.mxu0 0
        %2831 = vmatprep.subr.bf16.mxu0 0
        %2832 = vmatpush1.bf16.xpose.msra.mxu0 0
        %2833 = vmatprep.subr.bf16.mxu0 0
        %2834 = vmatpush1.bf16.xpose.msra.mxu0 0
        %2835 = vmatprep.subr.bf16.mxu0 0
        %2836 = vmatpush1.bf16.xpose.msra.mxu0 0
        %2837 = vmatprep.subr.bf16.mxu0 0
        %2838 = vmatpush1.bf16.xpose.msra.mxu0 0
        %2839 = vmatprep.subr.bf16.mxu0 0
        %2840 = vmatpush1.bf16.xpose.msra.mxu0 0
        %2841 = vmatprep.subr.bf16.mxu0 0
        %2842 = vmatpush1.bf16.xpose.msra.mxu0 0
        %2843 = vmatprep.subr.bf16.mxu0 0
        %2844 = vmatpush1.bf16.xpose.msra.mxu0 0
        %2845 = vmatprep.subr.bf16.mxu0 0
        %2846 = vmatpush1.bf16.xpose.msra.mxu0 0
        %2847 = vmatprep.mubr.bf16.mxu0 0
        %2848 = vmatmul.mubr.bf16.gmra.mrb[0].mxu0 %v1887
        %v2849 = vpop.f32.mrb[0].mxu0
        %v2850 = vadd.f32 0.0, %v2849
        %v2851 = vpop.f32.mrb[0].mxu0
        %v2852 = vpop.f32.mrb[0].mxu0
        %v2853 = vadd.f32 0.0, %v2852
        %v2854 = vpop.f32.mrb[0].mxu0
        %2855 = vdwg.mxu0
        %2856 = vmatprep.subr.bf16.mxu0 0
        %2857 = vmatpush1.bf16.xpose.msra.mxu0 %v1895
        %2858 = vmatprep.subr.bf16.mxu0 0
        %2859 = vmatpush1.bf16.xpose.msra.mxu0 0
        %2860 = vmatprep.subr.bf16.mxu0 0
        %2861 = vmatpush1.bf16.xpose.msra.mxu0 0
        %2862 = vmatprep.subr.bf16.mxu0 0
        %2863 = vmatpush1.bf16.xpose.msra.mxu0 0
        %2864 = vmatprep.subr.bf16.mxu0 0
        %2865 = vmatpush1.bf16.xpose.msra.mxu0 0
        %2866 = vmatprep.subr.bf16.mxu0 0
        %2867 = vmatpush1.bf16.xpose.msra.mxu0 0
        %2868 = vmatprep.subr.bf16.mxu0 0
        %2869 = vmatpush1.bf16.xpose.msra.mxu0 0
        %2870 = vmatprep.subr.bf16.mxu0 0
        %2871 = vmatpush1.bf16.xpose.msra.mxu0 0
        %2872 = vmatprep.subr.bf16.mxu0 0
        %2873 = vmatpush1.bf16.xpose.msra.mxu0 0
        %2874 = vmatprep.subr.bf16.mxu0 0
        %2875 = vmatpush1.bf16.xpose.msra.mxu0 0
        %2876 = vmatprep.subr.bf16.mxu0 0
        %2877 = vmatpush1.bf16.xpose.msra.mxu0 0
        %2878 = vmatprep.subr.bf16.mxu0 0
        %2879 = vmatpush1.bf16.xpose.msra.mxu0 0
        %2880 = vmatprep.subr.bf16.mxu0 0
        %2881 = vmatpush1.bf16.xpose.msra.mxu0 0
        %2882 = vmatprep.subr.bf16.mxu0 0
        %2883 = vmatpush1.bf16.xpose.msra.mxu0 0
        %2884 = vmatprep.subr.bf16.mxu0 0
        %2885 = vmatpush1.bf16.xpose.msra.mxu0 0
        %2886 = vmatprep.subr.bf16.mxu0 0
        %2887 = vmatpush1.bf16.xpose.msra.mxu0 0
        %2888 = vmatprep.mubr.bf16.mxu0 0
        %2889 = vmatmul.mubr.bf16.gmra.mrb[0].mxu0 %v1893
        %v2890 = vpop.f32.mrb[0].mxu0
        %v2891 = vadd.f32 0.0, %v2890
        %v2892 = vpop.f32.mrb[0].mxu0
        %v2893 = vpop.f32.mrb[0].mxu0
        %v2894 = vadd.f32 0.0, %v2893
        %v2895 = vpop.f32.mrb[0].mxu0
        %2896 = vdwg.mxu0
        %2897 = vmatprep.subr.bf16.mxu0 0
        %2898 = vmatpush1.bf16.xpose.msra.mxu0 %v1901
        %2899 = vmatprep.subr.bf16.mxu0 0
        %2900 = vmatpush1.bf16.xpose.msra.mxu0 0
        %2901 = vmatprep.subr.bf16.mxu0 0
        %2902 = vmatpush1.bf16.xpose.msra.mxu0 0
        %2903 = vmatprep.subr.bf16.mxu0 0
        %2904 = vmatpush1.bf16.xpose.msra.mxu0 0
        %2905 = vmatprep.subr.bf16.mxu0 0
        %2906 = vmatpush1.bf16.xpose.msra.mxu0 0
        %2907 = vmatprep.subr.bf16.mxu0 0
        %2908 = vmatpush1.bf16.xpose.msra.mxu0 0
        %2909 = vmatprep.subr.bf16.mxu0 0
        %2910 = vmatpush1.bf16.xpose.msra.mxu0 0
        %2911 = vmatprep.subr.bf16.mxu0 0
        %2912 = vmatpush1.bf16.xpose.msra.mxu0 0
        %2913 = vmatprep.subr.bf16.mxu0 0
        %2914 = vmatpush1.bf16.xpose.msra.mxu0 0
        %2915 = vmatprep.subr.bf16.mxu0 0
        %2916 = vmatpush1.bf16.xpose.msra.mxu0 0
        %2917 = vmatprep.subr.bf16.mxu0 0
        %2918 = vmatpush1.bf16.xpose.msra.mxu0 0
        %2919 = vmatprep.subr.bf16.mxu0 0
        %2920 = vmatpush1.bf16.xpose.msra.mxu0 0
        %2921 = vmatprep.subr.bf16.mxu0 0
        %2922 = vmatpush1.bf16.xpose.msra.mxu0 0
        %2923 = vmatprep.subr.bf16.mxu0 0
        %2924 = vmatpush1.bf16.xpose.msra.mxu0 0
        %2925 = vmatprep.subr.bf16.mxu0 0
        %2926 = vmatpush1.bf16.xpose.msra.mxu0 0
        %2927 = vmatprep.subr.bf16.mxu0 0
        %2928 = vmatpush1.bf16.xpose.msra.mxu0 0
        %2929 = vmatprep.mubr.bf16.mxu0 0
        %2930 = vmatmul.mubr.bf16.gmra.mrb[0].mxu0 %v1899
        %v2931 = vpop.f32.mrb[0].mxu0
        %v2932 = vadd.f32 0.0, %v2931
        %v2933 = vpop.f32.mrb[0].mxu0
        %v2934 = vpop.f32.mrb[0].mxu0
        %v2935 = vadd.f32 0.0, %v2934
        %v2936 = vpop.f32.mrb[0].mxu0
        %2937 = vdwg.mxu0
        %2938 = vmatprep.subr.bf16.mxu0 0
        %2939 = vmatpush1.bf16.xpose.msra.mxu0 %v1907
        %2940 = vmatprep.subr.bf16.mxu0 0
        %2941 = vmatpush1.bf16.xpose.msra.mxu0 0
        %2942 = vmatprep.subr.bf16.mxu0 0
        %2943 = vmatpush1.bf16.xpose.msra.mxu0 0
        %2944 = vmatprep.subr.bf16.mxu0 0
        %2945 = vmatpush1.bf16.xpose.msra.mxu0 0
        %2946 = vmatprep.subr.bf16.mxu0 0
        %2947 = vmatpush1.bf16.xpose.msra.mxu0 0
        %2948 = vmatprep.subr.bf16.mxu0 0
        %2949 = vmatpush1.bf16.xpose.msra.mxu0 0
        %2950 = vmatprep.subr.bf16.mxu0 0
        %2951 = vmatpush1.bf16.xpose.msra.mxu0 0
        %2952 = vmatprep.subr.bf16.mxu0 0
        %2953 = vmatpush1.bf16.xpose.msra.mxu0 0
        %2954 = vmatprep.subr.bf16.mxu0 0
        %2955 = vmatpush1.bf16.xpose.msra.mxu0 0
        %2956 = vmatprep.subr.bf16.mxu0 0
        %2957 = vmatpush1.bf16.xpose.msra.mxu0 0
        %2958 = vmatprep.subr.bf16.mxu0 0
        %2959 = vmatpush1.bf16.xpose.msra.mxu0 0
        %2960 = vmatprep.subr.bf16.mxu0 0
        %2961 = vmatpush1.bf16.xpose.msra.mxu0 0
        %2962 = vmatprep.subr.bf16.mxu0 0
        %2963 = vmatpush1.bf16.xpose.msra.mxu0 0
        %2964 = vmatprep.subr.bf16.mxu0 0
        %2965 = vmatpush1.bf16.xpose.msra.mxu0 0
        %2966 = vmatprep.subr.bf16.mxu0 0
        %2967 = vmatpush1.bf16.xpose.msra.mxu0 0
        %2968 = vmatprep.subr.bf16.mxu0 0
        %2969 = vmatpush1.bf16.xpose.msra.mxu0 0
        %2970 = vmatprep.mubr.bf16.mxu0 0
        %2971 = vmatmul.mubr.bf16.gmra.mrb[0].mxu0 %v1905
        %v2972 = vpop.f32.mrb[0].mxu0
        %v2973 = vadd.f32 0.0, %v2972
        %v2974 = vpop.f32.mrb[0].mxu0
        %v2975 = vpop.f32.mrb[0].mxu0
        %v2976 = vadd.f32 0.0, %v2975
        %v2977 = vpop.f32.mrb[0].mxu0
        %2978 = vdwg.mxu0
        %2979 = vmatprep.subr.bf16.mxu0 0
        %2980 = vmatpush1.bf16.xpose.msra.mxu0 %v1913
        %2981 = vmatprep.subr.bf16.mxu0 0
        %2982 = vmatpush1.bf16.xpose.msra.mxu0 0
        %2983 = vmatprep.subr.bf16.mxu0 0
        %2984 = vmatpush1.bf16.xpose.msra.mxu0 0
        %2985 = vmatprep.subr.bf16.mxu0 0
        %2986 = vmatpush1.bf16.xpose.msra.mxu0 0
        %2987 = vmatprep.subr.bf16.mxu0 0
        %2988 = vmatpush1.bf16.xpose.msra.mxu0 0
        %2989 = vmatprep.subr.bf16.mxu0 0
        %2990 = vmatpush1.bf16.xpose.msra.mxu0 0
        %2991 = vmatprep.subr.bf16.mxu0 0
        %2992 = vmatpush1.bf16.xpose.msra.mxu0 0
        %2993 = vmatprep.subr.bf16.mxu0 0
        %2994 = vmatpush1.bf16.xpose.msra.mxu0 0
        %2995 = vmatprep.subr.bf16.mxu0 0
        %2996 = vmatpush1.bf16.xpose.msra.mxu0 0
        %2997 = vmatprep.subr.bf16.mxu0 0
        %2998 = vmatpush1.bf16.xpose.msra.mxu0 0
        %2999 = vmatprep.subr.bf16.mxu0 0
        %3000 = vmatpush1.bf16.xpose.msra.mxu0 0
        %3001 = vmatprep.subr.bf16.mxu0 0
        %3002 = vmatpush1.bf16.xpose.msra.mxu0 0
        %3003 = vmatprep.subr.bf16.mxu0 0
        %3004 = vmatpush1.bf16.xpose.msra.mxu0 0
        %3005 = vmatprep.subr.bf16.mxu0 0
        %3006 = vmatpush1.bf16.xpose.msra.mxu0 0
        %3007 = vmatprep.subr.bf16.mxu0 0
        %3008 = vmatpush1.bf16.xpose.msra.mxu0 0
        %3009 = vmatprep.subr.bf16.mxu0 0
        %3010 = vmatpush1.bf16.xpose.msra.mxu0 0
        %3011 = vmatprep.mubr.bf16.mxu0 0
        %3012 = vmatmul.mubr.bf16.gmra.mrb[0].mxu0 %v1911
        %v3013 = vpop.f32.mrb[0].mxu0
        %v3014 = vadd.f32 0.0, %v3013
        %v3015 = vpop.f32.mrb[0].mxu0
        %v3016 = vpop.f32.mrb[0].mxu0
        %v3017 = vadd.f32 0.0, %v3016
        %v3018 = vpop.f32.mrb[0].mxu0
        %3019 = vdwg.mxu0
        %3020 = vmatprep.subr.bf16.mxu0 0
        %3021 = vmatpush1.bf16.xpose.msra.mxu0 %v1919
        %3022 = vmatprep.subr.bf16.mxu0 0
        %3023 = vmatpush1.bf16.xpose.msra.mxu0 0
        %3024 = vmatprep.subr.bf16.mxu0 0
        %3025 = vmatpush1.bf16.xpose.msra.mxu0 0
        %3026 = vmatprep.subr.bf16.mxu0 0
        %3027 = vmatpush1.bf16.xpose.msra.mxu0 0
        %3028 = vmatprep.subr.bf16.mxu0 0
        %3029 = vmatpush1.bf16.xpose.msra.mxu0 0
        %3030 = vmatprep.subr.bf16.mxu0 0
        %3031 = vmatpush1.bf16.xpose.msra.mxu0 0
        %3032 = vmatprep.subr.bf16.mxu0 0
        %3033 = vmatpush1.bf16.xpose.msra.mxu0 0
        %3034 = vmatprep.subr.bf16.mxu0 0
        %3035 = vmatpush1.bf16.xpose.msra.mxu0 0
        %3036 = vmatprep.subr.bf16.mxu0 0
        %3037 = vmatpush1.bf16.xpose.msra.mxu0 0
        %3038 = vmatprep.subr.bf16.mxu0 0
        %3039 = vmatpush1.bf16.xpose.msra.mxu0 0
        %3040 = vmatprep.subr.bf16.mxu0 0
        %3041 = vmatpush1.bf16.xpose.msra.mxu0 0
        %3042 = vmatprep.subr.bf16.mxu0 0
        %3043 = vmatpush1.bf16.xpose.msra.mxu0 0
        %3044 = vmatprep.subr.bf16.mxu0 0
        %3045 = vmatpush1.bf16.xpose.msra.mxu0 0
        %3046 = vmatprep.subr.bf16.mxu0 0
        %3047 = vmatpush1.bf16.xpose.msra.mxu0 0
        %3048 = vmatprep.subr.bf16.mxu0 0
        %3049 = vmatpush1.bf16.xpose.msra.mxu0 0
        %3050 = vmatprep.subr.bf16.mxu0 0
        %3051 = vmatpush1.bf16.xpose.msra.mxu0 0
        %3052 = vmatprep.mubr.bf16.mxu0 0
        %3053 = vmatmul.mubr.bf16.gmra.mrb[0].mxu0 %v1917
        %v3054 = vpop.f32.mrb[0].mxu0
        %v3055 = vadd.f32 0.0, %v3054
        %v3056 = vpop.f32.mrb[0].mxu0
        %v3057 = vpop.f32.mrb[0].mxu0
        %v3058 = vadd.f32 0.0, %v3057
        %v3059 = vpop.f32.mrb[0].mxu0
        %3060 = vdwg.mxu0
        %3061 = vmatprep.subr.bf16.mxu0 0
        %3062 = vmatpush1.bf16.xpose.msra.mxu0 %v1925
        %3063 = vmatprep.subr.bf16.mxu0 0
        %3064 = vmatpush1.bf16.xpose.msra.mxu0 0
        %3065 = vmatprep.subr.bf16.mxu0 0
        %3066 = vmatpush1.bf16.xpose.msra.mxu0 0
        %3067 = vmatprep.subr.bf16.mxu0 0
        %3068 = vmatpush1.bf16.xpose.msra.mxu0 0
        %3069 = vmatprep.subr.bf16.mxu0 0
        %3070 = vmatpush1.bf16.xpose.msra.mxu0 0
        %3071 = vmatprep.subr.bf16.mxu0 0
        %3072 = vmatpush1.bf16.xpose.msra.mxu0 0
        %3073 = vmatprep.subr.bf16.mxu0 0
        %3074 = vmatpush1.bf16.xpose.msra.mxu0 0
        %3075 = vmatprep.subr.bf16.mxu0 0
        %3076 = vmatpush1.bf16.xpose.msra.mxu0 0
        %3077 = vmatprep.subr.bf16.mxu0 0
        %3078 = vmatpush1.bf16.xpose.msra.mxu0 0
        %3079 = vmatprep.subr.bf16.mxu0 0
        %3080 = vmatpush1.bf16.xpose.msra.mxu0 0
        %3081 = vmatprep.subr.bf16.mxu0 0
        %3082 = vmatpush1.bf16.xpose.msra.mxu0 0
        %3083 = vmatprep.subr.bf16.mxu0 0
        %3084 = vmatpush1.bf16.xpose.msra.mxu0 0
        %3085 = vmatprep.subr.bf16.mxu0 0
        %3086 = vmatpush1.bf16.xpose.msra.mxu0 0
        %3087 = vmatprep.subr.bf16.mxu0 0
        %3088 = vmatpush1.bf16.xpose.msra.mxu0 0
        %3089 = vmatprep.subr.bf16.mxu0 0
        %3090 = vmatpush1.bf16.xpose.msra.mxu0 0
        %3091 = vmatprep.subr.bf16.mxu0 0
        %3092 = vmatpush1.bf16.xpose.msra.mxu0 0
        %3093 = vmatprep.mubr.bf16.mxu0 0
        %3094 = vmatmul.mubr.bf16.gmra.mrb[0].mxu0 %v1923
        %v3095 = vpop.f32.mrb[0].mxu0
        %v3096 = vadd.f32 0.0, %v3095
        %v3097 = vpop.f32.mrb[0].mxu0
        %v3098 = vpop.f32.mrb[0].mxu0
        %v3099 = vadd.f32 0.0, %v3098
        %v3100 = vpop.f32.mrb[0].mxu0
        %3101 = vdwg.mxu0
        %3102 = vmatprep.subr.bf16.mxu0 0
        %3103 = vmatpush1.bf16.xpose.msra.mxu0 %v1931
        %3104 = vmatprep.subr.bf16.mxu0 0
        %3105 = vmatpush1.bf16.xpose.msra.mxu0 0
        %3106 = vmatprep.subr.bf16.mxu0 0
        %3107 = vmatpush1.bf16.xpose.msra.mxu0 0
        %3108 = vmatprep.subr.bf16.mxu0 0
        %3109 = vmatpush1.bf16.xpose.msra.mxu0 0
        %3110 = vmatprep.subr.bf16.mxu0 0
        %3111 = vmatpush1.bf16.xpose.msra.mxu0 0
        %3112 = vmatprep.subr.bf16.mxu0 0
        %3113 = vmatpush1.bf16.xpose.msra.mxu0 0
        %3114 = vmatprep.subr.bf16.mxu0 0
        %3115 = vmatpush1.bf16.xpose.msra.mxu0 0
        %3116 = vmatprep.subr.bf16.mxu0 0
        %3117 = vmatpush1.bf16.xpose.msra.mxu0 0
        %3118 = vmatprep.subr.bf16.mxu0 0
        %3119 = vmatpush1.bf16.xpose.msra.mxu0 0
        %3120 = vmatprep.subr.bf16.mxu0 0
        %3121 = vmatpush1.bf16.xpose.msra.mxu0 0
        %3122 = vmatprep.subr.bf16.mxu0 0
        %3123 = vmatpush1.bf16.xpose.msra.mxu0 0
        %3124 = vmatprep.subr.bf16.mxu0 0
        %3125 = vmatpush1.bf16.xpose.msra.mxu0 0
        %3126 = vmatprep.subr.bf16.mxu0 0
        %3127 = vmatpush1.bf16.xpose.msra.mxu0 0
        %3128 = vmatprep.subr.bf16.mxu0 0
        %3129 = vmatpush1.bf16.xpose.msra.mxu0 0
        %3130 = vmatprep.subr.bf16.mxu0 0
        %3131 = vmatpush1.bf16.xpose.msra.mxu0 0
        %3132 = vmatprep.subr.bf16.mxu0 0
        %3133 = vmatpush1.bf16.xpose.msra.mxu0 0
        %3134 = vmatprep.mubr.bf16.mxu0 0
        %3135 = vmatmul.mubr.bf16.gmra.mrb[0].mxu0 %v1929
        %v3136 = vpop.f32.mrb[0].mxu0
        %v3137 = vadd.f32 0.0, %v3136
        %v3138 = vpop.f32.mrb[0].mxu0
        %v3139 = vpop.f32.mrb[0].mxu0
        %v3140 = vadd.f32 0.0, %v3139
        %v3141 = vpop.f32.mrb[0].mxu0
        %3142 = vdwg.mxu0
        %v3143 = vsel %vm2262, %v2850, -inf
        %3144 = vmax.xlane.f32.xlu0 %v3143
        %v3145 = vpop.xlane.xlu0 %3144
        %v3146 = vsel %vm2262, %v2853, -inf
        %3147 = vmax.xlane.f32.xlu0 %v3146
        %v3148 = vpop.xlane.xlu0 %3147
        %v3149 = vsel %vm2262, %v2891, -inf
        %3150 = vmax.xlane.f32.xlu0 %v3149
        %v3151 = vpop.xlane.xlu0 %3150
        %v3152 = vsel %vm2262, %v2894, -inf
        %3153 = vmax.xlane.f32.xlu0 %v3152
        %v3154 = vpop.xlane.xlu0 %3153
        %v3155 = vsel %vm2262, %v2932, -inf
        %3156 = vmax.xlane.f32.xlu0 %v3155
        %v3157 = vpop.xlane.xlu0 %3156
        %v3158 = vsel %vm2262, %v2935, -inf
        %3159 = vmax.xlane.f32.xlu0 %v3158
        %v3160 = vpop.xlane.xlu0 %3159
        %v3161 = vsel %vm2262, %v2973, -inf
        %3162 = vmax.xlane.f32.xlu0 %v3161
        %v3163 = vpop.xlane.xlu0 %3162
        %v3164 = vsel %vm2262, %v2976, -inf
        %3165 = vmax.xlane.f32.xlu0 %v3164
        %v3166 = vpop.xlane.xlu0 %3165
        %v3167 = vsel %vm2262, %v3014, -inf
        %3168 = vmax.xlane.f32.xlu0 %v3167
        %v3169 = vpop.xlane.xlu0 %3168
        %v3170 = vsel %vm2262, %v3017, -inf
        %3171 = vmax.xlane.f32.xlu0 %v3170
        %v3172 = vpop.xlane.xlu0 %3171
        %v3173 = vsel %vm2262, %v3055, -inf
        %3174 = vmax.xlane.f32.xlu0 %v3173
        %v3175 = vpop.xlane.xlu0 %3174
        %v3176 = vsel %vm2262, %v3058, -inf
        %3177 = vmax.xlane.f32.xlu0 %v3176
        %v3178 = vpop.xlane.xlu0 %3177
        %v3179 = vsel %vm2262, %v3096, -inf
        %3180 = vmax.xlane.f32.xlu0 %v3179
        %v3181 = vpop.xlane.xlu0 %3180
        %v3182 = vsel %vm2262, %v3099, -inf
        %3183 = vmax.xlane.f32.xlu0 %v3182
        %v3184 = vpop.xlane.xlu0 %3183
        %v3185 = vsel %vm2262, %v3137, -inf
        %3186 = vmax.xlane.f32.xlu0 %v3185
        %v3187 = vpop.xlane.xlu0 %3186
        %v3188 = vsel %vm2262, %v3140, -inf
        %3189 = vmax.xlane.f32.xlu0 %v3188
        %v3190 = vpop.xlane.xlu0 %3189
        %v3191 = vsub.f32 %v2850, %v3145
        %v3192 = vsub.f32 %v2853, %v3148
        %v3193 = vsub.f32 %v2891, %v3151
        %v3194 = vsub.f32 %v2894, %v3154
        %v3195 = vsub.f32 %v2932, %v3157
        %v3196 = vsub.f32 %v2935, %v3160
        %v3197 = vsub.f32 %v2973, %v3163
        %v3198 = vsub.f32 %v2976, %v3166
        %v3199 = vsub.f32 %v3014, %v3169
        %v3200 = vsub.f32 %v3017, %v3172
        %v3201 = vsub.f32 %v3055, %v3175
        %v3202 = vsub.f32 %v3058, %v3178
        %v3203 = vsub.f32 %v3096, %v3181
        %v3204 = vsub.f32 %v3099, %v3184
        %v3205 = vsub.f32 %v3137, %v3187
        %v3206 = vsub.f32 %v3140, %v3190
        %v3207 = vmul.f32 %v3191, 1.442695
        %v3208 = vpow.pop %v3207
        %v3209 = vmul.f32 %v3192, 1.442695
        %v3210 = vpow.pop %v3209
        %v3211 = vmul.f32 %v3193, 1.442695
        %v3212 = vpow.pop %v3211
        %v3213 = vmul.f32 %v3194, 1.442695
        %v3214 = vpow.pop %v3213
        %v3215 = vmul.f32 %v3195, 1.442695
        %v3216 = vpow.pop %v3215
        %v3217 = vmul.f32 %v3196, 1.442695
        %v3218 = vpow.pop %v3217
        %v3219 = vmul.f32 %v3197, 1.442695
        %v3220 = vpow.pop %v3219
        %v3221 = vmul.f32 %v3198, 1.442695
        %v3222 = vpow.pop %v3221
        %v3223 = vmul.f32 %v3199, 1.442695
        %v3224 = vpow.pop %v3223
        %v3225 = vmul.f32 %v3200, 1.442695
        %v3226 = vpow.pop %v3225
        %v3227 = vmul.f32 %v3201, 1.442695
        %v3228 = vpow.pop %v3227
        %v3229 = vmul.f32 %v3202, 1.442695
        %v3230 = vpow.pop %v3229
        %v3231 = vmul.f32 %v3203, 1.442695
        %v3232 = vpow.pop %v3231
        %v3233 = vmul.f32 %v3204, 1.442695
        %v3234 = vpow.pop %v3233
        %v3235 = vmul.f32 %v3205, 1.442695
        %v3236 = vpow.pop %v3235
        %v3237 = vmul.f32 %v3206, 1.442695
        %v3238 = vpow.pop %v3237
        %v3239 = vsel %vm2262, %v3208, 0.0
        %3240 = vadd.xlane.f32.xlu0 %v3239
        %v3241 = vpop.xlane.xlu0 %3240
        %v3242 = vsel %vm2262, %v3210, 0.0
        %3243 = vadd.xlane.f32.xlu0 %v3242
        %v3244 = vpop.xlane.xlu0 %3243
        %v3245 = vsel %vm2262, %v3212, 0.0
        %3246 = vadd.xlane.f32.xlu0 %v3245
        %v3247 = vpop.xlane.xlu0 %3246
        %v3248 = vsel %vm2262, %v3214, 0.0
        %3249 = vadd.xlane.f32.xlu0 %v3248
        %v3250 = vpop.xlane.xlu0 %3249
        %v3251 = vsel %vm2262, %v3216, 0.0
        %3252 = vadd.xlane.f32.xlu0 %v3251
        %v3253 = vpop.xlane.xlu0 %3252
        %v3254 = vsel %vm2262, %v3218, 0.0
        %3255 = vadd.xlane.f32.xlu0 %v3254
        %v3256 = vpop.xlane.xlu0 %3255
        %v3257 = vsel %vm2262, %v3220, 0.0
        %3258 = vadd.xlane.f32.xlu0 %v3257
        %v3259 = vpop.xlane.xlu0 %3258
        %v3260 = vsel %vm2262, %v3222, 0.0
        %3261 = vadd.xlane.f32.xlu0 %v3260
        %v3262 = vpop.xlane.xlu0 %3261
        %v3263 = vsel %vm2262, %v3224, 0.0
        %3264 = vadd.xlane.f32.xlu0 %v3263
        %v3265 = vpop.xlane.xlu0 %3264
        %v3266 = vsel %vm2262, %v3226, 0.0
        %3267 = vadd.xlane.f32.xlu0 %v3266
        %v3268 = vpop.xlane.xlu0 %3267
        %v3269 = vsel %vm2262, %v3228, 0.0
        %3270 = vadd.xlane.f32.xlu0 %v3269
        %v3271 = vpop.xlane.xlu0 %3270
        %v3272 = vsel %vm2262, %v3230, 0.0
        %3273 = vadd.xlane.f32.xlu0 %v3272
        %v3274 = vpop.xlane.xlu0 %3273
        %v3275 = vsel %vm2262, %v3232, 0.0
        %3276 = vadd.xlane.f32.xlu0 %v3275
        %v3277 = vpop.xlane.xlu0 %3276
        %v3278 = vsel %vm2262, %v3234, 0.0
        %3279 = vadd.xlane.f32.xlu0 %v3278
        %v3280 = vpop.xlane.xlu0 %3279
        %v3281 = vsel %vm2262, %v3236, 0.0
        %3282 = vadd.xlane.f32.xlu0 %v3281
        %v3283 = vpop.xlane.xlu0 %3282
        %v3284 = vsel %vm2262, %v3238, 0.0
        %3285 = vadd.xlane.f32.xlu0 %v3284
        %v3286 = vpop.xlane.xlu0 %3285
        %v3287 = vrcp.pop %v3241
        %v3288 = vrcp.pop %v3244
        %v3289 = vrcp.pop %v3247
        %v3290 = vrcp.pop %v3250
        %v3291 = vrcp.pop %v3253
        %v3292 = vrcp.pop %v3256
        %v3293 = vrcp.pop %v3259
        %v3294 = vrcp.pop %v3262
        %v3295 = vrcp.pop %v3265
        %v3296 = vrcp.pop %v3268
        %v3297 = vrcp.pop %v3271
        %v3298 = vrcp.pop %v3274
        %v3299 = vrcp.pop %v3277
        %v3300 = vrcp.pop %v3280
        %v3301 = vrcp.pop %v3283
        %v3302 = vrcp.pop %v3286
        %v3303 = vmul.f32 %v3208, %v3287
        %v3304 = vmul.f32 %v3210, %v3288
        %v3305 = vmul.f32 %v3212, %v3289
        %v3306 = vmul.f32 %v3214, %v3290
        %v3307 = vmul.f32 %v3216, %v3291
        %v3308 = vmul.f32 %v3218, %v3292
        %v3309 = vmul.f32 %v3220, %v3293
        %v3310 = vmul.f32 %v3222, %v3294
        %v3311 = vmul.f32 %v3224, %v3295
        %v3312 = vmul.f32 %v3226, %v3296
        %v3313 = vmul.f32 %v3228, %v3297
        %v3314 = vmul.f32 %v3230, %v3298
        %v3315 = vmul.f32 %v3232, %v3299
        %v3316 = vmul.f32 %v3234, %v3300
        %v3317 = vmul.f32 %v3236, %v3301
        %v3318 = vmul.f32 %v3238, %v3302
        %v3319 = vpack.c.bf16 %v3304, %v3303
        %v3320 = vpack.c.bf16 %v3306, %v3305
        %v3321 = vpack.c.bf16 %v3308, %v3307
        %v3322 = vpack.c.bf16 %v3310, %v3309
        %v3323 = vpack.c.bf16 %v3312, %v3311
        %v3324 = vpack.c.bf16 %v3314, %v3313
        %v3325 = vpack.c.bf16 %v3316, %v3315
        %v3326 = vpack.c.bf16 %v3318, %v3317
        %v3328 = vsel %vm2262, %v3319, 0
        %3330 = vmatprep.subr.bf16.mxu0 0
        %3331 = vmatpush1.bf16.msra.mxu0 %v1891
        %3332 = vmatprep.subr.bf16.mxu0 0
        %3333 = vmatpush1.bf16.msra.mxu0 0
        %3334 = vmatprep.subr.bf16.mxu0 0
        %3335 = vmatpush1.bf16.msra.mxu0 0
        %3336 = vmatprep.subr.bf16.mxu0 0
        %3337 = vmatpush1.bf16.msra.mxu0 0
        %3338 = vmatprep.subr.bf16.mxu0 0
        %3339 = vmatpush1.bf16.msra.mxu0 0
        %3340 = vmatprep.subr.bf16.mxu0 0
        %3341 = vmatpush1.bf16.msra.mxu0 0
        %3342 = vmatprep.subr.bf16.mxu0 0
        %3343 = vmatpush1.bf16.msra.mxu0 0
        %3344 = vmatprep.subr.bf16.mxu0 0
        %3345 = vmatpush1.bf16.msra.mxu0 0
        %3346 = vmatprep.subr.bf16.mxu0 0
        %3347 = vmatpush1.bf16.msra.mxu0 0
        %3348 = vmatprep.subr.bf16.mxu0 0
        %3349 = vmatpush1.bf16.msra.mxu0 0
        %3350 = vmatprep.subr.bf16.mxu0 0
        %3351 = vmatpush1.bf16.msra.mxu0 0
        %3352 = vmatprep.subr.bf16.mxu0 0
        %3353 = vmatpush1.bf16.msra.mxu0 0
        %3354 = vmatprep.subr.bf16.mxu0 0
        %3355 = vmatpush1.bf16.msra.mxu0 0
        %3356 = vmatprep.subr.bf16.mxu0 0
        %3357 = vmatpush1.bf16.msra.mxu0 0
        %3358 = vmatprep.subr.bf16.mxu0 0
        %3359 = vmatpush1.bf16.msra.mxu0 0
        %3360 = vmatprep.subr.bf16.mxu0 0
        %3361 = vmatpush1.bf16.msra.mxu0 0
        %3362 = vmatprep.mubr.bf16.mxu0 0
        %3363 = vmatmul.mubr.bf16.gmra.mrb[0].mxu0 %v3328
        %v3364 = vpop.f32.mrb[0].mxu0
        %v3365 = vadd.f32 0.0, %v3364
        %v3366 = vpop.f32.mrb[0].mxu0
        %v3367 = vpop.f32.mrb[0].mxu0
        %v3368 = vadd.f32 0.0, %v3367
        %v3369 = vpop.f32.mrb[0].mxu0
        %3370 = vdwg.mxu0
        %v3372 = vsel %vm2262, %v3320, 0
        %3374 = vmatprep.subr.bf16.mxu0 0
        %3375 = vmatpush1.bf16.msra.mxu0 %v1897
        %3376 = vmatprep.subr.bf16.mxu0 0
        %3377 = vmatpush1.bf16.msra.mxu0 0
        %3378 = vmatprep.subr.bf16.mxu0 0
        %3379 = vmatpush1.bf16.msra.mxu0 0
        %3380 = vmatprep.subr.bf16.mxu0 0
        %3381 = vmatpush1.bf16.msra.mxu0 0
        %3382 = vmatprep.subr.bf16.mxu0 0
        %3383 = vmatpush1.bf16.msra.mxu0 0
        %3384 = vmatprep.subr.bf16.mxu0 0
        %3385 = vmatpush1.bf16.msra.mxu0 0
        %3386 = vmatprep.subr.bf16.mxu0 0
        %3387 = vmatpush1.bf16.msra.mxu0 0
        %3388 = vmatprep.subr.bf16.mxu0 0
        %3389 = vmatpush1.bf16.msra.mxu0 0
        %3390 = vmatprep.subr.bf16.mxu0 0
        %3391 = vmatpush1.bf16.msra.mxu0 0
        %3392 = vmatprep.subr.bf16.mxu0 0
        %3393 = vmatpush1.bf16.msra.mxu0 0
        %3394 = vmatprep.subr.bf16.mxu0 0
        %3395 = vmatpush1.bf16.msra.mxu0 0
        %3396 = vmatprep.subr.bf16.mxu0 0
        %3397 = vmatpush1.bf16.msra.mxu0 0
        %3398 = vmatprep.subr.bf16.mxu0 0
        %3399 = vmatpush1.bf16.msra.mxu0 0
        %3400 = vmatprep.subr.bf16.mxu0 0
        %3401 = vmatpush1.bf16.msra.mxu0 0
        %3402 = vmatprep.subr.bf16.mxu0 0
        %3403 = vmatpush1.bf16.msra.mxu0 0
        %3404 = vmatprep.subr.bf16.mxu0 0
        %3405 = vmatpush1.bf16.msra.mxu0 0
        %3406 = vmatprep.mubr.bf16.mxu0 0
        %3407 = vmatmul.mubr.bf16.gmra.mrb[0].mxu0 %v3372
        %v3408 = vpop.f32.mrb[0].mxu0
        %v3409 = vadd.f32 0.0, %v3408
        %v3410 = vpop.f32.mrb[0].mxu0
        %v3411 = vpop.f32.mrb[0].mxu0
        %v3412 = vadd.f32 0.0, %v3411
        %v3413 = vpop.f32.mrb[0].mxu0
        %3414 = vdwg.mxu0
        %v3416 = vsel %vm2262, %v3321, 0
        %3418 = vmatprep.subr.bf16.mxu0 0
        %3419 = vmatpush1.bf16.msra.mxu0 %v1903
        %3420 = vmatprep.subr.bf16.mxu0 0
        %3421 = vmatpush1.bf16.msra.mxu0 0
        %3422 = vmatprep.subr.bf16.mxu0 0
        %3423 = vmatpush1.bf16.msra.mxu0 0
        %3424 = vmatprep.subr.bf16.mxu0 0
        %3425 = vmatpush1.bf16.msra.mxu0 0
        %3426 = vmatprep.subr.bf16.mxu0 0
        %3427 = vmatpush1.bf16.msra.mxu0 0
        %3428 = vmatprep.subr.bf16.mxu0 0
        %3429 = vmatpush1.bf16.msra.mxu0 0
        %3430 = vmatprep.subr.bf16.mxu0 0
        %3431 = vmatpush1.bf16.msra.mxu0 0
        %3432 = vmatprep.subr.bf16.mxu0 0
        %3433 = vmatpush1.bf16.msra.mxu0 0
        %3434 = vmatprep.subr.bf16.mxu0 0
        %3435 = vmatpush1.bf16.msra.mxu0 0
        %3436 = vmatprep.subr.bf16.mxu0 0
        %3437 = vmatpush1.bf16.msra.mxu0 0
        %3438 = vmatprep.subr.bf16.mxu0 0
        %3439 = vmatpush1.bf16.msra.mxu0 0
        %3440 = vmatprep.subr.bf16.mxu0 0
        %3441 = vmatpush1.bf16.msra.mxu0 0
        %3442 = vmatprep.subr.bf16.mxu0 0
        %3443 = vmatpush1.bf16.msra.mxu0 0
        %3444 = vmatprep.subr.bf16.mxu0 0
        %3445 = vmatpush1.bf16.msra.mxu0 0
        %3446 = vmatprep.subr.bf16.mxu0 0
        %3447 = vmatpush1.bf16.msra.mxu0 0
        %3448 = vmatprep.subr.bf16.mxu0 0
        %3449 = vmatpush1.bf16.msra.mxu0 0
        %3450 = vmatprep.mubr.bf16.mxu0 0
        %3451 = vmatmul.mubr.bf16.gmra.mrb[0].mxu0 %v3416
        %v3452 = vpop.f32.mrb[0].mxu0
        %v3453 = vadd.f32 0.0, %v3452
        %v3454 = vpop.f32.mrb[0].mxu0
        %v3455 = vpop.f32.mrb[0].mxu0
        %v3456 = vadd.f32 0.0, %v3455
        %v3457 = vpop.f32.mrb[0].mxu0
        %3458 = vdwg.mxu0
        %v3460 = vsel %vm2262, %v3322, 0
        %3462 = vmatprep.subr.bf16.mxu0 0
        %3463 = vmatpush1.bf16.msra.mxu0 %v1909
        %3464 = vmatprep.subr.bf16.mxu0 0
        %3465 = vmatpush1.bf16.msra.mxu0 0
        %3466 = vmatprep.subr.bf16.mxu0 0
        %3467 = vmatpush1.bf16.msra.mxu0 0
        %3468 = vmatprep.subr.bf16.mxu0 0
        %3469 = vmatpush1.bf16.msra.mxu0 0
        %3470 = vmatprep.subr.bf16.mxu0 0
        %3471 = vmatpush1.bf16.msra.mxu0 0
        %3472 = vmatprep.subr.bf16.mxu0 0
        %3473 = vmatpush1.bf16.msra.mxu0 0
        %3474 = vmatprep.subr.bf16.mxu0 0
        %3475 = vmatpush1.bf16.msra.mxu0 0
        %3476 = vmatprep.subr.bf16.mxu0 0
        %3477 = vmatpush1.bf16.msra.mxu0 0
        %3478 = vmatprep.subr.bf16.mxu0 0
        %3479 = vmatpush1.bf16.msra.mxu0 0
        %3480 = vmatprep.subr.bf16.mxu0 0
        %3481 = vmatpush1.bf16.msra.mxu0 0
        %3482 = vmatprep.subr.bf16.mxu0 0
        %3483 = vmatpush1.bf16.msra.mxu0 0
        %3484 = vmatprep.subr.bf16.mxu0 0
        %3485 = vmatpush1.bf16.msra.mxu0 0
        %3486 = vmatprep.subr.bf16.mxu0 0
        %3487 = vmatpush1.bf16.msra.mxu0 0
        %3488 = vmatprep.subr.bf16.mxu0 0
        %3489 = vmatpush1.bf16.msra.mxu0 0
        %3490 = vmatprep.subr.bf16.mxu0 0
        %3491 = vmatpush1.bf16.msra.mxu0 0
        %3492 = vmatprep.subr.bf16.mxu0 0
        %3493 = vmatpush1.bf16.msra.mxu0 0
        %3494 = vmatprep.mubr.bf16.mxu0 0
        %3495 = vmatmul.mubr.bf16.gmra.mrb[0].mxu0 %v3460
        %v3496 = vpop.f32.mrb[0].mxu0
        %v3497 = vadd.f32 0.0, %v3496
        %v3498 = vpop.f32.mrb[0].mxu0
        %v3499 = vpop.f32.mrb[0].mxu0
        %v3500 = vadd.f32 0.0, %v3499
        %v3501 = vpop.f32.mrb[0].mxu0
        %3502 = vdwg.mxu0
        %v3504 = vsel %vm2262, %v3323, 0
        %3506 = vmatprep.subr.bf16.mxu0 0
        %3507 = vmatpush1.bf16.msra.mxu0 %v1915
        %3508 = vmatprep.subr.bf16.mxu0 0
        %3509 = vmatpush1.bf16.msra.mxu0 0
        %3510 = vmatprep.subr.bf16.mxu0 0
        %3511 = vmatpush1.bf16.msra.mxu0 0
        %3512 = vmatprep.subr.bf16.mxu0 0
        %3513 = vmatpush1.bf16.msra.mxu0 0
        %3514 = vmatprep.subr.bf16.mxu0 0
        %3515 = vmatpush1.bf16.msra.mxu0 0
        %3516 = vmatprep.subr.bf16.mxu0 0
        %3517 = vmatpush1.bf16.msra.mxu0 0
        %3518 = vmatprep.subr.bf16.mxu0 0
        %3519 = vmatpush1.bf16.msra.mxu0 0
        %3520 = vmatprep.subr.bf16.mxu0 0
        %3521 = vmatpush1.bf16.msra.mxu0 0
        %3522 = vmatprep.subr.bf16.mxu0 0
        %3523 = vmatpush1.bf16.msra.mxu0 0
        %3524 = vmatprep.subr.bf16.mxu0 0
        %3525 = vmatpush1.bf16.msra.mxu0 0
        %3526 = vmatprep.subr.bf16.mxu0 0
        %3527 = vmatpush1.bf16.msra.mxu0 0
        %3528 = vmatprep.subr.bf16.mxu0 0
        %3529 = vmatpush1.bf16.msra.mxu0 0
        %3530 = vmatprep.subr.bf16.mxu0 0
        %3531 = vmatpush1.bf16.msra.mxu0 0
        %3532 = vmatprep.subr.bf16.mxu0 0
        %3533 = vmatpush1.bf16.msra.mxu0 0
        %3534 = vmatprep.subr.bf16.mxu0 0
        %3535 = vmatpush1.bf16.msra.mxu0 0
        %3536 = vmatprep.subr.bf16.mxu0 0
        %3537 = vmatpush1.bf16.msra.mxu0 0
        %3538 = vmatprep.mubr.bf16.mxu0 0
        %3539 = vmatmul.mubr.bf16.gmra.mrb[0].mxu0 %v3504
        %v3540 = vpop.f32.mrb[0].mxu0
        %v3541 = vadd.f32 0.0, %v3540
        %v3542 = vpop.f32.mrb[0].mxu0
        %v3543 = vpop.f32.mrb[0].mxu0
        %v3544 = vadd.f32 0.0, %v3543
        %v3545 = vpop.f32.mrb[0].mxu0
        %3546 = vdwg.mxu0
        %v3548 = vsel %vm2262, %v3324, 0
        %3550 = vmatprep.subr.bf16.mxu0 0
        %3551 = vmatpush1.bf16.msra.mxu0 %v1921
        %3552 = vmatprep.subr.bf16.mxu0 0
        %3553 = vmatpush1.bf16.msra.mxu0 0
        %3554 = vmatprep.subr.bf16.mxu0 0
        %3555 = vmatpush1.bf16.msra.mxu0 0
        %3556 = vmatprep.subr.bf16.mxu0 0
        %3557 = vmatpush1.bf16.msra.mxu0 0
        %3558 = vmatprep.subr.bf16.mxu0 0
        %3559 = vmatpush1.bf16.msra.mxu0 0
        %3560 = vmatprep.subr.bf16.mxu0 0
        %3561 = vmatpush1.bf16.msra.mxu0 0
        %3562 = vmatprep.subr.bf16.mxu0 0
        %3563 = vmatpush1.bf16.msra.mxu0 0
        %3564 = vmatprep.subr.bf16.mxu0 0
        %3565 = vmatpush1.bf16.msra.mxu0 0
        %3566 = vmatprep.subr.bf16.mxu0 0
        %3567 = vmatpush1.bf16.msra.mxu0 0
        %3568 = vmatprep.subr.bf16.mxu0 0
        %3569 = vmatpush1.bf16.msra.mxu0 0
        %3570 = vmatprep.subr.bf16.mxu0 0
        %3571 = vmatpush1.bf16.msra.mxu0 0
        %3572 = vmatprep.subr.bf16.mxu0 0
        %3573 = vmatpush1.bf16.msra.mxu0 0
        %3574 = vmatprep.subr.bf16.mxu0 0
        %3575 = vmatpush1.bf16.msra.mxu0 0
        %3576 = vmatprep.subr.bf16.mxu0 0
        %3577 = vmatpush1.bf16.msra.mxu0 0
        %3578 = vmatprep.subr.bf16.mxu0 0
        %3579 = vmatpush1.bf16.msra.mxu0 0
        %3580 = vmatprep.subr.bf16.mxu0 0
        %3581 = vmatpush1.bf16.msra.mxu0 0
        %3582 = vmatprep.mubr.bf16.mxu0 0
        %3583 = vmatmul.mubr.bf16.gmra.mrb[0].mxu0 %v3548
        %v3584 = vpop.f32.mrb[0].mxu0
        %v3585 = vadd.f32 0.0, %v3584
        %v3586 = vpop.f32.mrb[0].mxu0
        %v3587 = vpop.f32.mrb[0].mxu0
        %v3588 = vadd.f32 0.0, %v3587
        %v3589 = vpop.f32.mrb[0].mxu0
        %3590 = vdwg.mxu0
        %v3592 = vsel %vm2262, %v3325, 0
        %3594 = vmatprep.subr.bf16.mxu0 0
        %3595 = vmatpush1.bf16.msra.mxu0 %v1927
        %3596 = vmatprep.subr.bf16.mxu0 0
        %3597 = vmatpush1.bf16.msra.mxu0 0
        %3598 = vmatprep.subr.bf16.mxu0 0
        %3599 = vmatpush1.bf16.msra.mxu0 0
        %3600 = vmatprep.subr.bf16.mxu0 0
        %3601 = vmatpush1.bf16.msra.mxu0 0
        %3602 = vmatprep.subr.bf16.mxu0 0
        %3603 = vmatpush1.bf16.msra.mxu0 0
        %3604 = vmatprep.subr.bf16.mxu0 0
        %3605 = vmatpush1.bf16.msra.mxu0 0
        %3606 = vmatprep.subr.bf16.mxu0 0
        %3607 = vmatpush1.bf16.msra.mxu0 0
        %3608 = vmatprep.subr.bf16.mxu0 0
        %3609 = vmatpush1.bf16.msra.mxu0 0
        %3610 = vmatprep.subr.bf16.mxu0 0
        %3611 = vmatpush1.bf16.msra.mxu0 0
        %3612 = vmatprep.subr.bf16.mxu0 0
        %3613 = vmatpush1.bf16.msra.mxu0 0
        %3614 = vmatprep.subr.bf16.mxu0 0
        %3615 = vmatpush1.bf16.msra.mxu0 0
        %3616 = vmatprep.subr.bf16.mxu0 0
        %3617 = vmatpush1.bf16.msra.mxu0 0
        %3618 = vmatprep.subr.bf16.mxu0 0
        %3619 = vmatpush1.bf16.msra.mxu0 0
        %3620 = vmatprep.subr.bf16.mxu0 0
        %3621 = vmatpush1.bf16.msra.mxu0 0
        %3622 = vmatprep.subr.bf16.mxu0 0
        %3623 = vmatpush1.bf16.msra.mxu0 0
        %3624 = vmatprep.subr.bf16.mxu0 0
        %3625 = vmatpush1.bf16.msra.mxu0 0
        %3626 = vmatprep.mubr.bf16.mxu0 0
        %3627 = vmatmul.mubr.bf16.gmra.mrb[0].mxu0 %v3592
        %v3628 = vpop.f32.mrb[0].mxu0
        %v3629 = vadd.f32 0.0, %v3628
        %v3630 = vpop.f32.mrb[0].mxu0
        %v3631 = vpop.f32.mrb[0].mxu0
        %v3632 = vadd.f32 0.0, %v3631
        %v3633 = vpop.f32.mrb[0].mxu0
        %3634 = vdwg.mxu0
        %v3636 = vsel %vm2262, %v3326, 0
        %3638 = vmatprep.subr.bf16.mxu0 0
        %3639 = vmatpush1.bf16.msra.mxu0 %v1933
        %3640 = vmatprep.subr.bf16.mxu0 0
        %3641 = vmatpush1.bf16.msra.mxu0 0
        %3642 = vmatprep.subr.bf16.mxu0 0
        %3643 = vmatpush1.bf16.msra.mxu0 0
        %3644 = vmatprep.subr.bf16.mxu0 0
        %3645 = vmatpush1.bf16.msra.mxu0 0
        %3646 = vmatprep.subr.bf16.mxu0 0
        %3647 = vmatpush1.bf16.msra.mxu0 0
        %3648 = vmatprep.subr.bf16.mxu0 0
        %3649 = vmatpush1.bf16.msra.mxu0 0
        %3650 = vmatprep.subr.bf16.mxu0 0
        %3651 = vmatpush1.bf16.msra.mxu0 0
        %3652 = vmatprep.subr.bf16.mxu0 0
        %3653 = vmatpush1.bf16.msra.mxu0 0
        %3654 = vmatprep.subr.bf16.mxu0 0
        %3655 = vmatpush1.bf16.msra.mxu0 0
        %3656 = vmatprep.subr.bf16.mxu0 0
        %3657 = vmatpush1.bf16.msra.mxu0 0
        %3658 = vmatprep.subr.bf16.mxu0 0
        %3659 = vmatpush1.bf16.msra.mxu0 0
        %3660 = vmatprep.subr.bf16.mxu0 0
        %3661 = vmatpush1.bf16.msra.mxu0 0
        %3662 = vmatprep.subr.bf16.mxu0 0
        %3663 = vmatpush1.bf16.msra.mxu0 0
        %3664 = vmatprep.subr.bf16.mxu0 0
        %3665 = vmatpush1.bf16.msra.mxu0 0
        %3666 = vmatprep.subr.bf16.mxu0 0
        %3667 = vmatpush1.bf16.msra.mxu0 0
        %3668 = vmatprep.subr.bf16.mxu0 0
        %3669 = vmatpush1.bf16.msra.mxu0 0
        %3670 = vmatprep.mubr.bf16.mxu0 0
        %3671 = vmatmul.mubr.bf16.gmra.mrb[0].mxu0 %v3636
        %v3672 = vpop.f32.mrb[0].mxu0
        %v3673 = vadd.f32 0.0, %v3672
        %v3674 = vpop.f32.mrb[0].mxu0
        %v3675 = vpop.f32.mrb[0].mxu0
        %v3676 = vadd.f32 0.0, %v3675
        %v3677 = vpop.f32.mrb[0].mxu0
        %3678 = vdwg.mxu0
        %v3679 = vpack.c.bf16 %v3368, %v3365
        %v3680 = vpack.c.bf16 %v3412, %v3409
        %v3681 = vpack.c.bf16 %v3456, %v3453
        %v3682 = vpack.c.bf16 %v3500, %v3497
        %v3683 = vpack.c.bf16 %v3544, %v3541
        %v3684 = vpack.c.bf16 %v3588, %v3585
        %v3685 = vpack.c.bf16 %v3632, %v3629
        %v3686 = vpack.c.bf16 %v3676, %v3673
        %3687 = vst [vmem:[#allocation2 + $0x8] sm:$0xff] %v3679
        %3688 = vst [vmem:[#allocation2 + $0x18] sm:$0xff] %v3680
        %3689 = vst [vmem:[#allocation2 + $0x28] sm:$0xff] %v3681
        %3690 = vst [vmem:[#allocation2 + $0x38] sm:$0xff] %v3682
        %3691 = vst [vmem:[#allocation2 + $0x48] sm:$0xff] %v3683
        %3692 = vst [vmem:[#allocation2 + $0x58] sm:$0xff] %v3684
        %3693 = vst [vmem:[#allocation2 + $0x68] sm:$0xff] %v3685
        %3694 = vst [vmem:[#allocation2 + $0x78] sm:$0xff] %v3686
        %v3695 = vld [vmem:[#allocation2] sm:$0xff]
        %v3696 = vld [vmem:[#allocation2 + $0x8] sm:$0xff]
        %v3697 = vld [vmem:[#allocation2 + $0x10] sm:$0xff]
        %v3698 = vld [vmem:[#allocation2 + $0x18] sm:$0xff]
        %v3699 = vld [vmem:[#allocation2 + $0x20] sm:$0xff]
        %v3700 = vld [vmem:[#allocation2 + $0x28] sm:$0xff]
        %v3701 = vld [vmem:[#allocation2 + $0x30] sm:$0xff]
        %v3702 = vld [vmem:[#allocation2 + $0x38] sm:$0xff]
        %v3703 = vld [vmem:[#allocation2 + $0x40] sm:$0xff]
        %v3704 = vld [vmem:[#allocation2 + $0x48] sm:$0xff]
        %v3705 = vld [vmem:[#allocation2 + $0x50] sm:$0xff]
        %v3706 = vld [vmem:[#allocation2 + $0x58] sm:$0xff]
        %v3707 = vld [vmem:[#allocation2 + $0x60] sm:$0xff]
        %v3708 = vld [vmem:[#allocation2 + $0x68] sm:$0xff]
        %v3709 = vld [vmem:[#allocation2 + $0x70] sm:$0xff]
        %v3710 = vld [vmem:[#allocation2 + $0x78] sm:$0xff]
        %v3711 = vld [vmem:[#allocation11] sm:$0xff]
        %v3712 = vld [vmem:[#allocation11 + $0x8] sm:$0xff]
        %v3713 = vld [vmem:[#allocation11 + $0x10] sm:$0xff]
        %v3714 = vld [vmem:[#allocation11 + $0x18] sm:$0xff]
        %v3715 = vld [vmem:[#allocation11 + $0x20] sm:$0xff]
        %v3716 = vld [vmem:[#allocation11 + $0x28] sm:$0xff]
        %v3717 = vld [vmem:[#allocation11 + $0x30] sm:$0xff]
        %v3718 = vld [vmem:[#allocation11 + $0x38] sm:$0xff]
        %v3719 = vld [vmem:[#allocation11 + $0x40] sm:$0xff]
        %v3720 = vld [vmem:[#allocation11 + $0x48] sm:$0xff]
        %v3721 = vld [vmem:[#allocation11 + $0x50] sm:$0xff]
        %v3722 = vld [vmem:[#allocation11 + $0x58] sm:$0xff]
        %v3723 = vld [vmem:[#allocation11 + $0x60] sm:$0xff]
        %v3724 = vld [vmem:[#allocation11 + $0x68] sm:$0xff]
        %v3725 = vld [vmem:[#allocation11 + $0x70] sm:$0xff]
        %v3726 = vld [vmem:[#allocation11 + $0x78] sm:$0xff]
        %v3727 = vld [vmem:[#allocation11 + $0x80] sm:$0xff]
        %v3728 = vld [vmem:[#allocation11 + $0x88] sm:$0xff]
        %v3729 = vld [vmem:[#allocation11 + $0x90] sm:$0xff]
        %v3730 = vld [vmem:[#allocation11 + $0x98] sm:$0xff]
        %v3731 = vld [vmem:[#allocation11 + $0xa0] sm:$0xff]
        %v3732 = vld [vmem:[#allocation11 + $0xa8] sm:$0xff]
        %v3733 = vld [vmem:[#allocation11 + $0xb0] sm:$0xff]
        %v3734 = vld [vmem:[#allocation11 + $0xb8] sm:$0xff]
        %v3735 = vld [vmem:[#allocation11 + $0xc0] sm:$0xff]
        %v3736 = vld [vmem:[#allocation11 + $0xc8] sm:$0xff]
        %v3737 = vld [vmem:[#allocation11 + $0xd0] sm:$0xff]
        %v3738 = vld [vmem:[#allocation11 + $0xd8] sm:$0xff]
        %v3739 = vld [vmem:[#allocation11 + $0xe0] sm:$0xff]
        %v3740 = vld [vmem:[#allocation11 + $0xe8] sm:$0xff]
        %v3741 = vld [vmem:[#allocation11 + $0xf0] sm:$0xff]
        %v3742 = vld [vmem:[#allocation11 + $0xf8] sm:$0xff]
        %v3743 = vld [vmem:[%s6] sm:$0x3]
        %v3745 = vlaneseq
        %v3746 = vshrl.u32 %v3745, 7
        %v3747 = vsub.s32 0, %v3746
        %v3748 = vrot.slane %v3743, %v3747
        %v3749 = vlaneseq
        %v3750 = vshrl.u32 %v3749, 7
        %v3751 = vsub.s32 1, %v3750
        %v3752 = vrot.slane %v3743, %v3751
        %v3787 = vunpack.c.l.b16 %v3711
        %v3788 = vunpack.c.h.b16 %v3711
        %v3789 = vunpack.c.l.b16 %v3712
        %v3790 = vunpack.c.h.b16 %v3712
        %v3791 = vunpack.c.l.b16 %v3713
        %v3792 = vunpack.c.h.b16 %v3713
        %v3793 = vunpack.c.l.b16 %v3714
        %v3794 = vunpack.c.h.b16 %v3714
        %v3795 = vunpack.c.l.b16 %v3715
        %v3796 = vunpack.c.h.b16 %v3715
        %v3797 = vunpack.c.l.b16 %v3716
        %v3798 = vunpack.c.h.b16 %v3716
        %v3799 = vunpack.c.l.b16 %v3717
        %v3800 = vunpack.c.h.b16 %v3717
        %v3801 = vunpack.c.l.b16 %v3718
        %v3802 = vunpack.c.h.b16 %v3718
        %v3803 = vunpack.c.l.b16 %v3719
        %v3804 = vunpack.c.h.b16 %v3719
        %v3805 = vunpack.c.l.b16 %v3720
        %v3806 = vunpack.c.h.b16 %v3720
        %v3807 = vunpack.c.l.b16 %v3721
        %v3808 = vunpack.c.h.b16 %v3721
        %v3809 = vunpack.c.l.b16 %v3722
        %v3810 = vunpack.c.h.b16 %v3722
        %v3811 = vunpack.c.l.b16 %v3723
        %v3812 = vunpack.c.h.b16 %v3723
        %v3813 = vunpack.c.l.b16 %v3724
        %v3814 = vunpack.c.h.b16 %v3724
        %v3815 = vunpack.c.l.b16 %v3725
        %v3816 = vunpack.c.h.b16 %v3725
        %v3817 = vunpack.c.l.b16 %v3726
        %v3818 = vunpack.c.h.b16 %v3726
        %v3819 = vunpack.c.l.b16 %v3727
        %v3820 = vunpack.c.h.b16 %v3727
        %v3821 = vunpack.c.l.b16 %v3728
        %v3822 = vunpack.c.h.b16 %v3728
        %v3823 = vunpack.c.l.b16 %v3729
        %v3824 = vunpack.c.h.b16 %v3729
        %v3825 = vunpack.c.l.b16 %v3730
        %v3826 = vunpack.c.h.b16 %v3730
        %v3827 = vunpack.c.l.b16 %v3731
        %v3828 = vunpack.c.h.b16 %v3731
        %v3829 = vunpack.c.l.b16 %v3732
        %v3830 = vunpack.c.h.b16 %v3732
        %v3831 = vunpack.c.l.b16 %v3733
        %v3832 = vunpack.c.h.b16 %v3733
        %v3833 = vunpack.c.l.b16 %v3734
        %v3834 = vunpack.c.h.b16 %v3734
        %v3835 = vunpack.c.l.b16 %v3735
        %v3836 = vunpack.c.h.b16 %v3735
        %v3837 = vunpack.c.l.b16 %v3736
        %v3838 = vunpack.c.h.b16 %v3736
        %v3839 = vunpack.c.l.b16 %v3737
        %v3840 = vunpack.c.h.b16 %v3737
        %v3841 = vunpack.c.l.b16 %v3738
        %v3842 = vunpack.c.h.b16 %v3738
        %v3843 = vunpack.c.l.b16 %v3739
        %v3844 = vunpack.c.h.b16 %v3739
        %v3845 = vunpack.c.l.b16 %v3740
        %v3846 = vunpack.c.h.b16 %v3740
        %v3847 = vunpack.c.l.b16 %v3741
        %v3848 = vunpack.c.h.b16 %v3741
        %v3849 = vunpack.c.l.b16 %v3742
        %v3850 = vunpack.c.h.b16 %v3742
        %v3851 = vpack.c.b16 %v3789, %v3787
        %v3852 = vpack.c.b16 %v3790, %v3788
        %v3853 = vpack.c.b16 %v3793, %v3791
        %v3854 = vpack.c.b16 %v3794, %v3792
        %v3855 = vpack.c.b16 %v3797, %v3795
        %v3856 = vpack.c.b16 %v3798, %v3796
        %v3857 = vpack.c.b16 %v3801, %v3799
        %v3858 = vpack.c.b16 %v3802, %v3800
        %v3859 = vpack.c.b16 %v3805, %v3803
        %v3860 = vpack.c.b16 %v3806, %v3804
        %v3861 = vpack.c.b16 %v3809, %v3807
        %v3862 = vpack.c.b16 %v3810, %v3808
        %v3863 = vpack.c.b16 %v3813, %v3811
        %v3864 = vpack.c.b16 %v3814, %v3812
        %v3865 = vpack.c.b16 %v3817, %v3815
        %v3866 = vpack.c.b16 %v3818, %v3816
        %v3867 = vpack.c.b16 %v3821, %v3819
        %v3868 = vpack.c.b16 %v3822, %v3820
        %v3869 = vpack.c.b16 %v3825, %v3823
        %v3870 = vpack.c.b16 %v3826, %v3824
        %v3871 = vpack.c.b16 %v3829, %v3827
        %v3872 = vpack.c.b16 %v3830, %v3828
        %v3873 = vpack.c.b16 %v3833, %v3831
        %v3874 = vpack.c.b16 %v3834, %v3832
        %v3875 = vpack.c.b16 %v3837, %v3835
        %v3876 = vpack.c.b16 %v3838, %v3836
        %v3877 = vpack.c.b16 %v3841, %v3839
        %v3878 = vpack.c.b16 %v3842, %v3840
        %v3879 = vpack.c.b16 %v3845, %v3843
        %v3880 = vpack.c.b16 %v3846, %v3844
        %v3881 = vpack.c.b16 %v3849, %v3847
        %v3882 = vpack.c.b16 %v3850, %v3848
        %3915 = vmatprep.subr.bf16.mxu0 %v3852
        %3916 = vmatpush1.bf16.msra.mxu0 %v3851
        %3917 = vmatprep.subr.bf16.mxu0 %v3854
        %3918 = vmatpush1.bf16.msra.mxu0 %v3853
        %3919 = vmatprep.subr.bf16.mxu0 %v3856
        %3920 = vmatpush1.bf16.msra.mxu0 %v3855
        %3921 = vmatprep.subr.bf16.mxu0 %v3858
        %3922 = vmatpush1.bf16.msra.mxu0 %v3857
        %3923 = vmatprep.subr.bf16.mxu0 %v3860
        %3924 = vmatpush1.bf16.msra.mxu0 %v3859
        %3925 = vmatprep.subr.bf16.mxu0 %v3862
        %3926 = vmatpush1.bf16.msra.mxu0 %v3861
        %3927 = vmatprep.subr.bf16.mxu0 %v3864
        %3928 = vmatpush1.bf16.msra.mxu0 %v3863
        %3929 = vmatprep.subr.bf16.mxu0 %v3866
        %3930 = vmatpush1.bf16.msra.mxu0 %v3865
        %3931 = vmatprep.subr.bf16.mxu0 %v3868
        %3932 = vmatpush1.bf16.msra.mxu0 %v3867
        %3933 = vmatprep.subr.bf16.mxu0 %v3870
        %3934 = vmatpush1.bf16.msra.mxu0 %v3869
        %3935 = vmatprep.subr.bf16.mxu0 %v3872
        %3936 = vmatpush1.bf16.msra.mxu0 %v3871
        %3937 = vmatprep.subr.bf16.mxu0 %v3874
        %3938 = vmatpush1.bf16.msra.mxu0 %v3873
        %3939 = vmatprep.subr.bf16.mxu0 %v3876
        %3940 = vmatpush1.bf16.msra.mxu0 %v3875
        %3941 = vmatprep.subr.bf16.mxu0 %v3878
        %3942 = vmatpush1.bf16.msra.mxu0 %v3877
        %3943 = vmatprep.subr.bf16.mxu0 %v3880
        %3944 = vmatpush1.bf16.msra.mxu0 %v3879
        %3945 = vmatprep.subr.bf16.mxu0 %v3882
        %3946 = vmatpush1.bf16.msra.mxu0 %v3881
        %3947 = vmatprep.mubr.bf16.mxu0 %v3696
        %3948 = vmatmul.mubr.bf16.gmra.mrb[0].mxu0 %v3695
        %v3949 = vpop.f32.mrb[0].mxu0
        %v3950 = vadd.f32 %v3748, %v3949
        %v3951 = vpop.f32.mrb[0].mxu0
        %v3952 = vadd.f32 %v3752, %v3951
        %v3953 = vpop.f32.mrb[0].mxu0
        %v3954 = vadd.f32 %v3748, %v3953
        %v3955 = vpop.f32.mrb[0].mxu0
        %v3956 = vadd.f32 %v3752, %v3955
        %3957 = vmatprep.mubr.bf16.mxu0 %v3698
        %3958 = vmatmul.mubr.bf16.gmra.mrb[0].mxu0 %v3697
        %v3959 = vpop.f32.mrb[0].mxu0
        %v3960 = vadd.f32 %v3748, %v3959
        %v3961 = vpop.f32.mrb[0].mxu0
        %v3962 = vadd.f32 %v3752, %v3961
        %v3963 = vpop.f32.mrb[0].mxu0
        %v3964 = vadd.f32 %v3748, %v3963
        %v3965 = vpop.f32.mrb[0].mxu0
        %v3966 = vadd.f32 %v3752, %v3965
        %3967 = vmatprep.mubr.bf16.mxu0 %v3700
        %3968 = vmatmul.mubr.bf16.gmra.mrb[0].mxu0 %v3699
        %v3969 = vpop.f32.mrb[0].mxu0
        %v3970 = vadd.f32 %v3748, %v3969
        %v3971 = vpop.f32.mrb[0].mxu0
        %v3972 = vadd.f32 %v3752, %v3971
        %v3973 = vpop.f32.mrb[0].mxu0
        %v3974 = vadd.f32 %v3748, %v3973
        %v3975 = vpop.f32.mrb[0].mxu0
        %v3976 = vadd.f32 %v3752, %v3975
        %3977 = vmatprep.mubr.bf16.mxu0 %v3702
        %3978 = vmatmul.mubr.bf16.gmra.mrb[0].mxu0 %v3701
        %v3979 = vpop.f32.mrb[0].mxu0
        %v3980 = vadd.f32 %v3748, %v3979
        %v3981 = vpop.f32.mrb[0].mxu0
        %v3982 = vadd.f32 %v3752, %v3981
        %v3983 = vpop.f32.mrb[0].mxu0
        %v3984 = vadd.f32 %v3748, %v3983
        %v3985 = vpop.f32.mrb[0].mxu0
        %v3986 = vadd.f32 %v3752, %v3985
        %3987 = vmatprep.mubr.bf16.mxu0 %v3704
        %3988 = vmatmul.mubr.bf16.gmra.mrb[0].mxu0 %v3703
        %v3989 = vpop.f32.mrb[0].mxu0
        %v3990 = vadd.f32 %v3748, %v3989
        %v3991 = vpop.f32.mrb[0].mxu0
        %v3992 = vadd.f32 %v3752, %v3991
        %v3993 = vpop.f32.mrb[0].mxu0
        %v3994 = vadd.f32 %v3748, %v3993
        %v3995 = vpop.f32.mrb[0].mxu0
        %v3996 = vadd.f32 %v3752, %v3995
        %3997 = vmatprep.mubr.bf16.mxu0 %v3706
        %3998 = vmatmul.mubr.bf16.gmra.mrb[0].mxu0 %v3705
        %v3999 = vpop.f32.mrb[0].mxu0
        %v4000 = vadd.f32 %v3748, %v3999
        %v4001 = vpop.f32.mrb[0].mxu0
        %v4002 = vadd.f32 %v3752, %v4001
        %v4003 = vpop.f32.mrb[0].mxu0
        %v4004 = vadd.f32 %v3748, %v4003
        %v4005 = vpop.f32.mrb[0].mxu0
        %v4006 = vadd.f32 %v3752, %v4005
        %4007 = vmatprep.mubr.bf16.mxu0 %v3708
        %4008 = vmatmul.mubr.bf16.gmra.mrb[0].mxu0 %v3707
        %v4009 = vpop.f32.mrb[0].mxu0
        %v4010 = vadd.f32 %v3748, %v4009
        %v4011 = vpop.f32.mrb[0].mxu0
        %v4012 = vadd.f32 %v3752, %v4011
        %v4013 = vpop.f32.mrb[0].mxu0
        %v4014 = vadd.f32 %v3748, %v4013
        %v4015 = vpop.f32.mrb[0].mxu0
        %v4016 = vadd.f32 %v3752, %v4015
        %4017 = vmatprep.mubr.bf16.mxu0 %v3710
        %4018 = vmatmul.mubr.bf16.gmra.mrb[0].mxu0 %v3709
        %v4019 = vpop.f32.mrb[0].mxu0
        %v4020 = vadd.f32 %v3748, %v4019
        %v4021 = vpop.f32.mrb[0].mxu0
        %v4022 = vadd.f32 %v3752, %v4021
        %v4023 = vpop.f32.mrb[0].mxu0
        %v4024 = vadd.f32 %v3748, %v4023
        %v4025 = vpop.f32.mrb[0].mxu0
        %v4026 = vadd.f32 %v3752, %v4025
        %4027 = vdwg.mxu0
        %v4028 = vadd.f32 %v546, %v3950
        %v4029 = vadd.f32 %v547, %v3952
        %v4030 = vadd.f32 %v548, %v3954
        %v4031 = vadd.f32 %v549, %v3956
        %v4032 = vadd.f32 %v550, %v3960
        %v4033 = vadd.f32 %v551, %v3962
        %v4034 = vadd.f32 %v552, %v3964
        %v4035 = vadd.f32 %v553, %v3966
        %v4036 = vadd.f32 %v554, %v3970
        %v4037 = vadd.f32 %v555, %v3972
        %v4038 = vadd.f32 %v556, %v3974
        %v4039 = vadd.f32 %v557, %v3976
        %v4040 = vadd.f32 %v558, %v3980
        %v4041 = vadd.f32 %v559, %v3982
        %v4042 = vadd.f32 %v560, %v3984
        %v4043 = vadd.f32 %v561, %v3986
        %v4044 = vadd.f32 %v562, %v3990
        %v4045 = vadd.f32 %v563, %v3992
        %v4046 = vadd.f32 %v564, %v3994
        %v4047 = vadd.f32 %v565, %v3996
        %v4048 = vadd.f32 %v566, %v4000
        %v4049 = vadd.f32 %v567, %v4002
        %v4050 = vadd.f32 %v568, %v4004
        %v4051 = vadd.f32 %v569, %v4006
        %v4052 = vadd.f32 %v570, %v4010
        %v4053 = vadd.f32 %v571, %v4012
        %v4054 = vadd.f32 %v572, %v4014
        %v4055 = vadd.f32 %v573, %v4016
        %v4056 = vadd.f32 %v574, %v4020
        %v4057 = vadd.f32 %v575, %v4022
        %v4058 = vadd.f32 %v576, %v4024
        %v4059 = vadd.f32 %v577, %v4026
        %v4060 = vld [vmem:[%s7] sm:$0x3]
        %v4061 = vld [vmem:[%s8] sm:$0x3]
        %v4062 = vadd.f32 %v4028, %v4029
        %4063 = vadd.xlane.f32.xlu0 %v4062
        %v4064 = vpop.xlane.xlu0 %4063
        %v4065 = vadd.f32 %v4030, %v4031
        %4066 = vadd.xlane.f32.xlu0 %v4065
        %v4067 = vpop.xlane.xlu0 %4066
        %v4068 = vadd.f32 %v4032, %v4033
        %4069 = vadd.xlane.f32.xlu0 %v4068
        %v4070 = vpop.xlane.xlu0 %4069
        %v4071 = vadd.f32 %v4034, %v4035
        %4072 = vadd.xlane.f32.xlu0 %v4071
        %v4073 = vpop.xlane.xlu0 %4072
        %v4074 = vadd.f32 %v4036, %v4037
        %4075 = vadd.xlane.f32.xlu0 %v4074
        %v4076 = vpop.xlane.xlu0 %4075
        %v4077 = vadd.f32 %v4038, %v4039
        %4078 = vadd.xlane.f32.xlu0 %v4077
        %v4079 = vpop.xlane.xlu0 %4078
        %v4080 = vadd.f32 %v4040, %v4041
        %4081 = vadd.xlane.f32.xlu0 %v4080
        %v4082 = vpop.xlane.xlu0 %4081
        %v4083 = vadd.f32 %v4042, %v4043
        %4084 = vadd.xlane.f32.xlu0 %v4083
        %v4085 = vpop.xlane.xlu0 %4084
        %v4086 = vadd.f32 %v4044, %v4045
        %4087 = vadd.xlane.f32.xlu0 %v4086
        %v4088 = vpop.xlane.xlu0 %4087
        %v4089 = vadd.f32 %v4046, %v4047
        %4090 = vadd.xlane.f32.xlu0 %v4089
        %v4091 = vpop.xlane.xlu0 %4090
        %v4092 = vadd.f32 %v4048, %v4049
        %4093 = vadd.xlane.f32.xlu0 %v4092
        %v4094 = vpop.xlane.xlu0 %4093
        %v4095 = vadd.f32 %v4050, %v4051
        %4096 = vadd.xlane.f32.xlu0 %v4095
        %v4097 = vpop.xlane.xlu0 %4096
        %v4098 = vadd.f32 %v4052, %v4053
        %4099 = vadd.xlane.f32.xlu0 %v4098
        %v4100 = vpop.xlane.xlu0 %4099
        %v4101 = vadd.f32 %v4054, %v4055
        %4102 = vadd.xlane.f32.xlu0 %v4101
        %v4103 = vpop.xlane.xlu0 %4102
        %v4104 = vadd.f32 %v4056, %v4057
        %4105 = vadd.xlane.f32.xlu0 %v4104
        %v4106 = vpop.xlane.xlu0 %4105
        %v4107 = vadd.f32 %v4058, %v4059
        %4108 = vadd.xlane.f32.xlu0 %v4107
        %v4109 = vpop.xlane.xlu0 %4108
        %v4110 = vmul.f32 %v4064, %v628
        %v4111 = vmul.f32 %v4067, %v628
        %v4112 = vmul.f32 %v4070, %v628
        %v4113 = vmul.f32 %v4073, %v628
        %v4114 = vmul.f32 %v4076, %v628
        %v4115 = vmul.f32 %v4079, %v628
        %v4116 = vmul.f32 %v4082, %v628
        %v4117 = vmul.f32 %v4085, %v628
        %v4118 = vmul.f32 %v4088, %v628
        %v4119 = vmul.f32 %v4091, %v628
        %v4120 = vmul.f32 %v4094, %v628
        %v4121 = vmul.f32 %v4097, %v628
        %v4122 = vmul.f32 %v4100, %v628
        %v4123 = vmul.f32 %v4103, %v628
        %v4124 = vmul.f32 %v4106, %v628
        %v4125 = vmul.f32 %v4109, %v628
        %v4126 = vsub.f32 %v4028, %v4110
        %v4127 = vsub.f32 %v4029, %v4110
        %v4128 = vsub.f32 %v4030, %v4111
        %v4129 = vsub.f32 %v4031, %v4111
        %v4130 = vsub.f32 %v4032, %v4112
        %v4131 = vsub.f32 %v4033, %v4112
        %v4132 = vsub.f32 %v4034, %v4113
        %v4133 = vsub.f32 %v4035, %v4113
        %v4134 = vsub.f32 %v4036, %v4114
        %v4135 = vsub.f32 %v4037, %v4114
        %v4136 = vsub.f32 %v4038, %v4115
        %v4137 = vsub.f32 %v4039, %v4115
        %v4138 = vsub.f32 %v4040, %v4116
        %v4139 = vsub.f32 %v4041, %v4116
        %v4140 = vsub.f32 %v4042, %v4117
        %v4141 = vsub.f32 %v4043, %v4117
        %v4142 = vsub.f32 %v4044, %v4118
        %v4143 = vsub.f32 %v4045, %v4118
        %v4144 = vsub.f32 %v4046, %v4119
        %v4145 = vsub.f32 %v4047, %v4119
        %v4146 = vsub.f32 %v4048, %v4120
        %v4147 = vsub.f32 %v4049, %v4120
        %v4148 = vsub.f32 %v4050, %v4121
        %v4149 = vsub.f32 %v4051, %v4121
        %v4150 = vsub.f32 %v4052, %v4122
        %v4151 = vsub.f32 %v4053, %v4122
        %v4152 = vsub.f32 %v4054, %v4123
        %v4153 = vsub.f32 %v4055, %v4123
        %v4154 = vsub.f32 %v4056, %v4124
        %v4155 = vsub.f32 %v4057, %v4124
        %v4156 = vsub.f32 %v4058, %v4125
        %v4157 = vsub.f32 %v4059, %v4125
        %v4158 = vmul.f32 %v4126, %v4126
        %v4159 = vmul.f32 %v4127, %v4127
        %v4160 = vmul.f32 %v4128, %v4128
        %v4161 = vmul.f32 %v4129, %v4129
        %v4162 = vmul.f32 %v4130, %v4130
        %v4163 = vmul.f32 %v4131, %v4131
        %v4164 = vmul.f32 %v4132, %v4132
        %v4165 = vmul.f32 %v4133, %v4133
        %v4166 = vmul.f32 %v4134, %v4134
        %v4167 = vmul.f32 %v4135, %v4135
        %v4168 = vmul.f32 %v4136, %v4136
        %v4169 = vmul.f32 %v4137, %v4137
        %v4170 = vmul.f32 %v4138, %v4138
        %v4171 = vmul.f32 %v4139, %v4139
        %v4172 = vmul.f32 %v4140, %v4140
        %v4173 = vmul.f32 %v4141, %v4141
        %v4174 = vmul.f32 %v4142, %v4142
        %v4175 = vmul.f32 %v4143, %v4143
        %v4176 = vmul.f32 %v4144, %v4144
        %v4177 = vmul.f32 %v4145, %v4145
        %v4178 = vmul.f32 %v4146, %v4146
        %v4179 = vmul.f32 %v4147, %v4147
        %v4180 = vmul.f32 %v4148, %v4148
        %v4181 = vmul.f32 %v4149, %v4149
        %v4182 = vmul.f32 %v4150, %v4150
        %v4183 = vmul.f32 %v4151, %v4151
        %v4184 = vmul.f32 %v4152, %v4152
        %v4185 = vmul.f32 %v4153, %v4153
        %v4186 = vmul.f32 %v4154, %v4154
        %v4187 = vmul.f32 %v4155, %v4155
        %v4188 = vmul.f32 %v4156, %v4156
        %v4189 = vmul.f32 %v4157, %v4157
        %v4190 = vadd.f32 %v4158, %v4159
        %4191 = vadd.xlane.f32.xlu0 %v4190
        %v4192 = vpop.xlane.xlu0 %4191
        %v4193 = vadd.f32 %v4160, %v4161
        %4194 = vadd.xlane.f32.xlu0 %v4193
        %v4195 = vpop.xlane.xlu0 %4194
        %v4196 = vadd.f32 %v4162, %v4163
        %4197 = vadd.xlane.f32.xlu0 %v4196
        %v4198 = vpop.xlane.xlu0 %4197
        %v4199 = vadd.f32 %v4164, %v4165
        %4200 = vadd.xlane.f32.xlu0 %v4199
        %v4201 = vpop.xlane.xlu0 %4200
        %v4202 = vadd.f32 %v4166, %v4167
        %4203 = vadd.xlane.f32.xlu0 %v4202
        %v4204 = vpop.xlane.xlu0 %4203
        %v4205 = vadd.f32 %v4168, %v4169
        %4206 = vadd.xlane.f32.xlu0 %v4205
        %v4207 = vpop.xlane.xlu0 %4206
        %v4208 = vadd.f32 %v4170, %v4171
        %4209 = vadd.xlane.f32.xlu0 %v4208
        %v4210 = vpop.xlane.xlu0 %4209
        %v4211 = vadd.f32 %v4172, %v4173
        %4212 = vadd.xlane.f32.xlu0 %v4211
        %v4213 = vpop.xlane.xlu0 %4212
        %v4214 = vadd.f32 %v4174, %v4175
        %4215 = vadd.xlane.f32.xlu0 %v4214
        %v4216 = vpop.xlane.xlu0 %4215
        %v4217 = vadd.f32 %v4176, %v4177
        %4218 = vadd.xlane.f32.xlu0 %v4217
        %v4219 = vpop.xlane.xlu0 %4218
        %v4220 = vadd.f32 %v4178, %v4179
        %4221 = vadd.xlane.f32.xlu0 %v4220
        %v4222 = vpop.xlane.xlu0 %4221
        %v4223 = vadd.f32 %v4180, %v4181
        %4224 = vadd.xlane.f32.xlu0 %v4223
        %v4225 = vpop.xlane.xlu0 %4224
        %v4226 = vadd.f32 %v4182, %v4183
        %4227 = vadd.xlane.f32.xlu0 %v4226
        %v4228 = vpop.xlane.xlu0 %4227
        %v4229 = vadd.f32 %v4184, %v4185
        %4230 = vadd.xlane.f32.xlu0 %v4229
        %v4231 = vpop.xlane.xlu0 %4230
        %v4232 = vadd.f32 %v4186, %v4187
        %4233 = vadd.xlane.f32.xlu0 %v4232
        %v4234 = vpop.xlane.xlu0 %4233
        %v4235 = vadd.f32 %v4188, %v4189
        %4236 = vadd.xlane.f32.xlu0 %v4235
        %v4237 = vpop.xlane.xlu0 %4236
        %v4238 = vmul.f32 %v4192, %v628
        %v4239 = vmul.f32 %v4195, %v628
        %v4240 = vmul.f32 %v4198, %v628
        %v4241 = vmul.f32 %v4201, %v628
        %v4242 = vmul.f32 %v4204, %v628
        %v4243 = vmul.f32 %v4207, %v628
        %v4244 = vmul.f32 %v4210, %v628
        %v4245 = vmul.f32 %v4213, %v628
        %v4246 = vmul.f32 %v4216, %v628
        %v4247 = vmul.f32 %v4219, %v628
        %v4248 = vmul.f32 %v4222, %v628
        %v4249 = vmul.f32 %v4225, %v628
        %v4250 = vmul.f32 %v4228, %v628
        %v4251 = vmul.f32 %v4231, %v628
        %v4252 = vmul.f32 %v4234, %v628
        %v4253 = vmul.f32 %v4237, %v628
        %v4254 = vadd.f32 %v4238, 1e-05
        %v4255 = vadd.f32 %v4239, 1e-05
        %v4256 = vadd.f32 %v4240, 1e-05
        %v4257 = vadd.f32 %v4241, 1e-05
        %v4258 = vadd.f32 %v4242, 1e-05
        %v4259 = vadd.f32 %v4243, 1e-05
        %v4260 = vadd.f32 %v4244, 1e-05
        %v4261 = vadd.f32 %v4245, 1e-05
        %v4262 = vadd.f32 %v4246, 1e-05
        %v4263 = vadd.f32 %v4247, 1e-05
        %v4264 = vadd.f32 %v4248, 1e-05
        %v4265 = vadd.f32 %v4249, 1e-05
        %v4266 = vadd.f32 %v4250, 1e-05
        %v4267 = vadd.f32 %v4251, 1e-05
        %v4268 = vadd.f32 %v4252, 1e-05
        %v4269 = vadd.f32 %v4253, 1e-05
        %v4270 = vrsqrt.pop %v4254
        %v4271 = vrsqrt.pop %v4255
        %v4272 = vrsqrt.pop %v4256
        %v4273 = vrsqrt.pop %v4257
        %v4274 = vrsqrt.pop %v4258
        %v4275 = vrsqrt.pop %v4259
        %v4276 = vrsqrt.pop %v4260
        %v4277 = vrsqrt.pop %v4261
        %v4278 = vrsqrt.pop %v4262
        %v4279 = vrsqrt.pop %v4263
        %v4280 = vrsqrt.pop %v4264
        %v4281 = vrsqrt.pop %v4265
        %v4282 = vrsqrt.pop %v4266
        %v4283 = vrsqrt.pop %v4267
        %v4284 = vrsqrt.pop %v4268
        %v4285 = vrsqrt.pop %v4269
        %v4286 = vmul.f32 %v4126, %v4270
        %v4287 = vmul.f32 %v4127, %v4270
        %v4288 = vmul.f32 %v4128, %v4271
        %v4289 = vmul.f32 %v4129, %v4271
        %v4290 = vmul.f32 %v4130, %v4272
        %v4291 = vmul.f32 %v4131, %v4272
        %v4292 = vmul.f32 %v4132, %v4273
        %v4293 = vmul.f32 %v4133, %v4273
        %v4294 = vmul.f32 %v4134, %v4274
        %v4295 = vmul.f32 %v4135, %v4274
        %v4296 = vmul.f32 %v4136, %v4275
        %v4297 = vmul.f32 %v4137, %v4275
        %v4298 = vmul.f32 %v4138, %v4276
        %v4299 = vmul.f32 %v4139, %v4276
        %v4300 = vmul.f32 %v4140, %v4277
        %v4301 = vmul.f32 %v4141, %v4277
        %v4302 = vmul.f32 %v4142, %v4278
        %v4303 = vmul.f32 %v4143, %v4278
        %v4304 = vmul.f32 %v4144, %v4279
        %v4305 = vmul.f32 %v4145, %v4279
        %v4306 = vmul.f32 %v4146, %v4280
        %v4307 = vmul.f32 %v4147, %v4280
        %v4308 = vmul.f32 %v4148, %v4281
        %v4309 = vmul.f32 %v4149, %v4281
        %v4310 = vmul.f32 %v4150, %v4282
        %v4311 = vmul.f32 %v4151, %v4282
        %v4312 = vmul.f32 %v4152, %v4283
        %v4313 = vmul.f32 %v4153, %v4283
        %v4314 = vmul.f32 %v4154, %v4284
        %v4315 = vmul.f32 %v4155, %v4284
        %v4316 = vmul.f32 %v4156, %v4285
        %v4317 = vmul.f32 %v4157, %v4285
        %v4319 = vlaneseq
        %v4320 = vshrl.u32 %v4319, 7
        %v4321 = vsub.s32 0, %v4320
        %v4322 = vrot.slane %v4060, %v4321
        %v4323 = vlaneseq
        %v4324 = vshrl.u32 %v4323, 7
        %v4325 = vsub.s32 1, %v4324
        %v4326 = vrot.slane %v4060, %v4325
        %v4329 = vmul.f32 %v4286, %v4322
        %v4330 = vmul.f32 %v4287, %v4326
        %v4331 = vmul.f32 %v4288, %v4322
        %v4332 = vmul.f32 %v4289, %v4326
        %v4333 = vmul.f32 %v4290, %v4322
        %v4334 = vmul.f32 %v4291, %v4326
        %v4335 = vmul.f32 %v4292, %v4322
        %v4336 = vmul.f32 %v4293, %v4326
        %v4337 = vmul.f32 %v4294, %v4322
        %v4338 = vmul.f32 %v4295, %v4326
        %v4339 = vmul.f32 %v4296, %v4322
        %v4340 = vmul.f32 %v4297, %v4326
        %v4341 = vmul.f32 %v4298, %v4322
        %v4342 = vmul.f32 %v4299, %v4326
        %v4343 = vmul.f32 %v4300, %v4322
        %v4344 = vmul.f32 %v4301, %v4326
        %v4345 = vmul.f32 %v4302, %v4322
        %v4346 = vmul.f32 %v4303, %v4326
        %v4347 = vmul.f32 %v4304, %v4322
        %v4348 = vmul.f32 %v4305, %v4326
        %v4349 = vmul.f32 %v4306, %v4322
        %v4350 = vmul.f32 %v4307, %v4326
        %v4351 = vmul.f32 %v4308, %v4322
        %v4352 = vmul.f32 %v4309, %v4326
        %v4353 = vmul.f32 %v4310, %v4322
        %v4354 = vmul.f32 %v4311, %v4326
        %v4355 = vmul.f32 %v4312, %v4322
        %v4356 = vmul.f32 %v4313, %v4326
        %v4357 = vmul.f32 %v4314, %v4322
        %v4358 = vmul.f32 %v4315, %v4326
        %v4359 = vmul.f32 %v4316, %v4322
        %v4360 = vmul.f32 %v4317, %v4326
        %v4362 = vlaneseq
        %v4363 = vshrl.u32 %v4362, 7
        %v4364 = vsub.s32 0, %v4363
        %v4365 = vrot.slane %v4061, %v4364
        %v4366 = vlaneseq
        %v4367 = vshrl.u32 %v4366, 7
        %v4368 = vsub.s32 1, %v4367
        %v4369 = vrot.slane %v4061, %v4368
        %v4372 = vadd.f32 %v4329, %v4365
        %v4373 = vadd.f32 %v4330, %v4369
        %v4374 = vadd.f32 %v4331, %v4365
        %v4375 = vadd.f32 %v4332, %v4369
        %v4376 = vadd.f32 %v4333, %v4365
        %v4377 = vadd.f32 %v4334, %v4369
        %v4378 = vadd.f32 %v4335, %v4365
        %v4379 = vadd.f32 %v4336, %v4369
        %v4380 = vadd.f32 %v4337, %v4365
        %v4381 = vadd.f32 %v4338, %v4369
        %v4382 = vadd.f32 %v4339, %v4365
        %v4383 = vadd.f32 %v4340, %v4369
        %v4384 = vadd.f32 %v4341, %v4365
        %v4385 = vadd.f32 %v4342, %v4369
        %v4386 = vadd.f32 %v4343, %v4365
        %v4387 = vadd.f32 %v4344, %v4369
        %v4388 = vadd.f32 %v4345, %v4365
        %v4389 = vadd.f32 %v4346, %v4369
        %v4390 = vadd.f32 %v4347, %v4365
        %v4391 = vadd.f32 %v4348, %v4369
        %v4392 = vadd.f32 %v4349, %v4365
        %v4393 = vadd.f32 %v4350, %v4369
        %v4394 = vadd.f32 %v4351, %v4365
        %v4395 = vadd.f32 %v4352, %v4369
        %v4396 = vadd.f32 %v4353, %v4365
        %v4397 = vadd.f32 %v4354, %v4369
        %v4398 = vadd.f32 %v4355, %v4365
        %v4399 = vadd.f32 %v4356, %v4369
        %v4400 = vadd.f32 %v4357, %v4365
        %v4401 = vadd.f32 %v4358, %v4369
        %v4402 = vadd.f32 %v4359, %v4365
        %v4403 = vadd.f32 %v4360, %v4369
        %v4404 = vpack.c.bf16 %v4374, %v4372
        %v4405 = vpack.c.bf16 %v4375, %v4373
        %v4406 = vpack.c.bf16 %v4378, %v4376
        %v4407 = vpack.c.bf16 %v4379, %v4377
        %v4408 = vpack.c.bf16 %v4382, %v4380
        %v4409 = vpack.c.bf16 %v4383, %v4381
        %v4410 = vpack.c.bf16 %v4386, %v4384
        %v4411 = vpack.c.bf16 %v4387, %v4385
        %v4412 = vpack.c.bf16 %v4390, %v4388
        %v4413 = vpack.c.bf16 %v4391, %v4389
        %v4414 = vpack.c.bf16 %v4394, %v4392
        %v4415 = vpack.c.bf16 %v4395, %v4393
        %v4416 = vpack.c.bf16 %v4398, %v4396
        %v4417 = vpack.c.bf16 %v4399, %v4397
        %v4418 = vpack.c.bf16 %v4402, %v4400
        %v4419 = vpack.c.bf16 %v4403, %v4401
        %v4420 = vld [vmem:[#allocation12] sm:$0xff]
        %v4421 = vld [vmem:[#allocation12 + $0x8] sm:$0xff]
        %v4422 = vld [vmem:[#allocation12 + $0x10] sm:$0xff]
        %v4423 = vld [vmem:[#allocation12 + $0x18] sm:$0xff]
        %v4424 = vld [vmem:[#allocation12 + $0x20] sm:$0xff]
        %v4425 = vld [vmem:[#allocation12 + $0x28] sm:$0xff]
        %v4426 = vld [vmem:[#allocation12 + $0x30] sm:$0xff]
        %v4427 = vld [vmem:[#allocation12 + $0x38] sm:$0xff]
        %v4428 = vld [vmem:[#allocation12 + $0x40] sm:$0xff]
        %v4429 = vld [vmem:[#allocation12 + $0x48] sm:$0xff]
        %v4430 = vld [vmem:[#allocation12 + $0x50] sm:$0xff]
        %v4431 = vld [vmem:[#allocation12 + $0x58] sm:$0xff]
        %v4432 = vld [vmem:[#allocation12 + $0x60] sm:$0xff]
        %v4433 = vld [vmem:[#allocation12 + $0x68] sm:$0xff]
        %v4434 = vld [vmem:[#allocation12 + $0x70] sm:$0xff]
        %v4435 = vld [vmem:[#allocation12 + $0x78] sm:$0xff]
        %v4436 = vld [vmem:[#allocation12 + $0x80] sm:$0xff]
        %v4437 = vld [vmem:[#allocation12 + $0x88] sm:$0xff]
        %v4438 = vld [vmem:[#allocation12 + $0x90] sm:$0xff]
        %v4439 = vld [vmem:[#allocation12 + $0x98] sm:$0xff]
        %v4440 = vld [vmem:[#allocation12 + $0xa0] sm:$0xff]
        %v4441 = vld [vmem:[#allocation12 + $0xa8] sm:$0xff]
        %v4442 = vld [vmem:[#allocation12 + $0xb0] sm:$0xff]
        %v4443 = vld [vmem:[#allocation12 + $0xb8] sm:$0xff]
        %v4444 = vld [vmem:[#allocation12 + $0xc0] sm:$0xff]
        %v4445 = vld [vmem:[#allocation12 + $0xc8] sm:$0xff]
        %v4446 = vld [vmem:[#allocation12 + $0xd0] sm:$0xff]
        %v4447 = vld [vmem:[#allocation12 + $0xd8] sm:$0xff]
        %v4448 = vld [vmem:[#allocation12 + $0xe0] sm:$0xff]
        %v4449 = vld [vmem:[#allocation12 + $0xe8] sm:$0xff]
        %v4450 = vld [vmem:[#allocation12 + $0xf0] sm:$0xff]
        %v4451 = vld [vmem:[#allocation12 + $0xf8] sm:$0xff]
        %v4452 = vld [vmem:[#allocation12 + $0x100] sm:$0xff]
        %v4453 = vld [vmem:[#allocation12 + $0x108] sm:$0xff]
        %v4454 = vld [vmem:[#allocation12 + $0x110] sm:$0xff]
        %v4455 = vld [vmem:[#allocation12 + $0x118] sm:$0xff]
        %v4456 = vld [vmem:[#allocation12 + $0x120] sm:$0xff]
        %v4457 = vld [vmem:[#allocation12 + $0x128] sm:$0xff]
        %v4458 = vld [vmem:[#allocation12 + $0x130] sm:$0xff]
        %v4459 = vld [vmem:[#allocation12 + $0x138] sm:$0xff]
        %v4460 = vld [vmem:[#allocation12 + $0x140] sm:$0xff]
        %v4461 = vld [vmem:[#allocation12 + $0x148] sm:$0xff]
        %v4462 = vld [vmem:[#allocation12 + $0x150] sm:$0xff]
        %v4463 = vld [vmem:[#allocation12 + $0x158] sm:$0xff]
        %v4464 = vld [vmem:[#allocation12 + $0x160] sm:$0xff]
        %v4465 = vld [vmem:[#allocation12 + $0x168] sm:$0xff]
        %v4466 = vld [vmem:[#allocation12 + $0x170] sm:$0xff]
        %v4467 = vld [vmem:[#allocation12 + $0x178] sm:$0xff]
        %v4468 = vld [vmem:[#allocation12 + $0x180] sm:$0xff]
        %v4469 = vld [vmem:[#allocation12 + $0x188] sm:$0xff]
        %v4470 = vld [vmem:[#allocation12 + $0x190] sm:$0xff]
        %v4471 = vld [vmem:[#allocation12 + $0x198] sm:$0xff]
        %v4472 = vld [vmem:[#allocation12 + $0x1a0] sm:$0xff]
        %v4473 = vld [vmem:[#allocation12 + $0x1a8] sm:$0xff]
        %v4474 = vld [vmem:[#allocation12 + $0x1b0] sm:$0xff]
        %v4475 = vld [vmem:[#allocation12 + $0x1b8] sm:$0xff]
        %v4476 = vld [vmem:[#allocation12 + $0x1c0] sm:$0xff]
        %v4477 = vld [vmem:[#allocation12 + $0x1c8] sm:$0xff]
        %v4478 = vld [vmem:[#allocation12 + $0x1d0] sm:$0xff]
        %v4479 = vld [vmem:[#allocation12 + $0x1d8] sm:$0xff]
        %v4480 = vld [vmem:[#allocation12 + $0x1e0] sm:$0xff]
        %v4481 = vld [vmem:[#allocation12 + $0x1e8] sm:$0xff]
        %v4482 = vld [vmem:[#allocation12 + $0x1f0] sm:$0xff]
        %v4483 = vld [vmem:[#allocation12 + $0x1f8] sm:$0xff]
        %v4484 = vld [vmem:[#allocation12 + $0x200] sm:$0xff]
        %v4485 = vld [vmem:[#allocation12 + $0x208] sm:$0xff]
        %v4486 = vld [vmem:[#allocation12 + $0x210] sm:$0xff]
        %v4487 = vld [vmem:[#allocation12 + $0x218] sm:$0xff]
        %v4488 = vld [vmem:[#allocation12 + $0x220] sm:$0xff]
        %v4489 = vld [vmem:[#allocation12 + $0x228] sm:$0xff]
        %v4490 = vld [vmem:[#allocation12 + $0x230] sm:$0xff]
        %v4491 = vld [vmem:[#allocation12 + $0x238] sm:$0xff]
        %v4492 = vld [vmem:[#allocation12 + $0x240] sm:$0xff]
        %v4493 = vld [vmem:[#allocation12 + $0x248] sm:$0xff]
        %v4494 = vld [vmem:[#allocation12 + $0x250] sm:$0xff]
        %v4495 = vld [vmem:[#allocation12 + $0x258] sm:$0xff]
        %v4496 = vld [vmem:[#allocation12 + $0x260] sm:$0xff]
        %v4497 = vld [vmem:[#allocation12 + $0x268] sm:$0xff]
        %v4498 = vld [vmem:[#allocation12 + $0x270] sm:$0xff]
        %v4499 = vld [vmem:[#allocation12 + $0x278] sm:$0xff]
        %v4500 = vld [vmem:[#allocation12 + $0x280] sm:$0xff]
        %v4501 = vld [vmem:[#allocation12 + $0x288] sm:$0xff]
        %v4502 = vld [vmem:[#allocation12 + $0x290] sm:$0xff]
        %v4503 = vld [vmem:[#allocation12 + $0x298] sm:$0xff]
        %v4504 = vld [vmem:[#allocation12 + $0x2a0] sm:$0xff]
        %v4505 = vld [vmem:[#allocation12 + $0x2a8] sm:$0xff]
        %v4506 = vld [vmem:[#allocation12 + $0x2b0] sm:$0xff]
        %v4507 = vld [vmem:[#allocation12 + $0x2b8] sm:$0xff]
        %v4508 = vld [vmem:[#allocation12 + $0x2c0] sm:$0xff]
        %v4509 = vld [vmem:[#allocation12 + $0x2c8] sm:$0xff]
        %v4510 = vld [vmem:[#allocation12 + $0x2d0] sm:$0xff]
        %v4511 = vld [vmem:[#allocation12 + $0x2d8] sm:$0xff]
        %v4512 = vld [vmem:[#allocation12 + $0x2e0] sm:$0xff]
        %v4513 = vld [vmem:[#allocation12 + $0x2e8] sm:$0xff]
        %v4514 = vld [vmem:[#allocation12 + $0x2f0] sm:$0xff]
        %v4515 = vld [vmem:[#allocation12 + $0x2f8] sm:$0xff]
        %v4516 = vld [vmem:[#allocation12 + $0x300] sm:$0xff]
        %v4517 = vld [vmem:[#allocation12 + $0x308] sm:$0xff]
        %v4518 = vld [vmem:[#allocation12 + $0x310] sm:$0xff]
        %v4519 = vld [vmem:[#allocation12 + $0x318] sm:$0xff]
        %v4520 = vld [vmem:[#allocation12 + $0x320] sm:$0xff]
        %v4521 = vld [vmem:[#allocation12 + $0x328] sm:$0xff]
        %v4522 = vld [vmem:[#allocation12 + $0x330] sm:$0xff]
        %v4523 = vld [vmem:[#allocation12 + $0x338] sm:$0xff]
        %v4524 = vld [vmem:[#allocation12 + $0x340] sm:$0xff]
        %v4525 = vld [vmem:[#allocation12 + $0x348] sm:$0xff]
        %v4526 = vld [vmem:[#allocation12 + $0x350] sm:$0xff]
        %v4527 = vld [vmem:[#allocation12 + $0x358] sm:$0xff]
        %v4528 = vld [vmem:[#allocation12 + $0x360] sm:$0xff]
        %v4529 = vld [vmem:[#allocation12 + $0x368] sm:$0xff]
        %v4530 = vld [vmem:[#allocation12 + $0x370] sm:$0xff]
        %v4531 = vld [vmem:[#allocation12 + $0x378] sm:$0xff]
        %v4532 = vld [vmem:[#allocation12 + $0x380] sm:$0xff]
        %v4533 = vld [vmem:[#allocation12 + $0x388] sm:$0xff]
        %v4534 = vld [vmem:[#allocation12 + $0x390] sm:$0xff]
        %v4535 = vld [vmem:[#allocation12 + $0x398] sm:$0xff]
        %v4536 = vld [vmem:[#allocation12 + $0x3a0] sm:$0xff]
        %v4537 = vld [vmem:[#allocation12 + $0x3a8] sm:$0xff]
        %v4538 = vld [vmem:[#allocation12 + $0x3b0] sm:$0xff]
        %v4539 = vld [vmem:[#allocation12 + $0x3b8] sm:$0xff]
        %v4540 = vld [vmem:[#allocation12 + $0x3c0] sm:$0xff]
        %v4541 = vld [vmem:[#allocation12 + $0x3c8] sm:$0xff]
        %v4542 = vld [vmem:[#allocation12 + $0x3d0] sm:$0xff]
        %v4543 = vld [vmem:[#allocation12 + $0x3d8] sm:$0xff]
        %v4544 = vld [vmem:[#allocation12 + $0x3e0] sm:$0xff]
        %v4545 = vld [vmem:[#allocation12 + $0x3e8] sm:$0xff]
        %v4546 = vld [vmem:[#allocation12 + $0x3f0] sm:$0xff]
        %v4547 = vld [vmem:[#allocation12 + $0x3f8] sm:$0xff]
        %v4548 = vld [vmem:[%s10] sm:$0xff]
        %v4550 = vlaneseq
        %v4551 = vshrl.u32 %v4550, 7
        %v4552 = vsub.s32 0, %v4551
        %v4553 = vrot.slane %v4548, %v4552
        %v4554 = vlaneseq
        %v4555 = vshrl.u32 %v4554, 7
        %v4556 = vsub.s32 1, %v4555
        %v4557 = vrot.slane %v4548, %v4556
        %v4558 = vlaneseq
        %v4559 = vshrl.u32 %v4558, 7
        %v4560 = vsub.s32 2, %v4559
        %v4561 = vrot.slane %v4548, %v4560
        %v4562 = vlaneseq
        %v4563 = vshrl.u32 %v4562, 7
        %v4564 = vsub.s32 3, %v4563
        %v4565 = vrot.slane %v4548, %v4564
        %v4566 = vlaneseq
        %v4567 = vshrl.u32 %v4566, 7
        %v4568 = vsub.s32 4, %v4567
        %v4569 = vrot.slane %v4548, %v4568
        %v4570 = vlaneseq
        %v4571 = vshrl.u32 %v4570, 7
        %v4572 = vsub.s32 5, %v4571
        %v4573 = vrot.slane %v4548, %v4572
        %v4574 = vlaneseq
        %v4575 = vshrl.u32 %v4574, 7
        %v4576 = vsub.s32 6, %v4575
        %v4577 = vrot.slane %v4548, %v4576
        %v4578 = vlaneseq
        %v4579 = vshrl.u32 %v4578, 7
        %v4580 = vsub.s32 7, %v4579
        %v4581 = vrot.slane %v4548, %v4580
        %v4718 = vunpack.c.l.b16 %v4420
        %v4719 = vunpack.c.h.b16 %v4420
        %v4720 = vunpack.c.l.b16 %v4421
        %v4721 = vunpack.c.h.b16 %v4421
        %v4722 = vunpack.c.l.b16 %v4422
        %v4723 = vunpack.c.h.b16 %v4422
        %v4724 = vunpack.c.l.b16 %v4423
        %v4725 = vunpack.c.h.b16 %v4423
        %v4726 = vunpack.c.l.b16 %v4424
        %v4727 = vunpack.c.h.b16 %v4424
        %v4728 = vunpack.c.l.b16 %v4425
        %v4729 = vunpack.c.h.b16 %v4425
        %v4730 = vunpack.c.l.b16 %v4426
        %v4731 = vunpack.c.h.b16 %v4426
        %v4732 = vunpack.c.l.b16 %v4427
        %v4733 = vunpack.c.h.b16 %v4427
        %v4734 = vunpack.c.l.b16 %v4428
        %v4735 = vunpack.c.h.b16 %v4428
        %v4736 = vunpack.c.l.b16 %v4429
        %v4737 = vunpack.c.h.b16 %v4429
        %v4738 = vunpack.c.l.b16 %v4430
        %v4739 = vunpack.c.h.b16 %v4430
        %v4740 = vunpack.c.l.b16 %v4431
        %v4741 = vunpack.c.h.b16 %v4431
        %v4742 = vunpack.c.l.b16 %v4432
        %v4743 = vunpack.c.h.b16 %v4432
        %v4744 = vunpack.c.l.b16 %v4433
        %v4745 = vunpack.c.h.b16 %v4433
        %v4746 = vunpack.c.l.b16 %v4434
        %v4747 = vunpack.c.h.b16 %v4434
        %v4748 = vunpack.c.l.b16 %v4435
        %v4749 = vunpack.c.h.b16 %v4435
        %v4750 = vunpack.c.l.b16 %v4436
        %v4751 = vunpack.c.h.b16 %v4436
        %v4752 = vunpack.c.l.b16 %v4437
        %v4753 = vunpack.c.h.b16 %v4437
        %v4754 = vunpack.c.l.b16 %v4438
        %v4755 = vunpack.c.h.b16 %v4438
        %v4756 = vunpack.c.l.b16 %v4439
        %v4757 = vunpack.c.h.b16 %v4439
        %v4758 = vunpack.c.l.b16 %v4440
        %v4759 = vunpack.c.h.b16 %v4440
        %v4760 = vunpack.c.l.b16 %v4441
        %v4761 = vunpack.c.h.b16 %v4441
        %v4762 = vunpack.c.l.b16 %v4442
        %v4763 = vunpack.c.h.b16 %v4442
        %v4764 = vunpack.c.l.b16 %v4443
        %v4765 = vunpack.c.h.b16 %v4443
        %v4766 = vunpack.c.l.b16 %v4444
        %v4767 = vunpack.c.h.b16 %v4444
        %v4768 = vunpack.c.l.b16 %v4445
        %v4769 = vunpack.c.h.b16 %v4445
        %v4770 = vunpack.c.l.b16 %v4446
        %v4771 = vunpack.c.h.b16 %v4446
        %v4772 = vunpack.c.l.b16 %v4447
        %v4773 = vunpack.c.h.b16 %v4447
        %v4774 = vunpack.c.l.b16 %v4448
        %v4775 = vunpack.c.h.b16 %v4448
        %v4776 = vunpack.c.l.b16 %v4449
        %v4777 = vunpack.c.h.b16 %v4449
        %v4778 = vunpack.c.l.b16 %v4450
        %v4779 = vunpack.c.h.b16 %v4450
        %v4780 = vunpack.c.l.b16 %v4451
        %v4781 = vunpack.c.h.b16 %v4451
        %v4782 = vunpack.c.l.b16 %v4452
        %v4783 = vunpack.c.h.b16 %v4452
        %v4784 = vunpack.c.l.b16 %v4453
        %v4785 = vunpack.c.h.b16 %v4453
        %v4786 = vunpack.c.l.b16 %v4454
        %v4787 = vunpack.c.h.b16 %v4454
        %v4788 = vunpack.c.l.b16 %v4455
        %v4789 = vunpack.c.h.b16 %v4455
        %v4790 = vunpack.c.l.b16 %v4456
        %v4791 = vunpack.c.h.b16 %v4456
        %v4792 = vunpack.c.l.b16 %v4457
        %v4793 = vunpack.c.h.b16 %v4457
        %v4794 = vunpack.c.l.b16 %v4458
        %v4795 = vunpack.c.h.b16 %v4458
        %v4796 = vunpack.c.l.b16 %v4459
        %v4797 = vunpack.c.h.b16 %v4459
        %v4798 = vunpack.c.l.b16 %v4460
        %v4799 = vunpack.c.h.b16 %v4460
        %v4800 = vunpack.c.l.b16 %v4461
        %v4801 = vunpack.c.h.b16 %v4461
        %v4802 = vunpack.c.l.b16 %v4462
        %v4803 = vunpack.c.h.b16 %v4462
        %v4804 = vunpack.c.l.b16 %v4463
        %v4805 = vunpack.c.h.b16 %v4463
        %v4806 = vunpack.c.l.b16 %v4464
        %v4807 = vunpack.c.h.b16 %v4464
        %v4808 = vunpack.c.l.b16 %v4465
        %v4809 = vunpack.c.h.b16 %v4465
        %v4810 = vunpack.c.l.b16 %v4466
        %v4811 = vunpack.c.h.b16 %v4466
        %v4812 = vunpack.c.l.b16 %v4467
        %v4813 = vunpack.c.h.b16 %v4467
        %v4814 = vunpack.c.l.b16 %v4468
        %v4815 = vunpack.c.h.b16 %v4468
        %v4816 = vunpack.c.l.b16 %v4469
        %v4817 = vunpack.c.h.b16 %v4469
        %v4818 = vunpack.c.l.b16 %v4470
        %v4819 = vunpack.c.h.b16 %v4470
        %v4820 = vunpack.c.l.b16 %v4471
        %v4821 = vunpack.c.h.b16 %v4471
        %v4822 = vunpack.c.l.b16 %v4472
        %v4823 = vunpack.c.h.b16 %v4472
        %v4824 = vunpack.c.l.b16 %v4473
        %v4825 = vunpack.c.h.b16 %v4473
        %v4826 = vunpack.c.l.b16 %v4474
        %v4827 = vunpack.c.h.b16 %v4474
        %v4828 = vunpack.c.l.b16 %v4475
        %v4829 = vunpack.c.h.b16 %v4475
        %v4830 = vunpack.c.l.b16 %v4476
        %v4831 = vunpack.c.h.b16 %v4476
        %v4832 = vunpack.c.l.b16 %v4477
        %v4833 = vunpack.c.h.b16 %v4477
        %v4834 = vunpack.c.l.b16 %v4478
        %v4835 = vunpack.c.h.b16 %v4478
        %v4836 = vunpack.c.l.b16 %v4479
        %v4837 = vunpack.c.h.b16 %v4479
        %v4838 = vunpack.c.l.b16 %v4480
        %v4839 = vunpack.c.h.b16 %v4480
        %v4840 = vunpack.c.l.b16 %v4481
        %v4841 = vunpack.c.h.b16 %v4481
        %v4842 = vunpack.c.l.b16 %v4482
        %v4843 = vunpack.c.h.b16 %v4482
        %v4844 = vunpack.c.l.b16 %v4483
        %v4845 = vunpack.c.h.b16 %v4483
        %v4846 = vunpack.c.l.b16 %v4484
        %v4847 = vunpack.c.h.b16 %v4484
        %v4848 = vunpack.c.l.b16 %v4485
        %v4849 = vunpack.c.h.b16 %v4485
        %v4850 = vunpack.c.l.b16 %v4486
        %v4851 = vunpack.c.h.b16 %v4486
        %v4852 = vunpack.c.l.b16 %v4487
        %v4853 = vunpack.c.h.b16 %v4487
        %v4854 = vunpack.c.l.b16 %v4488
        %v4855 = vunpack.c.h.b16 %v4488
        %v4856 = vunpack.c.l.b16 %v4489
        %v4857 = vunpack.c.h.b16 %v4489
        %v4858 = vunpack.c.l.b16 %v4490
        %v4859 = vunpack.c.h.b16 %v4490
        %v4860 = vunpack.c.l.b16 %v4491
        %v4861 = vunpack.c.h.b16 %v4491
        %v4862 = vunpack.c.l.b16 %v4492
        %v4863 = vunpack.c.h.b16 %v4492
        %v4864 = vunpack.c.l.b16 %v4493
        %v4865 = vunpack.c.h.b16 %v4493
        %v4866 = vunpack.c.l.b16 %v4494
        %v4867 = vunpack.c.h.b16 %v4494
        %v4868 = vunpack.c.l.b16 %v4495
        %v4869 = vunpack.c.h.b16 %v4495
        %v4870 = vunpack.c.l.b16 %v4496
        %v4871 = vunpack.c.h.b16 %v4496
        %v4872 = vunpack.c.l.b16 %v4497
        %v4873 = vunpack.c.h.b16 %v4497
        %v4874 = vunpack.c.l.b16 %v4498
        %v4875 = vunpack.c.h.b16 %v4498
        %v4876 = vunpack.c.l.b16 %v4499
        %v4877 = vunpack.c.h.b16 %v4499
        %v4878 = vunpack.c.l.b16 %v4500
        %v4879 = vunpack.c.h.b16 %v4500
        %v4880 = vunpack.c.l.b16 %v4501
        %v4881 = vunpack.c.h.b16 %v4501
        %v4882 = vunpack.c.l.b16 %v4502
        %v4883 = vunpack.c.h.b16 %v4502
        %v4884 = vunpack.c.l.b16 %v4503
        %v4885 = vunpack.c.h.b16 %v4503
        %v4886 = vunpack.c.l.b16 %v4504
        %v4887 = vunpack.c.h.b16 %v4504
        %v4888 = vunpack.c.l.b16 %v4505
        %v4889 = vunpack.c.h.b16 %v4505
        %v4890 = vunpack.c.l.b16 %v4506
        %v4891 = vunpack.c.h.b16 %v4506
        %v4892 = vunpack.c.l.b16 %v4507
        %v4893 = vunpack.c.h.b16 %v4507
        %v4894 = vunpack.c.l.b16 %v4508
        %v4895 = vunpack.c.h.b16 %v4508
        %v4896 = vunpack.c.l.b16 %v4509
        %v4897 = vunpack.c.h.b16 %v4509
        %v4898 = vunpack.c.l.b16 %v4510
        %v4899 = vunpack.c.h.b16 %v4510
        %v4900 = vunpack.c.l.b16 %v4511
        %v4901 = vunpack.c.h.b16 %v4511
        %v4902 = vunpack.c.l.b16 %v4512
        %v4903 = vunpack.c.h.b16 %v4512
        %v4904 = vunpack.c.l.b16 %v4513
        %v4905 = vunpack.c.h.b16 %v4513
        %v4906 = vunpack.c.l.b16 %v4514
        %v4907 = vunpack.c.h.b16 %v4514
        %v4908 = vunpack.c.l.b16 %v4515
        %v4909 = vunpack.c.h.b16 %v4515
        %v4910 = vunpack.c.l.b16 %v4516
        %v4911 = vunpack.c.h.b16 %v4516
        %v4912 = vunpack.c.l.b16 %v4517
        %v4913 = vunpack.c.h.b16 %v4517
        %v4914 = vunpack.c.l.b16 %v4518
        %v4915 = vunpack.c.h.b16 %v4518
        %v4916 = vunpack.c.l.b16 %v4519
        %v4917 = vunpack.c.h.b16 %v4519
        %v4918 = vunpack.c.l.b16 %v4520
        %v4919 = vunpack.c.h.b16 %v4520
        %v4920 = vunpack.c.l.b16 %v4521
        %v4921 = vunpack.c.h.b16 %v4521
        %v4922 = vunpack.c.l.b16 %v4522
        %v4923 = vunpack.c.h.b16 %v4522
        %v4924 = vunpack.c.l.b16 %v4523
        %v4925 = vunpack.c.h.b16 %v4523
        %v4926 = vunpack.c.l.b16 %v4524
        %v4927 = vunpack.c.h.b16 %v4524
        %v4928 = vunpack.c.l.b16 %v4525
        %v4929 = vunpack.c.h.b16 %v4525
        %v4930 = vunpack.c.l.b16 %v4526
        %v4931 = vunpack.c.h.b16 %v4526
        %v4932 = vunpack.c.l.b16 %v4527
        %v4933 = vunpack.c.h.b16 %v4527
        %v4934 = vunpack.c.l.b16 %v4528
        %v4935 = vunpack.c.h.b16 %v4528
        %v4936 = vunpack.c.l.b16 %v4529
        %v4937 = vunpack.c.h.b16 %v4529
        %v4938 = vunpack.c.l.b16 %v4530
        %v4939 = vunpack.c.h.b16 %v4530
        %v4940 = vunpack.c.l.b16 %v4531
        %v4941 = vunpack.c.h.b16 %v4531
        %v4942 = vunpack.c.l.b16 %v4532
        %v4943 = vunpack.c.h.b16 %v4532
        %v4944 = vunpack.c.l.b16 %v4533
        %v4945 = vunpack.c.h.b16 %v4533
        %v4946 = vunpack.c.l.b16 %v4534
        %v4947 = vunpack.c.h.b16 %v4534
        %v4948 = vunpack.c.l.b16 %v4535
        %v4949 = vunpack.c.h.b16 %v4535
        %v4950 = vunpack.c.l.b16 %v4536
        %v4951 = vunpack.c.h.b16 %v4536
        %v4952 = vunpack.c.l.b16 %v4537
        %v4953 = vunpack.c.h.b16 %v4537
        %v4954 = vunpack.c.l.b16 %v4538
        %v4955 = vunpack.c.h.b16 %v4538
        %v4956 = vunpack.c.l.b16 %v4539
        %v4957 = vunpack.c.h.b16 %v4539
        %v4958 = vunpack.c.l.b16 %v4540
        %v4959 = vunpack.c.h.b16 %v4540
        %v4960 = vunpack.c.l.b16 %v4541
        %v4961 = vunpack.c.h.b16 %v4541
        %v4962 = vunpack.c.l.b16 %v4542
        %v4963 = vunpack.c.h.b16 %v4542
        %v4964 = vunpack.c.l.b16 %v4543
        %v4965 = vunpack.c.h.b16 %v4543
        %v4966 = vunpack.c.l.b16 %v4544
        %v4967 = vunpack.c.h.b16 %v4544
        %v4968 = vunpack.c.l.b16 %v4545
        %v4969 = vunpack.c.h.b16 %v4545
        %v4970 = vunpack.c.l.b16 %v4546
        %v4971 = vunpack.c.h.b16 %v4546
        %v4972 = vunpack.c.l.b16 %v4547
        %v4973 = vunpack.c.h.b16 %v4547
        %v4974 = vpack.c.b16 %v4726, %v4718
        %v4975 = vpack.c.b16 %v4727, %v4719
        %v4976 = vpack.c.b16 %v4728, %v4720
        %v4977 = vpack.c.b16 %v4729, %v4721
        %v4978 = vpack.c.b16 %v4730, %v4722
        %v4979 = vpack.c.b16 %v4731, %v4723
        %v4980 = vpack.c.b16 %v4732, %v4724
        %v4981 = vpack.c.b16 %v4733, %v4725
        %v4982 = vpack.c.b16 %v4742, %v4734
        %v4983 = vpack.c.b16 %v4743, %v4735
        %v4984 = vpack.c.b16 %v4744, %v4736
        %v4985 = vpack.c.b16 %v4745, %v4737
        %v4986 = vpack.c.b16 %v4746, %v4738
        %v4987 = vpack.c.b16 %v4747, %v4739
        %v4988 = vpack.c.b16 %v4748, %v4740
        %v4989 = vpack.c.b16 %v4749, %v4741
        %v4990 = vpack.c.b16 %v4758, %v4750
        %v4991 = vpack.c.b16 %v4759, %v4751
        %v4992 = vpack.c.b16 %v4760, %v4752
        %v4993 = vpack.c.b16 %v4761, %v4753
        %v4994 = vpack.c.b16 %v4762, %v4754
        %v4995 = vpack.c.b16 %v4763, %v4755
        %v4996 = vpack.c.b16 %v4764, %v4756
        %v4997 = vpack.c.b16 %v4765, %v4757
        %v4998 = vpack.c.b16 %v4774, %v4766
        %v4999 = vpack.c.b16 %v4775, %v4767
        %v5000 = vpack.c.b16 %v4776, %v4768
        %v5001 = vpack.c.b16 %v4777, %v4769
        %v5002 = vpack.c.b16 %v4778, %v4770
        %v5003 = vpack.c.b16 %v4779, %v4771
        %v5004 = vpack.c.b16 %v4780, %v4772
        %v5005 = vpack.c.b16 %v4781, %v4773
        %v5006 = vpack.c.b16 %v4790, %v4782
        %v5007 = vpack.c.b16 %v4791, %v4783
        %v5008 = vpack.c.b16 %v4792, %v4784
        %v5009 = vpack.c.b16 %v4793, %v4785
        %v5010 = vpack.c.b16 %v4794, %v4786
        %v5011 = vpack.c.b16 %v4795, %v4787
        %v5012 = vpack.c.b16 %v4796, %v4788
        %v5013 = vpack.c.b16 %v4797, %v4789
        %v5014 = vpack.c.b16 %v4806, %v4798
        %v5015 = vpack.c.b16 %v4807, %v4799
        %v5016 = vpack.c.b16 %v4808, %v4800
        %v5017 = vpack.c.b16 %v4809, %v4801
        %v5018 = vpack.c.b16 %v4810, %v4802
        %v5019 = vpack.c.b16 %v4811, %v4803
        %v5020 = vpack.c.b16 %v4812, %v4804
        %v5021 = vpack.c.b16 %v4813, %v4805
        %v5022 = vpack.c.b16 %v4822, %v4814
        %v5023 = vpack.c.b16 %v4823, %v4815
        %v5024 = vpack.c.b16 %v4824, %v4816
        %v5025 = vpack.c.b16 %v4825, %v4817
        %v5026 = vpack.c.b16 %v4826, %v4818
        %v5027 = vpack.c.b16 %v4827, %v4819
        %v5028 = vpack.c.b16 %v4828, %v4820
        %v5029 = vpack.c.b16 %v4829, %v4821
        %v5030 = vpack.c.b16 %v4838, %v4830
        %v5031 = vpack.c.b16 %v4839, %v4831
        %v5032 = vpack.c.b16 %v4840, %v4832
        %v5033 = vpack.c.b16 %v4841, %v4833
        %v5034 = vpack.c.b16 %v4842, %v4834
        %v5035 = vpack.c.b16 %v4843, %v4835
        %v5036 = vpack.c.b16 %v4844, %v4836
        %v5037 = vpack.c.b16 %v4845, %v4837
        %v5038 = vpack.c.b16 %v4854, %v4846
        %v5039 = vpack.c.b16 %v4855, %v4847
        %v5040 = vpack.c.b16 %v4856, %v4848
        %v5041 = vpack.c.b16 %v4857, %v4849
        %v5042 = vpack.c.b16 %v4858, %v4850
        %v5043 = vpack.c.b16 %v4859, %v4851
        %v5044 = vpack.c.b16 %v4860, %v4852
        %v5045 = vpack.c.b16 %v4861, %v4853
        %v5046 = vpack.c.b16 %v4870, %v4862
        %v5047 = vpack.c.b16 %v4871, %v4863
        %v5048 = vpack.c.b16 %v4872, %v4864
        %v5049 = vpack.c.b16 %v4873, %v4865
        %v5050 = vpack.c.b16 %v4874, %v4866
        %v5051 = vpack.c.b16 %v4875, %v4867
        %v5052 = vpack.c.b16 %v4876, %v4868
        %v5053 = vpack.c.b16 %v4877, %v4869
        %v5054 = vpack.c.b16 %v4886, %v4878
        %v5055 = vpack.c.b16 %v4887, %v4879
        %v5056 = vpack.c.b16 %v4888, %v4880
        %v5057 = vpack.c.b16 %v4889, %v4881
        %v5058 = vpack.c.b16 %v4890, %v4882
        %v5059 = vpack.c.b16 %v4891, %v4883
        %v5060 = vpack.c.b16 %v4892, %v4884
        %v5061 = vpack.c.b16 %v4893, %v4885
        %v5062 = vpack.c.b16 %v4902, %v4894
        %v5063 = vpack.c.b16 %v4903, %v4895
        %v5064 = vpack.c.b16 %v4904, %v4896
        %v5065 = vpack.c.b16 %v4905, %v4897
        %v5066 = vpack.c.b16 %v4906, %v4898
        %v5067 = vpack.c.b16 %v4907, %v4899
        %v5068 = vpack.c.b16 %v4908, %v4900
        %v5069 = vpack.c.b16 %v4909, %v4901
        %v5070 = vpack.c.b16 %v4918, %v4910
        %v5071 = vpack.c.b16 %v4919, %v4911
        %v5072 = vpack.c.b16 %v4920, %v4912
        %v5073 = vpack.c.b16 %v4921, %v4913
        %v5074 = vpack.c.b16 %v4922, %v4914
        %v5075 = vpack.c.b16 %v4923, %v4915
        %v5076 = vpack.c.b16 %v4924, %v4916
        %v5077 = vpack.c.b16 %v4925, %v4917
        %v5078 = vpack.c.b16 %v4934, %v4926
        %v5079 = vpack.c.b16 %v4935, %v4927
        %v5080 = vpack.c.b16 %v4936, %v4928
        %v5081 = vpack.c.b16 %v4937, %v4929
        %v5082 = vpack.c.b16 %v4938, %v4930
        %v5083 = vpack.c.b16 %v4939, %v4931
        %v5084 = vpack.c.b16 %v4940, %v4932
        %v5085 = vpack.c.b16 %v4941, %v4933
        %v5086 = vpack.c.b16 %v4950, %v4942
        %v5087 = vpack.c.b16 %v4951, %v4943
        %v5088 = vpack.c.b16 %v4952, %v4944
        %v5089 = vpack.c.b16 %v4953, %v4945
        %v5090 = vpack.c.b16 %v4954, %v4946
        %v5091 = vpack.c.b16 %v4955, %v4947
        %v5092 = vpack.c.b16 %v4956, %v4948
        %v5093 = vpack.c.b16 %v4957, %v4949
        %v5094 = vpack.c.b16 %v4966, %v4958
        %v5095 = vpack.c.b16 %v4967, %v4959
        %v5096 = vpack.c.b16 %v4968, %v4960
        %v5097 = vpack.c.b16 %v4969, %v4961
        %v5098 = vpack.c.b16 %v4970, %v4962
        %v5099 = vpack.c.b16 %v4971, %v4963
        %v5100 = vpack.c.b16 %v4972, %v4964
        %v5101 = vpack.c.b16 %v4973, %v4965
        %5230 = vmatprep.subr.bf16.mxu0 %v4975
        %5231 = vmatpush1.bf16.msra.mxu0 %v4974
        %5232 = vmatprep.subr.bf16.mxu0 %v4983
        %5233 = vmatpush1.bf16.msra.mxu0 %v4982
        %5234 = vmatprep.subr.bf16.mxu0 %v4991
        %5235 = vmatpush1.bf16.msra.mxu0 %v4990
        %5236 = vmatprep.subr.bf16.mxu0 %v4999
        %5237 = vmatpush1.bf16.msra.mxu0 %v4998
        %5238 = vmatprep.subr.bf16.mxu0 %v5007
        %5239 = vmatpush1.bf16.msra.mxu0 %v5006
        %5240 = vmatprep.subr.bf16.mxu0 %v5015
        %5241 = vmatpush1.bf16.msra.mxu0 %v5014
        %5242 = vmatprep.subr.bf16.mxu0 %v5023
        %5243 = vmatpush1.bf16.msra.mxu0 %v5022
        %5244 = vmatprep.subr.bf16.mxu0 %v5031
        %5245 = vmatpush1.bf16.msra.mxu0 %v5030
        %5246 = vmatprep.subr.bf16.mxu0 %v5039
        %5247 = vmatpush1.bf16.msra.mxu0 %v5038
        %5248 = vmatprep.subr.bf16.mxu0 %v5047
        %5249 = vmatpush1.bf16.msra.mxu0 %v5046
        %5250 = vmatprep.subr.bf16.mxu0 %v5055
        %5251 = vmatpush1.bf16.msra.mxu0 %v5054
        %5252 = vmatprep.subr.bf16.mxu0 %v5063
        %5253 = vmatpush1.bf16.msra.mxu0 %v5062
        %5254 = vmatprep.subr.bf16.mxu0 %v5071
        %5255 = vmatpush1.bf16.msra.mxu0 %v5070
        %5256 = vmatprep.subr.bf16.mxu0 %v5079
        %5257 = vmatpush1.bf16.msra.mxu0 %v5078
        %5258 = vmatprep.subr.bf16.mxu0 %v5087
        %5259 = vmatpush1.bf16.msra.mxu0 %v5086
        %5260 = vmatprep.subr.bf16.mxu0 %v5095
        %5261 = vmatpush1.bf16.msra.mxu0 %v5094
        %5262 = vmatprep.mubr.bf16.mxu0 %v4405
        %5263 = vmatmul.mubr.bf16.gmra.mrb[0].mxu0 %v4404
        %v5264 = vpop.f32.mrb[0].mxu0
        %v5265 = vadd.f32 %v4553, %v5264
        %v5266 = vpop.f32.mrb[0].mxu0
        %v5267 = vadd.f32 %v4557, %v5266
        %v5268 = vpop.f32.mrb[0].mxu0
        %v5269 = vadd.f32 %v4553, %v5268
        %v5270 = vpop.f32.mrb[0].mxu0
        %v5271 = vadd.f32 %v4557, %v5270
        %5272 = vmatprep.mubr.bf16.mxu0 %v4407
        %5273 = vmatmul.mubr.bf16.gmra.mrb[0].mxu0 %v4406
        %v5274 = vpop.f32.mrb[0].mxu0
        %v5275 = vadd.f32 %v4553, %v5274
        %v5276 = vpop.f32.mrb[0].mxu0
        %v5277 = vadd.f32 %v4557, %v5276
        %v5278 = vpop.f32.mrb[0].mxu0
        %v5279 = vadd.f32 %v4553, %v5278
        %v5280 = vpop.f32.mrb[0].mxu0
        %v5281 = vadd.f32 %v4557, %v5280
        %5282 = vmatprep.mubr.bf16.mxu0 %v4409
        %5283 = vmatmul.mubr.bf16.gmra.mrb[0].mxu0 %v4408
        %v5284 = vpop.f32.mrb[0].mxu0
        %v5285 = vadd.f32 %v4553, %v5284
        %v5286 = vpop.f32.mrb[0].mxu0
        %v5287 = vadd.f32 %v4557, %v5286
        %v5288 = vpop.f32.mrb[0].mxu0
        %v5289 = vadd.f32 %v4553, %v5288
        %v5290 = vpop.f32.mrb[0].mxu0
        %v5291 = vadd.f32 %v4557, %v5290
        %5292 = vmatprep.mubr.bf16.mxu0 %v4411
        %5293 = vmatmul.mubr.bf16.gmra.mrb[0].mxu0 %v4410
        %v5294 = vpop.f32.mrb[0].mxu0
        %v5295 = vadd.f32 %v4553, %v5294
        %v5296 = vpop.f32.mrb[0].mxu0
        %v5297 = vadd.f32 %v4557, %v5296
        %v5298 = vpop.f32.mrb[0].mxu0
        %v5299 = vadd.f32 %v4553, %v5298
        %v5300 = vpop.f32.mrb[0].mxu0
        %v5301 = vadd.f32 %v4557, %v5300
        %5302 = vmatprep.mubr.bf16.mxu0 %v4413
        %5303 = vmatmul.mubr.bf16.gmra.mrb[0].mxu0 %v4412
        %v5304 = vpop.f32.mrb[0].mxu0
        %v5305 = vadd.f32 %v4553, %v5304
        %v5306 = vpop.f32.mrb[0].mxu0
        %v5307 = vadd.f32 %v4557, %v5306
        %v5308 = vpop.f32.mrb[0].mxu0
        %v5309 = vadd.f32 %v4553, %v5308
        %v5310 = vpop.f32.mrb[0].mxu0
        %v5311 = vadd.f32 %v4557, %v5310
        %5312 = vmatprep.mubr.bf16.mxu0 %v4415
        %5313 = vmatmul.mubr.bf16.gmra.mrb[0].mxu0 %v4414
        %v5314 = vpop.f32.mrb[0].mxu0
        %v5315 = vadd.f32 %v4553, %v5314
        %v5316 = vpop.f32.mrb[0].mxu0
        %v5317 = vadd.f32 %v4557, %v5316
        %v5318 = vpop.f32.mrb[0].mxu0
        %v5319 = vadd.f32 %v4553, %v5318
        %v5320 = vpop.f32.mrb[0].mxu0
        %v5321 = vadd.f32 %v4557, %v5320
        %5322 = vmatprep.mubr.bf16.mxu0 %v4417
        %5323 = vmatmul.mubr.bf16.gmra.mrb[0].mxu0 %v4416
        %v5324 = vpop.f32.mrb[0].mxu0
        %v5325 = vadd.f32 %v4553, %v5324
        %v5326 = vpop.f32.mrb[0].mxu0
        %v5327 = vadd.f32 %v4557, %v5326
        %v5328 = vpop.f32.mrb[0].mxu0
        %v5329 = vadd.f32 %v4553, %v5328
        %v5330 = vpop.f32.mrb[0].mxu0
        %v5331 = vadd.f32 %v4557, %v5330
        %5332 = vmatprep.mubr.bf16.mxu0 %v4419
        %5333 = vmatmul.mubr.bf16.gmra.mrb[0].mxu0 %v4418
        %v5334 = vpop.f32.mrb[0].mxu0
        %v5335 = vadd.f32 %v4553, %v5334
        %v5336 = vpop.f32.mrb[0].mxu0
        %v5337 = vadd.f32 %v4557, %v5336
        %v5338 = vpop.f32.mrb[0].mxu0
        %v5339 = vadd.f32 %v4553, %v5338
        %v5340 = vpop.f32.mrb[0].mxu0
        %v5341 = vadd.f32 %v4557, %v5340
        %5342 = vdwg.mxu0
        %5343 = vmatprep.subr.bf16.mxu0 %v4977
        %5344 = vmatpush1.bf16.msra.mxu0 %v4976
        %5345 = vmatprep.subr.bf16.mxu0 %v4985
        %5346 = vmatpush1.bf16.msra.mxu0 %v4984
        %5347 = vmatprep.subr.bf16.mxu0 %v4993
        %5348 = vmatpush1.bf16.msra.mxu0 %v4992
        %5349 = vmatprep.subr.bf16.mxu0 %v5001
        %5350 = vmatpush1.bf16.msra.mxu0 %v5000
        %5351 = vmatprep.subr.bf16.mxu0 %v5009
        %5352 = vmatpush1.bf16.msra.mxu0 %v5008
        %5353 = vmatprep.subr.bf16.mxu0 %v5017
        %5354 = vmatpush1.bf16.msra.mxu0 %v5016
        %5355 = vmatprep.subr.bf16.mxu0 %v5025
        %5356 = vmatpush1.bf16.msra.mxu0 %v5024
        %5357 = vmatprep.subr.bf16.mxu0 %v5033
        %5358 = vmatpush1.bf16.msra.mxu0 %v5032
        %5359 = vmatprep.subr.bf16.mxu0 %v5041
        %5360 = vmatpush1.bf16.msra.mxu0 %v5040
        %5361 = vmatprep.subr.bf16.mxu0 %v5049
        %5362 = vmatpush1.bf16.msra.mxu0 %v5048
        %5363 = vmatprep.subr.bf16.mxu0 %v5057
        %5364 = vmatpush1.bf16.msra.mxu0 %v5056
        %5365 = vmatprep.subr.bf16.mxu0 %v5065
        %5366 = vmatpush1.bf16.msra.mxu0 %v5064
        %5367 = vmatprep.subr.bf16.mxu0 %v5073
        %5368 = vmatpush1.bf16.msra.mxu0 %v5072
        %5369 = vmatprep.subr.bf16.mxu0 %v5081
        %5370 = vmatpush1.bf16.msra.mxu0 %v5080
        %5371 = vmatprep.subr.bf16.mxu0 %v5089
        %5372 = vmatpush1.bf16.msra.mxu0 %v5088
        %5373 = vmatprep.subr.bf16.mxu0 %v5097
        %5374 = vmatpush1.bf16.msra.mxu0 %v5096
        %5375 = vmatprep.mubr.bf16.mxu0 %v4405
        %5376 = vmatmul.mubr.bf16.gmra.mrb[0].mxu0 %v4404
        %v5377 = vpop.f32.mrb[0].mxu0
        %v5378 = vadd.f32 %v4561, %v5377
        %v5379 = vpop.f32.mrb[0].mxu0
        %v5380 = vadd.f32 %v4565, %v5379
        %v5381 = vpop.f32.mrb[0].mxu0
        %v5382 = vadd.f32 %v4561, %v5381
        %v5383 = vpop.f32.mrb[0].mxu0
        %v5384 = vadd.f32 %v4565, %v5383
        %5385 = vmatprep.mubr.bf16.mxu0 %v4407
        %5386 = vmatmul.mubr.bf16.gmra.mrb[0].mxu0 %v4406
        %v5387 = vpop.f32.mrb[0].mxu0
        %v5388 = vadd.f32 %v4561, %v5387
        %v5389 = vpop.f32.mrb[0].mxu0
        %v5390 = vadd.f32 %v4565, %v5389
        %v5391 = vpop.f32.mrb[0].mxu0
        %v5392 = vadd.f32 %v4561, %v5391
        %v5393 = vpop.f32.mrb[0].mxu0
        %v5394 = vadd.f32 %v4565, %v5393
        %5395 = vmatprep.mubr.bf16.mxu0 %v4409
        %5396 = vmatmul.mubr.bf16.gmra.mrb[0].mxu0 %v4408
        %v5397 = vpop.f32.mrb[0].mxu0
        %v5398 = vadd.f32 %v4561, %v5397
        %v5399 = vpop.f32.mrb[0].mxu0
        %v5400 = vadd.f32 %v4565, %v5399
        %v5401 = vpop.f32.mrb[0].mxu0
        %v5402 = vadd.f32 %v4561, %v5401
        %v5403 = vpop.f32.mrb[0].mxu0
        %v5404 = vadd.f32 %v4565, %v5403
        %5405 = vmatprep.mubr.bf16.mxu0 %v4411
        %5406 = vmatmul.mubr.bf16.gmra.mrb[0].mxu0 %v4410
        %v5407 = vpop.f32.mrb[0].mxu0
        %v5408 = vadd.f32 %v4561, %v5407
        %v5409 = vpop.f32.mrb[0].mxu0
        %v5410 = vadd.f32 %v4565, %v5409
        %v5411 = vpop.f32.mrb[0].mxu0
        %v5412 = vadd.f32 %v4561, %v5411
        %v5413 = vpop.f32.mrb[0].mxu0
        %v5414 = vadd.f32 %v4565, %v5413
        %5415 = vmatprep.mubr.bf16.mxu0 %v4413
        %5416 = vmatmul.mubr.bf16.gmra.mrb[0].mxu0 %v4412
        %v5417 = vpop.f32.mrb[0].mxu0
        %v5418 = vadd.f32 %v4561, %v5417
        %v5419 = vpop.f32.mrb[0].mxu0
        %v5420 = vadd.f32 %v4565, %v5419
        %v5421 = vpop.f32.mrb[0].mxu0
        %v5422 = vadd.f32 %v4561, %v5421
        %v5423 = vpop.f32.mrb[0].mxu0
        %v5424 = vadd.f32 %v4565, %v5423
        %5425 = vmatprep.mubr.bf16.mxu0 %v4415
        %5426 = vmatmul.mubr.bf16.gmra.mrb[0].mxu0 %v4414
        %v5427 = vpop.f32.mrb[0].mxu0
        %v5428 = vadd.f32 %v4561, %v5427
        %v5429 = vpop.f32.mrb[0].mxu0
        %v5430 = vadd.f32 %v4565, %v5429
        %v5431 = vpop.f32.mrb[0].mxu0
        %v5432 = vadd.f32 %v4561, %v5431
        %v5433 = vpop.f32.mrb[0].mxu0
        %v5434 = vadd.f32 %v4565, %v5433
        %5435 = vmatprep.mubr.bf16.mxu0 %v4417
        %5436 = vmatmul.mubr.bf16.gmra.mrb[0].mxu0 %v4416
        %v5437 = vpop.f32.mrb[0].mxu0
        %v5438 = vadd.f32 %v4561, %v5437
        %v5439 = vpop.f32.mrb[0].mxu0
        %v5440 = vadd.f32 %v4565, %v5439
        %v5441 = vpop.f32.mrb[0].mxu0
        %v5442 = vadd.f32 %v4561, %v5441
        %v5443 = vpop.f32.mrb[0].mxu0
        %v5444 = vadd.f32 %v4565, %v5443
        %5445 = vmatprep.mubr.bf16.mxu0 %v4419
        %5446 = vmatmul.mubr.bf16.gmra.mrb[0].mxu0 %v4418
        %v5447 = vpop.f32.mrb[0].mxu0
        %v5448 = vadd.f32 %v4561, %v5447
        %v5449 = vpop.f32.mrb[0].mxu0
        %v5450 = vadd.f32 %v4565, %v5449
        %v5451 = vpop.f32.mrb[0].mxu0
        %v5452 = vadd.f32 %v4561, %v5451
        %v5453 = vpop.f32.mrb[0].mxu0
        %v5454 = vadd.f32 %v4565, %v5453
        %5455 = vdwg.mxu0
        %5456 = vmatprep.subr.bf16.mxu0 %v4979
        %5457 = vmatpush1.bf16.msra.mxu0 %v4978
        %5458 = vmatprep.subr.bf16.mxu0 %v4987
        %5459 = vmatpush1.bf16.msra.mxu0 %v4986
        %5460 = vmatprep.subr.bf16.mxu0 %v4995
        %5461 = vmatpush1.bf16.msra.mxu0 %v4994
        %5462 = vmatprep.subr.bf16.mxu0 %v5003
        %5463 = vmatpush1.bf16.msra.mxu0 %v5002
        %5464 = vmatprep.subr.bf16.mxu0 %v5011
        %5465 = vmatpush1.bf16.msra.mxu0 %v5010
        %5466 = vmatprep.subr.bf16.mxu0 %v5019
        %5467 = vmatpush1.bf16.msra.mxu0 %v5018
        %5468 = vmatprep.subr.bf16.mxu0 %v5027
        %5469 = vmatpush1.bf16.msra.mxu0 %v5026
        %5470 = vmatprep.subr.bf16.mxu0 %v5035
        %5471 = vmatpush1.bf16.msra.mxu0 %v5034
        %5472 = vmatprep.subr.bf16.mxu0 %v5043
        %5473 = vmatpush1.bf16.msra.mxu0 %v5042
        %5474 = vmatprep.subr.bf16.mxu0 %v5051
        %5475 = vmatpush1.bf16.msra.mxu0 %v5050
        %5476 = vmatprep.subr.bf16.mxu0 %v5059
        %5477 = vmatpush1.bf16.msra.mxu0 %v5058
        %5478 = vmatprep.subr.bf16.mxu0 %v5067
        %5479 = vmatpush1.bf16.msra.mxu0 %v5066
        %5480 = vmatprep.subr.bf16.mxu0 %v5075
        %5481 = vmatpush1.bf16.msra.mxu0 %v5074
        %5482 = vmatprep.subr.bf16.mxu0 %v5083
        %5483 = vmatpush1.bf16.msra.mxu0 %v5082
        %5484 = vmatprep.subr.bf16.mxu0 %v5091
        %5485 = vmatpush1.bf16.msra.mxu0 %v5090
        %5486 = vmatprep.subr.bf16.mxu0 %v5099
        %5487 = vmatpush1.bf16.msra.mxu0 %v5098
        %5488 = vmatprep.mubr.bf16.mxu0 %v4405
        %5489 = vmatmul.mubr.bf16.gmra.mrb[0].mxu0 %v4404
        %v5490 = vpop.f32.mrb[0].mxu0
        %v5491 = vadd.f32 %v4569, %v5490
        %v5492 = vpop.f32.mrb[0].mxu0
        %v5493 = vadd.f32 %v4573, %v5492
        %v5494 = vpop.f32.mrb[0].mxu0
        %v5495 = vadd.f32 %v4569, %v5494
        %v5496 = vpop.f32.mrb[0].mxu0
        %v5497 = vadd.f32 %v4573, %v5496
        %5498 = vmatprep.mubr.bf16.mxu0 %v4407
        %5499 = vmatmul.mubr.bf16.gmra.mrb[0].mxu0 %v4406
        %v5500 = vpop.f32.mrb[0].mxu0
        %v5501 = vadd.f32 %v4569, %v5500
        %v5502 = vpop.f32.mrb[0].mxu0
        %v5503 = vadd.f32 %v4573, %v5502
        %v5504 = vpop.f32.mrb[0].mxu0
        %v5505 = vadd.f32 %v4569, %v5504
        %v5506 = vpop.f32.mrb[0].mxu0
        %v5507 = vadd.f32 %v4573, %v5506
        %5508 = vmatprep.mubr.bf16.mxu0 %v4409
        %5509 = vmatmul.mubr.bf16.gmra.mrb[0].mxu0 %v4408
        %v5510 = vpop.f32.mrb[0].mxu0
        %v5511 = vadd.f32 %v4569, %v5510
        %v5512 = vpop.f32.mrb[0].mxu0
        %v5513 = vadd.f32 %v4573, %v5512
        %v5514 = vpop.f32.mrb[0].mxu0
        %v5515 = vadd.f32 %v4569, %v5514
        %v5516 = vpop.f32.mrb[0].mxu0
        %v5517 = vadd.f32 %v4573, %v5516
        %5518 = vmatprep.mubr.bf16.mxu0 %v4411
        %5519 = vmatmul.mubr.bf16.gmra.mrb[0].mxu0 %v4410
        %v5520 = vpop.f32.mrb[0].mxu0
        %v5521 = vadd.f32 %v4569, %v5520
        %v5522 = vpop.f32.mrb[0].mxu0
        %v5523 = vadd.f32 %v4573, %v5522
        %v5524 = vpop.f32.mrb[0].mxu0
        %v5525 = vadd.f32 %v4569, %v5524
        %v5526 = vpop.f32.mrb[0].mxu0
        %v5527 = vadd.f32 %v4573, %v5526
        %5528 = vmatprep.mubr.bf16.mxu0 %v4413
        %5529 = vmatmul.mubr.bf16.gmra.mrb[0].mxu0 %v4412
        %v5530 = vpop.f32.mrb[0].mxu0
        %v5531 = vadd.f32 %v4569, %v5530
        %v5532 = vpop.f32.mrb[0].mxu0
        %v5533 = vadd.f32 %v4573, %v5532
        %v5534 = vpop.f32.mrb[0].mxu0
        %v5535 = vadd.f32 %v4569, %v5534
        %v5536 = vpop.f32.mrb[0].mxu0
        %v5537 = vadd.f32 %v4573, %v5536
        %5538 = vmatprep.mubr.bf16.mxu0 %v4415
        %5539 = vmatmul.mubr.bf16.gmra.mrb[0].mxu0 %v4414
        %v5540 = vpop.f32.mrb[0].mxu0
        %v5541 = vadd.f32 %v4569, %v5540
        %v5542 = vpop.f32.mrb[0].mxu0
        %v5543 = vadd.f32 %v4573, %v5542
        %v5544 = vpop.f32.mrb[0].mxu0
        %v5545 = vadd.f32 %v4569, %v5544
        %v5546 = vpop.f32.mrb[0].mxu0
        %v5547 = vadd.f32 %v4573, %v5546
        %5548 = vmatprep.mubr.bf16.mxu0 %v4417
        %5549 = vmatmul.mubr.bf16.gmra.mrb[0].mxu0 %v4416
        %v5550 = vpop.f32.mrb[0].mxu0
        %v5551 = vadd.f32 %v4569, %v5550
        %v5552 = vpop.f32.mrb[0].mxu0
        %v5553 = vadd.f32 %v4573, %v5552
        %v5554 = vpop.f32.mrb[0].mxu0
        %v5555 = vadd.f32 %v4569, %v5554
        %v5556 = vpop.f32.mrb[0].mxu0
        %v5557 = vadd.f32 %v4573, %v5556
        %5558 = vmatprep.mubr.bf16.mxu0 %v4419
        %5559 = vmatmul.mubr.bf16.gmra.mrb[0].mxu0 %v4418
        %v5560 = vpop.f32.mrb[0].mxu0
        %v5561 = vadd.f32 %v4569, %v5560
        %v5562 = vpop.f32.mrb[0].mxu0
        %v5563 = vadd.f32 %v4573, %v5562
        %v5564 = vpop.f32.mrb[0].mxu0
        %v5565 = vadd.f32 %v4569, %v5564
        %v5566 = vpop.f32.mrb[0].mxu0
        %v5567 = vadd.f32 %v4573, %v5566
        %5568 = vdwg.mxu0
        %5569 = vmatprep.subr.bf16.mxu0 %v4981
        %5570 = vmatpush1.bf16.msra.mxu0 %v4980
        %5571 = vmatprep.subr.bf16.mxu0 %v4989
        %5572 = vmatpush1.bf16.msra.mxu0 %v4988
        %5573 = vmatprep.subr.bf16.mxu0 %v4997
        %5574 = vmatpush1.bf16.msra.mxu0 %v4996
        %5575 = vmatprep.subr.bf16.mxu0 %v5005
        %5576 = vmatpush1.bf16.msra.mxu0 %v5004
        %5577 = vmatprep.subr.bf16.mxu0 %v5013
        %5578 = vmatpush1.bf16.msra.mxu0 %v5012
        %5579 = vmatprep.subr.bf16.mxu0 %v5021
        %5580 = vmatpush1.bf16.msra.mxu0 %v5020
        %5581 = vmatprep.subr.bf16.mxu0 %v5029
        %5582 = vmatpush1.bf16.msra.mxu0 %v5028
        %5583 = vmatprep.subr.bf16.mxu0 %v5037
        %5584 = vmatpush1.bf16.msra.mxu0 %v5036
        %5585 = vmatprep.subr.bf16.mxu0 %v5045
        %5586 = vmatpush1.bf16.msra.mxu0 %v5044
        %5587 = vmatprep.subr.bf16.mxu0 %v5053
        %5588 = vmatpush1.bf16.msra.mxu0 %v5052
        %5589 = vmatprep.subr.bf16.mxu0 %v5061
        %5590 = vmatpush1.bf16.msra.mxu0 %v5060
        %5591 = vmatprep.subr.bf16.mxu0 %v5069
        %5592 = vmatpush1.bf16.msra.mxu0 %v5068
        %5593 = vmatprep.subr.bf16.mxu0 %v5077
        %5594 = vmatpush1.bf16.msra.mxu0 %v5076
        %5595 = vmatprep.subr.bf16.mxu0 %v5085
        %5596 = vmatpush1.bf16.msra.mxu0 %v5084
        %5597 = vmatprep.subr.bf16.mxu0 %v5093
        %5598 = vmatpush1.bf16.msra.mxu0 %v5092
        %5599 = vmatprep.subr.bf16.mxu0 %v5101
        %5600 = vmatpush1.bf16.msra.mxu0 %v5100
        %5601 = vmatprep.mubr.bf16.mxu0 %v4405
        %5602 = vmatmul.mubr.bf16.gmra.mrb[0].mxu0 %v4404
        %v5603 = vpop.f32.mrb[0].mxu0
        %v5604 = vadd.f32 %v4577, %v5603
        %v5605 = vpop.f32.mrb[0].mxu0
        %v5606 = vadd.f32 %v4581, %v5605
        %v5607 = vpop.f32.mrb[0].mxu0
        %v5608 = vadd.f32 %v4577, %v5607
        %v5609 = vpop.f32.mrb[0].mxu0
        %v5610 = vadd.f32 %v4581, %v5609
        %5611 = vmatprep.mubr.bf16.mxu0 %v4407
        %5612 = vmatmul.mubr.bf16.gmra.mrb[0].mxu0 %v4406
        %v5613 = vpop.f32.mrb[0].mxu0
        %v5614 = vadd.f32 %v4577, %v5613
        %v5615 = vpop.f32.mrb[0].mxu0
        %v5616 = vadd.f32 %v4581, %v5615
        %v5617 = vpop.f32.mrb[0].mxu0
        %v5618 = vadd.f32 %v4577, %v5617
        %v5619 = vpop.f32.mrb[0].mxu0
        %v5620 = vadd.f32 %v4581, %v5619
        %5621 = vmatprep.mubr.bf16.mxu0 %v4409
        %5622 = vmatmul.mubr.bf16.gmra.mrb[0].mxu0 %v4408
        %v5623 = vpop.f32.mrb[0].mxu0
        %v5624 = vadd.f32 %v4577, %v5623
        %v5625 = vpop.f32.mrb[0].mxu0
        %v5626 = vadd.f32 %v4581, %v5625
        %v5627 = vpop.f32.mrb[0].mxu0
        %v5628 = vadd.f32 %v4577, %v5627
        %v5629 = vpop.f32.mrb[0].mxu0
        %v5630 = vadd.f32 %v4581, %v5629
        %5631 = vmatprep.mubr.bf16.mxu0 %v4411
        %5632 = vmatmul.mubr.bf16.gmra.mrb[0].mxu0 %v4410
        %v5633 = vpop.f32.mrb[0].mxu0
        %v5634 = vadd.f32 %v4577, %v5633
        %v5635 = vpop.f32.mrb[0].mxu0
        %v5636 = vadd.f32 %v4581, %v5635
        %v5637 = vpop.f32.mrb[0].mxu0
        %v5638 = vadd.f32 %v4577, %v5637
        %v5639 = vpop.f32.mrb[0].mxu0
        %v5640 = vadd.f32 %v4581, %v5639
        %5641 = vmatprep.mubr.bf16.mxu0 %v4413
        %5642 = vmatmul.mubr.bf16.gmra.mrb[0].mxu0 %v4412
        %v5643 = vpop.f32.mrb[0].mxu0
        %v5644 = vadd.f32 %v4577, %v5643
        %v5645 = vpop.f32.mrb[0].mxu0
        %v5646 = vadd.f32 %v4581, %v5645
        %v5647 = vpop.f32.mrb[0].mxu0
        %v5648 = vadd.f32 %v4577, %v5647
        %v5649 = vpop.f32.mrb[0].mxu0
        %v5650 = vadd.f32 %v4581, %v5649
        %5651 = vmatprep.mubr.bf16.mxu0 %v4415
        %5652 = vmatmul.mubr.bf16.gmra.mrb[0].mxu0 %v4414
        %v5653 = vpop.f32.mrb[0].mxu0
        %v5654 = vadd.f32 %v4577, %v5653
        %v5655 = vpop.f32.mrb[0].mxu0
        %v5656 = vadd.f32 %v4581, %v5655
        %v5657 = vpop.f32.mrb[0].mxu0
        %v5658 = vadd.f32 %v4577, %v5657
        %v5659 = vpop.f32.mrb[0].mxu0
        %v5660 = vadd.f32 %v4581, %v5659
        %5661 = vmatprep.mubr.bf16.mxu0 %v4417
        %5662 = vmatmul.mubr.bf16.gmra.mrb[0].mxu0 %v4416
        %v5663 = vpop.f32.mrb[0].mxu0
        %v5664 = vadd.f32 %v4577, %v5663
        %v5665 = vpop.f32.mrb[0].mxu0
        %v5666 = vadd.f32 %v4581, %v5665
        %v5667 = vpop.f32.mrb[0].mxu0
        %v5668 = vadd.f32 %v4577, %v5667
        %v5669 = vpop.f32.mrb[0].mxu0
        %v5670 = vadd.f32 %v4581, %v5669
        %5671 = vmatprep.mubr.bf16.mxu0 %v4419
        %5672 = vmatmul.mubr.bf16.gmra.mrb[0].mxu0 %v4418
        %v5673 = vpop.f32.mrb[0].mxu0
        %v5674 = vadd.f32 %v4577, %v5673
        %v5675 = vpop.f32.mrb[0].mxu0
        %v5676 = vadd.f32 %v4581, %v5675
        %v5677 = vpop.f32.mrb[0].mxu0
        %v5678 = vadd.f32 %v4577, %v5677
        %v5679 = vpop.f32.mrb[0].mxu0
        %v5680 = vadd.f32 %v4581, %v5679
        %5681 = vdwg.mxu0
        %v5682 = vmul.f32 %v5265, 1.702
        %v5683 = vmul.f32 %v5267, 1.702
        %v5684 = vmul.f32 %v5378, 1.702
        %v5685 = vmul.f32 %v5380, 1.702
        %v5686 = vmul.f32 %v5491, 1.702
        %v5687 = vmul.f32 %v5493, 1.702
        %v5688 = vmul.f32 %v5604, 1.702
        %v5689 = vmul.f32 %v5606, 1.702
        %v5690 = vmul.f32 %v5269, 1.702
        %v5691 = vmul.f32 %v5271, 1.702
        %v5692 = vmul.f32 %v5382, 1.702
        %v5693 = vmul.f32 %v5384, 1.702
        %v5694 = vmul.f32 %v5495, 1.702
        %v5695 = vmul.f32 %v5497, 1.702
        %v5696 = vmul.f32 %v5608, 1.702
        %v5697 = vmul.f32 %v5610, 1.702
        %v5698 = vmul.f32 %v5275, 1.702
        %v5699 = vmul.f32 %v5277, 1.702
        %v5700 = vmul.f32 %v5388, 1.702
        %v5701 = vmul.f32 %v5390, 1.702
        %v5702 = vmul.f32 %v5501, 1.702
        %v5703 = vmul.f32 %v5503, 1.702
        %v5704 = vmul.f32 %v5614, 1.702
        %v5705 = vmul.f32 %v5616, 1.702
        %v5706 = vmul.f32 %v5279, 1.702
        %v5707 = vmul.f32 %v5281, 1.702
        %v5708 = vmul.f32 %v5392, 1.702
        %v5709 = vmul.f32 %v5394, 1.702
        %v5710 = vmul.f32 %v5505, 1.702
        %v5711 = vmul.f32 %v5507, 1.702
        %v5712 = vmul.f32 %v5618, 1.702
        %v5713 = vmul.f32 %v5620, 1.702
        %v5714 = vmul.f32 %v5285, 1.702
        %v5715 = vmul.f32 %v5287, 1.702
        %v5716 = vmul.f32 %v5398, 1.702
        %v5717 = vmul.f32 %v5400, 1.702
        %v5718 = vmul.f32 %v5511, 1.702
        %v5719 = vmul.f32 %v5513, 1.702
        %v5720 = vmul.f32 %v5624, 1.702
        %v5721 = vmul.f32 %v5626, 1.702
        %v5722 = vmul.f32 %v5289, 1.702
        %v5723 = vmul.f32 %v5291, 1.702
        %v5724 = vmul.f32 %v5402, 1.702
        %v5725 = vmul.f32 %v5404, 1.702
        %v5726 = vmul.f32 %v5515, 1.702
        %v5727 = vmul.f32 %v5517, 1.702
        %v5728 = vmul.f32 %v5628, 1.702
        %v5729 = vmul.f32 %v5630, 1.702
        %v5730 = vmul.f32 %v5295, 1.702
        %v5731 = vmul.f32 %v5297, 1.702
        %v5732 = vmul.f32 %v5408, 1.702
        %v5733 = vmul.f32 %v5410, 1.702
        %v5734 = vmul.f32 %v5521, 1.702
        %v5735 = vmul.f32 %v5523, 1.702
        %v5736 = vmul.f32 %v5634, 1.702
        %v5737 = vmul.f32 %v5636, 1.702
        %v5738 = vmul.f32 %v5299, 1.702
        %v5739 = vmul.f32 %v5301, 1.702
        %v5740 = vmul.f32 %v5412, 1.702
        %v5741 = vmul.f32 %v5414, 1.702
        %v5742 = vmul.f32 %v5525, 1.702
        %v5743 = vmul.f32 %v5527, 1.702
        %v5744 = vmul.f32 %v5638, 1.702
        %v5745 = vmul.f32 %v5640, 1.702
        %v5746 = vmul.f32 %v5305, 1.702
        %v5747 = vmul.f32 %v5307, 1.702
        %v5748 = vmul.f32 %v5418, 1.702
        %v5749 = vmul.f32 %v5420, 1.702
        %v5750 = vmul.f32 %v5531, 1.702
        %v5751 = vmul.f32 %v5533, 1.702
        %v5752 = vmul.f32 %v5644, 1.702
        %v5753 = vmul.f32 %v5646, 1.702
        %v5754 = vmul.f32 %v5309, 1.702
        %v5755 = vmul.f32 %v5311, 1.702
        %v5756 = vmul.f32 %v5422, 1.702
        %v5757 = vmul.f32 %v5424, 1.702
        %v5758 = vmul.f32 %v5535, 1.702
        %v5759 = vmul.f32 %v5537, 1.702
        %v5760 = vmul.f32 %v5648, 1.702
        %v5761 = vmul.f32 %v5650, 1.702
        %v5762 = vmul.f32 %v5315, 1.702
        %v5763 = vmul.f32 %v5317, 1.702
        %v5764 = vmul.f32 %v5428, 1.702
        %v5765 = vmul.f32 %v5430, 1.702
        %v5766 = vmul.f32 %v5541, 1.702
        %v5767 = vmul.f32 %v5543, 1.702
        %v5768 = vmul.f32 %v5654, 1.702
        %v5769 = vmul.f32 %v5656, 1.702
        %v5770 = vmul.f32 %v5319, 1.702
        %v5771 = vmul.f32 %v5321, 1.702
        %v5772 = vmul.f32 %v5432, 1.702
        %v5773 = vmul.f32 %v5434, 1.702
        %v5774 = vmul.f32 %v5545, 1.702
        %v5775 = vmul.f32 %v5547, 1.702
        %v5776 = vmul.f32 %v5658, 1.702
        %v5777 = vmul.f32 %v5660, 1.702
        %v5778 = vmul.f32 %v5325, 1.702
        %v5779 = vmul.f32 %v5327, 1.702
        %v5780 = vmul.f32 %v5438, 1.702
        %v5781 = vmul.f32 %v5440, 1.702
        %v5782 = vmul.f32 %v5551, 1.702
        %v5783 = vmul.f32 %v5553, 1.702
        %v5784 = vmul.f32 %v5664, 1.702
        %v5785 = vmul.f32 %v5666, 1.702
        %v5786 = vmul.f32 %v5329, 1.702
        %v5787 = vmul.f32 %v5331, 1.702
        %v5788 = vmul.f32 %v5442, 1.702
        %v5789 = vmul.f32 %v5444, 1.702
        %v5790 = vmul.f32 %v5555, 1.702
        %v5791 = vmul.f32 %v5557, 1.702
        %v5792 = vmul.f32 %v5668, 1.702
        %v5793 = vmul.f32 %v5670, 1.702
        %v5794 = vmul.f32 %v5335, 1.702
        %v5795 = vmul.f32 %v5337, 1.702
        %v5796 = vmul.f32 %v5448, 1.702
        %v5797 = vmul.f32 %v5450, 1.702
        %v5798 = vmul.f32 %v5561, 1.702
        %v5799 = vmul.f32 %v5563, 1.702
        %v5800 = vmul.f32 %v5674, 1.702
        %v5801 = vmul.f32 %v5676, 1.702
        %v5802 = vmul.f32 %v5339, 1.702
        %v5803 = vmul.f32 %v5341, 1.702
        %v5804 = vmul.f32 %v5452, 1.702
        %v5805 = vmul.f32 %v5454, 1.702
        %v5806 = vmul.f32 %v5565, 1.702
        %v5807 = vmul.f32 %v5567, 1.702
        %v5808 = vmul.f32 %v5678, 1.702
        %v5809 = vmul.f32 %v5680, 1.702
        %v5810 = vxor.u32 %v5682, 2147483648
        %v5811 = vxor.u32 %v5683, 2147483648
        %v5812 = vxor.u32 %v5684, 2147483648
        %v5813 = vxor.u32 %v5685, 2147483648
        %v5814 = vxor.u32 %v5686, 2147483648
        %v5815 = vxor.u32 %v5687, 2147483648
        %v5816 = vxor.u32 %v5688, 2147483648
        %v5817 = vxor.u32 %v5689, 2147483648
        %v5818 = vxor.u32 %v5690, 2147483648
        %v5819 = vxor.u32 %v5691, 2147483648
        %v5820 = vxor.u32 %v5692, 2147483648
        %v5821 = vxor.u32 %v5693, 2147483648
        %v5822 = vxor.u32 %v5694, 2147483648
        %v5823 = vxor.u32 %v5695, 2147483648
        %v5824 = vxor.u32 %v5696, 2147483648
        %v5825 = vxor.u32 %v5697, 2147483648
        %v5826 = vxor.u32 %v5698, 2147483648
        %v5827 = vxor.u32 %v5699, 2147483648
        %v5828 = vxor.u32 %v5700, 2147483648
        %v5829 = vxor.u32 %v5701, 2147483648
        %v5830 = vxor.u32 %v5702, 2147483648
        %v5831 = vxor.u32 %v5703, 2147483648
        %v5832 = vxor.u32 %v5704, 2147483648
        %v5833 = vxor.u32 %v5705, 2147483648
        %v5834 = vxor.u32 %v5706, 2147483648
        %v5835 = vxor.u32 %v5707, 2147483648
        %v5836 = vxor.u32 %v5708, 2147483648
        %v5837 = vxor.u32 %v5709, 2147483648
        %v5838 = vxor.u32 %v5710, 2147483648
        %v5839 = vxor.u32 %v5711, 2147483648
        %v5840 = vxor.u32 %v5712, 2147483648
        %v5841 = vxor.u32 %v5713, 2147483648
        %v5842 = vxor.u32 %v5714, 2147483648
        %v5843 = vxor.u32 %v5715, 2147483648
        %v5844 = vxor.u32 %v5716, 2147483648
        %v5845 = vxor.u32 %v5717, 2147483648
        %v5846 = vxor.u32 %v5718, 2147483648
        %v5847 = vxor.u32 %v5719, 2147483648
        %v5848 = vxor.u32 %v5720, 2147483648
        %v5849 = vxor.u32 %v5721, 2147483648
        %v5850 = vxor.u32 %v5722, 2147483648
        %v5851 = vxor.u32 %v5723, 2147483648
        %v5852 = vxor.u32 %v5724, 2147483648
        %v5853 = vxor.u32 %v5725, 2147483648
        %v5854 = vxor.u32 %v5726, 2147483648
        %v5855 = vxor.u32 %v5727, 2147483648
        %v5856 = vxor.u32 %v5728, 2147483648
        %v5857 = vxor.u32 %v5729, 2147483648
        %v5858 = vxor.u32 %v5730, 2147483648
        %v5859 = vxor.u32 %v5731, 2147483648
        %v5860 = vxor.u32 %v5732, 2147483648
        %v5861 = vxor.u32 %v5733, 2147483648
        %v5862 = vxor.u32 %v5734, 2147483648
        %v5863 = vxor.u32 %v5735, 2147483648
        %v5864 = vxor.u32 %v5736, 2147483648
        %v5865 = vxor.u32 %v5737, 2147483648
        %v5866 = vxor.u32 %v5738, 2147483648
        %v5867 = vxor.u32 %v5739, 2147483648
        %v5868 = vxor.u32 %v5740, 2147483648
        %v5869 = vxor.u32 %v5741, 2147483648
        %v5870 = vxor.u32 %v5742, 2147483648
        %v5871 = vxor.u32 %v5743, 2147483648
        %v5872 = vxor.u32 %v5744, 2147483648
        %v5873 = vxor.u32 %v5745, 2147483648
        %v5874 = vxor.u32 %v5746, 2147483648
        %v5875 = vxor.u32 %v5747, 2147483648
        %v5876 = vxor.u32 %v5748, 2147483648
        %v5877 = vxor.u32 %v5749, 2147483648
        %v5878 = vxor.u32 %v5750, 2147483648
        %v5879 = vxor.u32 %v5751, 2147483648
        %v5880 = vxor.u32 %v5752, 2147483648
        %v5881 = vxor.u32 %v5753, 2147483648
        %v5882 = vxor.u32 %v5754, 2147483648
        %v5883 = vxor.u32 %v5755, 2147483648
        %v5884 = vxor.u32 %v5756, 2147483648
        %v5885 = vxor.u32 %v5757, 2147483648
        %v5886 = vxor.u32 %v5758, 2147483648
        %v5887 = vxor.u32 %v5759, 2147483648
        %v5888 = vxor.u32 %v5760, 2147483648
        %v5889 = vxor.u32 %v5761, 2147483648
        %v5890 = vxor.u32 %v5762, 2147483648
        %v5891 = vxor.u32 %v5763, 2147483648
        %v5892 = vxor.u32 %v5764, 2147483648
        %v5893 = vxor.u32 %v5765, 2147483648
        %v5894 = vxor.u32 %v5766, 2147483648
        %v5895 = vxor.u32 %v5767, 2147483648
        %v5896 = vxor.u32 %v5768, 2147483648
        %v5897 = vxor.u32 %v5769, 2147483648
        %v5898 = vxor.u32 %v5770, 2147483648
        %v5899 = vxor.u32 %v5771, 2147483648
        %v5900 = vxor.u32 %v5772, 2147483648
        %v5901 = vxor.u32 %v5773, 2147483648
        %v5902 = vxor.u32 %v5774, 2147483648
        %v5903 = vxor.u32 %v5775, 2147483648
        %v5904 = vxor.u32 %v5776, 2147483648
        %v5905 = vxor.u32 %v5777, 2147483648
        %v5906 = vxor.u32 %v5778, 2147483648
        %v5907 = vxor.u32 %v5779, 2147483648
        %v5908 = vxor.u32 %v5780, 2147483648
        %v5909 = vxor.u32 %v5781, 2147483648
        %v5910 = vxor.u32 %v5782, 2147483648
        %v5911 = vxor.u32 %v5783, 2147483648
        %v5912 = vxor.u32 %v5784, 2147483648
        %v5913 = vxor.u32 %v5785, 2147483648
        %v5914 = vxor.u32 %v5786, 2147483648
        %v5915 = vxor.u32 %v5787, 2147483648
        %v5916 = vxor.u32 %v5788, 2147483648
        %v5917 = vxor.u32 %v5789, 2147483648
        %v5918 = vxor.u32 %v5790, 2147483648
        %v5919 = vxor.u32 %v5791, 2147483648
        %v5920 = vxor.u32 %v5792, 2147483648
        %v5921 = vxor.u32 %v5793, 2147483648
        %v5922 = vxor.u32 %v5794, 2147483648
        %v5923 = vxor.u32 %v5795, 2147483648
        %v5924 = vxor.u32 %v5796, 2147483648
        %v5925 = vxor.u32 %v5797, 2147483648
        %v5926 = vxor.u32 %v5798, 2147483648
        %v5927 = vxor.u32 %v5799, 2147483648
        %v5928 = vxor.u32 %v5800, 2147483648
        %v5929 = vxor.u32 %v5801, 2147483648
        %v5930 = vxor.u32 %v5802, 2147483648
        %v5931 = vxor.u32 %v5803, 2147483648
        %v5932 = vxor.u32 %v5804, 2147483648
        %v5933 = vxor.u32 %v5805, 2147483648
        %v5934 = vxor.u32 %v5806, 2147483648
        %v5935 = vxor.u32 %v5807, 2147483648
        %v5936 = vxor.u32 %v5808, 2147483648
        %v5937 = vxor.u32 %v5809, 2147483648
        %v5938 = vmul.f32 %v5810, 1.442695
        %v5939 = vpow.pop %v5938
        %v5940 = vmul.f32 %v5811, 1.442695
        %v5941 = vpow.pop %v5940
        %v5942 = vmul.f32 %v5812, 1.442695
        %v5943 = vpow.pop %v5942
        %v5944 = vmul.f32 %v5813, 1.442695
        %v5945 = vpow.pop %v5944
        %v5946 = vmul.f32 %v5814, 1.442695
        %v5947 = vpow.pop %v5946
        %v5948 = vmul.f32 %v5815, 1.442695
        %v5949 = vpow.pop %v5948
        %v5950 = vmul.f32 %v5816, 1.442695
        %v5951 = vpow.pop %v5950
        %v5952 = vmul.f32 %v5817, 1.442695
        %v5953 = vpow.pop %v5952
        %v5954 = vmul.f32 %v5818, 1.442695
        %v5955 = vpow.pop %v5954
        %v5956 = vmul.f32 %v5819, 1.442695
        %v5957 = vpow.pop %v5956
        %v5958 = vmul.f32 %v5820, 1.442695
        %v5959 = vpow.pop %v5958
        %v5960 = vmul.f32 %v5821, 1.442695
        %v5961 = vpow.pop %v5960
        %v5962 = vmul.f32 %v5822, 1.442695
        %v5963 = vpow.pop %v5962
        %v5964 = vmul.f32 %v5823, 1.442695
        %v5965 = vpow.pop %v5964
        %v5966 = vmul.f32 %v5824, 1.442695
        %v5967 = vpow.pop %v5966
        %v5968 = vmul.f32 %v5825, 1.442695
        %v5969 = vpow.pop %v5968
        %v5970 = vmul.f32 %v5826, 1.442695
        %v5971 = vpow.pop %v5970
        %v5972 = vmul.f32 %v5827, 1.442695
        %v5973 = vpow.pop %v5972
        %v5974 = vmul.f32 %v5828, 1.442695
        %v5975 = vpow.pop %v5974
        %v5976 = vmul.f32 %v5829, 1.442695
        %v5977 = vpow.pop %v5976
        %v5978 = vmul.f32 %v5830, 1.442695
        %v5979 = vpow.pop %v5978
        %v5980 = vmul.f32 %v5831, 1.442695
        %v5981 = vpow.pop %v5980
        %v5982 = vmul.f32 %v5832, 1.442695
        %v5983 = vpow.pop %v5982
        %v5984 = vmul.f32 %v5833, 1.442695
        %v5985 = vpow.pop %v5984
        %v5986 = vmul.f32 %v5834, 1.442695
        %v5987 = vpow.pop %v5986
        %v5988 = vmul.f32 %v5835, 1.442695
        %v5989 = vpow.pop %v5988
        %v5990 = vmul.f32 %v5836, 1.442695
        %v5991 = vpow.pop %v5990
        %v5992 = vmul.f32 %v5837, 1.442695
        %v5993 = vpow.pop %v5992
        %v5994 = vmul.f32 %v5838, 1.442695
        %v5995 = vpow.pop %v5994
        %v5996 = vmul.f32 %v5839, 1.442695
        %v5997 = vpow.pop %v5996
        %v5998 = vmul.f32 %v5840, 1.442695
        %v5999 = vpow.pop %v5998
        %v6000 = vmul.f32 %v5841, 1.442695
        %v6001 = vpow.pop %v6000
        %v6002 = vmul.f32 %v5842, 1.442695
        %v6003 = vpow.pop %v6002
        %v6004 = vmul.f32 %v5843, 1.442695
        %v6005 = vpow.pop %v6004
        %v6006 = vmul.f32 %v5844, 1.442695
        %v6007 = vpow.pop %v6006
        %v6008 = vmul.f32 %v5845, 1.442695
        %v6009 = vpow.pop %v6008
        %v6010 = vmul.f32 %v5846, 1.442695
        %v6011 = vpow.pop %v6010
        %v6012 = vmul.f32 %v5847, 1.442695
        %v6013 = vpow.pop %v6012
        %v6014 = vmul.f32 %v5848, 1.442695
        %v6015 = vpow.pop %v6014
        %v6016 = vmul.f32 %v5849, 1.442695
        %v6017 = vpow.pop %v6016
        %v6018 = vmul.f32 %v5850, 1.442695
        %v6019 = vpow.pop %v6018
        %v6020 = vmul.f32 %v5851, 1.442695
        %v6021 = vpow.pop %v6020
        %v6022 = vmul.f32 %v5852, 1.442695
        %v6023 = vpow.pop %v6022
        %v6024 = vmul.f32 %v5853, 1.442695
        %v6025 = vpow.pop %v6024
        %v6026 = vmul.f32 %v5854, 1.442695
        %v6027 = vpow.pop %v6026
        %v6028 = vmul.f32 %v5855, 1.442695
        %v6029 = vpow.pop %v6028
        %v6030 = vmul.f32 %v5856, 1.442695
        %v6031 = vpow.pop %v6030
        %v6032 = vmul.f32 %v5857, 1.442695
        %v6033 = vpow.pop %v6032
        %v6034 = vmul.f32 %v5858, 1.442695
        %v6035 = vpow.pop %v6034
        %v6036 = vmul.f32 %v5859, 1.442695
        %v6037 = vpow.pop %v6036
        %v6038 = vmul.f32 %v5860, 1.442695
        %v6039 = vpow.pop %v6038
        %v6040 = vmul.f32 %v5861, 1.442695
        %v6041 = vpow.pop %v6040
        %v6042 = vmul.f32 %v5862, 1.442695
        %v6043 = vpow.pop %v6042
        %v6044 = vmul.f32 %v5863, 1.442695
        %v6045 = vpow.pop %v6044
        %v6046 = vmul.f32 %v5864, 1.442695
        %v6047 = vpow.pop %v6046
        %v6048 = vmul.f32 %v5865, 1.442695
        %v6049 = vpow.pop %v6048
        %v6050 = vmul.f32 %v5866, 1.442695
        %v6051 = vpow.pop %v6050
        %v6052 = vmul.f32 %v5867, 1.442695
        %v6053 = vpow.pop %v6052
        %v6054 = vmul.f32 %v5868, 1.442695
        %v6055 = vpow.pop %v6054
        %v6056 = vmul.f32 %v5869, 1.442695
        %v6057 = vpow.pop %v6056
        %v6058 = vmul.f32 %v5870, 1.442695
        %v6059 = vpow.pop %v6058
        %v6060 = vmul.f32 %v5871, 1.442695
        %v6061 = vpow.pop %v6060
        %v6062 = vmul.f32 %v5872, 1.442695
        %v6063 = vpow.pop %v6062
        %v6064 = vmul.f32 %v5873, 1.442695
        %v6065 = vpow.pop %v6064
        %v6066 = vmul.f32 %v5874, 1.442695
        %v6067 = vpow.pop %v6066
        %v6068 = vmul.f32 %v5875, 1.442695
        %v6069 = vpow.pop %v6068
        %v6070 = vmul.f32 %v5876, 1.442695
        %v6071 = vpow.pop %v6070
        %v6072 = vmul.f32 %v5877, 1.442695
        %v6073 = vpow.pop %v6072
        %v6074 = vmul.f32 %v5878, 1.442695
        %v6075 = vpow.pop %v6074
        %v6076 = vmul.f32 %v5879, 1.442695
        %v6077 = vpow.pop %v6076
        %v6078 = vmul.f32 %v5880, 1.442695
        %v6079 = vpow.pop %v6078
        %v6080 = vmul.f32 %v5881, 1.442695
        %v6081 = vpow.pop %v6080
        %v6082 = vmul.f32 %v5882, 1.442695
        %v6083 = vpow.pop %v6082
        %v6084 = vmul.f32 %v5883, 1.442695
        %v6085 = vpow.pop %v6084
        %v6086 = vmul.f32 %v5884, 1.442695
        %v6087 = vpow.pop %v6086
        %v6088 = vmul.f32 %v5885, 1.442695
        %v6089 = vpow.pop %v6088
        %v6090 = vmul.f32 %v5886, 1.442695
        %v6091 = vpow.pop %v6090
        %v6092 = vmul.f32 %v5887, 1.442695
        %v6093 = vpow.pop %v6092
        %v6094 = vmul.f32 %v5888, 1.442695
        %v6095 = vpow.pop %v6094
        %v6096 = vmul.f32 %v5889, 1.442695
        %v6097 = vpow.pop %v6096
        %v6098 = vmul.f32 %v5890, 1.442695
        %v6099 = vpow.pop %v6098
        %v6100 = vmul.f32 %v5891, 1.442695
        %v6101 = vpow.pop %v6100
        %v6102 = vmul.f32 %v5892, 1.442695
        %v6103 = vpow.pop %v6102
        %v6104 = vmul.f32 %v5893, 1.442695
        %v6105 = vpow.pop %v6104
        %v6106 = vmul.f32 %v5894, 1.442695
        %v6107 = vpow.pop %v6106
        %v6108 = vmul.f32 %v5895, 1.442695
        %v6109 = vpow.pop %v6108
        %v6110 = vmul.f32 %v5896, 1.442695
        %v6111 = vpow.pop %v6110
        %v6112 = vmul.f32 %v5897, 1.442695
        %v6113 = vpow.pop %v6112
        %v6114 = vmul.f32 %v5898, 1.442695
        %v6115 = vpow.pop %v6114
        %v6116 = vmul.f32 %v5899, 1.442695
        %v6117 = vpow.pop %v6116
        %v6118 = vmul.f32 %v5900, 1.442695
        %v6119 = vpow.pop %v6118
        %v6120 = vmul.f32 %v5901, 1.442695
        %v6121 = vpow.pop %v6120
        %v6122 = vmul.f32 %v5902, 1.442695
        %v6123 = vpow.pop %v6122
        %v6124 = vmul.f32 %v5903, 1.442695
        %v6125 = vpow.pop %v6124
        %v6126 = vmul.f32 %v5904, 1.442695
        %v6127 = vpow.pop %v6126
        %v6128 = vmul.f32 %v5905, 1.442695
        %v6129 = vpow.pop %v6128
        %v6130 = vmul.f32 %v5906, 1.442695
        %v6131 = vpow.pop %v6130
        %v6132 = vmul.f32 %v5907, 1.442695
        %v6133 = vpow.pop %v6132
        %v6134 = vmul.f32 %v5908, 1.442695
        %v6135 = vpow.pop %v6134
        %v6136 = vmul.f32 %v5909, 1.442695
        %v6137 = vpow.pop %v6136
        %v6138 = vmul.f32 %v5910, 1.442695
        %v6139 = vpow.pop %v6138
        %v6140 = vmul.f32 %v5911, 1.442695
        %v6141 = vpow.pop %v6140
        %v6142 = vmul.f32 %v5912, 1.442695
        %v6143 = vpow.pop %v6142
        %v6144 = vmul.f32 %v5913, 1.442695
        %v6145 = vpow.pop %v6144
        %v6146 = vmul.f32 %v5914, 1.442695
        %v6147 = vpow.pop %v6146
        %v6148 = vmul.f32 %v5915, 1.442695
        %v6149 = vpow.pop %v6148
        %v6150 = vmul.f32 %v5916, 1.442695
        %v6151 = vpow.pop %v6150
        %v6152 = vmul.f32 %v5917, 1.442695
        %v6153 = vpow.pop %v6152
        %v6154 = vmul.f32 %v5918, 1.442695
        %v6155 = vpow.pop %v6154
        %v6156 = vmul.f32 %v5919, 1.442695
        %v6157 = vpow.pop %v6156
        %v6158 = vmul.f32 %v5920, 1.442695
        %v6159 = vpow.pop %v6158
        %v6160 = vmul.f32 %v5921, 1.442695
        %v6161 = vpow.pop %v6160
        %v6162 = vmul.f32 %v5922, 1.442695
        %v6163 = vpow.pop %v6162
        %v6164 = vmul.f32 %v5923, 1.442695
        %v6165 = vpow.pop %v6164
        %v6166 = vmul.f32 %v5924, 1.442695
        %v6167 = vpow.pop %v6166
        %v6168 = vmul.f32 %v5925, 1.442695
        %v6169 = vpow.pop %v6168
        %v6170 = vmul.f32 %v5926, 1.442695
        %v6171 = vpow.pop %v6170
        %v6172 = vmul.f32 %v5927, 1.442695
        %v6173 = vpow.pop %v6172
        %v6174 = vmul.f32 %v5928, 1.442695
        %v6175 = vpow.pop %v6174
        %v6176 = vmul.f32 %v5929, 1.442695
        %v6177 = vpow.pop %v6176
        %v6178 = vmul.f32 %v5930, 1.442695
        %v6179 = vpow.pop %v6178
        %v6180 = vmul.f32 %v5931, 1.442695
        %v6181 = vpow.pop %v6180
        %v6182 = vmul.f32 %v5932, 1.442695
        %v6183 = vpow.pop %v6182
        %v6184 = vmul.f32 %v5933, 1.442695
        %v6185 = vpow.pop %v6184
        %v6186 = vmul.f32 %v5934, 1.442695
        %v6187 = vpow.pop %v6186
        %v6188 = vmul.f32 %v5935, 1.442695
        %v6189 = vpow.pop %v6188
        %v6190 = vmul.f32 %v5936, 1.442695
        %v6191 = vpow.pop %v6190
        %v6192 = vmul.f32 %v5937, 1.442695
        %v6193 = vpow.pop %v6192
        %v6194 = vadd.f32 %v5939, 1.0
        %v6195 = vadd.f32 %v5941, 1.0
        %v6196 = vadd.f32 %v5943, 1.0
        %v6197 = vadd.f32 %v5945, 1.0
        %v6198 = vadd.f32 %v5947, 1.0
        %v6199 = vadd.f32 %v5949, 1.0
        %v6200 = vadd.f32 %v5951, 1.0
        %v6201 = vadd.f32 %v5953, 1.0
        %v6202 = vadd.f32 %v5955, 1.0
        %v6203 = vadd.f32 %v5957, 1.0
        %v6204 = vadd.f32 %v5959, 1.0
        %v6205 = vadd.f32 %v5961, 1.0
        %v6206 = vadd.f32 %v5963, 1.0
        %v6207 = vadd.f32 %v5965, 1.0
        %v6208 = vadd.f32 %v5967, 1.0
        %v6209 = vadd.f32 %v5969, 1.0
        %v6210 = vadd.f32 %v5971, 1.0
        %v6211 = vadd.f32 %v5973, 1.0
        %v6212 = vadd.f32 %v5975, 1.0
        %v6213 = vadd.f32 %v5977, 1.0
        %v6214 = vadd.f32 %v5979, 1.0
        %v6215 = vadd.f32 %v5981, 1.0
        %v6216 = vadd.f32 %v5983, 1.0
        %v6217 = vadd.f32 %v5985, 1.0
        %v6218 = vadd.f32 %v5987, 1.0
        %v6219 = vadd.f32 %v5989, 1.0
        %v6220 = vadd.f32 %v5991, 1.0
        %v6221 = vadd.f32 %v5993, 1.0
        %v6222 = vadd.f32 %v5995, 1.0
        %v6223 = vadd.f32 %v5997, 1.0
        %v6224 = vadd.f32 %v5999, 1.0
        %v6225 = vadd.f32 %v6001, 1.0
        %v6226 = vadd.f32 %v6003, 1.0
        %v6227 = vadd.f32 %v6005, 1.0
        %v6228 = vadd.f32 %v6007, 1.0
        %v6229 = vadd.f32 %v6009, 1.0
        %v6230 = vadd.f32 %v6011, 1.0
        %v6231 = vadd.f32 %v6013, 1.0
        %v6232 = vadd.f32 %v6015, 1.0
        %v6233 = vadd.f32 %v6017, 1.0
        %v6234 = vadd.f32 %v6019, 1.0
        %v6235 = vadd.f32 %v6021, 1.0
        %v6236 = vadd.f32 %v6023, 1.0
        %v6237 = vadd.f32 %v6025, 1.0
        %v6238 = vadd.f32 %v6027, 1.0
        %v6239 = vadd.f32 %v6029, 1.0
        %v6240 = vadd.f32 %v6031, 1.0
        %v6241 = vadd.f32 %v6033, 1.0
        %v6242 = vadd.f32 %v6035, 1.0
        %v6243 = vadd.f32 %v6037, 1.0
        %v6244 = vadd.f32 %v6039, 1.0
        %v6245 = vadd.f32 %v6041, 1.0
        %v6246 = vadd.f32 %v6043, 1.0
        %v6247 = vadd.f32 %v6045, 1.0
        %v6248 = vadd.f32 %v6047, 1.0
        %v6249 = vadd.f32 %v6049, 1.0
        %v6250 = vadd.f32 %v6051, 1.0
        %v6251 = vadd.f32 %v6053, 1.0
        %v6252 = vadd.f32 %v6055, 1.0
        %v6253 = vadd.f32 %v6057, 1.0
        %v6254 = vadd.f32 %v6059, 1.0
        %v6255 = vadd.f32 %v6061, 1.0
        %v6256 = vadd.f32 %v6063, 1.0
        %v6257 = vadd.f32 %v6065, 1.0
        %v6258 = vadd.f32 %v6067, 1.0
        %v6259 = vadd.f32 %v6069, 1.0
        %v6260 = vadd.f32 %v6071, 1.0
        %v6261 = vadd.f32 %v6073, 1.0
        %v6262 = vadd.f32 %v6075, 1.0
        %v6263 = vadd.f32 %v6077, 1.0
        %v6264 = vadd.f32 %v6079, 1.0
        %v6265 = vadd.f32 %v6081, 1.0
        %v6266 = vadd.f32 %v6083, 1.0
        %v6267 = vadd.f32 %v6085, 1.0
        %v6268 = vadd.f32 %v6087, 1.0
        %v6269 = vadd.f32 %v6089, 1.0
        %v6270 = vadd.f32 %v6091, 1.0
        %v6271 = vadd.f32 %v6093, 1.0
        %v6272 = vadd.f32 %v6095, 1.0
        %v6273 = vadd.f32 %v6097, 1.0
        %v6274 = vadd.f32 %v6099, 1.0
        %v6275 = vadd.f32 %v6101, 1.0
        %v6276 = vadd.f32 %v6103, 1.0
        %v6277 = vadd.f32 %v6105, 1.0
        %v6278 = vadd.f32 %v6107, 1.0
        %v6279 = vadd.f32 %v6109, 1.0
        %v6280 = vadd.f32 %v6111, 1.0
        %v6281 = vadd.f32 %v6113, 1.0
        %v6282 = vadd.f32 %v6115, 1.0
        %v6283 = vadd.f32 %v6117, 1.0
        %v6284 = vadd.f32 %v6119, 1.0
        %v6285 = vadd.f32 %v6121, 1.0
        %v6286 = vadd.f32 %v6123, 1.0
        %v6287 = vadd.f32 %v6125, 1.0
        %v6288 = vadd.f32 %v6127, 1.0
        %v6289 = vadd.f32 %v6129, 1.0
        %v6290 = vadd.f32 %v6131, 1.0
        %v6291 = vadd.f32 %v6133, 1.0
        %v6292 = vadd.f32 %v6135, 1.0
        %v6293 = vadd.f32 %v6137, 1.0
        %v6294 = vadd.f32 %v6139, 1.0
        %v6295 = vadd.f32 %v6141, 1.0
        %v6296 = vadd.f32 %v6143, 1.0
        %v6297 = vadd.f32 %v6145, 1.0
        %v6298 = vadd.f32 %v6147, 1.0
        %v6299 = vadd.f32 %v6149, 1.0
        %v6300 = vadd.f32 %v6151, 1.0
        %v6301 = vadd.f32 %v6153, 1.0
        %v6302 = vadd.f32 %v6155, 1.0
        %v6303 = vadd.f32 %v6157, 1.0
        %v6304 = vadd.f32 %v6159, 1.0
        %v6305 = vadd.f32 %v6161, 1.0
        %v6306 = vadd.f32 %v6163, 1.0
        %v6307 = vadd.f32 %v6165, 1.0
        %v6308 = vadd.f32 %v6167, 1.0
        %v6309 = vadd.f32 %v6169, 1.0
        %v6310 = vadd.f32 %v6171, 1.0
        %v6311 = vadd.f32 %v6173, 1.0
        %v6312 = vadd.f32 %v6175, 1.0
        %v6313 = vadd.f32 %v6177, 1.0
        %v6314 = vadd.f32 %v6179, 1.0
        %v6315 = vadd.f32 %v6181, 1.0
        %v6316 = vadd.f32 %v6183, 1.0
        %v6317 = vadd.f32 %v6185, 1.0
        %v6318 = vadd.f32 %v6187, 1.0
        %v6319 = vadd.f32 %v6189, 1.0
        %v6320 = vadd.f32 %v6191, 1.0
        %v6321 = vadd.f32 %v6193, 1.0
        %v6322 = vrcp.pop %v6194
        %v6323 = vmul.f32 1.0, %v6322
        %v6324 = vrcp.pop %v6195
        %v6325 = vmul.f32 1.0, %v6324
        %v6326 = vrcp.pop %v6196
        %v6327 = vmul.f32 1.0, %v6326
        %v6328 = vrcp.pop %v6197
        %v6329 = vmul.f32 1.0, %v6328
        %v6330 = vrcp.pop %v6198
        %v6331 = vmul.f32 1.0, %v6330
        %v6332 = vrcp.pop %v6199
        %v6333 = vmul.f32 1.0, %v6332
        %v6334 = vrcp.pop %v6200
        %v6335 = vmul.f32 1.0, %v6334
        %v6336 = vrcp.pop %v6201
        %v6337 = vmul.f32 1.0, %v6336
        %v6338 = vrcp.pop %v6202
        %v6339 = vmul.f32 1.0, %v6338
        %v6340 = vrcp.pop %v6203
        %v6341 = vmul.f32 1.0, %v6340
        %v6342 = vrcp.pop %v6204
        %v6343 = vmul.f32 1.0, %v6342
        %v6344 = vrcp.pop %v6205
        %v6345 = vmul.f32 1.0, %v6344
        %v6346 = vrcp.pop %v6206
        %v6347 = vmul.f32 1.0, %v6346
        %v6348 = vrcp.pop %v6207
        %v6349 = vmul.f32 1.0, %v6348
        %v6350 = vrcp.pop %v6208
        %v6351 = vmul.f32 1.0, %v6350
        %v6352 = vrcp.pop %v6209
        %v6353 = vmul.f32 1.0, %v6352
        %v6354 = vrcp.pop %v6210
        %v6355 = vmul.f32 1.0, %v6354
        %v6356 = vrcp.pop %v6211
        %v6357 = vmul.f32 1.0, %v6356
        %v6358 = vrcp.pop %v6212
        %v6359 = vmul.f32 1.0, %v6358
        %v6360 = vrcp.pop %v6213
        %v6361 = vmul.f32 1.0, %v6360
        %v6362 = vrcp.pop %v6214
        %v6363 = vmul.f32 1.0, %v6362
        %v6364 = vrcp.pop %v6215
        %v6365 = vmul.f32 1.0, %v6364
        %v6366 = vrcp.pop %v6216
        %v6367 = vmul.f32 1.0, %v6366
        %v6368 = vrcp.pop %v6217
        %v6369 = vmul.f32 1.0, %v6368
        %v6370 = vrcp.pop %v6218
        %v6371 = vmul.f32 1.0, %v6370
        %v6372 = vrcp.pop %v6219
        %v6373 = vmul.f32 1.0, %v6372
        %v6374 = vrcp.pop %v6220
        %v6375 = vmul.f32 1.0, %v6374
        %v6376 = vrcp.pop %v6221
        %v6377 = vmul.f32 1.0, %v6376
        %v6378 = vrcp.pop %v6222
        %v6379 = vmul.f32 1.0, %v6378
        %v6380 = vrcp.pop %v6223
        %v6381 = vmul.f32 1.0, %v6380
        %v6382 = vrcp.pop %v6224
        %v6383 = vmul.f32 1.0, %v6382
        %v6384 = vrcp.pop %v6225
        %v6385 = vmul.f32 1.0, %v6384
        %v6386 = vrcp.pop %v6226
        %v6387 = vmul.f32 1.0, %v6386
        %v6388 = vrcp.pop %v6227
        %v6389 = vmul.f32 1.0, %v6388
        %v6390 = vrcp.pop %v6228
        %v6391 = vmul.f32 1.0, %v6390
        %v6392 = vrcp.pop %v6229
        %v6393 = vmul.f32 1.0, %v6392
        %v6394 = vrcp.pop %v6230
        %v6395 = vmul.f32 1.0, %v6394
        %v6396 = vrcp.pop %v6231
        %v6397 = vmul.f32 1.0, %v6396
        %v6398 = vrcp.pop %v6232
        %v6399 = vmul.f32 1.0, %v6398
        %v6400 = vrcp.pop %v6233
        %v6401 = vmul.f32 1.0, %v6400
        %v6402 = vrcp.pop %v6234
        %v6403 = vmul.f32 1.0, %v6402
        %v6404 = vrcp.pop %v6235
        %v6405 = vmul.f32 1.0, %v6404
        %v6406 = vrcp.pop %v6236
        %v6407 = vmul.f32 1.0, %v6406
        %v6408 = vrcp.pop %v6237
        %v6409 = vmul.f32 1.0, %v6408
        %v6410 = vrcp.pop %v6238
        %v6411 = vmul.f32 1.0, %v6410
        %v6412 = vrcp.pop %v6239
        %v6413 = vmul.f32 1.0, %v6412
        %v6414 = vrcp.pop %v6240
        %v6415 = vmul.f32 1.0, %v6414
        %v6416 = vrcp.pop %v6241
        %v6417 = vmul.f32 1.0, %v6416
        %v6418 = vrcp.pop %v6242
        %v6419 = vmul.f32 1.0, %v6418
        %v6420 = vrcp.pop %v6243
        %v6421 = vmul.f32 1.0, %v6420
        %v6422 = vrcp.pop %v6244
        %v6423 = vmul.f32 1.0, %v6422
        %v6424 = vrcp.pop %v6245
        %v6425 = vmul.f32 1.0, %v6424
        %v6426 = vrcp.pop %v6246
        %v6427 = vmul.f32 1.0, %v6426
        %v6428 = vrcp.pop %v6247
        %v6429 = vmul.f32 1.0, %v6428
        %v6430 = vrcp.pop %v6248
        %v6431 = vmul.f32 1.0, %v6430
        %v6432 = vrcp.pop %v6249
        %v6433 = vmul.f32 1.0, %v6432
        %v6434 = vrcp.pop %v6250
        %v6435 = vmul.f32 1.0, %v6434
        %v6436 = vrcp.pop %v6251
        %v6437 = vmul.f32 1.0, %v6436
        %v6438 = vrcp.pop %v6252
        %v6439 = vmul.f32 1.0, %v6438
        %v6440 = vrcp.pop %v6253
        %v6441 = vmul.f32 1.0, %v6440
        %v6442 = vrcp.pop %v6254
        %v6443 = vmul.f32 1.0, %v6442
        %v6444 = vrcp.pop %v6255
        %v6445 = vmul.f32 1.0, %v6444
        %v6446 = vrcp.pop %v6256
        %v6447 = vmul.f32 1.0, %v6446
        %v6448 = vrcp.pop %v6257
        %v6449 = vmul.f32 1.0, %v6448
        %v6450 = vrcp.pop %v6258
        %v6451 = vmul.f32 1.0, %v6450
        %v6452 = vrcp.pop %v6259
        %v6453 = vmul.f32 1.0, %v6452
        %v6454 = vrcp.pop %v6260
        %v6455 = vmul.f32 1.0, %v6454
        %v6456 = vrcp.pop %v6261
        %v6457 = vmul.f32 1.0, %v6456
        %v6458 = vrcp.pop %v6262
        %v6459 = vmul.f32 1.0, %v6458
        %v6460 = vrcp.pop %v6263
        %v6461 = vmul.f32 1.0, %v6460
        %v6462 = vrcp.pop %v6264
        %v6463 = vmul.f32 1.0, %v6462
        %v6464 = vrcp.pop %v6265
        %v6465 = vmul.f32 1.0, %v6464
        %v6466 = vrcp.pop %v6266
        %v6467 = vmul.f32 1.0, %v6466
        %v6468 = vrcp.pop %v6267
        %v6469 = vmul.f32 1.0, %v6468
        %v6470 = vrcp.pop %v6268
        %v6471 = vmul.f32 1.0, %v6470
        %v6472 = vrcp.pop %v6269
        %v6473 = vmul.f32 1.0, %v6472
        %v6474 = vrcp.pop %v6270
        %v6475 = vmul.f32 1.0, %v6474
        %v6476 = vrcp.pop %v6271
        %v6477 = vmul.f32 1.0, %v6476
        %v6478 = vrcp.pop %v6272
        %v6479 = vmul.f32 1.0, %v6478
        %v6480 = vrcp.pop %v6273
        %v6481 = vmul.f32 1.0, %v6480
        %v6482 = vrcp.pop %v6274
        %v6483 = vmul.f32 1.0, %v6482
        %v6484 = vrcp.pop %v6275
        %v6485 = vmul.f32 1.0, %v6484
        %v6486 = vrcp.pop %v6276
        %v6487 = vmul.f32 1.0, %v6486
        %v6488 = vrcp.pop %v6277
        %v6489 = vmul.f32 1.0, %v6488
        %v6490 = vrcp.pop %v6278
        %v6491 = vmul.f32 1.0, %v6490
        %v6492 = vrcp.pop %v6279
        %v6493 = vmul.f32 1.0, %v6492
        %v6494 = vrcp.pop %v6280
        %v6495 = vmul.f32 1.0, %v6494
        %v6496 = vrcp.pop %v6281
        %v6497 = vmul.f32 1.0, %v6496
        %v6498 = vrcp.pop %v6282
        %v6499 = vmul.f32 1.0, %v6498
        %v6500 = vrcp.pop %v6283
        %v6501 = vmul.f32 1.0, %v6500
        %v6502 = vrcp.pop %v6284
        %v6503 = vmul.f32 1.0, %v6502
        %v6504 = vrcp.pop %v6285
        %v6505 = vmul.f32 1.0, %v6504
        %v6506 = vrcp.pop %v6286
        %v6507 = vmul.f32 1.0, %v6506
        %v6508 = vrcp.pop %v6287
        %v6509 = vmul.f32 1.0, %v6508
        %v6510 = vrcp.pop %v6288
        %v6511 = vmul.f32 1.0, %v6510
        %v6512 = vrcp.pop %v6289
        %v6513 = vmul.f32 1.0, %v6512
        %v6514 = vrcp.pop %v6290
        %v6515 = vmul.f32 1.0, %v6514
        %v6516 = vrcp.pop %v6291
        %v6517 = vmul.f32 1.0, %v6516
        %v6518 = vrcp.pop %v6292
        %v6519 = vmul.f32 1.0, %v6518
        %v6520 = vrcp.pop %v6293
        %v6521 = vmul.f32 1.0, %v6520
        %v6522 = vrcp.pop %v6294
        %v6523 = vmul.f32 1.0, %v6522
        %v6524 = vrcp.pop %v6295
        %v6525 = vmul.f32 1.0, %v6524
        %v6526 = vrcp.pop %v6296
        %v6527 = vmul.f32 1.0, %v6526
        %v6528 = vrcp.pop %v6297
        %v6529 = vmul.f32 1.0, %v6528
        %v6530 = vrcp.pop %v6298
        %v6531 = vmul.f32 1.0, %v6530
        %v6532 = vrcp.pop %v6299
        %v6533 = vmul.f32 1.0, %v6532
        %v6534 = vrcp.pop %v6300
        %v6535 = vmul.f32 1.0, %v6534
        %v6536 = vrcp.pop %v6301
        %v6537 = vmul.f32 1.0, %v6536
        %v6538 = vrcp.pop %v6302
        %v6539 = vmul.f32 1.0, %v6538
        %v6540 = vrcp.pop %v6303
        %v6541 = vmul.f32 1.0, %v6540
        %v6542 = vrcp.pop %v6304
        %v6543 = vmul.f32 1.0, %v6542
        %v6544 = vrcp.pop %v6305
        %v6545 = vmul.f32 1.0, %v6544
        %v6546 = vrcp.pop %v6306
        %v6547 = vmul.f32 1.0, %v6546
        %v6548 = vrcp.pop %v6307
        %v6549 = vmul.f32 1.0, %v6548
        %v6550 = vrcp.pop %v6308
        %v6551 = vmul.f32 1.0, %v6550
        %v6552 = vrcp.pop %v6309
        %v6553 = vmul.f32 1.0, %v6552
        %v6554 = vrcp.pop %v6310
        %v6555 = vmul.f32 1.0, %v6554
        %v6556 = vrcp.pop %v6311
        %v6557 = vmul.f32 1.0, %v6556
        %v6558 = vrcp.pop %v6312
        %v6559 = vmul.f32 1.0, %v6558
        %v6560 = vrcp.pop %v6313
        %v6561 = vmul.f32 1.0, %v6560
        %v6562 = vrcp.pop %v6314
        %v6563 = vmul.f32 1.0, %v6562
        %v6564 = vrcp.pop %v6315
        %v6565 = vmul.f32 1.0, %v6564
        %v6566 = vrcp.pop %v6316
        %v6567 = vmul.f32 1.0, %v6566
        %v6568 = vrcp.pop %v6317
        %v6569 = vmul.f32 1.0, %v6568
        %v6570 = vrcp.pop %v6318
        %v6571 = vmul.f32 1.0, %v6570
        %v6572 = vrcp.pop %v6319
        %v6573 = vmul.f32 1.0, %v6572
        %v6574 = vrcp.pop %v6320
        %v6575 = vmul.f32 1.0, %v6574
        %v6576 = vrcp.pop %v6321
        %v6577 = vmul.f32 1.0, %v6576
        %v6578 = vmul.f32 %v5265, %v6323
        %v6579 = vmul.f32 %v5267, %v6325
        %v6580 = vmul.f32 %v5378, %v6327
        %v6581 = vmul.f32 %v5380, %v6329
        %v6582 = vmul.f32 %v5491, %v6331
        %v6583 = vmul.f32 %v5493, %v6333
        %v6584 = vmul.f32 %v5604, %v6335
        %v6585 = vmul.f32 %v5606, %v6337
        %v6586 = vmul.f32 %v5269, %v6339
        %v6587 = vmul.f32 %v5271, %v6341
        %v6588 = vmul.f32 %v5382, %v6343
        %v6589 = vmul.f32 %v5384, %v6345
        %v6590 = vmul.f32 %v5495, %v6347
        %v6591 = vmul.f32 %v5497, %v6349
        %v6592 = vmul.f32 %v5608, %v6351
        %v6593 = vmul.f32 %v5610, %v6353
        %v6594 = vmul.f32 %v5275, %v6355
        %v6595 = vmul.f32 %v5277, %v6357
        %v6596 = vmul.f32 %v5388, %v6359
        %v6597 = vmul.f32 %v5390, %v6361
        %v6598 = vmul.f32 %v5501, %v6363
        %v6599 = vmul.f32 %v5503, %v6365
        %v6600 = vmul.f32 %v5614, %v6367
        %v6601 = vmul.f32 %v5616, %v6369
        %v6602 = vmul.f32 %v5279, %v6371
        %v6603 = vmul.f32 %v5281, %v6373
        %v6604 = vmul.f32 %v5392, %v6375
        %v6605 = vmul.f32 %v5394, %v6377
        %v6606 = vmul.f32 %v5505, %v6379
        %v6607 = vmul.f32 %v5507, %v6381
        %v6608 = vmul.f32 %v5618, %v6383
        %v6609 = vmul.f32 %v5620, %v6385
        %v6610 = vmul.f32 %v5285, %v6387
        %v6611 = vmul.f32 %v5287, %v6389
        %v6612 = vmul.f32 %v5398, %v6391
        %v6613 = vmul.f32 %v5400, %v6393
        %v6614 = vmul.f32 %v5511, %v6395
        %v6615 = vmul.f32 %v5513, %v6397
        %v6616 = vmul.f32 %v5624, %v6399
        %v6617 = vmul.f32 %v5626, %v6401
        %v6618 = vmul.f32 %v5289, %v6403
        %v6619 = vmul.f32 %v5291, %v6405
        %v6620 = vmul.f32 %v5402, %v6407
        %v6621 = vmul.f32 %v5404, %v6409
        %v6622 = vmul.f32 %v5515, %v6411
        %v6623 = vmul.f32 %v5517, %v6413
        %v6624 = vmul.f32 %v5628, %v6415
        %v6625 = vmul.f32 %v5630, %v6417
        %v6626 = vmul.f32 %v5295, %v6419
        %v6627 = vmul.f32 %v5297, %v6421
        %v6628 = vmul.f32 %v5408, %v6423
        %v6629 = vmul.f32 %v5410, %v6425
        %v6630 = vmul.f32 %v5521, %v6427
        %v6631 = vmul.f32 %v5523, %v6429
        %v6632 = vmul.f32 %v5634, %v6431
        %v6633 = vmul.f32 %v5636, %v6433
        %v6634 = vmul.f32 %v5299, %v6435
        %v6635 = vmul.f32 %v5301, %v6437
        %v6636 = vmul.f32 %v5412, %v6439
        %v6637 = vmul.f32 %v5414, %v6441
        %v6638 = vmul.f32 %v5525, %v6443
        %v6639 = vmul.f32 %v5527, %v6445
        %v6640 = vmul.f32 %v5638, %v6447
        %v6641 = vmul.f32 %v5640, %v6449
        %v6642 = vmul.f32 %v5305, %v6451
        %v6643 = vmul.f32 %v5307, %v6453
        %v6644 = vmul.f32 %v5418, %v6455
        %v6645 = vmul.f32 %v5420, %v6457
        %v6646 = vmul.f32 %v5531, %v6459
        %v6647 = vmul.f32 %v5533, %v6461
        %v6648 = vmul.f32 %v5644, %v6463
        %v6649 = vmul.f32 %v5646, %v6465
        %v6650 = vmul.f32 %v5309, %v6467
        %v6651 = vmul.f32 %v5311, %v6469
        %v6652 = vmul.f32 %v5422, %v6471
        %v6653 = vmul.f32 %v5424, %v6473
        %v6654 = vmul.f32 %v5535, %v6475
        %v6655 = vmul.f32 %v5537, %v6477
        %v6656 = vmul.f32 %v5648, %v6479
        %v6657 = vmul.f32 %v5650, %v6481
        %v6658 = vmul.f32 %v5315, %v6483
        %v6659 = vmul.f32 %v5317, %v6485
        %v6660 = vmul.f32 %v5428, %v6487
        %v6661 = vmul.f32 %v5430, %v6489
        %v6662 = vmul.f32 %v5541, %v6491
        %v6663 = vmul.f32 %v5543, %v6493
        %v6664 = vmul.f32 %v5654, %v6495
        %v6665 = vmul.f32 %v5656, %v6497
        %v6666 = vmul.f32 %v5319, %v6499
        %v6667 = vmul.f32 %v5321, %v6501
        %v6668 = vmul.f32 %v5432, %v6503
        %v6669 = vmul.f32 %v5434, %v6505
        %v6670 = vmul.f32 %v5545, %v6507
        %v6671 = vmul.f32 %v5547, %v6509
        %v6672 = vmul.f32 %v5658, %v6511
        %v6673 = vmul.f32 %v5660, %v6513
        %v6674 = vmul.f32 %v5325, %v6515
        %v6675 = vmul.f32 %v5327, %v6517
        %v6676 = vmul.f32 %v5438, %v6519
        %v6677 = vmul.f32 %v5440, %v6521
        %v6678 = vmul.f32 %v5551, %v6523
        %v6679 = vmul.f32 %v5553, %v6525
        %v6680 = vmul.f32 %v5664, %v6527
        %v6681 = vmul.f32 %v5666, %v6529
        %v6682 = vmul.f32 %v5329, %v6531
        %v6683 = vmul.f32 %v5331, %v6533
        %v6684 = vmul.f32 %v5442, %v6535
        %v6685 = vmul.f32 %v5444, %v6537
        %v6686 = vmul.f32 %v5555, %v6539
        %v6687 = vmul.f32 %v5557, %v6541
        %v6688 = vmul.f32 %v5668, %v6543
        %v6689 = vmul.f32 %v5670, %v6545
        %v6690 = vmul.f32 %v5335, %v6547
        %v6691 = vmul.f32 %v5337, %v6549
        %v6692 = vmul.f32 %v5448, %v6551
        %v6693 = vmul.f32 %v5450, %v6553
        %v6694 = vmul.f32 %v5561, %v6555
        %v6695 = vmul.f32 %v5563, %v6557
        %v6696 = vmul.f32 %v5674, %v6559
        %v6697 = vmul.f32 %v5676, %v6561
        %v6698 = vmul.f32 %v5339, %v6563
        %v6699 = vmul.f32 %v5341, %v6565
        %v6700 = vmul.f32 %v5452, %v6567
        %v6701 = vmul.f32 %v5454, %v6569
        %v6702 = vmul.f32 %v5565, %v6571
        %v6703 = vmul.f32 %v5567, %v6573
        %v6704 = vmul.f32 %v5678, %v6575
        %v6705 = vmul.f32 %v5680, %v6577
        %v6706 = vpack.c.bf16 %v6586, %v6578
        %v6707 = vpack.c.bf16 %v6587, %v6579
        %v6708 = vpack.c.bf16 %v6588, %v6580
        %v6709 = vpack.c.bf16 %v6589, %v6581
        %v6710 = vpack.c.bf16 %v6590, %v6582
        %v6711 = vpack.c.bf16 %v6591, %v6583
        %v6712 = vpack.c.bf16 %v6592, %v6584
        %v6713 = vpack.c.bf16 %v6593, %v6585
        %v6714 = vpack.c.bf16 %v6602, %v6594
        %v6715 = vpack.c.bf16 %v6603, %v6595
        %v6716 = vpack.c.bf16 %v6604, %v6596
        %v6717 = vpack.c.bf16 %v6605, %v6597
        %v6718 = vpack.c.bf16 %v6606, %v6598
        %v6719 = vpack.c.bf16 %v6607, %v6599
        %v6720 = vpack.c.bf16 %v6608, %v6600
        %v6721 = vpack.c.bf16 %v6609, %v6601
        %v6722 = vpack.c.bf16 %v6618, %v6610
        %v6723 = vpack.c.bf16 %v6619, %v6611
        %v6724 = vpack.c.bf16 %v6620, %v6612
        %v6725 = vpack.c.bf16 %v6621, %v6613
        %v6726 = vpack.c.bf16 %v6622, %v6614
        %v6727 = vpack.c.bf16 %v6623, %v6615
        %v6728 = vpack.c.bf16 %v6624, %v6616
        %v6729 = vpack.c.bf16 %v6625, %v6617
        %v6730 = vpack.c.bf16 %v6634, %v6626
        %v6731 = vpack.c.bf16 %v6635, %v6627
        %v6732 = vpack.c.bf16 %v6636, %v6628
        %v6733 = vpack.c.bf16 %v6637, %v6629
        %v6734 = vpack.c.bf16 %v6638, %v6630
        %v6735 = vpack.c.bf16 %v6639, %v6631
        %v6736 = vpack.c.bf16 %v6640, %v6632
        %v6737 = vpack.c.bf16 %v6641, %v6633
        %v6738 = vpack.c.bf16 %v6650, %v6642
        %v6739 = vpack.c.bf16 %v6651, %v6643
        %v6740 = vpack.c.bf16 %v6652, %v6644
        %v6741 = vpack.c.bf16 %v6653, %v6645
        %v6742 = vpack.c.bf16 %v6654, %v6646
        %v6743 = vpack.c.bf16 %v6655, %v6647
        %v6744 = vpack.c.bf16 %v6656, %v6648
        %v6745 = vpack.c.bf16 %v6657, %v6649
        %v6746 = vpack.c.bf16 %v6666, %v6658
        %v6747 = vpack.c.bf16 %v6667, %v6659
        %v6748 = vpack.c.bf16 %v6668, %v6660
        %v6749 = vpack.c.bf16 %v6669, %v6661
        %v6750 = vpack.c.bf16 %v6670, %v6662
        %v6751 = vpack.c.bf16 %v6671, %v6663
        %v6752 = vpack.c.bf16 %v6672, %v6664
        %v6753 = vpack.c.bf16 %v6673, %v6665
        %v6754 = vpack.c.bf16 %v6682, %v6674
        %v6755 = vpack.c.bf16 %v6683, %v6675
        %v6756 = vpack.c.bf16 %v6684, %v6676
        %v6757 = vpack.c.bf16 %v6685, %v6677
        %v6758 = vpack.c.bf16 %v6686, %v6678
        %v6759 = vpack.c.bf16 %v6687, %v6679
        %v6760 = vpack.c.bf16 %v6688, %v6680
        %v6761 = vpack.c.bf16 %v6689, %v6681
        %v6762 = vpack.c.bf16 %v6698, %v6690
        %v6763 = vpack.c.bf16 %v6699, %v6691
        %v6764 = vpack.c.bf16 %v6700, %v6692
        %v6765 = vpack.c.bf16 %v6701, %v6693
        %v6766 = vpack.c.bf16 %v6702, %v6694
        %v6767 = vpack.c.bf16 %v6703, %v6695
        %v6768 = vpack.c.bf16 %v6704, %v6696
        %v6769 = vpack.c.bf16 %v6705, %v6697
        %v6770 = vld [vmem:[#allocation14] sm:$0xff]
        %v6771 = vld [vmem:[#allocation14 + $0x8] sm:$0xff]
        %v6772 = vld [vmem:[#allocation14 + $0x10] sm:$0xff]
        %v6773 = vld [vmem:[#allocation14 + $0x18] sm:$0xff]
        %v6774 = vld [vmem:[#allocation14 + $0x20] sm:$0xff]
        %v6775 = vld [vmem:[#allocation14 + $0x28] sm:$0xff]
        %v6776 = vld [vmem:[#allocation14 + $0x30] sm:$0xff]
        %v6777 = vld [vmem:[#allocation14 + $0x38] sm:$0xff]
        %v6778 = vld [vmem:[#allocation14 + $0x40] sm:$0xff]
        %v6779 = vld [vmem:[#allocation14 + $0x48] sm:$0xff]
        %v6780 = vld [vmem:[#allocation14 + $0x50] sm:$0xff]
        %v6781 = vld [vmem:[#allocation14 + $0x58] sm:$0xff]
        %v6782 = vld [vmem:[#allocation14 + $0x60] sm:$0xff]
        %v6783 = vld [vmem:[#allocation14 + $0x68] sm:$0xff]
        %v6784 = vld [vmem:[#allocation14 + $0x70] sm:$0xff]
        %v6785 = vld [vmem:[#allocation14 + $0x78] sm:$0xff]
        %v6786 = vld [vmem:[#allocation14 + $0x80] sm:$0xff]
        %v6787 = vld [vmem:[#allocation14 + $0x88] sm:$0xff]
        %v6788 = vld [vmem:[#allocation14 + $0x90] sm:$0xff]
        %v6789 = vld [vmem:[#allocation14 + $0x98] sm:$0xff]
        %v6790 = vld [vmem:[#allocation14 + $0xa0] sm:$0xff]
        %v6791 = vld [vmem:[#allocation14 + $0xa8] sm:$0xff]
        %v6792 = vld [vmem:[#allocation14 + $0xb0] sm:$0xff]
        %v6793 = vld [vmem:[#allocation14 + $0xb8] sm:$0xff]
        %v6794 = vld [vmem:[#allocation14 + $0xc0] sm:$0xff]
        %v6795 = vld [vmem:[#allocation14 + $0xc8] sm:$0xff]
        %v6796 = vld [vmem:[#allocation14 + $0xd0] sm:$0xff]
        %v6797 = vld [vmem:[#allocation14 + $0xd8] sm:$0xff]
        %v6798 = vld [vmem:[#allocation14 + $0xe0] sm:$0xff]
        %v6799 = vld [vmem:[#allocation14 + $0xe8] sm:$0xff]
        %v6800 = vld [vmem:[#allocation14 + $0xf0] sm:$0xff]
        %v6801 = vld [vmem:[#allocation14 + $0xf8] sm:$0xff]
        %v6802 = vld [vmem:[#allocation14 + $0x100] sm:$0xff]
        %v6803 = vld [vmem:[#allocation14 + $0x108] sm:$0xff]
        %v6804 = vld [vmem:[#allocation14 + $0x110] sm:$0xff]
        %v6805 = vld [vmem:[#allocation14 + $0x118] sm:$0xff]
        %v6806 = vld [vmem:[#allocation14 + $0x120] sm:$0xff]
        %v6807 = vld [vmem:[#allocation14 + $0x128] sm:$0xff]
        %v6808 = vld [vmem:[#allocation14 + $0x130] sm:$0xff]
        %v6809 = vld [vmem:[#allocation14 + $0x138] sm:$0xff]
        %v6810 = vld [vmem:[#allocation14 + $0x140] sm:$0xff]
        %v6811 = vld [vmem:[#allocation14 + $0x148] sm:$0xff]
        %v6812 = vld [vmem:[#allocation14 + $0x150] sm:$0xff]
        %v6813 = vld [vmem:[#allocation14 + $0x158] sm:$0xff]
        %v6814 = vld [vmem:[#allocation14 + $0x160] sm:$0xff]
        %v6815 = vld [vmem:[#allocation14 + $0x168] sm:$0xff]
        %v6816 = vld [vmem:[#allocation14 + $0x170] sm:$0xff]
        %v6817 = vld [vmem:[#allocation14 + $0x178] sm:$0xff]
        %v6818 = vld [vmem:[#allocation14 + $0x180] sm:$0xff]
        %v6819 = vld [vmem:[#allocation14 + $0x188] sm:$0xff]
        %v6820 = vld [vmem:[#allocation14 + $0x190] sm:$0xff]
        %v6821 = vld [vmem:[#allocation14 + $0x198] sm:$0xff]
        %v6822 = vld [vmem:[#allocation14 + $0x1a0] sm:$0xff]
        %v6823 = vld [vmem:[#allocation14 + $0x1a8] sm:$0xff]
        %v6824 = vld [vmem:[#allocation14 + $0x1b0] sm:$0xff]
        %v6825 = vld [vmem:[#allocation14 + $0x1b8] sm:$0xff]
        %v6826 = vld [vmem:[#allocation14 + $0x1c0] sm:$0xff]
        %v6827 = vld [vmem:[#allocation14 + $0x1c8] sm:$0xff]
        %v6828 = vld [vmem:[#allocation14 + $0x1d0] sm:$0xff]
        %v6829 = vld [vmem:[#allocation14 + $0x1d8] sm:$0xff]
        %v6830 = vld [vmem:[#allocation14 + $0x1e0] sm:$0xff]
        %v6831 = vld [vmem:[#allocation14 + $0x1e8] sm:$0xff]
        %v6832 = vld [vmem:[#allocation14 + $0x1f0] sm:$0xff]
        %v6833 = vld [vmem:[#allocation14 + $0x1f8] sm:$0xff]
        %v6834 = vld [vmem:[#allocation14 + $0x200] sm:$0xff]
        %v6835 = vld [vmem:[#allocation14 + $0x208] sm:$0xff]
        %v6836 = vld [vmem:[#allocation14 + $0x210] sm:$0xff]
        %v6837 = vld [vmem:[#allocation14 + $0x218] sm:$0xff]
        %v6838 = vld [vmem:[#allocation14 + $0x220] sm:$0xff]
        %v6839 = vld [vmem:[#allocation14 + $0x228] sm:$0xff]
        %v6840 = vld [vmem:[#allocation14 + $0x230] sm:$0xff]
        %v6841 = vld [vmem:[#allocation14 + $0x238] sm:$0xff]
        %v6842 = vld [vmem:[#allocation14 + $0x240] sm:$0xff]
        %v6843 = vld [vmem:[#allocation14 + $0x248] sm:$0xff]
        %v6844 = vld [vmem:[#allocation14 + $0x250] sm:$0xff]
        %v6845 = vld [vmem:[#allocation14 + $0x258] sm:$0xff]
        %v6846 = vld [vmem:[#allocation14 + $0x260] sm:$0xff]
        %v6847 = vld [vmem:[#allocation14 + $0x268] sm:$0xff]
        %v6848 = vld [vmem:[#allocation14 + $0x270] sm:$0xff]
        %v6849 = vld [vmem:[#allocation14 + $0x278] sm:$0xff]
        %v6850 = vld [vmem:[#allocation14 + $0x280] sm:$0xff]
        %v6851 = vld [vmem:[#allocation14 + $0x288] sm:$0xff]
        %v6852 = vld [vmem:[#allocation14 + $0x290] sm:$0xff]
        %v6853 = vld [vmem:[#allocation14 + $0x298] sm:$0xff]
        %v6854 = vld [vmem:[#allocation14 + $0x2a0] sm:$0xff]
        %v6855 = vld [vmem:[#allocation14 + $0x2a8] sm:$0xff]
        %v6856 = vld [vmem:[#allocation14 + $0x2b0] sm:$0xff]
        %v6857 = vld [vmem:[#allocation14 + $0x2b8] sm:$0xff]
        %v6858 = vld [vmem:[#allocation14 + $0x2c0] sm:$0xff]
        %v6859 = vld [vmem:[#allocation14 + $0x2c8] sm:$0xff]
        %v6860 = vld [vmem:[#allocation14 + $0x2d0] sm:$0xff]
        %v6861 = vld [vmem:[#allocation14 + $0x2d8] sm:$0xff]
        %v6862 = vld [vmem:[#allocation14 + $0x2e0] sm:$0xff]
        %v6863 = vld [vmem:[#allocation14 + $0x2e8] sm:$0xff]
        %v6864 = vld [vmem:[#allocation14 + $0x2f0] sm:$0xff]
        %v6865 = vld [vmem:[#allocation14 + $0x2f8] sm:$0xff]
        %v6866 = vld [vmem:[#allocation14 + $0x300] sm:$0xff]
        %v6867 = vld [vmem:[#allocation14 + $0x308] sm:$0xff]
        %v6868 = vld [vmem:[#allocation14 + $0x310] sm:$0xff]
        %v6869 = vld [vmem:[#allocation14 + $0x318] sm:$0xff]
        %v6870 = vld [vmem:[#allocation14 + $0x320] sm:$0xff]
        %v6871 = vld [vmem:[#allocation14 + $0x328] sm:$0xff]
        %v6872 = vld [vmem:[#allocation14 + $0x330] sm:$0xff]
        %v6873 = vld [vmem:[#allocation14 + $0x338] sm:$0xff]
        %v6874 = vld [vmem:[#allocation14 + $0x340] sm:$0xff]
        %v6875 = vld [vmem:[#allocation14 + $0x348] sm:$0xff]
        %v6876 = vld [vmem:[#allocation14 + $0x350] sm:$0xff]
        %v6877 = vld [vmem:[#allocation14 + $0x358] sm:$0xff]
        %v6878 = vld [vmem:[#allocation14 + $0x360] sm:$0xff]
        %v6879 = vld [vmem:[#allocation14 + $0x368] sm:$0xff]
        %v6880 = vld [vmem:[#allocation14 + $0x370] sm:$0xff]
        %v6881 = vld [vmem:[#allocation14 + $0x378] sm:$0xff]
        %v6882 = vld [vmem:[#allocation14 + $0x380] sm:$0xff]
        %v6883 = vld [vmem:[#allocation14 + $0x388] sm:$0xff]
        %v6884 = vld [vmem:[#allocation14 + $0x390] sm:$0xff]
        %v6885 = vld [vmem:[#allocation14 + $0x398] sm:$0xff]
        %v6886 = vld [vmem:[#allocation14 + $0x3a0] sm:$0xff]
        %v6887 = vld [vmem:[#allocation14 + $0x3a8] sm:$0xff]
        %v6888 = vld [vmem:[#allocation14 + $0x3b0] sm:$0xff]
        %v6889 = vld [vmem:[#allocation14 + $0x3b8] sm:$0xff]
        %v6890 = vld [vmem:[#allocation14 + $0x3c0] sm:$0xff]
        %v6891 = vld [vmem:[#allocation14 + $0x3c8] sm:$0xff]
        %v6892 = vld [vmem:[#allocation14 + $0x3d0] sm:$0xff]
        %v6893 = vld [vmem:[#allocation14 + $0x3d8] sm:$0xff]
        %v6894 = vld [vmem:[#allocation14 + $0x3e0] sm:$0xff]
        %v6895 = vld [vmem:[#allocation14 + $0x3e8] sm:$0xff]
        %v6896 = vld [vmem:[#allocation14 + $0x3f0] sm:$0xff]
        %v6897 = vld [vmem:[#allocation14 + $0x3f8] sm:$0xff]
        %v6898 = vld [vmem:[%s12] sm:$0x3]
        %v6900 = vlaneseq
        %v6901 = vshrl.u32 %v6900, 7
        %v6902 = vsub.s32 0, %v6901
        %v6903 = vrot.slane %v6898, %v6902
        %v6904 = vlaneseq
        %v6905 = vshrl.u32 %v6904, 7
        %v6906 = vsub.s32 1, %v6905
        %v6907 = vrot.slane %v6898, %v6906
        %v7038 = vunpack.c.l.b16 %v6770
        %v7039 = vunpack.c.h.b16 %v6770
        %v7040 = vunpack.c.l.b16 %v6771
        %v7041 = vunpack.c.h.b16 %v6771
        %v7042 = vunpack.c.l.b16 %v6772
        %v7043 = vunpack.c.h.b16 %v6772
        %v7044 = vunpack.c.l.b16 %v6773
        %v7045 = vunpack.c.h.b16 %v6773
        %v7046 = vunpack.c.l.b16 %v6774
        %v7047 = vunpack.c.h.b16 %v6774
        %v7048 = vunpack.c.l.b16 %v6775
        %v7049 = vunpack.c.h.b16 %v6775
        %v7050 = vunpack.c.l.b16 %v6776
        %v7051 = vunpack.c.h.b16 %v6776
        %v7052 = vunpack.c.l.b16 %v6777
        %v7053 = vunpack.c.h.b16 %v6777
        %v7054 = vunpack.c.l.b16 %v6778
        %v7055 = vunpack.c.h.b16 %v6778
        %v7056 = vunpack.c.l.b16 %v6779
        %v7057 = vunpack.c.h.b16 %v6779
        %v7058 = vunpack.c.l.b16 %v6780
        %v7059 = vunpack.c.h.b16 %v6780
        %v7060 = vunpack.c.l.b16 %v6781
        %v7061 = vunpack.c.h.b16 %v6781
        %v7062 = vunpack.c.l.b16 %v6782
        %v7063 = vunpack.c.h.b16 %v6782
        %v7064 = vunpack.c.l.b16 %v6783
        %v7065 = vunpack.c.h.b16 %v6783
        %v7066 = vunpack.c.l.b16 %v6784
        %v7067 = vunpack.c.h.b16 %v6784
        %v7068 = vunpack.c.l.b16 %v6785
        %v7069 = vunpack.c.h.b16 %v6785
        %v7070 = vunpack.c.l.b16 %v6786
        %v7071 = vunpack.c.h.b16 %v6786
        %v7072 = vunpack.c.l.b16 %v6787
        %v7073 = vunpack.c.h.b16 %v6787
        %v7074 = vunpack.c.l.b16 %v6788
        %v7075 = vunpack.c.h.b16 %v6788
        %v7076 = vunpack.c.l.b16 %v6789
        %v7077 = vunpack.c.h.b16 %v6789
        %v7078 = vunpack.c.l.b16 %v6790
        %v7079 = vunpack.c.h.b16 %v6790
        %v7080 = vunpack.c.l.b16 %v6791
        %v7081 = vunpack.c.h.b16 %v6791
        %v7082 = vunpack.c.l.b16 %v6792
        %v7083 = vunpack.c.h.b16 %v6792
        %v7084 = vunpack.c.l.b16 %v6793
        %v7085 = vunpack.c.h.b16 %v6793
        %v7086 = vunpack.c.l.b16 %v6794
        %v7087 = vunpack.c.h.b16 %v6794
        %v7088 = vunpack.c.l.b16 %v6795
        %v7089 = vunpack.c.h.b16 %v6795
        %v7090 = vunpack.c.l.b16 %v6796
        %v7091 = vunpack.c.h.b16 %v6796
        %v7092 = vunpack.c.l.b16 %v6797
        %v7093 = vunpack.c.h.b16 %v6797
        %v7094 = vunpack.c.l.b16 %v6798
        %v7095 = vunpack.c.h.b16 %v6798
        %v7096 = vunpack.c.l.b16 %v6799
        %v7097 = vunpack.c.h.b16 %v6799
        %v7098 = vunpack.c.l.b16 %v6800
        %v7099 = vunpack.c.h.b16 %v6800
        %v7100 = vunpack.c.l.b16 %v6801
        %v7101 = vunpack.c.h.b16 %v6801
        %v7102 = vunpack.c.l.b16 %v6802
        %v7103 = vunpack.c.h.b16 %v6802
        %v7104 = vunpack.c.l.b16 %v6803
        %v7105 = vunpack.c.h.b16 %v6803
        %v7106 = vunpack.c.l.b16 %v6804
        %v7107 = vunpack.c.h.b16 %v6804
        %v7108 = vunpack.c.l.b16 %v6805
        %v7109 = vunpack.c.h.b16 %v6805
        %v7110 = vunpack.c.l.b16 %v6806
        %v7111 = vunpack.c.h.b16 %v6806
        %v7112 = vunpack.c.l.b16 %v6807
        %v7113 = vunpack.c.h.b16 %v6807
        %v7114 = vunpack.c.l.b16 %v6808
        %v7115 = vunpack.c.h.b16 %v6808
        %v7116 = vunpack.c.l.b16 %v6809
        %v7117 = vunpack.c.h.b16 %v6809
        %v7118 = vunpack.c.l.b16 %v6810
        %v7119 = vunpack.c.h.b16 %v6810
        %v7120 = vunpack.c.l.b16 %v6811
        %v7121 = vunpack.c.h.b16 %v6811
        %v7122 = vunpack.c.l.b16 %v6812
        %v7123 = vunpack.c.h.b16 %v6812
        %v7124 = vunpack.c.l.b16 %v6813
        %v7125 = vunpack.c.h.b16 %v6813
        %v7126 = vunpack.c.l.b16 %v6814
        %v7127 = vunpack.c.h.b16 %v6814
        %v7128 = vunpack.c.l.b16 %v6815
        %v7129 = vunpack.c.h.b16 %v6815
        %v7130 = vunpack.c.l.b16 %v6816
        %v7131 = vunpack.c.h.b16 %v6816
        %v7132 = vunpack.c.l.b16 %v6817
        %v7133 = vunpack.c.h.b16 %v6817
        %v7134 = vunpack.c.l.b16 %v6818
        %v7135 = vunpack.c.h.b16 %v6818
        %v7136 = vunpack.c.l.b16 %v6819
        %v7137 = vunpack.c.h.b16 %v6819
        %v7138 = vunpack.c.l.b16 %v6820
        %v7139 = vunpack.c.h.b16 %v6820
        %v7140 = vunpack.c.l.b16 %v6821
        %v7141 = vunpack.c.h.b16 %v6821
        %v7142 = vunpack.c.l.b16 %v6822
        %v7143 = vunpack.c.h.b16 %v6822
        %v7144 = vunpack.c.l.b16 %v6823
        %v7145 = vunpack.c.h.b16 %v6823
        %v7146 = vunpack.c.l.b16 %v6824
        %v7147 = vunpack.c.h.b16 %v6824
        %v7148 = vunpack.c.l.b16 %v6825
        %v7149 = vunpack.c.h.b16 %v6825
        %v7150 = vunpack.c.l.b16 %v6826
        %v7151 = vunpack.c.h.b16 %v6826
        %v7152 = vunpack.c.l.b16 %v6827
        %v7153 = vunpack.c.h.b16 %v6827
        %v7154 = vunpack.c.l.b16 %v6828
        %v7155 = vunpack.c.h.b16 %v6828
        %v7156 = vunpack.c.l.b16 %v6829
        %v7157 = vunpack.c.h.b16 %v6829
        %v7158 = vunpack.c.l.b16 %v6830
        %v7159 = vunpack.c.h.b16 %v6830
        %v7160 = vunpack.c.l.b16 %v6831
        %v7161 = vunpack.c.h.b16 %v6831
        %v7162 = vunpack.c.l.b16 %v6832
        %v7163 = vunpack.c.h.b16 %v6832
        %v7164 = vunpack.c.l.b16 %v6833
        %v7165 = vunpack.c.h.b16 %v6833
        %v7166 = vunpack.c.l.b16 %v6834
        %v7167 = vunpack.c.h.b16 %v6834
        %v7168 = vunpack.c.l.b16 %v6835
        %v7169 = vunpack.c.h.b16 %v6835
        %v7170 = vunpack.c.l.b16 %v6836
        %v7171 = vunpack.c.h.b16 %v6836
        %v7172 = vunpack.c.l.b16 %v6837
        %v7173 = vunpack.c.h.b16 %v6837
        %v7174 = vunpack.c.l.b16 %v6838
        %v7175 = vunpack.c.h.b16 %v6838
        %v7176 = vunpack.c.l.b16 %v6839
        %v7177 = vunpack.c.h.b16 %v6839
        %v7178 = vunpack.c.l.b16 %v6840
        %v7179 = vunpack.c.h.b16 %v6840
        %v7180 = vunpack.c.l.b16 %v6841
        %v7181 = vunpack.c.h.b16 %v6841
        %v7182 = vunpack.c.l.b16 %v6842
        %v7183 = vunpack.c.h.b16 %v6842
        %v7184 = vunpack.c.l.b16 %v6843
        %v7185 = vunpack.c.h.b16 %v6843
        %v7186 = vunpack.c.l.b16 %v6844
        %v7187 = vunpack.c.h.b16 %v6844
        %v7188 = vunpack.c.l.b16 %v6845
        %v7189 = vunpack.c.h.b16 %v6845
        %v7190 = vunpack.c.l.b16 %v6846
        %v7191 = vunpack.c.h.b16 %v6846
        %v7192 = vunpack.c.l.b16 %v6847
        %v7193 = vunpack.c.h.b16 %v6847
        %v7194 = vunpack.c.l.b16 %v6848
        %v7195 = vunpack.c.h.b16 %v6848
        %v7196 = vunpack.c.l.b16 %v6849
        %v7197 = vunpack.c.h.b16 %v6849
        %v7198 = vunpack.c.l.b16 %v6850
        %v7199 = vunpack.c.h.b16 %v6850
        %v7200 = vunpack.c.l.b16 %v6851
        %v7201 = vunpack.c.h.b16 %v6851
        %v7202 = vunpack.c.l.b16 %v6852
        %v7203 = vunpack.c.h.b16 %v6852
        %v7204 = vunpack.c.l.b16 %v6853
        %v7205 = vunpack.c.h.b16 %v6853
        %v7206 = vunpack.c.l.b16 %v6854
        %v7207 = vunpack.c.h.b16 %v6854
        %v7208 = vunpack.c.l.b16 %v6855
        %v7209 = vunpack.c.h.b16 %v6855
        %v7210 = vunpack.c.l.b16 %v6856
        %v7211 = vunpack.c.h.b16 %v6856
        %v7212 = vunpack.c.l.b16 %v6857
        %v7213 = vunpack.c.h.b16 %v6857
        %v7214 = vunpack.c.l.b16 %v6858
        %v7215 = vunpack.c.h.b16 %v6858
        %v7216 = vunpack.c.l.b16 %v6859
        %v7217 = vunpack.c.h.b16 %v6859
        %v7218 = vunpack.c.l.b16 %v6860
        %v7219 = vunpack.c.h.b16 %v6860
        %v7220 = vunpack.c.l.b16 %v6861
        %v7221 = vunpack.c.h.b16 %v6861
        %v7222 = vunpack.c.l.b16 %v6862
        %v7223 = vunpack.c.h.b16 %v6862
        %v7224 = vunpack.c.l.b16 %v6863
        %v7225 = vunpack.c.h.b16 %v6863
        %v7226 = vunpack.c.l.b16 %v6864
        %v7227 = vunpack.c.h.b16 %v6864
        %v7228 = vunpack.c.l.b16 %v6865
        %v7229 = vunpack.c.h.b16 %v6865
        %v7230 = vunpack.c.l.b16 %v6866
        %v7231 = vunpack.c.h.b16 %v6866
        %v7232 = vunpack.c.l.b16 %v6867
        %v7233 = vunpack.c.h.b16 %v6867
        %v7234 = vunpack.c.l.b16 %v6868
        %v7235 = vunpack.c.h.b16 %v6868
        %v7236 = vunpack.c.l.b16 %v6869
        %v7237 = vunpack.c.h.b16 %v6869
        %v7238 = vunpack.c.l.b16 %v6870
        %v7239 = vunpack.c.h.b16 %v6870
        %v7240 = vunpack.c.l.b16 %v6871
        %v7241 = vunpack.c.h.b16 %v6871
        %v7242 = vunpack.c.l.b16 %v6872
        %v7243 = vunpack.c.h.b16 %v6872
        %v7244 = vunpack.c.l.b16 %v6873
        %v7245 = vunpack.c.h.b16 %v6873
        %v7246 = vunpack.c.l.b16 %v6874
        %v7247 = vunpack.c.h.b16 %v6874
        %v7248 = vunpack.c.l.b16 %v6875
        %v7249 = vunpack.c.h.b16 %v6875
        %v7250 = vunpack.c.l.b16 %v6876
        %v7251 = vunpack.c.h.b16 %v6876
        %v7252 = vunpack.c.l.b16 %v6877
        %v7253 = vunpack.c.h.b16 %v6877
        %v7254 = vunpack.c.l.b16 %v6878
        %v7255 = vunpack.c.h.b16 %v6878
        %v7256 = vunpack.c.l.b16 %v6879
        %v7257 = vunpack.c.h.b16 %v6879
        %v7258 = vunpack.c.l.b16 %v6880
        %v7259 = vunpack.c.h.b16 %v6880
        %v7260 = vunpack.c.l.b16 %v6881
        %v7261 = vunpack.c.h.b16 %v6881
        %v7262 = vunpack.c.l.b16 %v6882
        %v7263 = vunpack.c.h.b16 %v6882
        %v7264 = vunpack.c.l.b16 %v6883
        %v7265 = vunpack.c.h.b16 %v6883
        %v7266 = vunpack.c.l.b16 %v6884
        %v7267 = vunpack.c.h.b16 %v6884
        %v7268 = vunpack.c.l.b16 %v6885
        %v7269 = vunpack.c.h.b16 %v6885
        %v7270 = vunpack.c.l.b16 %v6886
        %v7271 = vunpack.c.h.b16 %v6886
        %v7272 = vunpack.c.l.b16 %v6887
        %v7273 = vunpack.c.h.b16 %v6887
        %v7274 = vunpack.c.l.b16 %v6888
        %v7275 = vunpack.c.h.b16 %v6888
        %v7276 = vunpack.c.l.b16 %v6889
        %v7277 = vunpack.c.h.b16 %v6889
        %v7278 = vunpack.c.l.b16 %v6890
        %v7279 = vunpack.c.h.b16 %v6890
        %v7280 = vunpack.c.l.b16 %v6891
        %v7281 = vunpack.c.h.b16 %v6891
        %v7282 = vunpack.c.l.b16 %v6892
        %v7283 = vunpack.c.h.b16 %v6892
        %v7284 = vunpack.c.l.b16 %v6893
        %v7285 = vunpack.c.h.b16 %v6893
        %v7286 = vunpack.c.l.b16 %v6894
        %v7287 = vunpack.c.h.b16 %v6894
        %v7288 = vunpack.c.l.b16 %v6895
        %v7289 = vunpack.c.h.b16 %v6895
        %v7290 = vunpack.c.l.b16 %v6896
        %v7291 = vunpack.c.h.b16 %v6896
        %v7292 = vunpack.c.l.b16 %v6897
        %v7293 = vunpack.c.h.b16 %v6897
        %v7294 = vpack.c.b16 %v7040, %v7038
        %v7295 = vpack.c.b16 %v7041, %v7039
        %v7296 = vpack.c.b16 %v7044, %v7042
        %v7297 = vpack.c.b16 %v7045, %v7043
        %v7298 = vpack.c.b16 %v7048, %v7046
        %v7299 = vpack.c.b16 %v7049, %v7047
        %v7300 = vpack.c.b16 %v7052, %v7050
        %v7301 = vpack.c.b16 %v7053, %v7051
        %v7302 = vpack.c.b16 %v7056, %v7054
        %v7303 = vpack.c.b16 %v7057, %v7055
        %v7304 = vpack.c.b16 %v7060, %v7058
        %v7305 = vpack.c.b16 %v7061, %v7059
        %v7306 = vpack.c.b16 %v7064, %v7062
        %v7307 = vpack.c.b16 %v7065, %v7063
        %v7308 = vpack.c.b16 %v7068, %v7066
        %v7309 = vpack.c.b16 %v7069, %v7067
        %v7310 = vpack.c.b16 %v7072, %v7070
        %v7311 = vpack.c.b16 %v7073, %v7071
        %v7312 = vpack.c.b16 %v7076, %v7074
        %v7313 = vpack.c.b16 %v7077, %v7075
        %v7314 = vpack.c.b16 %v7080, %v7078
        %v7315 = vpack.c.b16 %v7081, %v7079
        %v7316 = vpack.c.b16 %v7084, %v7082
        %v7317 = vpack.c.b16 %v7085, %v7083
        %v7318 = vpack.c.b16 %v7088, %v7086
        %v7319 = vpack.c.b16 %v7089, %v7087
        %v7320 = vpack.c.b16 %v7092, %v7090
        %v7321 = vpack.c.b16 %v7093, %v7091
        %v7322 = vpack.c.b16 %v7096, %v7094
        %v7323 = vpack.c.b16 %v7097, %v7095
        %v7324 = vpack.c.b16 %v7100, %v7098
        %v7325 = vpack.c.b16 %v7101, %v7099
        %v7326 = vpack.c.b16 %v7104, %v7102
        %v7327 = vpack.c.b16 %v7105, %v7103
        %v7328 = vpack.c.b16 %v7108, %v7106
        %v7329 = vpack.c.b16 %v7109, %v7107
        %v7330 = vpack.c.b16 %v7112, %v7110
        %v7331 = vpack.c.b16 %v7113, %v7111
        %v7332 = vpack.c.b16 %v7116, %v7114
        %v7333 = vpack.c.b16 %v7117, %v7115
        %v7334 = vpack.c.b16 %v7120, %v7118
        %v7335 = vpack.c.b16 %v7121, %v7119
        %v7336 = vpack.c.b16 %v7124, %v7122
        %v7337 = vpack.c.b16 %v7125, %v7123
        %v7338 = vpack.c.b16 %v7128, %v7126
        %v7339 = vpack.c.b16 %v7129, %v7127
        %v7340 = vpack.c.b16 %v7132, %v7130
        %v7341 = vpack.c.b16 %v7133, %v7131
        %v7342 = vpack.c.b16 %v7136, %v7134
        %v7343 = vpack.c.b16 %v7137, %v7135
        %v7344 = vpack.c.b16 %v7140, %v7138
        %v7345 = vpack.c.b16 %v7141, %v7139
        %v7346 = vpack.c.b16 %v7144, %v7142
        %v7347 = vpack.c.b16 %v7145, %v7143
        %v7348 = vpack.c.b16 %v7148, %v7146
        %v7349 = vpack.c.b16 %v7149, %v7147
        %v7350 = vpack.c.b16 %v7152, %v7150
        %v7351 = vpack.c.b16 %v7153, %v7151
        %v7352 = vpack.c.b16 %v7156, %v7154
        %v7353 = vpack.c.b16 %v7157, %v7155
        %v7354 = vpack.c.b16 %v7160, %v7158
        %v7355 = vpack.c.b16 %v7161, %v7159
        %v7356 = vpack.c.b16 %v7164, %v7162
        %v7357 = vpack.c.b16 %v7165, %v7163
        %v7358 = vpack.c.b16 %v7168, %v7166
        %v7359 = vpack.c.b16 %v7169, %v7167
        %v7360 = vpack.c.b16 %v7172, %v7170
        %v7361 = vpack.c.b16 %v7173, %v7171
        %v7362 = vpack.c.b16 %v7176, %v7174
        %v7363 = vpack.c.b16 %v7177, %v7175
        %v7364 = vpack.c.b16 %v7180, %v7178
        %v7365 = vpack.c.b16 %v7181, %v7179
        %v7366 = vpack.c.b16 %v7184, %v7182
        %v7367 = vpack.c.b16 %v7185, %v7183
        %v7368 = vpack.c.b16 %v7188, %v7186
        %v7369 = vpack.c.b16 %v7189, %v7187
        %v7370 = vpack.c.b16 %v7192, %v7190
        %v7371 = vpack.c.b16 %v7193, %v7191
        %v7372 = vpack.c.b16 %v7196, %v7194
        %v7373 = vpack.c.b16 %v7197, %v7195
        %v7374 = vpack.c.b16 %v7200, %v7198
        %v7375 = vpack.c.b16 %v7201, %v7199
        %v7376 = vpack.c.b16 %v7204, %v7202
        %v7377 = vpack.c.b16 %v7205, %v7203
        %v7378 = vpack.c.b16 %v7208, %v7206
        %v7379 = vpack.c.b16 %v7209, %v7207
        %v7380 = vpack.c.b16 %v7212, %v7210
        %v7381 = vpack.c.b16 %v7213, %v7211
        %v7382 = vpack.c.b16 %v7216, %v7214
        %v7383 = vpack.c.b16 %v7217, %v7215
        %v7384 = vpack.c.b16 %v7220, %v7218
        %v7385 = vpack.c.b16 %v7221, %v7219
        %v7386 = vpack.c.b16 %v7224, %v7222
        %v7387 = vpack.c.b16 %v7225, %v7223
        %v7388 = vpack.c.b16 %v7228, %v7226
        %v7389 = vpack.c.b16 %v7229, %v7227
        %v7390 = vpack.c.b16 %v7232, %v7230
        %v7391 = vpack.c.b16 %v7233, %v7231
        %v7392 = vpack.c.b16 %v7236, %v7234
        %v7393 = vpack.c.b16 %v7237, %v7235
        %v7394 = vpack.c.b16 %v7240, %v7238
        %v7395 = vpack.c.b16 %v7241, %v7239
        %v7396 = vpack.c.b16 %v7244, %v7242
        %v7397 = vpack.c.b16 %v7245, %v7243
        %v7398 = vpack.c.b16 %v7248, %v7246
        %v7399 = vpack.c.b16 %v7249, %v7247
        %v7400 = vpack.c.b16 %v7252, %v7250
        %v7401 = vpack.c.b16 %v7253, %v7251
        %v7402 = vpack.c.b16 %v7256, %v7254
        %v7403 = vpack.c.b16 %v7257, %v7255
        %v7404 = vpack.c.b16 %v7260, %v7258
        %v7405 = vpack.c.b16 %v7261, %v7259
        %v7406 = vpack.c.b16 %v7264, %v7262
        %v7407 = vpack.c.b16 %v7265, %v7263
        %v7408 = vpack.c.b16 %v7268, %v7266
        %v7409 = vpack.c.b16 %v7269, %v7267
        %v7410 = vpack.c.b16 %v7272, %v7270
        %v7411 = vpack.c.b16 %v7273, %v7271
        %v7412 = vpack.c.b16 %v7276, %v7274
        %v7413 = vpack.c.b16 %v7277, %v7275
        %v7414 = vpack.c.b16 %v7280, %v7278
        %v7415 = vpack.c.b16 %v7281, %v7279
        %v7416 = vpack.c.b16 %v7284, %v7282
        %v7417 = vpack.c.b16 %v7285, %v7283
        %v7418 = vpack.c.b16 %v7288, %v7286
        %v7419 = vpack.c.b16 %v7289, %v7287
        %v7420 = vpack.c.b16 %v7292, %v7290
        %v7421 = vpack.c.b16 %v7293, %v7291
        %7550 = vmatprep.subr.bf16.mxu0 %v7295
        %7551 = vmatpush1.bf16.msra.mxu0 %v7294
        %7552 = vmatprep.subr.bf16.mxu0 %v7297
        %7553 = vmatpush1.bf16.msra.mxu0 %v7296
        %7554 = vmatprep.subr.bf16.mxu0 %v7299
        %7555 = vmatpush1.bf16.msra.mxu0 %v7298
        %7556 = vmatprep.subr.bf16.mxu0 %v7301
        %7557 = vmatpush1.bf16.msra.mxu0 %v7300
        %7558 = vmatprep.subr.bf16.mxu0 %v7303
        %7559 = vmatpush1.bf16.msra.mxu0 %v7302
        %7560 = vmatprep.subr.bf16.mxu0 %v7305
        %7561 = vmatpush1.bf16.msra.mxu0 %v7304
        %7562 = vmatprep.subr.bf16.mxu0 %v7307
        %7563 = vmatpush1.bf16.msra.mxu0 %v7306
        %7564 = vmatprep.subr.bf16.mxu0 %v7309
        %7565 = vmatpush1.bf16.msra.mxu0 %v7308
        %7566 = vmatprep.subr.bf16.mxu0 %v7311
        %7567 = vmatpush1.bf16.msra.mxu0 %v7310
        %7568 = vmatprep.subr.bf16.mxu0 %v7313
        %7569 = vmatpush1.bf16.msra.mxu0 %v7312
        %7570 = vmatprep.subr.bf16.mxu0 %v7315
        %7571 = vmatpush1.bf16.msra.mxu0 %v7314
        %7572 = vmatprep.subr.bf16.mxu0 %v7317
        %7573 = vmatpush1.bf16.msra.mxu0 %v7316
        %7574 = vmatprep.subr.bf16.mxu0 %v7319
        %7575 = vmatpush1.bf16.msra.mxu0 %v7318
        %7576 = vmatprep.subr.bf16.mxu0 %v7321
        %7577 = vmatpush1.bf16.msra.mxu0 %v7320
        %7578 = vmatprep.subr.bf16.mxu0 %v7323
        %7579 = vmatpush1.bf16.msra.mxu0 %v7322
        %7580 = vmatprep.subr.bf16.mxu0 %v7325
        %7581 = vmatpush1.bf16.msra.mxu0 %v7324
        %7582 = vmatprep.mubr.bf16.mxu0 %v6707
        %7583 = vmatmul.mubr.bf16.gmra.mrb[0].mxu0 %v6706
        %v7584 = vpop.f32.mrb[0].mxu0
        %v7585 = vadd.f32 %v6903, %v7584
        %v7586 = vpop.f32.mrb[0].mxu0
        %v7587 = vadd.f32 %v6907, %v7586
        %v7588 = vpop.f32.mrb[0].mxu0
        %v7589 = vadd.f32 %v6903, %v7588
        %v7590 = vpop.f32.mrb[0].mxu0
        %v7591 = vadd.f32 %v6907, %v7590
        %7592 = vmatprep.mubr.bf16.mxu0 %v6715
        %7593 = vmatmul.mubr.bf16.gmra.mrb[0].mxu0 %v6714
        %v7594 = vpop.f32.mrb[0].mxu0
        %v7595 = vadd.f32 %v6903, %v7594
        %v7596 = vpop.f32.mrb[0].mxu0
        %v7597 = vadd.f32 %v6907, %v7596
        %v7598 = vpop.f32.mrb[0].mxu0
        %v7599 = vadd.f32 %v6903, %v7598
        %v7600 = vpop.f32.mrb[0].mxu0
        %v7601 = vadd.f32 %v6907, %v7600
        %7602 = vmatprep.mubr.bf16.mxu0 %v6723
        %7603 = vmatmul.mubr.bf16.gmra.mrb[0].mxu0 %v6722
        %v7604 = vpop.f32.mrb[0].mxu0
        %v7605 = vadd.f32 %v6903, %v7604
        %v7606 = vpop.f32.mrb[0].mxu0
        %v7607 = vadd.f32 %v6907, %v7606
        %v7608 = vpop.f32.mrb[0].mxu0
        %v7609 = vadd.f32 %v6903, %v7608
        %v7610 = vpop.f32.mrb[0].mxu0
        %v7611 = vadd.f32 %v6907, %v7610
        %7612 = vmatprep.mubr.bf16.mxu0 %v6731
        %7613 = vmatmul.mubr.bf16.gmra.mrb[0].mxu0 %v6730
        %v7614 = vpop.f32.mrb[0].mxu0
        %v7615 = vadd.f32 %v6903, %v7614
        %v7616 = vpop.f32.mrb[0].mxu0
        %v7617 = vadd.f32 %v6907, %v7616
        %v7618 = vpop.f32.mrb[0].mxu0
        %v7619 = vadd.f32 %v6903, %v7618
        %v7620 = vpop.f32.mrb[0].mxu0
        %v7621 = vadd.f32 %v6907, %v7620
        %7622 = vmatprep.mubr.bf16.mxu0 %v6739
        %7623 = vmatmul.mubr.bf16.gmra.mrb[0].mxu0 %v6738
        %v7624 = vpop.f32.mrb[0].mxu0
        %v7625 = vadd.f32 %v6903, %v7624
        %v7626 = vpop.f32.mrb[0].mxu0
        %v7627 = vadd.f32 %v6907, %v7626
        %v7628 = vpop.f32.mrb[0].mxu0
        %v7629 = vadd.f32 %v6903, %v7628
        %v7630 = vpop.f32.mrb[0].mxu0
        %v7631 = vadd.f32 %v6907, %v7630
        %7632 = vmatprep.mubr.bf16.mxu0 %v6747
        %7633 = vmatmul.mubr.bf16.gmra.mrb[0].mxu0 %v6746
        %v7634 = vpop.f32.mrb[0].mxu0
        %v7635 = vadd.f32 %v6903, %v7634
        %v7636 = vpop.f32.mrb[0].mxu0
        %v7637 = vadd.f32 %v6907, %v7636
        %v7638 = vpop.f32.mrb[0].mxu0
        %v7639 = vadd.f32 %v6903, %v7638
        %v7640 = vpop.f32.mrb[0].mxu0
        %v7641 = vadd.f32 %v6907, %v7640
        %7642 = vmatprep.mubr.bf16.mxu0 %v6755
        %7643 = vmatmul.mubr.bf16.gmra.mrb[0].mxu0 %v6754
        %v7644 = vpop.f32.mrb[0].mxu0
        %v7645 = vadd.f32 %v6903, %v7644
        %v7646 = vpop.f32.mrb[0].mxu0
        %v7647 = vadd.f32 %v6907, %v7646
        %v7648 = vpop.f32.mrb[0].mxu0
        %v7649 = vadd.f32 %v6903, %v7648
        %v7650 = vpop.f32.mrb[0].mxu0
        %v7651 = vadd.f32 %v6907, %v7650
        %7652 = vmatprep.mubr.bf16.mxu0 %v6763
        %7653 = vmatmul.mubr.bf16.gmra.mrb[0].mxu0 %v6762
        %v7654 = vpop.f32.mrb[0].mxu0
        %v7655 = vadd.f32 %v6903, %v7654
        %v7656 = vpop.f32.mrb[0].mxu0
        %v7657 = vadd.f32 %v6907, %v7656
        %v7658 = vpop.f32.mrb[0].mxu0
        %v7659 = vadd.f32 %v6903, %v7658
        %v7660 = vpop.f32.mrb[0].mxu0
        %v7661 = vadd.f32 %v6907, %v7660
        %7662 = vdwg.mxu0
        %7663 = vmatprep.subr.bf16.mxu0 %v7327
        %7664 = vmatpush1.bf16.msra.mxu0 %v7326
        %7665 = vmatprep.subr.bf16.mxu0 %v7329
        %7666 = vmatpush1.bf16.msra.mxu0 %v7328
        %7667 = vmatprep.subr.bf16.mxu0 %v7331
        %7668 = vmatpush1.bf16.msra.mxu0 %v7330
        %7669 = vmatprep.subr.bf16.mxu0 %v7333
        %7670 = vmatpush1.bf16.msra.mxu0 %v7332
        %7671 = vmatprep.subr.bf16.mxu0 %v7335
        %7672 = vmatpush1.bf16.msra.mxu0 %v7334
        %7673 = vmatprep.subr.bf16.mxu0 %v7337
        %7674 = vmatpush1.bf16.msra.mxu0 %v7336
        %7675 = vmatprep.subr.bf16.mxu0 %v7339
        %7676 = vmatpush1.bf16.msra.mxu0 %v7338
        %7677 = vmatprep.subr.bf16.mxu0 %v7341
        %7678 = vmatpush1.bf16.msra.mxu0 %v7340
        %7679 = vmatprep.subr.bf16.mxu0 %v7343
        %7680 = vmatpush1.bf16.msra.mxu0 %v7342
        %7681 = vmatprep.subr.bf16.mxu0 %v7345
        %7682 = vmatpush1.bf16.msra.mxu0 %v7344
        %7683 = vmatprep.subr.bf16.mxu0 %v7347
        %7684 = vmatpush1.bf16.msra.mxu0 %v7346
        %7685 = vmatprep.subr.bf16.mxu0 %v7349
        %7686 = vmatpush1.bf16.msra.mxu0 %v7348
        %7687 = vmatprep.subr.bf16.mxu0 %v7351
        %7688 = vmatpush1.bf16.msra.mxu0 %v7350
        %7689 = vmatprep.subr.bf16.mxu0 %v7353
        %7690 = vmatpush1.bf16.msra.mxu0 %v7352
        %7691 = vmatprep.subr.bf16.mxu0 %v7355
        %7692 = vmatpush1.bf16.msra.mxu0 %v7354
        %7693 = vmatprep.subr.bf16.mxu0 %v7357
        %7694 = vmatpush1.bf16.msra.mxu0 %v7356
        %7695 = vmatprep.mubr.bf16.mxu0 %v6709
        %7696 = vmatmul.mubr.bf16.gmra.mrb[0].mxu0 %v6708
        %v7697 = vpop.f32.mrb[0].mxu0
        %v7698 = vadd.f32 %v7585, %v7697
        %v7699 = vpop.f32.mrb[0].mxu0
        %v7700 = vadd.f32 %v7587, %v7699
        %v7701 = vpop.f32.mrb[0].mxu0
        %v7702 = vadd.f32 %v7589, %v7701
        %v7703 = vpop.f32.mrb[0].mxu0
        %v7704 = vadd.f32 %v7591, %v7703
        %7705 = vmatprep.mubr.bf16.mxu0 %v6717
        %7706 = vmatmul.mubr.bf16.gmra.mrb[0].mxu0 %v6716
        %v7707 = vpop.f32.mrb[0].mxu0
        %v7708 = vadd.f32 %v7595, %v7707
        %v7709 = vpop.f32.mrb[0].mxu0
        %v7710 = vadd.f32 %v7597, %v7709
        %v7711 = vpop.f32.mrb[0].mxu0
        %v7712 = vadd.f32 %v7599, %v7711
        %v7713 = vpop.f32.mrb[0].mxu0
        %v7714 = vadd.f32 %v7601, %v7713
        %7715 = vmatprep.mubr.bf16.mxu0 %v6725
        %7716 = vmatmul.mubr.bf16.gmra.mrb[0].mxu0 %v6724
        %v7717 = vpop.f32.mrb[0].mxu0
        %v7718 = vadd.f32 %v7605, %v7717
        %v7719 = vpop.f32.mrb[0].mxu0
        %v7720 = vadd.f32 %v7607, %v7719
        %v7721 = vpop.f32.mrb[0].mxu0
        %v7722 = vadd.f32 %v7609, %v7721
        %v7723 = vpop.f32.mrb[0].mxu0
        %v7724 = vadd.f32 %v7611, %v7723
        %7725 = vmatprep.mubr.bf16.mxu0 %v6733
        %7726 = vmatmul.mubr.bf16.gmra.mrb[0].mxu0 %v6732
        %v7727 = vpop.f32.mrb[0].mxu0
        %v7728 = vadd.f32 %v7615, %v7727
        %v7729 = vpop.f32.mrb[0].mxu0
        %v7730 = vadd.f32 %v7617, %v7729
        %v7731 = vpop.f32.mrb[0].mxu0
        %v7732 = vadd.f32 %v7619, %v7731
        %v7733 = vpop.f32.mrb[0].mxu0
        %v7734 = vadd.f32 %v7621, %v7733
        %7735 = vmatprep.mubr.bf16.mxu0 %v6741
        %7736 = vmatmul.mubr.bf16.gmra.mrb[0].mxu0 %v6740
        %v7737 = vpop.f32.mrb[0].mxu0
        %v7738 = vadd.f32 %v7625, %v7737
        %v7739 = vpop.f32.mrb[0].mxu0
        %v7740 = vadd.f32 %v7627, %v7739
        %v7741 = vpop.f32.mrb[0].mxu0
        %v7742 = vadd.f32 %v7629, %v7741
        %v7743 = vpop.f32.mrb[0].mxu0
        %v7744 = vadd.f32 %v7631, %v7743
        %7745 = vmatprep.mubr.bf16.mxu0 %v6749
        %7746 = vmatmul.mubr.bf16.gmra.mrb[0].mxu0 %v6748
        %v7747 = vpop.f32.mrb[0].mxu0
        %v7748 = vadd.f32 %v7635, %v7747
        %v7749 = vpop.f32.mrb[0].mxu0
        %v7750 = vadd.f32 %v7637, %v7749
        %v7751 = vpop.f32.mrb[0].mxu0
        %v7752 = vadd.f32 %v7639, %v7751
        %v7753 = vpop.f32.mrb[0].mxu0
        %v7754 = vadd.f32 %v7641, %v7753
        %7755 = vmatprep.mubr.bf16.mxu0 %v6757
        %7756 = vmatmul.mubr.bf16.gmra.mrb[0].mxu0 %v6756
        %v7757 = vpop.f32.mrb[0].mxu0
        %v7758 = vadd.f32 %v7645, %v7757
        %v7759 = vpop.f32.mrb[0].mxu0
        %v7760 = vadd.f32 %v7647, %v7759
        %v7761 = vpop.f32.mrb[0].mxu0
        %v7762 = vadd.f32 %v7649, %v7761
        %v7763 = vpop.f32.mrb[0].mxu0
        %v7764 = vadd.f32 %v7651, %v7763
        %7765 = vmatprep.mubr.bf16.mxu0 %v6765
        %7766 = vmatmul.mubr.bf16.gmra.mrb[0].mxu0 %v6764
        %v7767 = vpop.f32.mrb[0].mxu0
        %v7768 = vadd.f32 %v7655, %v7767
        %v7769 = vpop.f32.mrb[0].mxu0
        %v7770 = vadd.f32 %v7657, %v7769
        %v7771 = vpop.f32.mrb[0].mxu0
        %v7772 = vadd.f32 %v7659, %v7771
        %v7773 = vpop.f32.mrb[0].mxu0
        %v7774 = vadd.f32 %v7661, %v7773
        %7775 = vdwg.mxu0
        %7776 = vmatprep.subr.bf16.mxu0 %v7359
        %7777 = vmatpush1.bf16.msra.mxu0 %v7358
        %7778 = vmatprep.subr.bf16.mxu0 %v7361
        %7779 = vmatpush1.bf16.msra.mxu0 %v7360
        %7780 = vmatprep.subr.bf16.mxu0 %v7363
        %7781 = vmatpush1.bf16.msra.mxu0 %v7362
        %7782 = vmatprep.subr.bf16.mxu0 %v7365
        %7783 = vmatpush1.bf16.msra.mxu0 %v7364
        %7784 = vmatprep.subr.bf16.mxu0 %v7367
        %7785 = vmatpush1.bf16.msra.mxu0 %v7366
        %7786 = vmatprep.subr.bf16.mxu0 %v7369
        %7787 = vmatpush1.bf16.msra.mxu0 %v7368
        %7788 = vmatprep.subr.bf16.mxu0 %v7371
        %7789 = vmatpush1.bf16.msra.mxu0 %v7370
        %7790 = vmatprep.subr.bf16.mxu0 %v7373
        %7791 = vmatpush1.bf16.msra.mxu0 %v7372
        %7792 = vmatprep.subr.bf16.mxu0 %v7375
        %7793 = vmatpush1.bf16.msra.mxu0 %v7374
        %7794 = vmatprep.subr.bf16.mxu0 %v7377
        %7795 = vmatpush1.bf16.msra.mxu0 %v7376
        %7796 = vmatprep.subr.bf16.mxu0 %v7379
        %7797 = vmatpush1.bf16.msra.mxu0 %v7378
        %7798 = vmatprep.subr.bf16.mxu0 %v7381
        %7799 = vmatpush1.bf16.msra.mxu0 %v7380
        %7800 = vmatprep.subr.bf16.mxu0 %v7383
        %7801 = vmatpush1.bf16.msra.mxu0 %v7382
        %7802 = vmatprep.subr.bf16.mxu0 %v7385
        %7803 = vmatpush1.bf16.msra.mxu0 %v7384
        %7804 = vmatprep.subr.bf16.mxu0 %v7387
        %7805 = vmatpush1.bf16.msra.mxu0 %v7386
        %7806 = vmatprep.subr.bf16.mxu0 %v7389
        %7807 = vmatpush1.bf16.msra.mxu0 %v7388
        %7808 = vmatprep.mubr.bf16.mxu0 %v6711
        %7809 = vmatmul.mubr.bf16.gmra.mrb[0].mxu0 %v6710
        %v7810 = vpop.f32.mrb[0].mxu0
        %v7811 = vadd.f32 %v7698, %v7810
        %v7812 = vpop.f32.mrb[0].mxu0
        %v7813 = vadd.f32 %v7700, %v7812
        %v7814 = vpop.f32.mrb[0].mxu0
        %v7815 = vadd.f32 %v7702, %v7814
        %v7816 = vpop.f32.mrb[0].mxu0
        %v7817 = vadd.f32 %v7704, %v7816
        %7818 = vmatprep.mubr.bf16.mxu0 %v6719
        %7819 = vmatmul.mubr.bf16.gmra.mrb[0].mxu0 %v6718
        %v7820 = vpop.f32.mrb[0].mxu0
        %v7821 = vadd.f32 %v7708, %v7820
        %v7822 = vpop.f32.mrb[0].mxu0
        %v7823 = vadd.f32 %v7710, %v7822
        %v7824 = vpop.f32.mrb[0].mxu0
        %v7825 = vadd.f32 %v7712, %v7824
        %v7826 = vpop.f32.mrb[0].mxu0
        %v7827 = vadd.f32 %v7714, %v7826
        %7828 = vmatprep.mubr.bf16.mxu0 %v6727
        %7829 = vmatmul.mubr.bf16.gmra.mrb[0].mxu0 %v6726
        %v7830 = vpop.f32.mrb[0].mxu0
        %v7831 = vadd.f32 %v7718, %v7830
        %v7832 = vpop.f32.mrb[0].mxu0
        %v7833 = vadd.f32 %v7720, %v7832
        %v7834 = vpop.f32.mrb[0].mxu0
        %v7835 = vadd.f32 %v7722, %v7834
        %v7836 = vpop.f32.mrb[0].mxu0
        %v7837 = vadd.f32 %v7724, %v7836
        %7838 = vmatprep.mubr.bf16.mxu0 %v6735
        %7839 = vmatmul.mubr.bf16.gmra.mrb[0].mxu0 %v6734
        %v7840 = vpop.f32.mrb[0].mxu0
        %v7841 = vadd.f32 %v7728, %v7840
        %v7842 = vpop.f32.mrb[0].mxu0
        %v7843 = vadd.f32 %v7730, %v7842
        %v7844 = vpop.f32.mrb[0].mxu0
        %v7845 = vadd.f32 %v7732, %v7844
        %v7846 = vpop.f32.mrb[0].mxu0
        %v7847 = vadd.f32 %v7734, %v7846
        %7848 = vmatprep.mubr.bf16.mxu0 %v6743
        %7849 = vmatmul.mubr.bf16.gmra.mrb[0].mxu0 %v6742
        %v7850 = vpop.f32.mrb[0].mxu0
        %v7851 = vadd.f32 %v7738, %v7850
        %v7852 = vpop.f32.mrb[0].mxu0
        %v7853 = vadd.f32 %v7740, %v7852
        %v7854 = vpop.f32.mrb[0].mxu0
        %v7855 = vadd.f32 %v7742, %v7854
        %v7856 = vpop.f32.mrb[0].mxu0
        %v7857 = vadd.f32 %v7744, %v7856
        %7858 = vmatprep.mubr.bf16.mxu0 %v6751
        %7859 = vmatmul.mubr.bf16.gmra.mrb[0].mxu0 %v6750
        %v7860 = vpop.f32.mrb[0].mxu0
        %v7861 = vadd.f32 %v7748, %v7860
        %v7862 = vpop.f32.mrb[0].mxu0
        %v7863 = vadd.f32 %v7750, %v7862
        %v7864 = vpop.f32.mrb[0].mxu0
        %v7865 = vadd.f32 %v7752, %v7864
        %v7866 = vpop.f32.mrb[0].mxu0
        %v7867 = vadd.f32 %v7754, %v7866
        %7868 = vmatprep.mubr.bf16.mxu0 %v6759
        %7869 = vmatmul.mubr.bf16.gmra.mrb[0].mxu0 %v6758
        %v7870 = vpop.f32.mrb[0].mxu0
        %v7871 = vadd.f32 %v7758, %v7870
        %v7872 = vpop.f32.mrb[0].mxu0
        %v7873 = vadd.f32 %v7760, %v7872
        %v7874 = vpop.f32.mrb[0].mxu0
        %v7875 = vadd.f32 %v7762, %v7874
        %v7876 = vpop.f32.mrb[0].mxu0
        %v7877 = vadd.f32 %v7764, %v7876
        %7878 = vmatprep.mubr.bf16.mxu0 %v6767
        %7879 = vmatmul.mubr.bf16.gmra.mrb[0].mxu0 %v6766
        %v7880 = vpop.f32.mrb[0].mxu0
        %v7881 = vadd.f32 %v7768, %v7880
        %v7882 = vpop.f32.mrb[0].mxu0
        %v7883 = vadd.f32 %v7770, %v7882
        %v7884 = vpop.f32.mrb[0].mxu0
        %v7885 = vadd.f32 %v7772, %v7884
        %v7886 = vpop.f32.mrb[0].mxu0
        %v7887 = vadd.f32 %v7774, %v7886
        %7888 = vdwg.mxu0
        %7889 = vmatprep.subr.bf16.mxu0 %v7391
        %7890 = vmatpush1.bf16.msra.mxu0 %v7390
        %7891 = vmatprep.subr.bf16.mxu0 %v7393
        %7892 = vmatpush1.bf16.msra.mxu0 %v7392
        %7893 = vmatprep.subr.bf16.mxu0 %v7395
        %7894 = vmatpush1.bf16.msra.mxu0 %v7394
        %7895 = vmatprep.subr.bf16.mxu0 %v7397
        %7896 = vmatpush1.bf16.msra.mxu0 %v7396
        %7897 = vmatprep.subr.bf16.mxu0 %v7399
        %7898 = vmatpush1.bf16.msra.mxu0 %v7398
        %7899 = vmatprep.subr.bf16.mxu0 %v7401
        %7900 = vmatpush1.bf16.msra.mxu0 %v7400
        %7901 = vmatprep.subr.bf16.mxu0 %v7403
        %7902 = vmatpush1.bf16.msra.mxu0 %v7402
        %7903 = vmatprep.subr.bf16.mxu0 %v7405
        %7904 = vmatpush1.bf16.msra.mxu0 %v7404
        %7905 = vmatprep.subr.bf16.mxu0 %v7407
        %7906 = vmatpush1.bf16.msra.mxu0 %v7406
        %7907 = vmatprep.subr.bf16.mxu0 %v7409
        %7908 = vmatpush1.bf16.msra.mxu0 %v7408
        %7909 = vmatprep.subr.bf16.mxu0 %v7411
        %7910 = vmatpush1.bf16.msra.mxu0 %v7410
        %7911 = vmatprep.subr.bf16.mxu0 %v7413
        %7912 = vmatpush1.bf16.msra.mxu0 %v7412
        %7913 = vmatprep.subr.bf16.mxu0 %v7415
        %7914 = vmatpush1.bf16.msra.mxu0 %v7414
        %7915 = vmatprep.subr.bf16.mxu0 %v7417
        %7916 = vmatpush1.bf16.msra.mxu0 %v7416
        %7917 = vmatprep.subr.bf16.mxu0 %v7419
        %7918 = vmatpush1.bf16.msra.mxu0 %v7418
        %7919 = vmatprep.subr.bf16.mxu0 %v7421
        %7920 = vmatpush1.bf16.msra.mxu0 %v7420
        %7921 = vmatprep.mubr.bf16.mxu0 %v6713
        %7922 = vmatmul.mubr.bf16.gmra.mrb[0].mxu0 %v6712
        %v7923 = vpop.f32.mrb[0].mxu0
        %v7924 = vadd.f32 %v7811, %v7923
        %v7925 = vpop.f32.mrb[0].mxu0
        %v7926 = vadd.f32 %v7813, %v7925
        %v7927 = vpop.f32.mrb[0].mxu0
        %v7928 = vadd.f32 %v7815, %v7927
        %v7929 = vpop.f32.mrb[0].mxu0
        %v7930 = vadd.f32 %v7817, %v7929
        %7931 = vmatprep.mubr.bf16.mxu0 %v6721
        %7932 = vmatmul.mubr.bf16.gmra.mrb[0].mxu0 %v6720
        %v7933 = vpop.f32.mrb[0].mxu0
        %v7934 = vadd.f32 %v7821, %v7933
        %v7935 = vpop.f32.mrb[0].mxu0
        %v7936 = vadd.f32 %v7823, %v7935
        %v7937 = vpop.f32.mrb[0].mxu0
        %v7938 = vadd.f32 %v7825, %v7937
        %v7939 = vpop.f32.mrb[0].mxu0
        %v7940 = vadd.f32 %v7827, %v7939
        %7941 = vmatprep.mubr.bf16.mxu0 %v6729
        %7942 = vmatmul.mubr.bf16.gmra.mrb[0].mxu0 %v6728
        %v7943 = vpop.f32.mrb[0].mxu0
        %v7944 = vadd.f32 %v7831, %v7943
        %v7945 = vpop.f32.mrb[0].mxu0
        %v7946 = vadd.f32 %v7833, %v7945
        %v7947 = vpop.f32.mrb[0].mxu0
        %v7948 = vadd.f32 %v7835, %v7947
        %v7949 = vpop.f32.mrb[0].mxu0
        %v7950 = vadd.f32 %v7837, %v7949
        %7951 = vmatprep.mubr.bf16.mxu0 %v6737
        %7952 = vmatmul.mubr.bf16.gmra.mrb[0].mxu0 %v6736
        %v7953 = vpop.f32.mrb[0].mxu0
        %v7954 = vadd.f32 %v7841, %v7953
        %v7955 = vpop.f32.mrb[0].mxu0
        %v7956 = vadd.f32 %v7843, %v7955
        %v7957 = vpop.f32.mrb[0].mxu0
        %v7958 = vadd.f32 %v7845, %v7957
        %v7959 = vpop.f32.mrb[0].mxu0
        %v7960 = vadd.f32 %v7847, %v7959
        %7961 = vmatprep.mubr.bf16.mxu0 %v6745
        %7962 = vmatmul.mubr.bf16.gmra.mrb[0].mxu0 %v6744
        %v7963 = vpop.f32.mrb[0].mxu0
        %v7964 = vadd.f32 %v7851, %v7963
        %v7965 = vpop.f32.mrb[0].mxu0
        %v7966 = vadd.f32 %v7853, %v7965
        %v7967 = vpop.f32.mrb[0].mxu0
        %v7968 = vadd.f32 %v7855, %v7967
        %v7969 = vpop.f32.mrb[0].mxu0
        %v7970 = vadd.f32 %v7857, %v7969
        %7971 = vmatprep.mubr.bf16.mxu0 %v6753
        %7972 = vmatmul.mubr.bf16.gmra.mrb[0].mxu0 %v6752
        %v7973 = vpop.f32.mrb[0].mxu0
        %v7974 = vadd.f32 %v7861, %v7973
        %v7975 = vpop.f32.mrb[0].mxu0
        %v7976 = vadd.f32 %v7863, %v7975
        %v7977 = vpop.f32.mrb[0].mxu0
        %v7978 = vadd.f32 %v7865, %v7977
        %v7979 = vpop.f32.mrb[0].mxu0
        %v7980 = vadd.f32 %v7867, %v7979
        %7981 = vmatprep.mubr.bf16.mxu0 %v6761
        %7982 = vmatmul.mubr.bf16.gmra.mrb[0].mxu0 %v6760
        %v7983 = vpop.f32.mrb[0].mxu0
        %v7984 = vadd.f32 %v7871, %v7983
        %v7985 = vpop.f32.mrb[0].mxu0
        %v7986 = vadd.f32 %v7873, %v7985
        %v7987 = vpop.f32.mrb[0].mxu0
        %v7988 = vadd.f32 %v7875, %v7987
        %v7989 = vpop.f32.mrb[0].mxu0
        %v7990 = vadd.f32 %v7877, %v7989
        %7991 = vmatprep.mubr.bf16.mxu0 %v6769
        %7992 = vmatmul.mubr.bf16.gmra.mrb[0].mxu0 %v6768
        %v7993 = vpop.f32.mrb[0].mxu0
        %v7994 = vadd.f32 %v7881, %v7993
        %v7995 = vpop.f32.mrb[0].mxu0
        %v7996 = vadd.f32 %v7883, %v7995
        %v7997 = vpop.f32.mrb[0].mxu0
        %v7998 = vadd.f32 %v7885, %v7997
        %v7999 = vpop.f32.mrb[0].mxu0
        %v8000 = vadd.f32 %v7887, %v7999
        %8001 = vdwg.mxu0
        %v8002 = vadd.f32 %v4028, %v7924
        %v8003 = vadd.f32 %v4029, %v7926
        %v8004 = vadd.f32 %v4030, %v7928
        %v8005 = vadd.f32 %v4031, %v7930
        %v8006 = vadd.f32 %v4032, %v7934
        %v8007 = vadd.f32 %v4033, %v7936
        %v8008 = vadd.f32 %v4034, %v7938
        %v8009 = vadd.f32 %v4035, %v7940
        %v8010 = vadd.f32 %v4036, %v7944
        %v8011 = vadd.f32 %v4037, %v7946
        %v8012 = vadd.f32 %v4038, %v7948
        %v8013 = vadd.f32 %v4039, %v7950
        %v8014 = vadd.f32 %v4040, %v7954
        %v8015 = vadd.f32 %v4041, %v7956
        %v8016 = vadd.f32 %v4042, %v7958
        %v8017 = vadd.f32 %v4043, %v7960
        %v8018 = vadd.f32 %v4044, %v7964
        %v8019 = vadd.f32 %v4045, %v7966
        %v8020 = vadd.f32 %v4046, %v7968
        %v8021 = vadd.f32 %v4047, %v7970
        %v8022 = vadd.f32 %v4048, %v7974
        %v8023 = vadd.f32 %v4049, %v7976
        %v8024 = vadd.f32 %v4050, %v7978
        %v8025 = vadd.f32 %v4051, %v7980
        %v8026 = vadd.f32 %v4052, %v7984
        %v8027 = vadd.f32 %v4053, %v7986
        %v8028 = vadd.f32 %v4054, %v7988
        %v8029 = vadd.f32 %v4055, %v7990
        %v8030 = vadd.f32 %v4056, %v7994
        %v8031 = vadd.f32 %v4057, %v7996
        %v8032 = vadd.f32 %v4058, %v7998
        %v8033 = vadd.f32 %v4059, %v8000
        %8034 = vst [vmem:[%s542] sm:$0xff] %v8002
        %8035 = vst [vmem:[%s542 + $0x8] sm:$0xff] %v8003
        %8036 = vst [vmem:[%s542 + $0x10] sm:$0xff] %v8004
        %8037 = vst [vmem:[%s542 + $0x18] sm:$0xff] %v8005
        %8038 = vst [vmem:[%s542 + $0x20] sm:$0xff] %v8006
        %8039 = vst [vmem:[%s542 + $0x28] sm:$0xff] %v8007
        %8040 = vst [vmem:[%s542 + $0x30] sm:$0xff] %v8008
        %8041 = vst [vmem:[%s542 + $0x38] sm:$0xff] %v8009
        %8042 = vst [vmem:[%s542 + $0x40] sm:$0xff] %v8010
        %8043 = vst [vmem:[%s542 + $0x48] sm:$0xff] %v8011
        %8044 = vst [vmem:[%s542 + $0x50] sm:$0xff] %v8012
        %8045 = vst [vmem:[%s542 + $0x58] sm:$0xff] %v8013
        %8046 = vst [vmem:[%s542 + $0x60] sm:$0xff] %v8014
        %8047 = vst [vmem:[%s542 + $0x68] sm:$0xff] %v8015
        %8048 = vst [vmem:[%s542 + $0x70] sm:$0xff] %v8016
        %8049 = vst [vmem:[%s542 + $0x78] sm:$0xff] %v8017
        %8050 = vst [vmem:[%s542 + $0x80] sm:$0xff] %v8018
        %8051 = vst [vmem:[%s542 + $0x88] sm:$0xff] %v8019
        %8052 = vst [vmem:[%s542 + $0x90] sm:$0xff] %v8020
        %8053 = vst [vmem:[%s542 + $0x98] sm:$0xff] %v8021
        %8054 = vst [vmem:[%s542 + $0xa0] sm:$0xff] %v8022
        %8055 = vst [vmem:[%s542 + $0xa8] sm:$0xff] %v8023
        %8056 = vst [vmem:[%s542 + $0xb0] sm:$0xff] %v8024
        %8057 = vst [vmem:[%s542 + $0xb8] sm:$0xff] %v8025
        %8058 = vst [vmem:[%s542 + $0xc0] sm:$0xff] %v8026
        %8059 = vst [vmem:[%s542 + $0xc8] sm:$0xff] %v8027
        %8060 = vst [vmem:[%s542 + $0xd0] sm:$0xff] %v8028
        %8061 = vst [vmem:[%s542 + $0xd8] sm:$0xff] %v8029
        %8062 = vst [vmem:[%s542 + $0xe0] sm:$0xff] %v8030
        %8063 = vst [vmem:[%s542 + $0xe8] sm:$0xff] %v8031
        %8064 = vst [vmem:[%s542 + $0xf0] sm:$0xff] %v8032
        %8065 = vst [vmem:[%s542 + $0xf8] sm:$0xff] %v8033
        %s8066 = sand.u32 %s319, 1
        %s8067 = scalar_lea.sflag [#allocation5], %s8066
        %s8068 = sand.u32 %s319, 1
        %s8069 = smul.addr %s8068, 256
        %s8070 = scalar_lea.vmem [#allocation15], %s8069
        // Predicated region
        $region101: #{tpu_custom_call.1} parent=71 // pred_check
          %p8071 = pneg %p329
        $region102: #{tpu_custom_call.1} parent=71 // pred_check_branch
          %8073 = sbr.rel (%p8071) target = $region104
        $region103: #{tpu_custom_call.1} parent=71 // pred_region
          %s8074 = smul.u32 8, %s33
          %s8076 = ssub.s32 4096, 4096
          %8077 = vsyncadd %s8067, %s8076
          %s8078 = smul.addr %s8074, 4
          %s8079 = smul.addr %s8078, 128
          %s8080 = scalar_lea.hbm %s13, %s8079
          %s8081 = sshll.u32 %s8070, 4
          %s8082 = int_to_ptr.vmem [resolvable:$true] %s8081
          %8087 = dma.vmem_to_hbm [thread:$0]  %s8082, 4096, %s8080, %s8067, 256, 256, 16
        $region104: #{tpu_custom_call.1} parent=71 // pred_fallthru
          _
      $region72: #{tpu_custom_call.1} parent=5 // pred_fallthru
        _
      %p8088 = scmp.le.s32.totalorder 2, %s28
      // Predicated region
      $region105: #{tpu_custom_call.1} parent=5 // pred_check
        %p8089 = pneg %p8088
      $region106: #{tpu_custom_call.1} parent=5 // pred_check_branch
        %8091 = sbr.rel (%p8089) target = $region108
      $region107: #{tpu_custom_call.1} parent=5 // pred_region
        %s8092 = ssub.s32 %s28, 2
        // Predicated region
        $region109: #{tpu_custom_call.1} parent=107 // pred_check
          %p8093 = pneg %p335
        $region110: #{tpu_custom_call.1} parent=107 // pred_check_branch
          %8095 = sbr.rel (%p8093) target = $region112
        $region111: #{tpu_custom_call.1} parent=107 // pred_region
          %s8096 = sand.u32 %s320, 1
          %s8097 = scalar_lea.sflag [#allocation5], %s8096
          %s8098 = sand.u32 %s320, 1
          %s8099 = smul.addr %s8098, 256
          %s8100 = scalar_lea.vmem [#allocation15], %s8099
          %8101 = dma.done %s8097, 4096
        $region112: #{tpu_custom_call.1} parent=107 // pred_fallthru
          _
      $region108: #{tpu_custom_call.1} parent=5 // pred_fallthru
        _
    $region6: #{tpu_custom_call.1} parent=1 // loop_footer
      %s32 = sadd.s32 1, %s28
    $region7: #{tpu_custom_call.1} parent=1 // loop_footer_branch
      %27 = sbr.rel target = $region3
    $region8: #{tpu_custom_call.1} parent=1 // loop_exit
      _
    %8102 = vsyncpa [#allocation4], 1
    %s8103 = scalar_lea.sflag [#allocation4], 1
    %8104 = vsyncpa %s8103, 1
    %8105 = vsyncpa [#allocation7], 1
    %8106 = vsyncpa [#allocation10], 1
    %8107 = vsyncpa [#allocation13], 1
    %8108 = vsyncpa [#allocation5], 1
    %s8109 = scalar_lea.sflag [#allocation5], 1
    %8110 = vsyncpa %s8109, 1

</llo_original>
